<compile_context>
chip_gen: v7x
topology: tpu7x:2x2x1
jax: 0.10.0
libtpu: 0.0.40
codegen_flags: <defaults>
</compile_context>

<pallas_src>
import functools

import numpy as np

import jax
import jax.numpy as jnp
from jax import lax
from jax.experimental import pallas as pl
from jax.experimental.pallas import tpu as pltpu

# MXU operand dtype (bf16 operands + f32 accumulation is MXU-native on
# v5e/v6e/v7x).  Set to jnp.float32 if bit-exact argmax agreement with the
# torch reference must be re-validated.
_DFT_DTYPE = jnp.bfloat16


@functools.lru_cache(maxsize=None)
def _dft_constants(N: int):
    """Real-valued DFT / IDFT weight matrices, built once in float64."""
    n = np.arange(N)
    theta = 2.0 * np.pi * ((np.outer(n, n) % N).astype(np.float64) / float(N))
    C = np.cos(theta)
    S = np.sin(theta)
    inv_nn = 1.0 / (N * N)
    Cl = np.roll(C, N // 2, axis=0) * inv_nn      # fftshift rows + 1/N^2
    Sl = np.roll(S, N // 2, axis=0) * inv_nn
    Cr = np.roll(C, N // 2, axis=1)               # fftshift cols
    Sr = np.roll(S, N // 2, axis=1)

    dt = _DFT_DTYPE
    CSv = jnp.asarray(np.concatenate([C, S], axis=0), dtype=dt)         # (2N, N)
    W2 = jnp.asarray(np.block([[C, -S], [-S, -C]]), dtype=dt)           # (2N, 2N)
    ICLl = jnp.asarray(np.concatenate([Cl, Sl], axis=0), dtype=dt)      # (2N, N)
    ICLr = jnp.asarray(np.concatenate([-Sl, Cl], axis=0), dtype=dt)     # (2N, N)
    Crj = jnp.asarray(Cr, dtype=dt)                                     # (N, N)
    Srj = jnp.asarray(Sr, dtype=dt)                                     # (N, N)
    return CSv, W2, ICLl, ICLr, Crj, Srj


def _phase_corr_kernel(a_ref, b_ref, csv_ref, w2_ref, icll_ref, iclr_ref,
                       cr_ref, sr_ref, r_ref, asum_ref, ssum_ref):
    Bt = r_ref.shape[0]
    N = r_ref.shape[1]
    f32 = jnp.float32
    cdt = csv_ref.dtype        # bf16 MXU operand dtype
    eps = f32(1e-15)

    CSv = csv_ref[...]         # (2N, N)   [C ; S]
    W2 = w2_ref[...]           # (2N, 2N)  [[C, -S], [-S, -C]]
    ICLl = icll_ref[...]       # (2N, N)   [Cl ; Sl]   (row-shifted, /N^2)
    ICLr = iclr_ref[...]       # (2N, N)   [-Sl ; Cl]
    Cr = cr_ref[...]           # (N, N)    column-shifted C
    Sr = sr_ref[...]           # (N, N)    column-shifted S

    # ---- FFT2 of all 2*Bt images, fused ----------------------------------
    # Stage 1 (column DFT): lane-pack the images [a_0 .. a_{Bt-1}, b_0 .. b_{Bt-1}]
    # and issue a single MXU dot with the stationary [C;S].
    imgs = [a_ref[i].astype(cdt) for i in range(Bt)] + \
           [b_ref[i].astype(cdt) for i in range(Bt)]
    X = jnp.concatenate(imgs, axis=1)                                   # (N, 2*Bt*N)
    T = jnp.dot(CSv, X, preferred_element_type=f32).astype(cdt)         # (2N, 2*Bt*N)

    # Regroup (128-aligned vreg copies): per image j build [P_j | Q_j] and
    # sublane-stack all images, so stage 2 is a single dot against W2.
    pq_blocks = [
        jnp.concatenate([T[:N, j * N:(j + 1) * N],
                         T[N:, j * N:(j + 1) * N]], axis=1)             # (N, 2N)
        for j in range(2 * Bt)
    ]
    PQ = jnp.concatenate(pq_blocks, axis=0)                             # (2*Bt*N, 2N)

    # Stage 2 (row DFT): F row-block j = [re_j | im_j].
    F = jnp.dot(PQ, W2, preferred_element_type=f32)                     # (2*Bt*N, 2N)

    for i in range(Bt):
        Fa = F[i * N:(i + 1) * N]
        Fb = F[(Bt + i) * N:(Bt + i + 1) * N]
        ra, ia = Fa[:, :N], Fa[:, N:]
        rb, ib = Fb[:, :N], Fb[:, N:]

        # ---- normalized cross-power spectrum (f32 VPU, single rsqrt) -----
        num0 = ra * rb + ia * ib
        num1 = ra * ib - rb * ia
        inv = lax.rsqrt((ra * ra + ia * ia + eps) * (rb * rb + ib * ib + eps))
        R0 = (num0 * inv).astype(cdt)
        R1 = (num1 * inv).astype(cdt)

        # ---- IFFT2 (real part); fftshift + 1/N^2 folded into the weights --
        # Stage 1: two accumulated dots (no sublane concat of R0/R1).
        XY = (jnp.dot(ICLl, R0, preferred_element_type=f32)
              + jnp.dot(ICLr, R1, preferred_element_type=f32))          # (2N, N) [X;Y]
        Xs = XY[:N].astype(cdt)
        Ys = XY[N:].astype(cdt)
        rr = (jnp.dot(Xs, Cr, preferred_element_type=f32)
              - jnp.dot(Ys, Sr, preferred_element_type=f32))            # (N, N)
        # imag(ifft2) is analytically ~0 (conjugate-symmetric spectrum of real
        # inputs), so sqrt(rr^2 + ri^2 + eps) collapses to |rr|.
        rmag = jnp.abs(rr)

        # TODO(synk): trans=True band-zeroing path not implemented (module
        # default trans=False is reproduced here).
        r_ref[i] = rmag.astype(r_ref.dtype)
        # lane-dense (1, N) sum rows (unmasked stores).
        asum_ref[i] = jnp.sum(rmag, axis=1).reshape(1, N)   # == torch.sum(r, 2)
        ssum_ref[i] = jnp.sum(rmag, axis=0).reshape(1, N)   # == torch.sum(r, 1)


def _pick_block_b(B: int, max_bt: int = 4) -> int:
    """Batch-block size: divisor of B, <= max_bt (v7x 64 MiB VMEM cap),
    preferring a grid length >= 2 so v7x's two TensorCores both get work."""
    divs = [d for d in range(1, min(B, max_bt) + 1) if B % d == 0]
    pref = [d for d in divs if B // d >= 2]
    return max(pref) if pref else max(divs)


@functools.partial(jax.jit, static_argnames=("block_b",))
def _phase_corr_jit(template, source, logbase, *, block_b):
    B, H, W = template.shape
    N = H
    Bt = block_b
    CSv, W2, ICLl, ICLr, Cr, Sr = _dft_constants(N)

    r, asum, ssum = pl.pallas_call(
        _phase_corr_kernel,
        out_shape=(
            jax.ShapeDtypeStruct((B, N, N), jnp.float32),
            jax.ShapeDtypeStruct((B, 1, N), jnp.float32),
            jax.ShapeDtypeStruct((B, 1, N), jnp.float32),
        ),
        grid_spec=pltpu.PrefetchScalarGridSpec(
            num_scalar_prefetch=0,
            grid=(B // Bt,),
            in_specs=[
                pl.BlockSpec((Bt, N, N), lambda i: (i, 0, 0)),
                pl.BlockSpec((Bt, N, N), lambda i: (i, 0, 0)),
                pl.BlockSpec((2 * N, N), lambda i: (0, 0)),
                pl.BlockSpec((2 * N, 2 * N), lambda i: (0, 0)),
                pl.BlockSpec((2 * N, N), lambda i: (0, 0)),
                pl.BlockSpec((2 * N, N), lambda i: (0, 0)),
                pl.BlockSpec((N, N), lambda i: (0, 0)),
                pl.BlockSpec((N, N), lambda i: (0, 0)),
            ],
            out_specs=(
                pl.BlockSpec((Bt, N, N), lambda i: (i, 0, 0)),
                pl.BlockSpec((Bt, 1, N), lambda i: (i, 0, 0)),
                pl.BlockSpec((Bt, 1, N), lambda i: (i, 0, 0)),
            ),
        ),
        compiler_params=pltpu.CompilerParams(
            dimension_semantics=("parallel",),
            vmem_limit_bytes=48 * 1024 * 1024),
    )(template, source, CSv, W2, ICLl, ICLr, Cr, Sr)

    angle_sum = asum[:, 0, :]   # (B, N) == torch.sum(r, 2)
    scale_sum = ssum[:, 0, :]   # (B, N) == torch.sum(r, 1)

    # TODO(synk): `modelc2s` is never passed by PhaseCorr.forward in the
    # reference module (missing call argument); it is treated as identity here.
    angle_out = jnp.argmax(angle_sum[:, 128:128 + 64], axis=-1) + 128
    scale_out = jnp.argmax(scale_sum, axis=-1)

    angle_ori = angle_out.astype(jnp.float32) * 180.0 / N
    angle = jnp.where(angle_ori >= 90.0, angle_ori - 90.0, angle_ori + 90.0)

    sca_f = (scale_out - W // 2).astype(jnp.float32)
    scale = 1.0 / jnp.power(logbase, sca_f)
    return angle, scale, r


def phase_corr_pallas(template, source, logbase, max_block_b: int = 4):
    B, H, W = template.shape
    # The reference hard-codes the argmax slice [128:128+64] and 180/H mapping
    # for 256x256 log-polar maps (DPCN config); enforce it explicitly.
    assert H == W == 256, "DPCN phase_corr assumes 256x256 inputs"
    Bt = _pick_block_b(B, max_block_b)
    return _phase_corr_jit(template, source, jnp.float32(logbase), block_b=Bt)


if __name__ == "__main__":
    key = jax.random.PRNGKey(0)
    k1, k2 = jax.random.split(key)
    # H = W = 256 is implied by the hard-coded [:, 128:128+64] slice in the module.
    B, H, W = 2, 256, 256
    template = jax.random.uniform(k1, (B, H, W), dtype=jnp.float32)
    source = jax.random.uniform(k2, (B, H, W), dtype=jnp.float32)
    logbase = 1.0267  # deterministic synthetic log-polar base scalar

    angle, scale, r = phase_corr_pallas(template, source, logbase)
    jax.block_until_ready((angle, scale, r))
    print("KERNEL_OK")
</pallas_src>

<mosaic_0001>
module attributes {stable_mosaic.version = 11 : i64} {
  func.func @_phase_corr_kernel(%arg0: i32, %arg1: memref<1x256x256xf32, #tpu.memory_space<vmem>>, %arg2: memref<1x256x256xf32, #tpu.memory_space<vmem>>, %arg3: memref<512x256xbf16, #tpu.memory_space<vmem>>, %arg4: memref<512x512xbf16, #tpu.memory_space<vmem>>, %arg5: memref<512x256xbf16, #tpu.memory_space<vmem>>, %arg6: memref<512x256xbf16, #tpu.memory_space<vmem>>, %arg7: memref<256x256xbf16, #tpu.memory_space<vmem>>, %arg8: memref<256x256xbf16, #tpu.memory_space<vmem>>, %arg9: memref<1x256x256xf32, #tpu.memory_space<vmem>>, %arg10: memref<1x1x256xf32, #tpu.memory_space<vmem>>, %arg11: memref<1x1x256xf32, #tpu.memory_space<vmem>>) attributes {dimension_semantics = [#tpu.dimension_semantics<parallel>], iteration_bounds = array<i64: 2>, scalar_prefetch = 0 : i64, scratch_operands = 0 : i64, tpu.core_type = #tpu.core_type<tc>, window_params = [{transform_indices = @transform_0, window_bounds = array<i64: 1, 256, 256>}, {transform_indices = @transform_1, window_bounds = array<i64: 1, 256, 256>}, {pipeline_mode = #tpu.pipeline_mode<synchronous>, transform_indices = @transform_2, window_bounds = array<i64: 512, 256>}, {pipeline_mode = #tpu.pipeline_mode<synchronous>, transform_indices = @transform_3, window_bounds = array<i64: 512, 512>}, {pipeline_mode = #tpu.pipeline_mode<synchronous>, transform_indices = @transform_4, window_bounds = array<i64: 512, 256>}, {pipeline_mode = #tpu.pipeline_mode<synchronous>, transform_indices = @transform_5, window_bounds = array<i64: 512, 256>}, {pipeline_mode = #tpu.pipeline_mode<synchronous>, transform_indices = @transform_6, window_bounds = array<i64: 256, 256>}, {pipeline_mode = #tpu.pipeline_mode<synchronous>, transform_indices = @transform_7, window_bounds = array<i64: 256, 256>}, {transform_indices = @transform_8, window_bounds = array<i64: 1, 256, 256>}, {transform_indices = @transform_9, window_bounds = array<i64: 1, 1, 256>}, {transform_indices = @transform_10, window_bounds = array<i64: 1, 1, 256>}]} {
    %c0 = arith.constant 0 : index
    %c0_0 = arith.constant 0 : index
    %0 = vector.load %arg3[%c0, %c0_0] : memref<512x256xbf16, #tpu.memory_space<vmem>>, vector<512x256xbf16>
    %c0_1 = arith.constant 0 : index
    %c0_2 = arith.constant 0 : index
    %1 = vector.load %arg4[%c0_1, %c0_2] : memref<512x512xbf16, #tpu.memory_space<vmem>>, vector<512x512xbf16>
    %c0_3 = arith.constant 0 : index
    %c0_4 = arith.constant 0 : index
    %2 = vector.load %arg5[%c0_3, %c0_4] : memref<512x256xbf16, #tpu.memory_space<vmem>>, vector<512x256xbf16>
    %c0_5 = arith.constant 0 : index
    %c0_6 = arith.constant 0 : index
    %3 = vector.load %arg6[%c0_5, %c0_6] : memref<512x256xbf16, #tpu.memory_space<vmem>>, vector<512x256xbf16>
    %c0_7 = arith.constant 0 : index
    %c0_8 = arith.constant 0 : index
    %4 = vector.load %arg7[%c0_7, %c0_8] : memref<256x256xbf16, #tpu.memory_space<vmem>>, vector<256x256xbf16>
    %c0_9 = arith.constant 0 : index
    %c0_10 = arith.constant 0 : index
    %5 = vector.load %arg8[%c0_9, %c0_10] : memref<256x256xbf16, #tpu.memory_space<vmem>>, vector<256x256xbf16>
    %c0_11 = arith.constant 0 : index
    %c0_12 = arith.constant 0 : index
    %c0_13 = arith.constant 0 : index
    %6 = vector.load %arg1[%c0_11, %c0_12, %c0_13] : memref<1x256x256xf32, #tpu.memory_space<vmem>>, vector<1x256x256xf32>
    %7 = vector.shape_cast %6 : vector<1x256x256xf32> to vector<256x256xf32>
    %8 = arith.truncf %7 : vector<256x256xf32> to vector<256x256xbf16>
    %c0_14 = arith.constant 0 : index
    %c0_15 = arith.constant 0 : index
    %c0_16 = arith.constant 0 : index
    %9 = vector.load %arg2[%c0_14, %c0_15, %c0_16] : memref<1x256x256xf32, #tpu.memory_space<vmem>>, vector<1x256x256xf32>
    %10 = vector.shape_cast %9 : vector<1x256x256xf32> to vector<256x256xf32>
    %11 = arith.truncf %10 : vector<256x256xf32> to vector<256x256xbf16>
    %12 = tpu.concatenate %8, %11 in 1 : vector<256x256xbf16>, vector<256x256xbf16> -> vector<256x512xbf16>
    %cst = arith.constant dense<0.000000e+00> : vector<512x512xf32>
    %13 = tpu.matmul %0, %12, %cst {dimension_numbers = #tpu.dot_dimension_numbers<[1], [0], [0], [1], [0, 0, 1, 1], [], []>} : vector<512x256xbf16>, vector<256x512xbf16>, vector<512x512xf32> -> vector<512x512xf32>
    %14 = arith.truncf %13 : vector<512x512xf32> to vector<512x512xbf16>
    %15 = vector.extract_strided_slice %14 {offsets = [0, 0], sizes = [256, 256], strides = [1, 1]} : vector<512x512xbf16> to vector<256x256xbf16>
    %16 = vector.extract_strided_slice %14 {offsets = [256, 0], sizes = [256, 256], strides = [1, 1]} : vector<512x512xbf16> to vector<256x256xbf16>
    %17 = tpu.concatenate %15, %16 in 1 : vector<256x256xbf16>, vector<256x256xbf16> -> vector<256x512xbf16>
    %18 = vector.extract_strided_slice %14 {offsets = [0, 256], sizes = [256, 256], strides = [1, 1]} : vector<512x512xbf16> to vector<256x256xbf16>
    %19 = vector.extract_strided_slice %14 {offsets = [256, 256], sizes = [256, 256], strides = [1, 1]} : vector<512x512xbf16> to vector<256x256xbf16>
    %20 = tpu.concatenate %18, %19 in 1 : vector<256x256xbf16>, vector<256x256xbf16> -> vector<256x512xbf16>
    %21 = tpu.concatenate %17, %20 in 0 : vector<256x512xbf16>, vector<256x512xbf16> -> vector<512x512xbf16>
    %cst_17 = arith.constant dense<0.000000e+00> : vector<512x512xf32>
    %22 = tpu.matmul %21, %1, %cst_17 {dimension_numbers = #tpu.dot_dimension_numbers<[1], [0], [0], [1], [0, 0, 1, 1], [], []>} : vector<512x512xbf16>, vector<512x512xbf16>, vector<512x512xf32> -> vector<512x512xf32>
    %23 = vector.extract_strided_slice %22 {offsets = [0, 0], sizes = [256, 512], strides = [1, 1]} : vector<512x512xf32> to vector<256x512xf32>
    %24 = vector.extract_strided_slice %22 {offsets = [256, 0], sizes = [256, 512], strides = [1, 1]} : vector<512x512xf32> to vector<256x512xf32>
    %25 = vector.extract_strided_slice %23 {offsets = [0, 0], sizes = [256, 256], strides = [1, 1]} : vector<256x512xf32> to vector<256x256xf32>
    %26 = vector.extract_strided_slice %23 {offsets = [0, 256], sizes = [256, 256], strides = [1, 1]} : vector<256x512xf32> to vector<256x256xf32>
    %27 = vector.extract_strided_slice %24 {offsets = [0, 0], sizes = [256, 256], strides = [1, 1]} : vector<256x512xf32> to vector<256x256xf32>
    %28 = vector.extract_strided_slice %24 {offsets = [0, 256], sizes = [256, 256], strides = [1, 1]} : vector<256x512xf32> to vector<256x256xf32>
    %29 = arith.mulf %25, %27 : vector<256x256xf32>
    %30 = arith.mulf %26, %28 : vector<256x256xf32>
    %31 = arith.addf %29, %30 : vector<256x256xf32>
    %32 = arith.mulf %25, %28 : vector<256x256xf32>
    %33 = arith.mulf %27, %26 : vector<256x256xf32>
    %34 = arith.subf %32, %33 : vector<256x256xf32>
    %35 = arith.mulf %25, %25 : vector<256x256xf32>
    %36 = arith.mulf %26, %26 : vector<256x256xf32>
    %37 = arith.addf %35, %36 : vector<256x256xf32>
    %cst_18 = arith.constant 1.000000e-15 : f32
    %38 = vector.broadcast %cst_18 : f32 to vector<256x256xf32>
    %39 = arith.addf %37, %38 : vector<256x256xf32>
    %40 = arith.mulf %27, %27 : vector<256x256xf32>
    %41 = arith.mulf %28, %28 : vector<256x256xf32>
    %42 = arith.addf %40, %41 : vector<256x256xf32>
    %cst_19 = arith.constant 1.000000e-15 : f32
    %43 = vector.broadcast %cst_19 : f32 to vector<256x256xf32>
    %44 = arith.addf %42, %43 : vector<256x256xf32>
    %45 = arith.mulf %39, %44 : vector<256x256xf32>
    %46 = math.rsqrt %45 : vector<256x256xf32>
    %47 = arith.mulf %31, %46 : vector<256x256xf32>
    %48 = arith.truncf %47 : vector<256x256xf32> to vector<256x256xbf16>
    %49 = arith.mulf %34, %46 : vector<256x256xf32>
    %50 = arith.truncf %49 : vector<256x256xf32> to vector<256x256xbf16>
    %cst_20 = arith.constant dense<0.000000e+00> : vector<512x256xf32>
    %51 = tpu.matmul %2, %48, %cst_20 {dimension_numbers = #tpu.dot_dimension_numbers<[1], [0], [0], [1], [0, 0, 1, 1], [], []>} : vector<512x256xbf16>, vector<256x256xbf16>, vector<512x256xf32> -> vector<512x256xf32>
    %cst_21 = arith.constant dense<0.000000e+00> : vector<512x256xf32>
    %52 = tpu.matmul %3, %50, %cst_21 {dimension_numbers = #tpu.dot_dimension_numbers<[1], [0], [0], [1], [0, 0, 1, 1], [], []>} : vector<512x256xbf16>, vector<256x256xbf16>, vector<512x256xf32> -> vector<512x256xf32>
    %53 = arith.addf %51, %52 : vector<512x256xf32>
    %54 = vector.extract_strided_slice %53 {offsets = [0, 0], sizes = [256, 256], strides = [1, 1]} : vector<512x256xf32> to vector<256x256xf32>
    %55 = arith.truncf %54 : vector<256x256xf32> to vector<256x256xbf16>
    %56 = vector.extract_strided_slice %53 {offsets = [256, 0], sizes = [256, 256], strides = [1, 1]} : vector<512x256xf32> to vector<256x256xf32>
    %57 = arith.truncf %56 : vector<256x256xf32> to vector<256x256xbf16>
    %cst_22 = arith.constant dense<0.000000e+00> : vector<256x256xf32>
    %58 = tpu.matmul %55, %4, %cst_22 {dimension_numbers = #tpu.dot_dimension_numbers<[1], [0], [0], [1], [0, 0, 1, 1], [], []>} : vector<256x256xbf16>, vector<256x256xbf16>, vector<256x256xf32> -> vector<256x256xf32>
    %cst_23 = arith.constant dense<0.000000e+00> : vector<256x256xf32>
    %59 = tpu.matmul %57, %5, %cst_23 {dimension_numbers = #tpu.dot_dimension_numbers<[1], [0], [0], [1], [0, 0, 1, 1], [], []>} : vector<256x256xbf16>, vector<256x256xbf16>, vector<256x256xf32> -> vector<256x256xf32>
    %60 = arith.subf %58, %59 : vector<256x256xf32>
    %61 = math.absf %60 : vector<256x256xf32>
    %c0_24 = arith.constant 0 : index
    %c0_25 = arith.constant 0 : index
    %c0_26 = arith.constant 0 : index
    %62 = vector.load %arg9[%c0_24, %c0_25, %c0_26] : memref<1x256x256xf32, #tpu.memory_space<vmem>>, vector<1x256x256xf32>
    %63 = vector.shape_cast %62 : vector<1x256x256xf32> to vector<256x256xf32>
    %64 = vector.shape_cast %61 : vector<256x256xf32> to vector<1x256x256xf32>
    tpu.vector_store %arg9[%c0_24, %c0_25, %c0_26], %64 {strides = array<i32>} : memref<1x256x256xf32, #tpu.memory_space<vmem>>, vector<1x256x256xf32>,
    %cst_27 = arith.constant dense<0.000000e+00> : vector<256xf32>
    %65 = vector.multi_reduction <add>, %61, %cst_27 [1] : vector<256x256xf32> to vector<256xf32>
    %66 = vector.shape_cast %65 : vector<256xf32> to vector<1x256xf32>
    %c0_28 = arith.constant 0 : index
    %c0_29 = arith.constant 0 : index
    %c0_30 = arith.constant 0 : index
    %67 = vector.load %arg10[%c0_28, %c0_29, %c0_30] : memref<1x1x256xf32, #tpu.memory_space<vmem>>, vector<1x1x256xf32>
    %68 = vector.shape_cast %67 : vector<1x1x256xf32> to vector<1x256xf32>
    %69 = vector.shape_cast %66 : vector<1x256xf32> to vector<1x1x256xf32>
    tpu.vector_store %arg10[%c0_28, %c0_29, %c0_30], %69 {strides = array<i32>} : memref<1x1x256xf32, #tpu.memory_space<vmem>>, vector<1x1x256xf32>,
    %cst_31 = arith.constant dense<0.000000e+00> : vector<256xf32>
    %70 = vector.multi_reduction <add>, %61, %cst_31 [0] : vector<256x256xf32> to vector<256xf32>
    %71 = vector.shape_cast %70 : vector<256xf32> to vector<1x256xf32>
    %c0_32 = arith.constant 0 : index
    %c0_33 = arith.constant 0 : index
    %c0_34 = arith.constant 0 : index
    %72 = vector.load %arg11[%c0_32, %c0_33, %c0_34] : memref<1x1x256xf32, #tpu.memory_space<vmem>>, vector<1x1x256xf32>
    %73 = vector.shape_cast %72 : vector<1x1x256xf32> to vector<1x256xf32>
    %74 = vector.shape_cast %71 : vector<1x256xf32> to vector<1x1x256xf32>
    tpu.vector_store %arg11[%c0_32, %c0_33, %c0_34], %74 {strides = array<i32>} : memref<1x1x256xf32, #tpu.memory_space<vmem>>, vector<1x1x256xf32>,
    return
  }
  func.func @transform_0(%arg0: i32) -> (i32, i32, i32) {
    %c0_i32 = arith.constant 0 : i32
    %c0_i32_0 = arith.constant 0 : i32
    %c0_i32_1 = arith.constant 0 : i32
    return %arg0, %c0_i32, %c0_i32_0 : i32, i32, i32
  }
  func.func @transform_1(%arg0: i32) -> (i32, i32, i32) {
    %c0_i32 = arith.constant 0 : i32
    %c0_i32_0 = arith.constant 0 : i32
    %c0_i32_1 = arith.constant 0 : i32
    return %arg0, %c0_i32, %c0_i32_0 : i32, i32, i32
  }
  func.func @transform_2(%arg0: i32) -> (i32, i32) {
    %c0_i32 = arith.constant 0 : i32
    %c0_i32_0 = arith.constant 0 : i32
    %c0_i32_1 = arith.constant 0 : i32
    return %c0_i32, %c0_i32_0 : i32, i32
  }
  func.func @transform_3(%arg0: i32) -> (i32, i32) {
    %c0_i32 = arith.constant 0 : i32
    %c0_i32_0 = arith.constant 0 : i32
    %c0_i32_1 = arith.constant 0 : i32
    return %c0_i32, %c0_i32_0 : i32, i32
  }
  func.func @transform_4(%arg0: i32) -> (i32, i32) {
    %c0_i32 = arith.constant 0 : i32
    %c0_i32_0 = arith.constant 0 : i32
    %c0_i32_1 = arith.constant 0 : i32
    return %c0_i32, %c0_i32_0 : i32, i32
  }
  func.func @transform_5(%arg0: i32) -> (i32, i32) {
    %c0_i32 = arith.constant 0 : i32
    %c0_i32_0 = arith.constant 0 : i32
    %c0_i32_1 = arith.constant 0 : i32
    return %c0_i32, %c0_i32_0 : i32, i32
  }
  func.func @transform_6(%arg0: i32) -> (i32, i32) {
    %c0_i32 = arith.constant 0 : i32
    %c0_i32_0 = arith.constant 0 : i32
    %c0_i32_1 = arith.constant 0 : i32
    return %c0_i32, %c0_i32_0 : i32, i32
  }
  func.func @transform_7(%arg0: i32) -> (i32, i32) {
    %c0_i32 = arith.constant 0 : i32
    %c0_i32_0 = arith.constant 0 : i32
    %c0_i32_1 = arith.constant 0 : i32
    return %c0_i32, %c0_i32_0 : i32, i32
  }
  func.func @transform_8(%arg0: i32) -> (i32, i32, i32) {
    %c0_i32 = arith.constant 0 : i32
    %c0_i32_0 = arith.constant 0 : i32
    %c0_i32_1 = arith.constant 0 : i32
    return %arg0, %c0_i32, %c0_i32_0 : i32, i32, i32
  }
  func.func @transform_9(%arg0: i32) -> (i32, i32, i32) {
    %c0_i32 = arith.constant 0 : i32
    %c0_i32_0 = arith.constant 0 : i32
    %c0_i32_1 = arith.constant 0 : i32
    return %arg0, %c0_i32, %c0_i32_0 : i32, i32, i32
  }
  func.func @transform_10(%arg0: i32) -> (i32, i32, i32) {
    %c0_i32 = arith.constant 0 : i32
    %c0_i32_0 = arith.constant 0 : i32
    %c0_i32_1 = arith.constant 0 : i32
    return %arg0, %c0_i32, %c0_i32_0 : i32, i32, i32
  }
}

</mosaic_0001>

<llo_original>
// kernel: _phase_corr_jit.1
$region0: #{_phase_corr_jit.1}
  #allocation0 [shape = 'u32[]', space=smem, size = 0x4, offset = 0x4, fixed_abs, tag = 'smem constant byte address 0x4 - core index']
  #allocation1 [shape = 'u32[144,128]{1,0:T(1,128)}', space=vmem, size = 0x12000, scoped, tag = 'internal scratch']
  %s0 = inlined_call_operand.vmem [shape: f32[2,256,256], index: 0, kind: input, shape index: {}]
  %s1 = inlined_call_operand.vmem [shape: f32[2,256,256], index: 1, kind: input, shape index: {}]
  %s2 = inlined_call_operand.vmem [shape: bf16[512,256], index: 2, kind: input, shape index: {}]
  %s3 = inlined_call_operand.vmem [shape: bf16[512,512], index: 3, kind: input, shape index: {}]
  %s4 = inlined_call_operand.vmem [shape: bf16[512,256], index: 4, kind: input, shape index: {}]
  %s5 = inlined_call_operand.vmem [shape: bf16[512,256], index: 5, kind: input, shape index: {}]
  %s6 = inlined_call_operand.vmem [shape: bf16[256,256], index: 6, kind: input, shape index: {}]
  %s7 = inlined_call_operand.vmem [shape: bf16[256,256], index: 7, kind: input, shape index: {}]
  %s8 = inlined_call_operand.hbm [shape: f32[2,256,256], index: 8, kind: output, shape index: {0}]
  %s9 = inlined_call_operand.vmem [shape: f32[2,1,256], index: 9, kind: output, shape index: {1}]
  %s10 = inlined_call_operand.vmem [shape: f32[2,1,256], index: 10, kind: output, shape index: {2}]
  %11 = xla_tuple %s8, %s9, %s10
  %s12 = sld [smem:[#allocation0]]
  $region81: #{_phase_corr_jit.1} parent=0
    _
  %s14 = ssub.s32 1, %s12
  %s15 = scalar_select 0, %s14, %s12
  $region1: #{_phase_corr_jit.1} parent=0
    #allocation2 [shape = 'u8[524288]{0}', space=vmem, size = 0x80000, scoped, tag = 'output window, operand 0']
    #allocation3 [shape = 's32[2]{0}', space=sflag, size = 0x8, scoped, tag = 'scoped memory for _phase_corr_jit.1']
    %16 = vsyncpa [#allocation3], 0
    %s17 = scalar_lea.sflag [#allocation3], 1
    %18 = vsyncpa %s17, 0
    loop: start=0, step=1, limit=4
    $region2: #{_phase_corr_jit.1} parent=1 // loop_pre_header
      _
    $region3: #{_phase_corr_jit.1} parent=1 // loop_header
      %s20 = sphi 0, %s24
      %p21 = scmp.ge.s32.totalorder %s20, 4
      %s30 = sphi 0, %s32
      %s33 = sphi 0, %s30
      %s34 = sphi 0, %s33
      %s50 = sphi 0, %s34
      %s56 = sphi 0, %s58
      %s59 = sphi 0, %s56
      %s60 = sphi 0, %s59
      %s76 = sphi 0, %s60
      %s80 = sphi 0, %s80
      %s82 = sphi 0, %s80
      %s83 = sphi 0, %s82
      %s97 = sphi 0, %s83
      %s101 = sphi 0, %s101
      %s103 = sphi 0, %s101
      %s104 = sphi 0, %s103
      %s118 = sphi 0, %s104
      %s122 = sphi 0, %s122
      %s124 = sphi 0, %s122
      %s125 = sphi 0, %s124
      %s139 = sphi 0, %s125
      %s143 = sphi 0, %s143
      %s145 = sphi 0, %s143
      %s146 = sphi 0, %s145
      %s160 = sphi 0, %s146
      %s164 = sphi 0, %s164
      %s166 = sphi 0, %s164
      %s167 = sphi 0, %s166
      %s181 = sphi 0, %s167
      %s185 = sphi 0, %s185
      %s187 = sphi 0, %s185
      %s188 = sphi 0, %s187
      %s202 = sphi 0, %s188
      %s208 = sphi 0, %s210
      %s211 = sphi 0, %s208
      %s212 = sphi 0, %s211
      %s228 = sphi 0, %s212
      %s234 = sphi 0, %s236
      %s237 = sphi 0, %s234
      %s238 = sphi 0, %s237
      %s254 = sphi 0, %s238
      %s260 = sphi 0, %s262
      %s263 = sphi 0, %s260
      %s264 = sphi 0, %s263
      %s280 = sphi 0, %s264
    $region4: #{_phase_corr_jit.1} parent=1 // loop_header_branch
      %23 = sbr.rel (%p21) target = $region8
    $region5: #{_phase_corr_jit.1} parent=1 // loop_body
      %s25 = ssub.s32 %s20, 1
      %s26 = ssub.s32 %s20, 2
      %s27 = sadd.s32 %s20, 1
      %s28 = ssub.s32 %s20, %s27
      %p29 = scmp.eq.s32.totalorder %s28, 0
      %s31 = sadd.s32 %s30, 1
      %s32 = scalar_select %p29, %s30, %s31
      %p35 = pneg %p29
      %p36 = scmp.eq.s32.totalorder %s20, 1
      %p37 = por %p35, %p36
      %p38 = scmp.ne.s32.totalorder %s30, %s33
      %p39 = scmp.eq.s32.totalorder %s20, 0
      %p40 = por %p38, %p39
      %p41 = scmp.ne.s32.totalorder %s30, %s33
      %p42 = scmp.eq.s32.totalorder %s25, 1
      %p43 = por %p41, %p42
      %p44 = scmp.ne.s32.totalorder %s33, %s34
      %p45 = scmp.eq.s32.totalorder %s25, 0
      %p46 = por %p44, %p45
      %p47 = scmp.ne.s32.totalorder %s33, %s34
      %p48 = scmp.eq.s32.totalorder %s26, 1
      %p49 = por %p47, %p48
      %p51 = scmp.ne.s32.totalorder %s34, %s50
      %p52 = scmp.eq.s32.totalorder %s26, 0
      %p53 = por %p51, %p52
      %s54 = ssub.s32 %s20, %s27
      %p55 = scmp.eq.s32.totalorder %s54, 0
      %s57 = sadd.s32 %s56, 1
      %s58 = scalar_select %p55, %s56, %s57
      %p61 = pneg %p55
      %p62 = scmp.eq.s32.totalorder %s20, 1
      %p63 = por %p61, %p62
      %p64 = scmp.ne.s32.totalorder %s56, %s59
      %p65 = scmp.eq.s32.totalorder %s20, 0
      %p66 = por %p64, %p65
      %p67 = scmp.ne.s32.totalorder %s56, %s59
      %p68 = scmp.eq.s32.totalorder %s25, 1
      %p69 = por %p67, %p68
      %p70 = scmp.ne.s32.totalorder %s59, %s60
      %p71 = scmp.eq.s32.totalorder %s25, 0
      %p72 = por %p70, %p71
      %p73 = scmp.ne.s32.totalorder %s59, %s60
      %p74 = scmp.eq.s32.totalorder %s26, 1
      %p75 = por %p73, %p74
      %p77 = scmp.ne.s32.totalorder %s60, %s76
      %p78 = scmp.eq.s32.totalorder %s26, 0
      %p79 = por %p77, %p78
      %s81 = sadd.s32 %s80, 1
      %p84 = scmp.eq.s32.totalorder %s20, 1
      %p85 = scmp.ne.s32.totalorder %s80, %s82
      %p86 = scmp.eq.s32.totalorder %s20, 0
      %p87 = por %p85, %p86
      %p88 = scmp.ne.s32.totalorder %s80, %s82
      %p89 = scmp.eq.s32.totalorder %s25, 1
      %p90 = por %p88, %p89
      %p91 = scmp.ne.s32.totalorder %s82, %s83
      %p92 = scmp.eq.s32.totalorder %s25, 0
      %p93 = por %p91, %p92
      %p94 = scmp.ne.s32.totalorder %s82, %s83
      %p95 = scmp.eq.s32.totalorder %s26, 1
      %p96 = por %p94, %p95
      %p98 = scmp.ne.s32.totalorder %s83, %s97
      %p99 = scmp.eq.s32.totalorder %s26, 0
      %p100 = por %p98, %p99
      %s102 = sadd.s32 %s101, 1
      %p105 = scmp.eq.s32.totalorder %s20, 1
      %p106 = scmp.ne.s32.totalorder %s101, %s103
      %p107 = scmp.eq.s32.totalorder %s20, 0
      %p108 = por %p106, %p107
      %p109 = scmp.ne.s32.totalorder %s101, %s103
      %p110 = scmp.eq.s32.totalorder %s25, 1
      %p111 = por %p109, %p110
      %p112 = scmp.ne.s32.totalorder %s103, %s104
      %p113 = scmp.eq.s32.totalorder %s25, 0
      %p114 = por %p112, %p113
      %p115 = scmp.ne.s32.totalorder %s103, %s104
      %p116 = scmp.eq.s32.totalorder %s26, 1
      %p117 = por %p115, %p116
      %p119 = scmp.ne.s32.totalorder %s104, %s118
      %p120 = scmp.eq.s32.totalorder %s26, 0
      %p121 = por %p119, %p120
      %s123 = sadd.s32 %s122, 1
      %p126 = scmp.eq.s32.totalorder %s20, 1
      %p127 = scmp.ne.s32.totalorder %s122, %s124
      %p128 = scmp.eq.s32.totalorder %s20, 0
      %p129 = por %p127, %p128
      %p130 = scmp.ne.s32.totalorder %s122, %s124
      %p131 = scmp.eq.s32.totalorder %s25, 1
      %p132 = por %p130, %p131
      %p133 = scmp.ne.s32.totalorder %s124, %s125
      %p134 = scmp.eq.s32.totalorder %s25, 0
      %p135 = por %p133, %p134
      %p136 = scmp.ne.s32.totalorder %s124, %s125
      %p137 = scmp.eq.s32.totalorder %s26, 1
      %p138 = por %p136, %p137
      %p140 = scmp.ne.s32.totalorder %s125, %s139
      %p141 = scmp.eq.s32.totalorder %s26, 0
      %p142 = por %p140, %p141
      %s144 = sadd.s32 %s143, 1
      %p147 = scmp.eq.s32.totalorder %s20, 1
      %p148 = scmp.ne.s32.totalorder %s143, %s145
      %p149 = scmp.eq.s32.totalorder %s20, 0
      %p150 = por %p148, %p149
      %p151 = scmp.ne.s32.totalorder %s143, %s145
      %p152 = scmp.eq.s32.totalorder %s25, 1
      %p153 = por %p151, %p152
      %p154 = scmp.ne.s32.totalorder %s145, %s146
      %p155 = scmp.eq.s32.totalorder %s25, 0
      %p156 = por %p154, %p155
      %p157 = scmp.ne.s32.totalorder %s145, %s146
      %p158 = scmp.eq.s32.totalorder %s26, 1
      %p159 = por %p157, %p158
      %p161 = scmp.ne.s32.totalorder %s146, %s160
      %p162 = scmp.eq.s32.totalorder %s26, 0
      %p163 = por %p161, %p162
      %s165 = sadd.s32 %s164, 1
      %p168 = scmp.eq.s32.totalorder %s20, 1
      %p169 = scmp.ne.s32.totalorder %s164, %s166
      %p170 = scmp.eq.s32.totalorder %s20, 0
      %p171 = por %p169, %p170
      %p172 = scmp.ne.s32.totalorder %s164, %s166
      %p173 = scmp.eq.s32.totalorder %s25, 1
      %p174 = por %p172, %p173
      %p175 = scmp.ne.s32.totalorder %s166, %s167
      %p176 = scmp.eq.s32.totalorder %s25, 0
      %p177 = por %p175, %p176
      %p178 = scmp.ne.s32.totalorder %s166, %s167
      %p179 = scmp.eq.s32.totalorder %s26, 1
      %p180 = por %p178, %p179
      %p182 = scmp.ne.s32.totalorder %s167, %s181
      %p183 = scmp.eq.s32.totalorder %s26, 0
      %p184 = por %p182, %p183
      %s186 = sadd.s32 %s185, 1
      %p189 = scmp.eq.s32.totalorder %s20, 1
      %p190 = scmp.ne.s32.totalorder %s185, %s187
      %p191 = scmp.eq.s32.totalorder %s20, 0
      %p192 = por %p190, %p191
      %p193 = scmp.ne.s32.totalorder %s185, %s187
      %p194 = scmp.eq.s32.totalorder %s25, 1
      %p195 = por %p193, %p194
      %p196 = scmp.ne.s32.totalorder %s187, %s188
      %p197 = scmp.eq.s32.totalorder %s25, 0
      %p198 = por %p196, %p197
      %p199 = scmp.ne.s32.totalorder %s187, %s188
      %p200 = scmp.eq.s32.totalorder %s26, 1
      %p201 = por %p199, %p200
      %p203 = scmp.ne.s32.totalorder %s188, %s202
      %p204 = scmp.eq.s32.totalorder %s26, 0
      %p205 = por %p203, %p204
      %s206 = ssub.s32 %s20, %s27
      %p207 = scmp.eq.s32.totalorder %s206, 0
      %s209 = sadd.s32 %s208, 1
      %s210 = scalar_select %p207, %s208, %s209
      %p213 = pneg %p207
      %p214 = scmp.eq.s32.totalorder %s20, 1
      %p215 = por %p213, %p214
      %p216 = scmp.ne.s32.totalorder %s208, %s211
      %p217 = scmp.eq.s32.totalorder %s20, 0
      %p218 = por %p216, %p217
      %p219 = scmp.ne.s32.totalorder %s208, %s211
      %p220 = scmp.eq.s32.totalorder %s25, 1
      %p221 = por %p219, %p220
      %p222 = scmp.ne.s32.totalorder %s211, %s212
      %p223 = scmp.eq.s32.totalorder %s25, 0
      %p224 = por %p222, %p223
      %p225 = scmp.ne.s32.totalorder %s211, %s212
      %p226 = scmp.eq.s32.totalorder %s26, 1
      %p227 = por %p225, %p226
      %p229 = scmp.ne.s32.totalorder %s212, %s228
      %p230 = scmp.eq.s32.totalorder %s26, 0
      %p231 = por %p229, %p230
      %s232 = ssub.s32 %s20, %s27
      %p233 = scmp.eq.s32.totalorder %s232, 0
      %s235 = sadd.s32 %s234, 1
      %s236 = scalar_select %p233, %s234, %s235
      %p239 = pneg %p233
      %p240 = scmp.eq.s32.totalorder %s20, 1
      %p241 = por %p239, %p240
      %p242 = scmp.ne.s32.totalorder %s234, %s237
      %p243 = scmp.eq.s32.totalorder %s20, 0
      %p244 = por %p242, %p243
      %p245 = scmp.ne.s32.totalorder %s234, %s237
      %p246 = scmp.eq.s32.totalorder %s25, 1
      %p247 = por %p245, %p246
      %p248 = scmp.ne.s32.totalorder %s237, %s238
      %p249 = scmp.eq.s32.totalorder %s25, 0
      %p250 = por %p248, %p249
      %p251 = scmp.ne.s32.totalorder %s237, %s238
      %p252 = scmp.eq.s32.totalorder %s26, 1
      %p253 = por %p251, %p252
      %p255 = scmp.ne.s32.totalorder %s238, %s254
      %p256 = scmp.eq.s32.totalorder %s26, 0
      %p257 = por %p255, %p256
      %s258 = ssub.s32 %s20, %s27
      %p259 = scmp.eq.s32.totalorder %s258, 0
      %s261 = sadd.s32 %s260, 1
      %s262 = scalar_select %p259, %s260, %s261
      %p265 = pneg %p259
      %p266 = scmp.eq.s32.totalorder %s20, 1
      %p267 = por %p265, %p266
      %p268 = scmp.ne.s32.totalorder %s260, %s263
      %p269 = scmp.eq.s32.totalorder %s20, 0
      %p270 = por %p268, %p269
      %p271 = scmp.ne.s32.totalorder %s260, %s263
      %p272 = scmp.eq.s32.totalorder %s25, 1
      %p273 = por %p271, %p272
      %p274 = scmp.ne.s32.totalorder %s263, %s264
      %p275 = scmp.eq.s32.totalorder %s25, 0
      %p276 = por %p274, %p275
      %p277 = scmp.ne.s32.totalorder %s263, %s264
      %p278 = scmp.eq.s32.totalorder %s26, 1
      %p279 = por %p277, %p278
      %p281 = scmp.ne.s32.totalorder %s264, %s280
      %p282 = scmp.eq.s32.totalorder %s26, 0
      %p283 = por %p281, %p282
      %p284 = scmp.le.s32.totalorder 1, %s20
      %p285 = scmp.lt.s32.totalorder %s20, 3
      %p286 = pnand %p284, %p285
      %p287 = pneg %p286
      // Predicated region
      $region9: #{_phase_corr_jit.1} parent=5 // pred_check
        _
      $region10: #{_phase_corr_jit.1} parent=5 // pred_check_branch
        %289 = sbr.rel (%p286) target = $region12
      $region11: #{_phase_corr_jit.1} parent=5 // pred_region
        %s290 = ssub.s32 %s20, 1
        // Predicated region
        $region13: #{_phase_corr_jit.1} parent=11 // pred_check
          %p291 = pneg %p93
        $region14: #{_phase_corr_jit.1} parent=11 // pred_check_branch
          %293 = sbr.rel (%p291) target = $region16
        $region15: #{_phase_corr_jit.1} parent=11 // pred_region
          _
        $region16: #{_phase_corr_jit.1} parent=11 // pred_fallthru
          _
        // Predicated region
        $region17: #{_phase_corr_jit.1} parent=11 // pred_check
          %p294 = pneg %p114
        $region18: #{_phase_corr_jit.1} parent=11 // pred_check_branch
          %296 = sbr.rel (%p294) target = $region20
        $region19: #{_phase_corr_jit.1} parent=11 // pred_region
          _
        $region20: #{_phase_corr_jit.1} parent=11 // pred_fallthru
          _
        // Predicated region
        $region21: #{_phase_corr_jit.1} parent=11 // pred_check
          %p297 = pneg %p135
        $region22: #{_phase_corr_jit.1} parent=11 // pred_check_branch
          %299 = sbr.rel (%p297) target = $region24
        $region23: #{_phase_corr_jit.1} parent=11 // pred_region
          _
        $region24: #{_phase_corr_jit.1} parent=11 // pred_fallthru
          _
        // Predicated region
        $region25: #{_phase_corr_jit.1} parent=11 // pred_check
          %p300 = pneg %p156
        $region26: #{_phase_corr_jit.1} parent=11 // pred_check_branch
          %302 = sbr.rel (%p300) target = $region28
        $region27: #{_phase_corr_jit.1} parent=11 // pred_region
          _
        $region28: #{_phase_corr_jit.1} parent=11 // pred_fallthru
          _
        // Predicated region
        $region29: #{_phase_corr_jit.1} parent=11 // pred_check
          %p303 = pneg %p177
        $region30: #{_phase_corr_jit.1} parent=11 // pred_check_branch
          %305 = sbr.rel (%p303) target = $region32
        $region31: #{_phase_corr_jit.1} parent=11 // pred_region
          _
        $region32: #{_phase_corr_jit.1} parent=11 // pred_fallthru
          _
        // Predicated region
        $region33: #{_phase_corr_jit.1} parent=11 // pred_check
          %p306 = pneg %p198
        $region34: #{_phase_corr_jit.1} parent=11 // pred_check_branch
          %308 = sbr.rel (%p306) target = $region36
        $region35: #{_phase_corr_jit.1} parent=11 // pred_region
          _
        $region36: #{_phase_corr_jit.1} parent=11 // pred_fallthru
          _
      $region12: #{_phase_corr_jit.1} parent=5 // pred_fallthru
        _
      %p309 = scmp.lt.s32.totalorder %s20, 2
      // Predicated region
      $region37: #{_phase_corr_jit.1} parent=5 // pred_check
        %p310 = pneg %p309
      $region38: #{_phase_corr_jit.1} parent=5 // pred_check_branch
        %312 = sbr.rel (%p310) target = $region40
      $region39: #{_phase_corr_jit.1} parent=5 // pred_region
        // Predicated region
        $region41: #{_phase_corr_jit.1} parent=39 // pred_check
          %p313 = pneg %p40
        $region42: #{_phase_corr_jit.1} parent=39 // pred_check_branch
          %315 = sbr.rel (%p313) target = $region44
        $region43: #{_phase_corr_jit.1} parent=39 // pred_region
          %p316 = scmp.lt.s32.totalorder %s20, 1
          %s317 = scalar_select %p316, %s20, 1
          %s318 = smul.addr %s317, 64
          %s319 = smul.addr %s318, 8
          %s320 = scalar_lea.vmem %s0, %s319
        $region44: #{_phase_corr_jit.1} parent=39 // pred_fallthru
          _
        // Predicated region
        $region45: #{_phase_corr_jit.1} parent=39 // pred_check
          %p321 = pneg %p66
        $region46: #{_phase_corr_jit.1} parent=39 // pred_check_branch
          %323 = sbr.rel (%p321) target = $region48
        $region47: #{_phase_corr_jit.1} parent=39 // pred_region
          %p324 = scmp.lt.s32.totalorder %s20, 1
          %s325 = scalar_select %p324, %s20, 1
          %s326 = smul.addr %s325, 64
          %s327 = smul.addr %s326, 8
          %s328 = scalar_lea.vmem %s1, %s327
        $region48: #{_phase_corr_jit.1} parent=39 // pred_fallthru
          _
      $region40: #{_phase_corr_jit.1} parent=5 // pred_fallthru
        _
      %p329 = scmp.le.s32.totalorder 1, %s20
      %p330 = scmp.lt.s32.totalorder %s20, 3
      %p331 = pnand %p329, %p330
      %p332 = pneg %p331
      // Predicated region
      $region49: #{_phase_corr_jit.1} parent=5 // pred_check
        _
      $region50: #{_phase_corr_jit.1} parent=5 // pred_check_branch
        %334 = sbr.rel (%p331) target = $region52
      $region51: #{_phase_corr_jit.1} parent=5 // pred_region
        %s335 = ssub.s32 %s20, 1
        %p336 = scmp.lt.s32.totalorder %s25, 1
        %s337 = scalar_select %p336, %s25, 1
        %s338 = smul.addr %s337, 64
        %s339 = smul.addr %s338, 8
        %s340 = scalar_lea.vmem %s0, %s339
        %p341 = pneg %p46
        %p342 = pneg %p43
        %p343 = scmp.lt.s32.totalorder %s25, 1
        %s344 = scalar_select %p343, %s25, 1
        %s345 = smul.addr %s344, 64
        %s346 = smul.addr %s345, 8
        %s347 = scalar_lea.vmem %s1, %s346
        %p348 = pneg %p72
        %p349 = pneg %p69
        %p350 = pneg %p93
        %p351 = pneg %p90
        %p352 = pneg %p114
        %p353 = pneg %p111
        %p354 = pneg %p135
        %p355 = pneg %p132
        %p356 = pneg %p156
        %p357 = pneg %p153
        %p358 = pneg %p177
        %p359 = pneg %p174
        %p360 = pneg %p198
        %p361 = pneg %p195
        %p362 = pneg %p224
        %p363 = pneg %p221
        %s364 = sand.u32 %s211, 1
        %s365 = scalar_lea.sflag [#allocation3], %s364
        %s366 = sand.u32 %s211, 1
        %s367 = smul.addr %s366, 512
        %s368 = scalar_lea.vmem [#allocation2], %s367
        %p369 = pneg %p250
        %p370 = pneg %p247
        %p371 = scmp.lt.s32.totalorder %s25, 1
        %s372 = scalar_select %p371, %s25, 1
        %s373 = smul.addr %s372, 2
        %s374 = scalar_lea.vmem %s9, %s373
        %p375 = pneg %p276
        %p376 = pneg %p273
        %p377 = scmp.lt.s32.totalorder %s25, 1
        %s378 = scalar_select %p377, %s25, 1
        %s379 = smul.addr %s378, 2
        %s380 = scalar_lea.vmem %s10, %s379
        %p381 = scmp.lt.s32.totalorder %s25, 1
        %s382 = scalar_select %p381, %s25, 1
        %s383 = smul.addr %s382, 64
        %s384 = smul.addr %s383, 8
        %s385 = scalar_lea.vmem %s0, %s384
        %p386 = scmp.lt.s32.totalorder %s25, 1
        %s387 = scalar_select %p386, %s25, 1
        %s388 = smul.addr %s387, 64
        %s389 = smul.addr %s388, 8
        %s390 = scalar_lea.vmem %s1, %s389
        %p391 = scmp.lt.s32.totalorder %s25, 1
        %s392 = scalar_select %p391, %s25, 1
        %s393 = smul.addr %s392, 2
        %s394 = scalar_lea.vmem %s9, %s393
        %p395 = scmp.lt.s32.totalorder %s25, 1
        %s396 = scalar_select %p395, %s25, 1
        %s397 = smul.addr %s396, 2
        %s398 = scalar_lea.vmem %s10, %s397
        %v399 = vld [vmem:[%s2] sm:$0xff]
        %v400 = vld [vmem:[%s2 + $0x8] sm:$0xff]
        %v401 = vld [vmem:[%s2 + $0x10] sm:$0xff]
        %v402 = vld [vmem:[%s2 + $0x18] sm:$0xff]
        %v403 = vld [vmem:[%s2 + $0x20] sm:$0xff]
        %v404 = vld [vmem:[%s2 + $0x28] sm:$0xff]
        %v405 = vld [vmem:[%s2 + $0x30] sm:$0xff]
        %v406 = vld [vmem:[%s2 + $0x38] sm:$0xff]
        %v407 = vld [vmem:[%s2 + $0x40] sm:$0xff]
        %v408 = vld [vmem:[%s2 + $0x48] sm:$0xff]
        %v409 = vld [vmem:[%s2 + $0x50] sm:$0xff]
        %v410 = vld [vmem:[%s2 + $0x58] sm:$0xff]
        %v411 = vld [vmem:[%s2 + $0x60] sm:$0xff]
        %v412 = vld [vmem:[%s2 + $0x68] sm:$0xff]
        %v413 = vld [vmem:[%s2 + $0x70] sm:$0xff]
        %v414 = vld [vmem:[%s2 + $0x78] sm:$0xff]
        %v415 = vld [vmem:[%s2 + $0x80] sm:$0xff]
        %v416 = vld [vmem:[%s2 + $0x88] sm:$0xff]
        %v417 = vld [vmem:[%s2 + $0x90] sm:$0xff]
        %v418 = vld [vmem:[%s2 + $0x98] sm:$0xff]
        %v419 = vld [vmem:[%s2 + $0xa0] sm:$0xff]
        %v420 = vld [vmem:[%s2 + $0xa8] sm:$0xff]
        %v421 = vld [vmem:[%s2 + $0xb0] sm:$0xff]
        %v422 = vld [vmem:[%s2 + $0xb8] sm:$0xff]
        %v423 = vld [vmem:[%s2 + $0xc0] sm:$0xff]
        %v424 = vld [vmem:[%s2 + $0xc8] sm:$0xff]
        %v425 = vld [vmem:[%s2 + $0xd0] sm:$0xff]
        %v426 = vld [vmem:[%s2 + $0xd8] sm:$0xff]
        %v427 = vld [vmem:[%s2 + $0xe0] sm:$0xff]
        %v428 = vld [vmem:[%s2 + $0xe8] sm:$0xff]
        %v429 = vld [vmem:[%s2 + $0xf0] sm:$0xff]
        %v430 = vld [vmem:[%s2 + $0xf8] sm:$0xff]
        %v431 = vld [vmem:[%s2 + $0x100] sm:$0xff]
        %v432 = vld [vmem:[%s2 + $0x108] sm:$0xff]
        %v433 = vld [vmem:[%s2 + $0x110] sm:$0xff]
        %v434 = vld [vmem:[%s2 + $0x118] sm:$0xff]
        %v435 = vld [vmem:[%s2 + $0x120] sm:$0xff]
        %v436 = vld [vmem:[%s2 + $0x128] sm:$0xff]
        %v437 = vld [vmem:[%s2 + $0x130] sm:$0xff]
        %v438 = vld [vmem:[%s2 + $0x138] sm:$0xff]
        %v439 = vld [vmem:[%s2 + $0x140] sm:$0xff]
        %v440 = vld [vmem:[%s2 + $0x148] sm:$0xff]
        %v441 = vld [vmem:[%s2 + $0x150] sm:$0xff]
        %v442 = vld [vmem:[%s2 + $0x158] sm:$0xff]
        %v443 = vld [vmem:[%s2 + $0x160] sm:$0xff]
        %v444 = vld [vmem:[%s2 + $0x168] sm:$0xff]
        %v445 = vld [vmem:[%s2 + $0x170] sm:$0xff]
        %v446 = vld [vmem:[%s2 + $0x178] sm:$0xff]
        %v447 = vld [vmem:[%s2 + $0x180] sm:$0xff]
        %v448 = vld [vmem:[%s2 + $0x188] sm:$0xff]
        %v449 = vld [vmem:[%s2 + $0x190] sm:$0xff]
        %v450 = vld [vmem:[%s2 + $0x198] sm:$0xff]
        %v451 = vld [vmem:[%s2 + $0x1a0] sm:$0xff]
        %v452 = vld [vmem:[%s2 + $0x1a8] sm:$0xff]
        %v453 = vld [vmem:[%s2 + $0x1b0] sm:$0xff]
        %v454 = vld [vmem:[%s2 + $0x1b8] sm:$0xff]
        %v455 = vld [vmem:[%s2 + $0x1c0] sm:$0xff]
        %v456 = vld [vmem:[%s2 + $0x1c8] sm:$0xff]
        %v457 = vld [vmem:[%s2 + $0x1d0] sm:$0xff]
        %v458 = vld [vmem:[%s2 + $0x1d8] sm:$0xff]
        %v459 = vld [vmem:[%s2 + $0x1e0] sm:$0xff]
        %v460 = vld [vmem:[%s2 + $0x1e8] sm:$0xff]
        %v461 = vld [vmem:[%s2 + $0x1f0] sm:$0xff]
        %v462 = vld [vmem:[%s2 + $0x1f8] sm:$0xff]
        %v463 = vld [vmem:[%s3] sm:$0xff]
        %v464 = vld [vmem:[%s3 + $0x8] sm:$0xff]
        %v465 = vld [vmem:[%s3 + $0x10] sm:$0xff]
        %v466 = vld [vmem:[%s3 + $0x18] sm:$0xff]
        %v467 = vld [vmem:[%s3 + $0x20] sm:$0xff]
        %v468 = vld [vmem:[%s3 + $0x28] sm:$0xff]
        %v469 = vld [vmem:[%s3 + $0x30] sm:$0xff]
        %v470 = vld [vmem:[%s3 + $0x38] sm:$0xff]
        %v471 = vld [vmem:[%s3 + $0x40] sm:$0xff]
        %v472 = vld [vmem:[%s3 + $0x48] sm:$0xff]
        %v473 = vld [vmem:[%s3 + $0x50] sm:$0xff]
        %v474 = vld [vmem:[%s3 + $0x58] sm:$0xff]
        %v475 = vld [vmem:[%s3 + $0x60] sm:$0xff]
        %v476 = vld [vmem:[%s3 + $0x68] sm:$0xff]
        %v477 = vld [vmem:[%s3 + $0x70] sm:$0xff]
        %v478 = vld [vmem:[%s3 + $0x78] sm:$0xff]
        %v479 = vld [vmem:[%s3 + $0x80] sm:$0xff]
        %v480 = vld [vmem:[%s3 + $0x88] sm:$0xff]
        %v481 = vld [vmem:[%s3 + $0x90] sm:$0xff]
        %v482 = vld [vmem:[%s3 + $0x98] sm:$0xff]
        %v483 = vld [vmem:[%s3 + $0xa0] sm:$0xff]
        %v484 = vld [vmem:[%s3 + $0xa8] sm:$0xff]
        %v485 = vld [vmem:[%s3 + $0xb0] sm:$0xff]
        %v486 = vld [vmem:[%s3 + $0xb8] sm:$0xff]
        %v487 = vld [vmem:[%s3 + $0xc0] sm:$0xff]
        %v488 = vld [vmem:[%s3 + $0xc8] sm:$0xff]
        %v489 = vld [vmem:[%s3 + $0xd0] sm:$0xff]
        %v490 = vld [vmem:[%s3 + $0xd8] sm:$0xff]
        %v491 = vld [vmem:[%s3 + $0xe0] sm:$0xff]
        %v492 = vld [vmem:[%s3 + $0xe8] sm:$0xff]
        %v493 = vld [vmem:[%s3 + $0xf0] sm:$0xff]
        %v494 = vld [vmem:[%s3 + $0xf8] sm:$0xff]
        %v495 = vld [vmem:[%s3 + $0x100] sm:$0xff]
        %v496 = vld [vmem:[%s3 + $0x108] sm:$0xff]
        %v497 = vld [vmem:[%s3 + $0x110] sm:$0xff]
        %v498 = vld [vmem:[%s3 + $0x118] sm:$0xff]
        %v499 = vld [vmem:[%s3 + $0x120] sm:$0xff]
        %v500 = vld [vmem:[%s3 + $0x128] sm:$0xff]
        %v501 = vld [vmem:[%s3 + $0x130] sm:$0xff]
        %v502 = vld [vmem:[%s3 + $0x138] sm:$0xff]
        %v503 = vld [vmem:[%s3 + $0x140] sm:$0xff]
        %v504 = vld [vmem:[%s3 + $0x148] sm:$0xff]
        %v505 = vld [vmem:[%s3 + $0x150] sm:$0xff]
        %v506 = vld [vmem:[%s3 + $0x158] sm:$0xff]
        %v507 = vld [vmem:[%s3 + $0x160] sm:$0xff]
        %v508 = vld [vmem:[%s3 + $0x168] sm:$0xff]
        %v509 = vld [vmem:[%s3 + $0x170] sm:$0xff]
        %v510 = vld [vmem:[%s3 + $0x178] sm:$0xff]
        %v511 = vld [vmem:[%s3 + $0x180] sm:$0xff]
        %v512 = vld [vmem:[%s3 + $0x188] sm:$0xff]
        %v513 = vld [vmem:[%s3 + $0x190] sm:$0xff]
        %v514 = vld [vmem:[%s3 + $0x198] sm:$0xff]
        %v515 = vld [vmem:[%s3 + $0x1a0] sm:$0xff]
        %v516 = vld [vmem:[%s3 + $0x1a8] sm:$0xff]
        %v517 = vld [vmem:[%s3 + $0x1b0] sm:$0xff]
        %v518 = vld [vmem:[%s3 + $0x1b8] sm:$0xff]
        %v519 = vld [vmem:[%s3 + $0x1c0] sm:$0xff]
        %v520 = vld [vmem:[%s3 + $0x1c8] sm:$0xff]
        %v521 = vld [vmem:[%s3 + $0x1d0] sm:$0xff]
        %v522 = vld [vmem:[%s3 + $0x1d8] sm:$0xff]
        %v523 = vld [vmem:[%s3 + $0x1e0] sm:$0xff]
        %v524 = vld [vmem:[%s3 + $0x1e8] sm:$0xff]
        %v525 = vld [vmem:[%s3 + $0x1f0] sm:$0xff]
        %v526 = vld [vmem:[%s3 + $0x1f8] sm:$0xff]
        %v527 = vld [vmem:[%s3 + $0x200] sm:$0xff]
        %v528 = vld [vmem:[%s3 + $0x208] sm:$0xff]
        %v529 = vld [vmem:[%s3 + $0x210] sm:$0xff]
        %v530 = vld [vmem:[%s3 + $0x218] sm:$0xff]
        %v531 = vld [vmem:[%s3 + $0x220] sm:$0xff]
        %v532 = vld [vmem:[%s3 + $0x228] sm:$0xff]
        %v533 = vld [vmem:[%s3 + $0x230] sm:$0xff]
        %v534 = vld [vmem:[%s3 + $0x238] sm:$0xff]
        %v535 = vld [vmem:[%s3 + $0x240] sm:$0xff]
        %v536 = vld [vmem:[%s3 + $0x248] sm:$0xff]
        %v537 = vld [vmem:[%s3 + $0x250] sm:$0xff]
        %v538 = vld [vmem:[%s3 + $0x258] sm:$0xff]
        %v539 = vld [vmem:[%s3 + $0x260] sm:$0xff]
        %v540 = vld [vmem:[%s3 + $0x268] sm:$0xff]
        %v541 = vld [vmem:[%s3 + $0x270] sm:$0xff]
        %v542 = vld [vmem:[%s3 + $0x278] sm:$0xff]
        %v543 = vld [vmem:[%s3 + $0x280] sm:$0xff]
        %v544 = vld [vmem:[%s3 + $0x288] sm:$0xff]
        %v545 = vld [vmem:[%s3 + $0x290] sm:$0xff]
        %v546 = vld [vmem:[%s3 + $0x298] sm:$0xff]
        %v547 = vld [vmem:[%s3 + $0x2a0] sm:$0xff]
        %v548 = vld [vmem:[%s3 + $0x2a8] sm:$0xff]
        %v549 = vld [vmem:[%s3 + $0x2b0] sm:$0xff]
        %v550 = vld [vmem:[%s3 + $0x2b8] sm:$0xff]
        %v551 = vld [vmem:[%s3 + $0x2c0] sm:$0xff]
        %v552 = vld [vmem:[%s3 + $0x2c8] sm:$0xff]
        %v553 = vld [vmem:[%s3 + $0x2d0] sm:$0xff]
        %v554 = vld [vmem:[%s3 + $0x2d8] sm:$0xff]
        %v555 = vld [vmem:[%s3 + $0x2e0] sm:$0xff]
        %v556 = vld [vmem:[%s3 + $0x2e8] sm:$0xff]
        %v557 = vld [vmem:[%s3 + $0x2f0] sm:$0xff]
        %v558 = vld [vmem:[%s3 + $0x2f8] sm:$0xff]
        %v559 = vld [vmem:[%s3 + $0x300] sm:$0xff]
        %v560 = vld [vmem:[%s3 + $0x308] sm:$0xff]
        %v561 = vld [vmem:[%s3 + $0x310] sm:$0xff]
        %v562 = vld [vmem:[%s3 + $0x318] sm:$0xff]
        %v563 = vld [vmem:[%s3 + $0x320] sm:$0xff]
        %v564 = vld [vmem:[%s3 + $0x328] sm:$0xff]
        %v565 = vld [vmem:[%s3 + $0x330] sm:$0xff]
        %v566 = vld [vmem:[%s3 + $0x338] sm:$0xff]
        %v567 = vld [vmem:[%s3 + $0x340] sm:$0xff]
        %v568 = vld [vmem:[%s3 + $0x348] sm:$0xff]
        %v569 = vld [vmem:[%s3 + $0x350] sm:$0xff]
        %v570 = vld [vmem:[%s3 + $0x358] sm:$0xff]
        %v571 = vld [vmem:[%s3 + $0x360] sm:$0xff]
        %v572 = vld [vmem:[%s3 + $0x368] sm:$0xff]
        %v573 = vld [vmem:[%s3 + $0x370] sm:$0xff]
        %v574 = vld [vmem:[%s3 + $0x378] sm:$0xff]
        %v575 = vld [vmem:[%s3 + $0x380] sm:$0xff]
        %v576 = vld [vmem:[%s3 + $0x388] sm:$0xff]
        %v577 = vld [vmem:[%s3 + $0x390] sm:$0xff]
        %v578 = vld [vmem:[%s3 + $0x398] sm:$0xff]
        %v579 = vld [vmem:[%s3 + $0x3a0] sm:$0xff]
        %v580 = vld [vmem:[%s3 + $0x3a8] sm:$0xff]
        %v581 = vld [vmem:[%s3 + $0x3b0] sm:$0xff]
        %v582 = vld [vmem:[%s3 + $0x3b8] sm:$0xff]
        %v583 = vld [vmem:[%s3 + $0x3c0] sm:$0xff]
        %v584 = vld [vmem:[%s3 + $0x3c8] sm:$0xff]
        %v585 = vld [vmem:[%s3 + $0x3d0] sm:$0xff]
        %v586 = vld [vmem:[%s3 + $0x3d8] sm:$0xff]
        %v587 = vld [vmem:[%s3 + $0x3e0] sm:$0xff]
        %v588 = vld [vmem:[%s3 + $0x3e8] sm:$0xff]
        %v589 = vld [vmem:[%s3 + $0x3f0] sm:$0xff]
        %v590 = vld [vmem:[%s3 + $0x3f8] sm:$0xff]
        %v591 = vld [vmem:[%s4] sm:$0xff]
        %v592 = vld [vmem:[%s4 + $0x8] sm:$0xff]
        %v593 = vld [vmem:[%s4 + $0x10] sm:$0xff]
        %v594 = vld [vmem:[%s4 + $0x18] sm:$0xff]
        %v595 = vld [vmem:[%s4 + $0x20] sm:$0xff]
        %v596 = vld [vmem:[%s4 + $0x28] sm:$0xff]
        %v597 = vld [vmem:[%s4 + $0x30] sm:$0xff]
        %v598 = vld [vmem:[%s4 + $0x38] sm:$0xff]
        %v599 = vld [vmem:[%s4 + $0x40] sm:$0xff]
        %v600 = vld [vmem:[%s4 + $0x48] sm:$0xff]
        %v601 = vld [vmem:[%s4 + $0x50] sm:$0xff]
        %v602 = vld [vmem:[%s4 + $0x58] sm:$0xff]
        %v603 = vld [vmem:[%s4 + $0x60] sm:$0xff]
        %v604 = vld [vmem:[%s4 + $0x68] sm:$0xff]
        %v605 = vld [vmem:[%s4 + $0x70] sm:$0xff]
        %v606 = vld [vmem:[%s4 + $0x78] sm:$0xff]
        %v607 = vld [vmem:[%s4 + $0x80] sm:$0xff]
        %v608 = vld [vmem:[%s4 + $0x88] sm:$0xff]
        %v609 = vld [vmem:[%s4 + $0x90] sm:$0xff]
        %v610 = vld [vmem:[%s4 + $0x98] sm:$0xff]
        %v611 = vld [vmem:[%s4 + $0xa0] sm:$0xff]
        %v612 = vld [vmem:[%s4 + $0xa8] sm:$0xff]
        %v613 = vld [vmem:[%s4 + $0xb0] sm:$0xff]
        %v614 = vld [vmem:[%s4 + $0xb8] sm:$0xff]
        %v615 = vld [vmem:[%s4 + $0xc0] sm:$0xff]
        %v616 = vld [vmem:[%s4 + $0xc8] sm:$0xff]
        %v617 = vld [vmem:[%s4 + $0xd0] sm:$0xff]
        %v618 = vld [vmem:[%s4 + $0xd8] sm:$0xff]
        %v619 = vld [vmem:[%s4 + $0xe0] sm:$0xff]
        %v620 = vld [vmem:[%s4 + $0xe8] sm:$0xff]
        %v621 = vld [vmem:[%s4 + $0xf0] sm:$0xff]
        %v622 = vld [vmem:[%s4 + $0xf8] sm:$0xff]
        %v623 = vld [vmem:[%s4 + $0x100] sm:$0xff]
        %v624 = vld [vmem:[%s4 + $0x108] sm:$0xff]
        %v625 = vld [vmem:[%s4 + $0x110] sm:$0xff]
        %v626 = vld [vmem:[%s4 + $0x118] sm:$0xff]
        %v627 = vld [vmem:[%s4 + $0x120] sm:$0xff]
        %v628 = vld [vmem:[%s4 + $0x128] sm:$0xff]
        %v629 = vld [vmem:[%s4 + $0x130] sm:$0xff]
        %v630 = vld [vmem:[%s4 + $0x138] sm:$0xff]
        %v631 = vld [vmem:[%s4 + $0x140] sm:$0xff]
        %v632 = vld [vmem:[%s4 + $0x148] sm:$0xff]
        %v633 = vld [vmem:[%s4 + $0x150] sm:$0xff]
        %v634 = vld [vmem:[%s4 + $0x158] sm:$0xff]
        %v635 = vld [vmem:[%s4 + $0x160] sm:$0xff]
        %v636 = vld [vmem:[%s4 + $0x168] sm:$0xff]
        %v637 = vld [vmem:[%s4 + $0x170] sm:$0xff]
        %v638 = vld [vmem:[%s4 + $0x178] sm:$0xff]
        %v639 = vld [vmem:[%s4 + $0x180] sm:$0xff]
        %v640 = vld [vmem:[%s4 + $0x188] sm:$0xff]
        %v641 = vld [vmem:[%s4 + $0x190] sm:$0xff]
        %v642 = vld [vmem:[%s4 + $0x198] sm:$0xff]
        %v643 = vld [vmem:[%s4 + $0x1a0] sm:$0xff]
        %v644 = vld [vmem:[%s4 + $0x1a8] sm:$0xff]
        %v645 = vld [vmem:[%s4 + $0x1b0] sm:$0xff]
        %v646 = vld [vmem:[%s4 + $0x1b8] sm:$0xff]
        %v647 = vld [vmem:[%s4 + $0x1c0] sm:$0xff]
        %v648 = vld [vmem:[%s4 + $0x1c8] sm:$0xff]
        %v649 = vld [vmem:[%s4 + $0x1d0] sm:$0xff]
        %v650 = vld [vmem:[%s4 + $0x1d8] sm:$0xff]
        %v651 = vld [vmem:[%s4 + $0x1e0] sm:$0xff]
        %v652 = vld [vmem:[%s4 + $0x1e8] sm:$0xff]
        %v653 = vld [vmem:[%s4 + $0x1f0] sm:$0xff]
        %v654 = vld [vmem:[%s4 + $0x1f8] sm:$0xff]
        %v655 = vld [vmem:[%s5] sm:$0xff]
        %v656 = vld [vmem:[%s5 + $0x8] sm:$0xff]
        %v657 = vld [vmem:[%s5 + $0x10] sm:$0xff]
        %v658 = vld [vmem:[%s5 + $0x18] sm:$0xff]
        %v659 = vld [vmem:[%s5 + $0x20] sm:$0xff]
        %v660 = vld [vmem:[%s5 + $0x28] sm:$0xff]
        %v661 = vld [vmem:[%s5 + $0x30] sm:$0xff]
        %v662 = vld [vmem:[%s5 + $0x38] sm:$0xff]
        %v663 = vld [vmem:[%s5 + $0x40] sm:$0xff]
        %v664 = vld [vmem:[%s5 + $0x48] sm:$0xff]
        %v665 = vld [vmem:[%s5 + $0x50] sm:$0xff]
        %v666 = vld [vmem:[%s5 + $0x58] sm:$0xff]
        %v667 = vld [vmem:[%s5 + $0x60] sm:$0xff]
        %v668 = vld [vmem:[%s5 + $0x68] sm:$0xff]
        %v669 = vld [vmem:[%s5 + $0x70] sm:$0xff]
        %v670 = vld [vmem:[%s5 + $0x78] sm:$0xff]
        %v671 = vld [vmem:[%s5 + $0x80] sm:$0xff]
        %v672 = vld [vmem:[%s5 + $0x88] sm:$0xff]
        %v673 = vld [vmem:[%s5 + $0x90] sm:$0xff]
        %v674 = vld [vmem:[%s5 + $0x98] sm:$0xff]
        %v675 = vld [vmem:[%s5 + $0xa0] sm:$0xff]
        %v676 = vld [vmem:[%s5 + $0xa8] sm:$0xff]
        %v677 = vld [vmem:[%s5 + $0xb0] sm:$0xff]
        %v678 = vld [vmem:[%s5 + $0xb8] sm:$0xff]
        %v679 = vld [vmem:[%s5 + $0xc0] sm:$0xff]
        %v680 = vld [vmem:[%s5 + $0xc8] sm:$0xff]
        %v681 = vld [vmem:[%s5 + $0xd0] sm:$0xff]
        %v682 = vld [vmem:[%s5 + $0xd8] sm:$0xff]
        %v683 = vld [vmem:[%s5 + $0xe0] sm:$0xff]
        %v684 = vld [vmem:[%s5 + $0xe8] sm:$0xff]
        %v685 = vld [vmem:[%s5 + $0xf0] sm:$0xff]
        %v686 = vld [vmem:[%s5 + $0xf8] sm:$0xff]
        %v687 = vld [vmem:[%s5 + $0x100] sm:$0xff]
        %v688 = vld [vmem:[%s5 + $0x108] sm:$0xff]
        %v689 = vld [vmem:[%s5 + $0x110] sm:$0xff]
        %v690 = vld [vmem:[%s5 + $0x118] sm:$0xff]
        %v691 = vld [vmem:[%s5 + $0x120] sm:$0xff]
        %v692 = vld [vmem:[%s5 + $0x128] sm:$0xff]
        %v693 = vld [vmem:[%s5 + $0x130] sm:$0xff]
        %v694 = vld [vmem:[%s5 + $0x138] sm:$0xff]
        %v695 = vld [vmem:[%s5 + $0x140] sm:$0xff]
        %v696 = vld [vmem:[%s5 + $0x148] sm:$0xff]
        %v697 = vld [vmem:[%s5 + $0x150] sm:$0xff]
        %v698 = vld [vmem:[%s5 + $0x158] sm:$0xff]
        %v699 = vld [vmem:[%s5 + $0x160] sm:$0xff]
        %v700 = vld [vmem:[%s5 + $0x168] sm:$0xff]
        %v701 = vld [vmem:[%s5 + $0x170] sm:$0xff]
        %v702 = vld [vmem:[%s5 + $0x178] sm:$0xff]
        %v703 = vld [vmem:[%s5 + $0x180] sm:$0xff]
        %v704 = vld [vmem:[%s5 + $0x188] sm:$0xff]
        %v705 = vld [vmem:[%s5 + $0x190] sm:$0xff]
        %v706 = vld [vmem:[%s5 + $0x198] sm:$0xff]
        %v707 = vld [vmem:[%s5 + $0x1a0] sm:$0xff]
        %v708 = vld [vmem:[%s5 + $0x1a8] sm:$0xff]
        %v709 = vld [vmem:[%s5 + $0x1b0] sm:$0xff]
        %v710 = vld [vmem:[%s5 + $0x1b8] sm:$0xff]
        %v711 = vld [vmem:[%s5 + $0x1c0] sm:$0xff]
        %v712 = vld [vmem:[%s5 + $0x1c8] sm:$0xff]
        %v713 = vld [vmem:[%s5 + $0x1d0] sm:$0xff]
        %v714 = vld [vmem:[%s5 + $0x1d8] sm:$0xff]
        %v715 = vld [vmem:[%s5 + $0x1e0] sm:$0xff]
        %v716 = vld [vmem:[%s5 + $0x1e8] sm:$0xff]
        %v717 = vld [vmem:[%s5 + $0x1f0] sm:$0xff]
        %v718 = vld [vmem:[%s5 + $0x1f8] sm:$0xff]
        %v719 = vld [vmem:[%s6] sm:$0xff]
        %v720 = vld [vmem:[%s6 + $0x8] sm:$0xff]
        %v721 = vld [vmem:[%s6 + $0x10] sm:$0xff]
        %v722 = vld [vmem:[%s6 + $0x18] sm:$0xff]
        %v723 = vld [vmem:[%s6 + $0x20] sm:$0xff]
        %v724 = vld [vmem:[%s6 + $0x28] sm:$0xff]
        %v725 = vld [vmem:[%s6 + $0x30] sm:$0xff]
        %v726 = vld [vmem:[%s6 + $0x38] sm:$0xff]
        %v727 = vld [vmem:[%s6 + $0x40] sm:$0xff]
        %v728 = vld [vmem:[%s6 + $0x48] sm:$0xff]
        %v729 = vld [vmem:[%s6 + $0x50] sm:$0xff]
        %v730 = vld [vmem:[%s6 + $0x58] sm:$0xff]
        %v731 = vld [vmem:[%s6 + $0x60] sm:$0xff]
        %v732 = vld [vmem:[%s6 + $0x68] sm:$0xff]
        %v733 = vld [vmem:[%s6 + $0x70] sm:$0xff]
        %v734 = vld [vmem:[%s6 + $0x78] sm:$0xff]
        %v735 = vld [vmem:[%s6 + $0x80] sm:$0xff]
        %v736 = vld [vmem:[%s6 + $0x88] sm:$0xff]
        %v737 = vld [vmem:[%s6 + $0x90] sm:$0xff]
        %v738 = vld [vmem:[%s6 + $0x98] sm:$0xff]
        %v739 = vld [vmem:[%s6 + $0xa0] sm:$0xff]
        %v740 = vld [vmem:[%s6 + $0xa8] sm:$0xff]
        %v741 = vld [vmem:[%s6 + $0xb0] sm:$0xff]
        %v742 = vld [vmem:[%s6 + $0xb8] sm:$0xff]
        %v743 = vld [vmem:[%s6 + $0xc0] sm:$0xff]
        %v744 = vld [vmem:[%s6 + $0xc8] sm:$0xff]
        %v745 = vld [vmem:[%s6 + $0xd0] sm:$0xff]
        %v746 = vld [vmem:[%s6 + $0xd8] sm:$0xff]
        %v747 = vld [vmem:[%s6 + $0xe0] sm:$0xff]
        %v748 = vld [vmem:[%s6 + $0xe8] sm:$0xff]
        %v749 = vld [vmem:[%s6 + $0xf0] sm:$0xff]
        %v750 = vld [vmem:[%s6 + $0xf8] sm:$0xff]
        %v751 = vld [vmem:[%s7] sm:$0xff]
        %v752 = vld [vmem:[%s7 + $0x8] sm:$0xff]
        %v753 = vld [vmem:[%s7 + $0x10] sm:$0xff]
        %v754 = vld [vmem:[%s7 + $0x18] sm:$0xff]
        %v755 = vld [vmem:[%s7 + $0x20] sm:$0xff]
        %v756 = vld [vmem:[%s7 + $0x28] sm:$0xff]
        %v757 = vld [vmem:[%s7 + $0x30] sm:$0xff]
        %v758 = vld [vmem:[%s7 + $0x38] sm:$0xff]
        %v759 = vld [vmem:[%s7 + $0x40] sm:$0xff]
        %v760 = vld [vmem:[%s7 + $0x48] sm:$0xff]
        %v761 = vld [vmem:[%s7 + $0x50] sm:$0xff]
        %v762 = vld [vmem:[%s7 + $0x58] sm:$0xff]
        %v763 = vld [vmem:[%s7 + $0x60] sm:$0xff]
        %v764 = vld [vmem:[%s7 + $0x68] sm:$0xff]
        %v765 = vld [vmem:[%s7 + $0x70] sm:$0xff]
        %v766 = vld [vmem:[%s7 + $0x78] sm:$0xff]
        %v767 = vld [vmem:[%s7 + $0x80] sm:$0xff]
        %v768 = vld [vmem:[%s7 + $0x88] sm:$0xff]
        %v769 = vld [vmem:[%s7 + $0x90] sm:$0xff]
        %v770 = vld [vmem:[%s7 + $0x98] sm:$0xff]
        %v771 = vld [vmem:[%s7 + $0xa0] sm:$0xff]
        %v772 = vld [vmem:[%s7 + $0xa8] sm:$0xff]
        %v773 = vld [vmem:[%s7 + $0xb0] sm:$0xff]
        %v774 = vld [vmem:[%s7 + $0xb8] sm:$0xff]
        %v775 = vld [vmem:[%s7 + $0xc0] sm:$0xff]
        %v776 = vld [vmem:[%s7 + $0xc8] sm:$0xff]
        %v777 = vld [vmem:[%s7 + $0xd0] sm:$0xff]
        %v778 = vld [vmem:[%s7 + $0xd8] sm:$0xff]
        %v779 = vld [vmem:[%s7 + $0xe0] sm:$0xff]
        %v780 = vld [vmem:[%s7 + $0xe8] sm:$0xff]
        %v781 = vld [vmem:[%s7 + $0xf0] sm:$0xff]
        %v782 = vld [vmem:[%s7 + $0xf8] sm:$0xff]
        %v783 = vld [vmem:[%s385] sm:$0xff]
        %v784 = vld [vmem:[%s385 + $0x8] sm:$0xff]
        %v785 = vld [vmem:[%s385 + $0x10] sm:$0xff]
        %v786 = vld [vmem:[%s385 + $0x18] sm:$0xff]
        %v787 = vld [vmem:[%s385 + $0x20] sm:$0xff]
        %v788 = vld [vmem:[%s385 + $0x28] sm:$0xff]
        %v789 = vld [vmem:[%s385 + $0x30] sm:$0xff]
        %v790 = vld [vmem:[%s385 + $0x38] sm:$0xff]
        %v791 = vld [vmem:[%s385 + $0x40] sm:$0xff]
        %v792 = vld [vmem:[%s385 + $0x48] sm:$0xff]
        %v793 = vld [vmem:[%s385 + $0x50] sm:$0xff]
        %v794 = vld [vmem:[%s385 + $0x58] sm:$0xff]
        %v795 = vld [vmem:[%s385 + $0x60] sm:$0xff]
        %v796 = vld [vmem:[%s385 + $0x68] sm:$0xff]
        %v797 = vld [vmem:[%s385 + $0x70] sm:$0xff]
        %v798 = vld [vmem:[%s385 + $0x78] sm:$0xff]
        %v799 = vld [vmem:[%s385 + $0x80] sm:$0xff]
        %v800 = vld [vmem:[%s385 + $0x88] sm:$0xff]
        %v801 = vld [vmem:[%s385 + $0x90] sm:$0xff]
        %v802 = vld [vmem:[%s385 + $0x98] sm:$0xff]
        %v803 = vld [vmem:[%s385 + $0xa0] sm:$0xff]
        %v804 = vld [vmem:[%s385 + $0xa8] sm:$0xff]
        %v805 = vld [vmem:[%s385 + $0xb0] sm:$0xff]
        %v806 = vld [vmem:[%s385 + $0xb8] sm:$0xff]
        %v807 = vld [vmem:[%s385 + $0xc0] sm:$0xff]
        %v808 = vld [vmem:[%s385 + $0xc8] sm:$0xff]
        %v809 = vld [vmem:[%s385 + $0xd0] sm:$0xff]
        %v810 = vld [vmem:[%s385 + $0xd8] sm:$0xff]
        %v811 = vld [vmem:[%s385 + $0xe0] sm:$0xff]
        %v812 = vld [vmem:[%s385 + $0xe8] sm:$0xff]
        %v813 = vld [vmem:[%s385 + $0xf0] sm:$0xff]
        %v814 = vld [vmem:[%s385 + $0xf8] sm:$0xff]
        %v815 = vld [vmem:[%s385 + $0x100] sm:$0xff]
        %v816 = vld [vmem:[%s385 + $0x108] sm:$0xff]
        %v817 = vld [vmem:[%s385 + $0x110] sm:$0xff]
        %v818 = vld [vmem:[%s385 + $0x118] sm:$0xff]
        %v819 = vld [vmem:[%s385 + $0x120] sm:$0xff]
        %v820 = vld [vmem:[%s385 + $0x128] sm:$0xff]
        %v821 = vld [vmem:[%s385 + $0x130] sm:$0xff]
        %v822 = vld [vmem:[%s385 + $0x138] sm:$0xff]
        %v823 = vld [vmem:[%s385 + $0x140] sm:$0xff]
        %v824 = vld [vmem:[%s385 + $0x148] sm:$0xff]
        %v825 = vld [vmem:[%s385 + $0x150] sm:$0xff]
        %v826 = vld [vmem:[%s385 + $0x158] sm:$0xff]
        %v827 = vld [vmem:[%s385 + $0x160] sm:$0xff]
        %v828 = vld [vmem:[%s385 + $0x168] sm:$0xff]
        %v829 = vld [vmem:[%s385 + $0x170] sm:$0xff]
        %v830 = vld [vmem:[%s385 + $0x178] sm:$0xff]
        %v831 = vld [vmem:[%s385 + $0x180] sm:$0xff]
        %v832 = vld [vmem:[%s385 + $0x188] sm:$0xff]
        %v833 = vld [vmem:[%s385 + $0x190] sm:$0xff]
        %v834 = vld [vmem:[%s385 + $0x198] sm:$0xff]
        %v835 = vld [vmem:[%s385 + $0x1a0] sm:$0xff]
        %v836 = vld [vmem:[%s385 + $0x1a8] sm:$0xff]
        %v837 = vld [vmem:[%s385 + $0x1b0] sm:$0xff]
        %v838 = vld [vmem:[%s385 + $0x1b8] sm:$0xff]
        %v839 = vld [vmem:[%s385 + $0x1c0] sm:$0xff]
        %v840 = vld [vmem:[%s385 + $0x1c8] sm:$0xff]
        %v841 = vld [vmem:[%s385 + $0x1d0] sm:$0xff]
        %v842 = vld [vmem:[%s385 + $0x1d8] sm:$0xff]
        %v843 = vld [vmem:[%s385 + $0x1e0] sm:$0xff]
        %v844 = vld [vmem:[%s385 + $0x1e8] sm:$0xff]
        %v845 = vld [vmem:[%s385 + $0x1f0] sm:$0xff]
        %v846 = vld [vmem:[%s385 + $0x1f8] sm:$0xff]
        %v847 = vpack.c.bf16 %v785, %v783
        %v848 = vpack.c.bf16 %v786, %v784
        %v849 = vpack.c.bf16 %v789, %v787
        %v850 = vpack.c.bf16 %v790, %v788
        %v851 = vpack.c.bf16 %v793, %v791
        %v852 = vpack.c.bf16 %v794, %v792
        %v853 = vpack.c.bf16 %v797, %v795
        %v854 = vpack.c.bf16 %v798, %v796
        %v855 = vpack.c.bf16 %v801, %v799
        %v856 = vpack.c.bf16 %v802, %v800
        %v857 = vpack.c.bf16 %v805, %v803
        %v858 = vpack.c.bf16 %v806, %v804
        %v859 = vpack.c.bf16 %v809, %v807
        %v860 = vpack.c.bf16 %v810, %v808
        %v861 = vpack.c.bf16 %v813, %v811
        %v862 = vpack.c.bf16 %v814, %v812
        %v863 = vpack.c.bf16 %v817, %v815
        %v864 = vpack.c.bf16 %v818, %v816
        %v865 = vpack.c.bf16 %v821, %v819
        %v866 = vpack.c.bf16 %v822, %v820
        %v867 = vpack.c.bf16 %v825, %v823
        %v868 = vpack.c.bf16 %v826, %v824
        %v869 = vpack.c.bf16 %v829, %v827
        %v870 = vpack.c.bf16 %v830, %v828
        %v871 = vpack.c.bf16 %v833, %v831
        %v872 = vpack.c.bf16 %v834, %v832
        %v873 = vpack.c.bf16 %v837, %v835
        %v874 = vpack.c.bf16 %v838, %v836
        %v875 = vpack.c.bf16 %v841, %v839
        %v876 = vpack.c.bf16 %v842, %v840
        %v877 = vpack.c.bf16 %v845, %v843
        %v878 = vpack.c.bf16 %v846, %v844
        %v879 = vld [vmem:[%s390] sm:$0xff]
        %v880 = vld [vmem:[%s390 + $0x8] sm:$0xff]
        %v881 = vld [vmem:[%s390 + $0x10] sm:$0xff]
        %v882 = vld [vmem:[%s390 + $0x18] sm:$0xff]
        %v883 = vld [vmem:[%s390 + $0x20] sm:$0xff]
        %v884 = vld [vmem:[%s390 + $0x28] sm:$0xff]
        %v885 = vld [vmem:[%s390 + $0x30] sm:$0xff]
        %v886 = vld [vmem:[%s390 + $0x38] sm:$0xff]
        %v887 = vld [vmem:[%s390 + $0x40] sm:$0xff]
        %v888 = vld [vmem:[%s390 + $0x48] sm:$0xff]
        %v889 = vld [vmem:[%s390 + $0x50] sm:$0xff]
        %v890 = vld [vmem:[%s390 + $0x58] sm:$0xff]
        %v891 = vld [vmem:[%s390 + $0x60] sm:$0xff]
        %v892 = vld [vmem:[%s390 + $0x68] sm:$0xff]
        %v893 = vld [vmem:[%s390 + $0x70] sm:$0xff]
        %v894 = vld [vmem:[%s390 + $0x78] sm:$0xff]
        %v895 = vld [vmem:[%s390 + $0x80] sm:$0xff]
        %v896 = vld [vmem:[%s390 + $0x88] sm:$0xff]
        %v897 = vld [vmem:[%s390 + $0x90] sm:$0xff]
        %v898 = vld [vmem:[%s390 + $0x98] sm:$0xff]
        %v899 = vld [vmem:[%s390 + $0xa0] sm:$0xff]
        %v900 = vld [vmem:[%s390 + $0xa8] sm:$0xff]
        %v901 = vld [vmem:[%s390 + $0xb0] sm:$0xff]
        %v902 = vld [vmem:[%s390 + $0xb8] sm:$0xff]
        %v903 = vld [vmem:[%s390 + $0xc0] sm:$0xff]
        %v904 = vld [vmem:[%s390 + $0xc8] sm:$0xff]
        %v905 = vld [vmem:[%s390 + $0xd0] sm:$0xff]
        %v906 = vld [vmem:[%s390 + $0xd8] sm:$0xff]
        %v907 = vld [vmem:[%s390 + $0xe0] sm:$0xff]
        %v908 = vld [vmem:[%s390 + $0xe8] sm:$0xff]
        %v909 = vld [vmem:[%s390 + $0xf0] sm:$0xff]
        %v910 = vld [vmem:[%s390 + $0xf8] sm:$0xff]
        %v911 = vld [vmem:[%s390 + $0x100] sm:$0xff]
        %v912 = vld [vmem:[%s390 + $0x108] sm:$0xff]
        %v913 = vld [vmem:[%s390 + $0x110] sm:$0xff]
        %v914 = vld [vmem:[%s390 + $0x118] sm:$0xff]
        %v915 = vld [vmem:[%s390 + $0x120] sm:$0xff]
        %v916 = vld [vmem:[%s390 + $0x128] sm:$0xff]
        %v917 = vld [vmem:[%s390 + $0x130] sm:$0xff]
        %v918 = vld [vmem:[%s390 + $0x138] sm:$0xff]
        %v919 = vld [vmem:[%s390 + $0x140] sm:$0xff]
        %v920 = vld [vmem:[%s390 + $0x148] sm:$0xff]
        %v921 = vld [vmem:[%s390 + $0x150] sm:$0xff]
        %v922 = vld [vmem:[%s390 + $0x158] sm:$0xff]
        %v923 = vld [vmem:[%s390 + $0x160] sm:$0xff]
        %v924 = vld [vmem:[%s390 + $0x168] sm:$0xff]
        %v925 = vld [vmem:[%s390 + $0x170] sm:$0xff]
        %v926 = vld [vmem:[%s390 + $0x178] sm:$0xff]
        %v927 = vld [vmem:[%s390 + $0x180] sm:$0xff]
        %v928 = vld [vmem:[%s390 + $0x188] sm:$0xff]
        %v929 = vld [vmem:[%s390 + $0x190] sm:$0xff]
        %v930 = vld [vmem:[%s390 + $0x198] sm:$0xff]
        %v931 = vld [vmem:[%s390 + $0x1a0] sm:$0xff]
        %v932 = vld [vmem:[%s390 + $0x1a8] sm:$0xff]
        %v933 = vld [vmem:[%s390 + $0x1b0] sm:$0xff]
        %v934 = vld [vmem:[%s390 + $0x1b8] sm:$0xff]
        %v935 = vld [vmem:[%s390 + $0x1c0] sm:$0xff]
        %v936 = vld [vmem:[%s390 + $0x1c8] sm:$0xff]
        %v937 = vld [vmem:[%s390 + $0x1d0] sm:$0xff]
        %v938 = vld [vmem:[%s390 + $0x1d8] sm:$0xff]
        %v939 = vld [vmem:[%s390 + $0x1e0] sm:$0xff]
        %v940 = vld [vmem:[%s390 + $0x1e8] sm:$0xff]
        %v941 = vld [vmem:[%s390 + $0x1f0] sm:$0xff]
        %v942 = vld [vmem:[%s390 + $0x1f8] sm:$0xff]
        %v943 = vpack.c.bf16 %v881, %v879
        %v944 = vpack.c.bf16 %v882, %v880
        %v945 = vpack.c.bf16 %v885, %v883
        %v946 = vpack.c.bf16 %v886, %v884
        %v947 = vpack.c.bf16 %v889, %v887
        %v948 = vpack.c.bf16 %v890, %v888
        %v949 = vpack.c.bf16 %v893, %v891
        %v950 = vpack.c.bf16 %v894, %v892
        %v951 = vpack.c.bf16 %v897, %v895
        %v952 = vpack.c.bf16 %v898, %v896
        %v953 = vpack.c.bf16 %v901, %v899
        %v954 = vpack.c.bf16 %v902, %v900
        %v955 = vpack.c.bf16 %v905, %v903
        %v956 = vpack.c.bf16 %v906, %v904
        %v957 = vpack.c.bf16 %v909, %v907
        %v958 = vpack.c.bf16 %v910, %v908
        %v959 = vpack.c.bf16 %v913, %v911
        %v960 = vpack.c.bf16 %v914, %v912
        %v961 = vpack.c.bf16 %v917, %v915
        %v962 = vpack.c.bf16 %v918, %v916
        %v963 = vpack.c.bf16 %v921, %v919
        %v964 = vpack.c.bf16 %v922, %v920
        %v965 = vpack.c.bf16 %v925, %v923
        %v966 = vpack.c.bf16 %v926, %v924
        %v967 = vpack.c.bf16 %v929, %v927
        %v968 = vpack.c.bf16 %v930, %v928
        %v969 = vpack.c.bf16 %v933, %v931
        %v970 = vpack.c.bf16 %v934, %v932
        %v971 = vpack.c.bf16 %v937, %v935
        %v972 = vpack.c.bf16 %v938, %v936
        %v973 = vpack.c.bf16 %v941, %v939
        %v974 = vpack.c.bf16 %v942, %v940
        %v1039 = vunpack.c.l.b16 %v399
        %v1040 = vunpack.c.h.b16 %v399
        %v1041 = vunpack.c.l.b16 %v400
        %v1042 = vunpack.c.h.b16 %v400
        %v1043 = vunpack.c.l.b16 %v401
        %v1044 = vunpack.c.h.b16 %v401
        %v1045 = vunpack.c.l.b16 %v402
        %v1046 = vunpack.c.h.b16 %v402
        %v1047 = vunpack.c.l.b16 %v403
        %v1048 = vunpack.c.h.b16 %v403
        %v1049 = vunpack.c.l.b16 %v404
        %v1050 = vunpack.c.h.b16 %v404
        %v1051 = vunpack.c.l.b16 %v405
        %v1052 = vunpack.c.h.b16 %v405
        %v1053 = vunpack.c.l.b16 %v406
        %v1054 = vunpack.c.h.b16 %v406
        %v1055 = vunpack.c.l.b16 %v407
        %v1056 = vunpack.c.h.b16 %v407
        %v1057 = vunpack.c.l.b16 %v408
        %v1058 = vunpack.c.h.b16 %v408
        %v1059 = vunpack.c.l.b16 %v409
        %v1060 = vunpack.c.h.b16 %v409
        %v1061 = vunpack.c.l.b16 %v410
        %v1062 = vunpack.c.h.b16 %v410
        %v1063 = vunpack.c.l.b16 %v411
        %v1064 = vunpack.c.h.b16 %v411
        %v1065 = vunpack.c.l.b16 %v412
        %v1066 = vunpack.c.h.b16 %v412
        %v1067 = vunpack.c.l.b16 %v413
        %v1068 = vunpack.c.h.b16 %v413
        %v1069 = vunpack.c.l.b16 %v414
        %v1070 = vunpack.c.h.b16 %v414
        %v1071 = vunpack.c.l.b16 %v415
        %v1072 = vunpack.c.h.b16 %v415
        %v1073 = vunpack.c.l.b16 %v416
        %v1074 = vunpack.c.h.b16 %v416
        %v1075 = vunpack.c.l.b16 %v417
        %v1076 = vunpack.c.h.b16 %v417
        %v1077 = vunpack.c.l.b16 %v418
        %v1078 = vunpack.c.h.b16 %v418
        %v1079 = vunpack.c.l.b16 %v419
        %v1080 = vunpack.c.h.b16 %v419
        %v1081 = vunpack.c.l.b16 %v420
        %v1082 = vunpack.c.h.b16 %v420
        %v1083 = vunpack.c.l.b16 %v421
        %v1084 = vunpack.c.h.b16 %v421
        %v1085 = vunpack.c.l.b16 %v422
        %v1086 = vunpack.c.h.b16 %v422
        %v1087 = vunpack.c.l.b16 %v423
        %v1088 = vunpack.c.h.b16 %v423
        %v1089 = vunpack.c.l.b16 %v424
        %v1090 = vunpack.c.h.b16 %v424
        %v1091 = vunpack.c.l.b16 %v425
        %v1092 = vunpack.c.h.b16 %v425
        %v1093 = vunpack.c.l.b16 %v426
        %v1094 = vunpack.c.h.b16 %v426
        %v1095 = vunpack.c.l.b16 %v427
        %v1096 = vunpack.c.h.b16 %v427
        %v1097 = vunpack.c.l.b16 %v428
        %v1098 = vunpack.c.h.b16 %v428
        %v1099 = vunpack.c.l.b16 %v429
        %v1100 = vunpack.c.h.b16 %v429
        %v1101 = vunpack.c.l.b16 %v430
        %v1102 = vunpack.c.h.b16 %v430
        %v1103 = vunpack.c.l.b16 %v431
        %v1104 = vunpack.c.h.b16 %v431
        %v1105 = vunpack.c.l.b16 %v432
        %v1106 = vunpack.c.h.b16 %v432
        %v1107 = vunpack.c.l.b16 %v433
        %v1108 = vunpack.c.h.b16 %v433
        %v1109 = vunpack.c.l.b16 %v434
        %v1110 = vunpack.c.h.b16 %v434
        %v1111 = vunpack.c.l.b16 %v435
        %v1112 = vunpack.c.h.b16 %v435
        %v1113 = vunpack.c.l.b16 %v436
        %v1114 = vunpack.c.h.b16 %v436
        %v1115 = vunpack.c.l.b16 %v437
        %v1116 = vunpack.c.h.b16 %v437
        %v1117 = vunpack.c.l.b16 %v438
        %v1118 = vunpack.c.h.b16 %v438
        %v1119 = vunpack.c.l.b16 %v439
        %v1120 = vunpack.c.h.b16 %v439
        %v1121 = vunpack.c.l.b16 %v440
        %v1122 = vunpack.c.h.b16 %v440
        %v1123 = vunpack.c.l.b16 %v441
        %v1124 = vunpack.c.h.b16 %v441
        %v1125 = vunpack.c.l.b16 %v442
        %v1126 = vunpack.c.h.b16 %v442
        %v1127 = vunpack.c.l.b16 %v443
        %v1128 = vunpack.c.h.b16 %v443
        %v1129 = vunpack.c.l.b16 %v444
        %v1130 = vunpack.c.h.b16 %v444
        %v1131 = vunpack.c.l.b16 %v445
        %v1132 = vunpack.c.h.b16 %v445
        %v1133 = vunpack.c.l.b16 %v446
        %v1134 = vunpack.c.h.b16 %v446
        %v1135 = vunpack.c.l.b16 %v447
        %v1136 = vunpack.c.h.b16 %v447
        %v1137 = vunpack.c.l.b16 %v448
        %v1138 = vunpack.c.h.b16 %v448
        %v1139 = vunpack.c.l.b16 %v449
        %v1140 = vunpack.c.h.b16 %v449
        %v1141 = vunpack.c.l.b16 %v450
        %v1142 = vunpack.c.h.b16 %v450
        %v1143 = vunpack.c.l.b16 %v451
        %v1144 = vunpack.c.h.b16 %v451
        %v1145 = vunpack.c.l.b16 %v452
        %v1146 = vunpack.c.h.b16 %v452
        %v1147 = vunpack.c.l.b16 %v453
        %v1148 = vunpack.c.h.b16 %v453
        %v1149 = vunpack.c.l.b16 %v454
        %v1150 = vunpack.c.h.b16 %v454
        %v1151 = vunpack.c.l.b16 %v455
        %v1152 = vunpack.c.h.b16 %v455
        %v1153 = vunpack.c.l.b16 %v456
        %v1154 = vunpack.c.h.b16 %v456
        %v1155 = vunpack.c.l.b16 %v457
        %v1156 = vunpack.c.h.b16 %v457
        %v1157 = vunpack.c.l.b16 %v458
        %v1158 = vunpack.c.h.b16 %v458
        %v1159 = vunpack.c.l.b16 %v459
        %v1160 = vunpack.c.h.b16 %v459
        %v1161 = vunpack.c.l.b16 %v460
        %v1162 = vunpack.c.h.b16 %v460
        %v1163 = vunpack.c.l.b16 %v461
        %v1164 = vunpack.c.h.b16 %v461
        %v1165 = vunpack.c.l.b16 %v462
        %v1166 = vunpack.c.h.b16 %v462
        %v1167 = vpack.c.b16 %v1041, %v1039
        %v1168 = vpack.c.b16 %v1042, %v1040
        %v1169 = vpack.c.b16 %v1045, %v1043
        %v1170 = vpack.c.b16 %v1046, %v1044
        %v1171 = vpack.c.b16 %v1049, %v1047
        %v1172 = vpack.c.b16 %v1050, %v1048
        %v1173 = vpack.c.b16 %v1053, %v1051
        %v1174 = vpack.c.b16 %v1054, %v1052
        %v1175 = vpack.c.b16 %v1057, %v1055
        %v1176 = vpack.c.b16 %v1058, %v1056
        %v1177 = vpack.c.b16 %v1061, %v1059
        %v1178 = vpack.c.b16 %v1062, %v1060
        %v1179 = vpack.c.b16 %v1065, %v1063
        %v1180 = vpack.c.b16 %v1066, %v1064
        %v1181 = vpack.c.b16 %v1069, %v1067
        %v1182 = vpack.c.b16 %v1070, %v1068
        %v1183 = vpack.c.b16 %v1073, %v1071
        %v1184 = vpack.c.b16 %v1074, %v1072
        %v1185 = vpack.c.b16 %v1077, %v1075
        %v1186 = vpack.c.b16 %v1078, %v1076
        %v1187 = vpack.c.b16 %v1081, %v1079
        %v1188 = vpack.c.b16 %v1082, %v1080
        %v1189 = vpack.c.b16 %v1085, %v1083
        %v1190 = vpack.c.b16 %v1086, %v1084
        %v1191 = vpack.c.b16 %v1089, %v1087
        %v1192 = vpack.c.b16 %v1090, %v1088
        %v1193 = vpack.c.b16 %v1093, %v1091
        %v1194 = vpack.c.b16 %v1094, %v1092
        %v1195 = vpack.c.b16 %v1097, %v1095
        %v1196 = vpack.c.b16 %v1098, %v1096
        %v1197 = vpack.c.b16 %v1101, %v1099
        %v1198 = vpack.c.b16 %v1102, %v1100
        %v1199 = vpack.c.b16 %v1105, %v1103
        %v1200 = vpack.c.b16 %v1106, %v1104
        %v1201 = vpack.c.b16 %v1109, %v1107
        %v1202 = vpack.c.b16 %v1110, %v1108
        %v1203 = vpack.c.b16 %v1113, %v1111
        %v1204 = vpack.c.b16 %v1114, %v1112
        %v1205 = vpack.c.b16 %v1117, %v1115
        %v1206 = vpack.c.b16 %v1118, %v1116
        %v1207 = vpack.c.b16 %v1121, %v1119
        %v1208 = vpack.c.b16 %v1122, %v1120
        %v1209 = vpack.c.b16 %v1125, %v1123
        %v1210 = vpack.c.b16 %v1126, %v1124
        %v1211 = vpack.c.b16 %v1129, %v1127
        %v1212 = vpack.c.b16 %v1130, %v1128
        %v1213 = vpack.c.b16 %v1133, %v1131
        %v1214 = vpack.c.b16 %v1134, %v1132
        %v1215 = vpack.c.b16 %v1137, %v1135
        %v1216 = vpack.c.b16 %v1138, %v1136
        %v1217 = vpack.c.b16 %v1141, %v1139
        %v1218 = vpack.c.b16 %v1142, %v1140
        %v1219 = vpack.c.b16 %v1145, %v1143
        %v1220 = vpack.c.b16 %v1146, %v1144
        %v1221 = vpack.c.b16 %v1149, %v1147
        %v1222 = vpack.c.b16 %v1150, %v1148
        %v1223 = vpack.c.b16 %v1153, %v1151
        %v1224 = vpack.c.b16 %v1154, %v1152
        %v1225 = vpack.c.b16 %v1157, %v1155
        %v1226 = vpack.c.b16 %v1158, %v1156
        %v1227 = vpack.c.b16 %v1161, %v1159
        %v1228 = vpack.c.b16 %v1162, %v1160
        %v1229 = vpack.c.b16 %v1165, %v1163
        %v1230 = vpack.c.b16 %v1166, %v1164
        %1295 = vmatprep.subr.bf16.mxu0 %v848
        %1296 = vmatpush1.bf16.msra.mxu0 %v847
        %1297 = vmatprep.subr.bf16.mxu0 %v850
        %1298 = vmatpush1.bf16.msra.mxu0 %v849
        %1299 = vmatprep.subr.bf16.mxu0 %v852
        %1300 = vmatpush1.bf16.msra.mxu0 %v851
        %1301 = vmatprep.subr.bf16.mxu0 %v854
        %1302 = vmatpush1.bf16.msra.mxu0 %v853
        %1303 = vmatprep.subr.bf16.mxu0 %v856
        %1304 = vmatpush1.bf16.msra.mxu0 %v855
        %1305 = vmatprep.subr.bf16.mxu0 %v858
        %1306 = vmatpush1.bf16.msra.mxu0 %v857
        %1307 = vmatprep.subr.bf16.mxu0 %v860
        %1308 = vmatpush1.bf16.msra.mxu0 %v859
        %1309 = vmatprep.subr.bf16.mxu0 %v862
        %1310 = vmatpush1.bf16.msra.mxu0 %v861
        %1311 = vmatprep.subr.bf16.mxu0 %v864
        %1312 = vmatpush1.bf16.msra.mxu0 %v863
        %1313 = vmatprep.subr.bf16.mxu0 %v866
        %1314 = vmatpush1.bf16.msra.mxu0 %v865
        %1315 = vmatprep.subr.bf16.mxu0 %v868
        %1316 = vmatpush1.bf16.msra.mxu0 %v867
        %1317 = vmatprep.subr.bf16.mxu0 %v870
        %1318 = vmatpush1.bf16.msra.mxu0 %v869
        %1319 = vmatprep.subr.bf16.mxu0 %v872
        %1320 = vmatpush1.bf16.msra.mxu0 %v871
        %1321 = vmatprep.subr.bf16.mxu0 %v874
        %1322 = vmatpush1.bf16.msra.mxu0 %v873
        %1323 = vmatprep.subr.bf16.mxu0 %v876
        %1324 = vmatpush1.bf16.msra.mxu0 %v875
        %1325 = vmatprep.subr.bf16.mxu0 %v878
        %1326 = vmatpush1.bf16.msra.mxu0 %v877
        %1327 = vmatprep.mubr.bf16.mxu0 %v1168
        %1328 = vmatmul.mubr.bf16.gmra.mrb[0].mxu0 %v1167
        %v1329 = vpop.f32.mrb[0].mxu0
        %v1330 = vadd.f32 0.0, %v1329
        %v1331 = vpop.f32.mrb[0].mxu0
        %v1332 = vadd.f32 0.0, %v1331
        %v1333 = vpop.f32.mrb[0].mxu0
        %v1334 = vadd.f32 0.0, %v1333
        %v1335 = vpop.f32.mrb[0].mxu0
        %v1336 = vadd.f32 0.0, %v1335
        %1337 = vmatprep.mubr.bf16.mxu0 %v1170
        %1338 = vmatmul.mubr.bf16.gmra.mrb[0].mxu0 %v1169
        %v1339 = vpop.f32.mrb[0].mxu0
        %v1340 = vadd.f32 0.0, %v1339
        %v1341 = vpop.f32.mrb[0].mxu0
        %v1342 = vadd.f32 0.0, %v1341
        %v1343 = vpop.f32.mrb[0].mxu0
        %v1344 = vadd.f32 0.0, %v1343
        %v1345 = vpop.f32.mrb[0].mxu0
        %v1346 = vadd.f32 0.0, %v1345
        %1347 = vmatprep.mubr.bf16.mxu0 %v1172
        %1348 = vmatmul.mubr.bf16.gmra.mrb[0].mxu0 %v1171
        %v1349 = vpop.f32.mrb[0].mxu0
        %v1350 = vadd.f32 0.0, %v1349
        %v1351 = vpop.f32.mrb[0].mxu0
        %v1352 = vadd.f32 0.0, %v1351
        %v1353 = vpop.f32.mrb[0].mxu0
        %v1354 = vadd.f32 0.0, %v1353
        %v1355 = vpop.f32.mrb[0].mxu0
        %v1356 = vadd.f32 0.0, %v1355
        %1357 = vmatprep.mubr.bf16.mxu0 %v1174
        %1358 = vmatmul.mubr.bf16.gmra.mrb[0].mxu0 %v1173
        %v1359 = vpop.f32.mrb[0].mxu0
        %v1360 = vadd.f32 0.0, %v1359
        %v1361 = vpop.f32.mrb[0].mxu0
        %v1362 = vadd.f32 0.0, %v1361
        %v1363 = vpop.f32.mrb[0].mxu0
        %v1364 = vadd.f32 0.0, %v1363
        %v1365 = vpop.f32.mrb[0].mxu0
        %v1366 = vadd.f32 0.0, %v1365
        %1367 = vmatprep.mubr.bf16.mxu0 %v1176
        %1368 = vmatmul.mubr.bf16.gmra.mrb[0].mxu0 %v1175
        %v1369 = vpop.f32.mrb[0].mxu0
        %v1370 = vadd.f32 0.0, %v1369
        %v1371 = vpop.f32.mrb[0].mxu0
        %v1372 = vadd.f32 0.0, %v1371
        %v1373 = vpop.f32.mrb[0].mxu0
        %v1374 = vadd.f32 0.0, %v1373
        %v1375 = vpop.f32.mrb[0].mxu0
        %v1376 = vadd.f32 0.0, %v1375
        %1377 = vmatprep.mubr.bf16.mxu0 %v1178
        %1378 = vmatmul.mubr.bf16.gmra.mrb[0].mxu0 %v1177
        %v1379 = vpop.f32.mrb[0].mxu0
        %v1380 = vadd.f32 0.0, %v1379
        %v1381 = vpop.f32.mrb[0].mxu0
        %v1382 = vadd.f32 0.0, %v1381
        %v1383 = vpop.f32.mrb[0].mxu0
        %v1384 = vadd.f32 0.0, %v1383
        %v1385 = vpop.f32.mrb[0].mxu0
        %v1386 = vadd.f32 0.0, %v1385
        %1387 = vmatprep.mubr.bf16.mxu0 %v1180
        %1388 = vmatmul.mubr.bf16.gmra.mrb[0].mxu0 %v1179
        %v1389 = vpop.f32.mrb[0].mxu0
        %v1390 = vadd.f32 0.0, %v1389
        %v1391 = vpop.f32.mrb[0].mxu0
        %v1392 = vadd.f32 0.0, %v1391
        %v1393 = vpop.f32.mrb[0].mxu0
        %v1394 = vadd.f32 0.0, %v1393
        %v1395 = vpop.f32.mrb[0].mxu0
        %v1396 = vadd.f32 0.0, %v1395
        %1397 = vmatprep.mubr.bf16.mxu0 %v1182
        %1398 = vmatmul.mubr.bf16.gmra.mrb[0].mxu0 %v1181
        %v1399 = vpop.f32.mrb[0].mxu0
        %v1400 = vadd.f32 0.0, %v1399
        %v1401 = vpop.f32.mrb[0].mxu0
        %v1402 = vadd.f32 0.0, %v1401
        %v1403 = vpop.f32.mrb[0].mxu0
        %v1404 = vadd.f32 0.0, %v1403
        %v1405 = vpop.f32.mrb[0].mxu0
        %v1406 = vadd.f32 0.0, %v1405
        %1407 = vmatprep.mubr.bf16.mxu0 %v1184
        %1408 = vmatmul.mubr.bf16.gmra.mrb[0].mxu0 %v1183
        %v1409 = vpop.f32.mrb[0].mxu0
        %v1410 = vadd.f32 0.0, %v1409
        %v1411 = vpop.f32.mrb[0].mxu0
        %v1412 = vadd.f32 0.0, %v1411
        %v1413 = vpop.f32.mrb[0].mxu0
        %v1414 = vadd.f32 0.0, %v1413
        %v1415 = vpop.f32.mrb[0].mxu0
        %v1416 = vadd.f32 0.0, %v1415
        %1417 = vmatprep.mubr.bf16.mxu0 %v1186
        %1418 = vmatmul.mubr.bf16.gmra.mrb[0].mxu0 %v1185
        %v1419 = vpop.f32.mrb[0].mxu0
        %v1420 = vadd.f32 0.0, %v1419
        %v1421 = vpop.f32.mrb[0].mxu0
        %v1422 = vadd.f32 0.0, %v1421
        %v1423 = vpop.f32.mrb[0].mxu0
        %v1424 = vadd.f32 0.0, %v1423
        %v1425 = vpop.f32.mrb[0].mxu0
        %v1426 = vadd.f32 0.0, %v1425
        %1427 = vmatprep.mubr.bf16.mxu0 %v1188
        %1428 = vmatmul.mubr.bf16.gmra.mrb[0].mxu0 %v1187
        %v1429 = vpop.f32.mrb[0].mxu0
        %v1430 = vadd.f32 0.0, %v1429
        %v1431 = vpop.f32.mrb[0].mxu0
        %v1432 = vadd.f32 0.0, %v1431
        %v1433 = vpop.f32.mrb[0].mxu0
        %v1434 = vadd.f32 0.0, %v1433
        %v1435 = vpop.f32.mrb[0].mxu0
        %v1436 = vadd.f32 0.0, %v1435
        %1437 = vmatprep.mubr.bf16.mxu0 %v1190
        %1438 = vmatmul.mubr.bf16.gmra.mrb[0].mxu0 %v1189
        %v1439 = vpop.f32.mrb[0].mxu0
        %v1440 = vadd.f32 0.0, %v1439
        %v1441 = vpop.f32.mrb[0].mxu0
        %v1442 = vadd.f32 0.0, %v1441
        %v1443 = vpop.f32.mrb[0].mxu0
        %v1444 = vadd.f32 0.0, %v1443
        %v1445 = vpop.f32.mrb[0].mxu0
        %v1446 = vadd.f32 0.0, %v1445
        %1447 = vmatprep.mubr.bf16.mxu0 %v1192
        %1448 = vmatmul.mubr.bf16.gmra.mrb[0].mxu0 %v1191
        %v1449 = vpop.f32.mrb[0].mxu0
        %v1450 = vadd.f32 0.0, %v1449
        %v1451 = vpop.f32.mrb[0].mxu0
        %v1452 = vadd.f32 0.0, %v1451
        %v1453 = vpop.f32.mrb[0].mxu0
        %v1454 = vadd.f32 0.0, %v1453
        %v1455 = vpop.f32.mrb[0].mxu0
        %v1456 = vadd.f32 0.0, %v1455
        %1457 = vmatprep.mubr.bf16.mxu0 %v1194
        %1458 = vmatmul.mubr.bf16.gmra.mrb[0].mxu0 %v1193
        %v1459 = vpop.f32.mrb[0].mxu0
        %v1460 = vadd.f32 0.0, %v1459
        %v1461 = vpop.f32.mrb[0].mxu0
        %v1462 = vadd.f32 0.0, %v1461
        %v1463 = vpop.f32.mrb[0].mxu0
        %v1464 = vadd.f32 0.0, %v1463
        %v1465 = vpop.f32.mrb[0].mxu0
        %v1466 = vadd.f32 0.0, %v1465
        %1467 = vmatprep.mubr.bf16.mxu0 %v1196
        %1468 = vmatmul.mubr.bf16.gmra.mrb[0].mxu0 %v1195
        %v1469 = vpop.f32.mrb[0].mxu0
        %v1470 = vadd.f32 0.0, %v1469
        %v1471 = vpop.f32.mrb[0].mxu0
        %v1472 = vadd.f32 0.0, %v1471
        %v1473 = vpop.f32.mrb[0].mxu0
        %v1474 = vadd.f32 0.0, %v1473
        %v1475 = vpop.f32.mrb[0].mxu0
        %v1476 = vadd.f32 0.0, %v1475
        %1477 = vmatprep.mubr.bf16.mxu0 %v1198
        %1478 = vmatmul.mubr.bf16.gmra.mrb[0].mxu0 %v1197
        %v1479 = vpop.f32.mrb[0].mxu0
        %v1480 = vadd.f32 0.0, %v1479
        %v1481 = vpop.f32.mrb[0].mxu0
        %v1482 = vadd.f32 0.0, %v1481
        %v1483 = vpop.f32.mrb[0].mxu0
        %v1484 = vadd.f32 0.0, %v1483
        %v1485 = vpop.f32.mrb[0].mxu0
        %v1486 = vadd.f32 0.0, %v1485
        %1487 = vmatprep.mubr.bf16.mxu0 %v1200
        %1488 = vmatmul.mubr.bf16.gmra.mrb[0].mxu0 %v1199
        %v1489 = vpop.f32.mrb[0].mxu0
        %v1490 = vadd.f32 0.0, %v1489
        %v1491 = vpop.f32.mrb[0].mxu0
        %v1492 = vadd.f32 0.0, %v1491
        %v1493 = vpop.f32.mrb[0].mxu0
        %v1494 = vadd.f32 0.0, %v1493
        %v1495 = vpop.f32.mrb[0].mxu0
        %v1496 = vadd.f32 0.0, %v1495
        %1497 = vmatprep.mubr.bf16.mxu0 %v1202
        %1498 = vmatmul.mubr.bf16.gmra.mrb[0].mxu0 %v1201
        %v1499 = vpop.f32.mrb[0].mxu0
        %v1500 = vadd.f32 0.0, %v1499
        %v1501 = vpop.f32.mrb[0].mxu0
        %v1502 = vadd.f32 0.0, %v1501
        %v1503 = vpop.f32.mrb[0].mxu0
        %v1504 = vadd.f32 0.0, %v1503
        %v1505 = vpop.f32.mrb[0].mxu0
        %v1506 = vadd.f32 0.0, %v1505
        %1507 = vmatprep.mubr.bf16.mxu0 %v1204
        %1508 = vmatmul.mubr.bf16.gmra.mrb[0].mxu0 %v1203
        %v1509 = vpop.f32.mrb[0].mxu0
        %v1510 = vadd.f32 0.0, %v1509
        %v1511 = vpop.f32.mrb[0].mxu0
        %v1512 = vadd.f32 0.0, %v1511
        %v1513 = vpop.f32.mrb[0].mxu0
        %v1514 = vadd.f32 0.0, %v1513
        %v1515 = vpop.f32.mrb[0].mxu0
        %v1516 = vadd.f32 0.0, %v1515
        %1517 = vmatprep.mubr.bf16.mxu0 %v1206
        %1518 = vmatmul.mubr.bf16.gmra.mrb[0].mxu0 %v1205
        %v1519 = vpop.f32.mrb[0].mxu0
        %v1520 = vadd.f32 0.0, %v1519
        %v1521 = vpop.f32.mrb[0].mxu0
        %v1522 = vadd.f32 0.0, %v1521
        %v1523 = vpop.f32.mrb[0].mxu0
        %v1524 = vadd.f32 0.0, %v1523
        %v1525 = vpop.f32.mrb[0].mxu0
        %v1526 = vadd.f32 0.0, %v1525
        %1527 = vmatprep.mubr.bf16.mxu0 %v1208
        %1528 = vmatmul.mubr.bf16.gmra.mrb[0].mxu0 %v1207
        %v1529 = vpop.f32.mrb[0].mxu0
        %v1530 = vadd.f32 0.0, %v1529
        %v1531 = vpop.f32.mrb[0].mxu0
        %v1532 = vadd.f32 0.0, %v1531
        %v1533 = vpop.f32.mrb[0].mxu0
        %v1534 = vadd.f32 0.0, %v1533
        %v1535 = vpop.f32.mrb[0].mxu0
        %v1536 = vadd.f32 0.0, %v1535
        %1537 = vmatprep.mubr.bf16.mxu0 %v1210
        %1538 = vmatmul.mubr.bf16.gmra.mrb[0].mxu0 %v1209
        %v1539 = vpop.f32.mrb[0].mxu0
        %v1540 = vadd.f32 0.0, %v1539
        %v1541 = vpop.f32.mrb[0].mxu0
        %v1542 = vadd.f32 0.0, %v1541
        %v1543 = vpop.f32.mrb[0].mxu0
        %v1544 = vadd.f32 0.0, %v1543
        %v1545 = vpop.f32.mrb[0].mxu0
        %v1546 = vadd.f32 0.0, %v1545
        %1547 = vmatprep.mubr.bf16.mxu0 %v1212
        %1548 = vmatmul.mubr.bf16.gmra.mrb[0].mxu0 %v1211
        %v1549 = vpop.f32.mrb[0].mxu0
        %v1550 = vadd.f32 0.0, %v1549
        %v1551 = vpop.f32.mrb[0].mxu0
        %v1552 = vadd.f32 0.0, %v1551
        %v1553 = vpop.f32.mrb[0].mxu0
        %v1554 = vadd.f32 0.0, %v1553
        %v1555 = vpop.f32.mrb[0].mxu0
        %v1556 = vadd.f32 0.0, %v1555
        %1557 = vmatprep.mubr.bf16.mxu0 %v1214
        %1558 = vmatmul.mubr.bf16.gmra.mrb[0].mxu0 %v1213
        %v1559 = vpop.f32.mrb[0].mxu0
        %v1560 = vadd.f32 0.0, %v1559
        %v1561 = vpop.f32.mrb[0].mxu0
        %v1562 = vadd.f32 0.0, %v1561
        %v1563 = vpop.f32.mrb[0].mxu0
        %v1564 = vadd.f32 0.0, %v1563
        %v1565 = vpop.f32.mrb[0].mxu0
        %v1566 = vadd.f32 0.0, %v1565
        %1567 = vmatprep.mubr.bf16.mxu0 %v1216
        %1568 = vmatmul.mubr.bf16.gmra.mrb[0].mxu0 %v1215
        %v1569 = vpop.f32.mrb[0].mxu0
        %v1570 = vadd.f32 0.0, %v1569
        %v1571 = vpop.f32.mrb[0].mxu0
        %v1572 = vadd.f32 0.0, %v1571
        %v1573 = vpop.f32.mrb[0].mxu0
        %v1574 = vadd.f32 0.0, %v1573
        %v1575 = vpop.f32.mrb[0].mxu0
        %v1576 = vadd.f32 0.0, %v1575
        %1577 = vmatprep.mubr.bf16.mxu0 %v1218
        %1578 = vmatmul.mubr.bf16.gmra.mrb[0].mxu0 %v1217
        %v1579 = vpop.f32.mrb[0].mxu0
        %v1580 = vadd.f32 0.0, %v1579
        %v1581 = vpop.f32.mrb[0].mxu0
        %v1582 = vadd.f32 0.0, %v1581
        %v1583 = vpop.f32.mrb[0].mxu0
        %v1584 = vadd.f32 0.0, %v1583
        %v1585 = vpop.f32.mrb[0].mxu0
        %v1586 = vadd.f32 0.0, %v1585
        %1587 = vmatprep.mubr.bf16.mxu0 %v1220
        %1588 = vmatmul.mubr.bf16.gmra.mrb[0].mxu0 %v1219
        %v1589 = vpop.f32.mrb[0].mxu0
        %v1590 = vadd.f32 0.0, %v1589
        %v1591 = vpop.f32.mrb[0].mxu0
        %v1592 = vadd.f32 0.0, %v1591
        %v1593 = vpop.f32.mrb[0].mxu0
        %v1594 = vadd.f32 0.0, %v1593
        %v1595 = vpop.f32.mrb[0].mxu0
        %v1596 = vadd.f32 0.0, %v1595
        %1597 = vmatprep.mubr.bf16.mxu0 %v1222
        %1598 = vmatmul.mubr.bf16.gmra.mrb[0].mxu0 %v1221
        %v1599 = vpop.f32.mrb[0].mxu0
        %v1600 = vadd.f32 0.0, %v1599
        %v1601 = vpop.f32.mrb[0].mxu0
        %v1602 = vadd.f32 0.0, %v1601
        %v1603 = vpop.f32.mrb[0].mxu0
        %v1604 = vadd.f32 0.0, %v1603
        %v1605 = vpop.f32.mrb[0].mxu0
        %v1606 = vadd.f32 0.0, %v1605
        %1607 = vmatprep.mubr.bf16.mxu0 %v1224
        %1608 = vmatmul.mubr.bf16.gmra.mrb[0].mxu0 %v1223
        %v1609 = vpop.f32.mrb[0].mxu0
        %v1610 = vadd.f32 0.0, %v1609
        %v1611 = vpop.f32.mrb[0].mxu0
        %v1612 = vadd.f32 0.0, %v1611
        %v1613 = vpop.f32.mrb[0].mxu0
        %v1614 = vadd.f32 0.0, %v1613
        %v1615 = vpop.f32.mrb[0].mxu0
        %v1616 = vadd.f32 0.0, %v1615
        %1617 = vmatprep.mubr.bf16.mxu0 %v1226
        %1618 = vmatmul.mubr.bf16.gmra.mrb[0].mxu0 %v1225
        %v1619 = vpop.f32.mrb[0].mxu0
        %v1620 = vadd.f32 0.0, %v1619
        %v1621 = vpop.f32.mrb[0].mxu0
        %v1622 = vadd.f32 0.0, %v1621
        %v1623 = vpop.f32.mrb[0].mxu0
        %v1624 = vadd.f32 0.0, %v1623
        %v1625 = vpop.f32.mrb[0].mxu0
        %v1626 = vadd.f32 0.0, %v1625
        %1627 = vmatprep.mubr.bf16.mxu0 %v1228
        %1628 = vmatmul.mubr.bf16.gmra.mrb[0].mxu0 %v1227
        %v1629 = vpop.f32.mrb[0].mxu0
        %v1630 = vadd.f32 0.0, %v1629
        %v1631 = vpop.f32.mrb[0].mxu0
        %v1632 = vadd.f32 0.0, %v1631
        %v1633 = vpop.f32.mrb[0].mxu0
        %v1634 = vadd.f32 0.0, %v1633
        %v1635 = vpop.f32.mrb[0].mxu0
        %v1636 = vadd.f32 0.0, %v1635
        %1637 = vmatprep.mubr.bf16.mxu0 %v1230
        %1638 = vmatmul.mubr.bf16.gmra.mrb[0].mxu0 %v1229
        %v1639 = vpop.f32.mrb[0].mxu0
        %v1640 = vadd.f32 0.0, %v1639
        %v1641 = vpop.f32.mrb[0].mxu0
        %v1642 = vadd.f32 0.0, %v1641
        %v1643 = vpop.f32.mrb[0].mxu0
        %v1644 = vadd.f32 0.0, %v1643
        %v1645 = vpop.f32.mrb[0].mxu0
        %v1646 = vadd.f32 0.0, %v1645
        %1647 = vdwg.mxu0
        %1648 = vmatprep.subr.bf16.mxu0 %v944
        %1649 = vmatpush1.bf16.msra.mxu0 %v943
        %1650 = vmatprep.subr.bf16.mxu0 %v946
        %1651 = vmatpush1.bf16.msra.mxu0 %v945
        %1652 = vmatprep.subr.bf16.mxu0 %v948
        %1653 = vmatpush1.bf16.msra.mxu0 %v947
        %1654 = vmatprep.subr.bf16.mxu0 %v950
        %1655 = vmatpush1.bf16.msra.mxu0 %v949
        %1656 = vmatprep.subr.bf16.mxu0 %v952
        %1657 = vmatpush1.bf16.msra.mxu0 %v951
        %1658 = vmatprep.subr.bf16.mxu0 %v954
        %1659 = vmatpush1.bf16.msra.mxu0 %v953
        %1660 = vmatprep.subr.bf16.mxu0 %v956
        %1661 = vmatpush1.bf16.msra.mxu0 %v955
        %1662 = vmatprep.subr.bf16.mxu0 %v958
        %1663 = vmatpush1.bf16.msra.mxu0 %v957
        %1664 = vmatprep.subr.bf16.mxu0 %v960
        %1665 = vmatpush1.bf16.msra.mxu0 %v959
        %1666 = vmatprep.subr.bf16.mxu0 %v962
        %1667 = vmatpush1.bf16.msra.mxu0 %v961
        %1668 = vmatprep.subr.bf16.mxu0 %v964
        %1669 = vmatpush1.bf16.msra.mxu0 %v963
        %1670 = vmatprep.subr.bf16.mxu0 %v966
        %1671 = vmatpush1.bf16.msra.mxu0 %v965
        %1672 = vmatprep.subr.bf16.mxu0 %v968
        %1673 = vmatpush1.bf16.msra.mxu0 %v967
        %1674 = vmatprep.subr.bf16.mxu0 %v970
        %1675 = vmatpush1.bf16.msra.mxu0 %v969
        %1676 = vmatprep.subr.bf16.mxu0 %v972
        %1677 = vmatpush1.bf16.msra.mxu0 %v971
        %1678 = vmatprep.subr.bf16.mxu0 %v974
        %1679 = vmatpush1.bf16.msra.mxu0 %v973
        %1680 = vmatprep.mubr.bf16.mxu0 %v1168
        %1681 = vmatmul.mubr.bf16.gmra.mrb[0].mxu0 %v1167
        %v1682 = vpop.f32.mrb[0].mxu0
        %v1683 = vadd.f32 0.0, %v1682
        %v1684 = vpop.f32.mrb[0].mxu0
        %v1685 = vadd.f32 0.0, %v1684
        %v1686 = vpop.f32.mrb[0].mxu0
        %v1687 = vadd.f32 0.0, %v1686
        %v1688 = vpop.f32.mrb[0].mxu0
        %v1689 = vadd.f32 0.0, %v1688
        %1690 = vmatprep.mubr.bf16.mxu0 %v1170
        %1691 = vmatmul.mubr.bf16.gmra.mrb[0].mxu0 %v1169
        %v1692 = vpop.f32.mrb[0].mxu0
        %v1693 = vadd.f32 0.0, %v1692
        %v1694 = vpop.f32.mrb[0].mxu0
        %v1695 = vadd.f32 0.0, %v1694
        %v1696 = vpop.f32.mrb[0].mxu0
        %v1697 = vadd.f32 0.0, %v1696
        %v1698 = vpop.f32.mrb[0].mxu0
        %v1699 = vadd.f32 0.0, %v1698
        %1700 = vmatprep.mubr.bf16.mxu0 %v1172
        %1701 = vmatmul.mubr.bf16.gmra.mrb[0].mxu0 %v1171
        %v1702 = vpop.f32.mrb[0].mxu0
        %v1703 = vadd.f32 0.0, %v1702
        %v1704 = vpop.f32.mrb[0].mxu0
        %v1705 = vadd.f32 0.0, %v1704
        %v1706 = vpop.f32.mrb[0].mxu0
        %v1707 = vadd.f32 0.0, %v1706
        %v1708 = vpop.f32.mrb[0].mxu0
        %v1709 = vadd.f32 0.0, %v1708
        %1710 = vmatprep.mubr.bf16.mxu0 %v1174
        %1711 = vmatmul.mubr.bf16.gmra.mrb[0].mxu0 %v1173
        %v1712 = vpop.f32.mrb[0].mxu0
        %v1713 = vadd.f32 0.0, %v1712
        %v1714 = vpop.f32.mrb[0].mxu0
        %v1715 = vadd.f32 0.0, %v1714
        %v1716 = vpop.f32.mrb[0].mxu0
        %v1717 = vadd.f32 0.0, %v1716
        %v1718 = vpop.f32.mrb[0].mxu0
        %v1719 = vadd.f32 0.0, %v1718
        %1720 = vmatprep.mubr.bf16.mxu0 %v1176
        %1721 = vmatmul.mubr.bf16.gmra.mrb[0].mxu0 %v1175
        %v1722 = vpop.f32.mrb[0].mxu0
        %v1723 = vadd.f32 0.0, %v1722
        %v1724 = vpop.f32.mrb[0].mxu0
        %v1725 = vadd.f32 0.0, %v1724
        %v1726 = vpop.f32.mrb[0].mxu0
        %v1727 = vadd.f32 0.0, %v1726
        %v1728 = vpop.f32.mrb[0].mxu0
        %v1729 = vadd.f32 0.0, %v1728
        %1730 = vmatprep.mubr.bf16.mxu0 %v1178
        %1731 = vmatmul.mubr.bf16.gmra.mrb[0].mxu0 %v1177
        %v1732 = vpop.f32.mrb[0].mxu0
        %v1733 = vadd.f32 0.0, %v1732
        %v1734 = vpop.f32.mrb[0].mxu0
        %v1735 = vadd.f32 0.0, %v1734
        %v1736 = vpop.f32.mrb[0].mxu0
        %v1737 = vadd.f32 0.0, %v1736
        %v1738 = vpop.f32.mrb[0].mxu0
        %v1739 = vadd.f32 0.0, %v1738
        %1740 = vmatprep.mubr.bf16.mxu0 %v1180
        %1741 = vmatmul.mubr.bf16.gmra.mrb[0].mxu0 %v1179
        %v1742 = vpop.f32.mrb[0].mxu0
        %v1743 = vadd.f32 0.0, %v1742
        %v1744 = vpop.f32.mrb[0].mxu0
        %v1745 = vadd.f32 0.0, %v1744
        %v1746 = vpop.f32.mrb[0].mxu0
        %v1747 = vadd.f32 0.0, %v1746
        %v1748 = vpop.f32.mrb[0].mxu0
        %v1749 = vadd.f32 0.0, %v1748
        %1750 = vmatprep.mubr.bf16.mxu0 %v1182
        %1751 = vmatmul.mubr.bf16.gmra.mrb[0].mxu0 %v1181
        %v1752 = vpop.f32.mrb[0].mxu0
        %v1753 = vadd.f32 0.0, %v1752
        %v1754 = vpop.f32.mrb[0].mxu0
        %v1755 = vadd.f32 0.0, %v1754
        %v1756 = vpop.f32.mrb[0].mxu0
        %v1757 = vadd.f32 0.0, %v1756
        %v1758 = vpop.f32.mrb[0].mxu0
        %v1759 = vadd.f32 0.0, %v1758
        %1760 = vmatprep.mubr.bf16.mxu0 %v1184
        %1761 = vmatmul.mubr.bf16.gmra.mrb[0].mxu0 %v1183
        %v1762 = vpop.f32.mrb[0].mxu0
        %v1763 = vadd.f32 0.0, %v1762
        %v1764 = vpop.f32.mrb[0].mxu0
        %v1765 = vadd.f32 0.0, %v1764
        %v1766 = vpop.f32.mrb[0].mxu0
        %v1767 = vadd.f32 0.0, %v1766
        %v1768 = vpop.f32.mrb[0].mxu0
        %v1769 = vadd.f32 0.0, %v1768
        %1770 = vmatprep.mubr.bf16.mxu0 %v1186
        %1771 = vmatmul.mubr.bf16.gmra.mrb[0].mxu0 %v1185
        %v1772 = vpop.f32.mrb[0].mxu0
        %v1773 = vadd.f32 0.0, %v1772
        %v1774 = vpop.f32.mrb[0].mxu0
        %v1775 = vadd.f32 0.0, %v1774
        %v1776 = vpop.f32.mrb[0].mxu0
        %v1777 = vadd.f32 0.0, %v1776
        %v1778 = vpop.f32.mrb[0].mxu0
        %v1779 = vadd.f32 0.0, %v1778
        %1780 = vmatprep.mubr.bf16.mxu0 %v1188
        %1781 = vmatmul.mubr.bf16.gmra.mrb[0].mxu0 %v1187
        %v1782 = vpop.f32.mrb[0].mxu0
        %v1783 = vadd.f32 0.0, %v1782
        %v1784 = vpop.f32.mrb[0].mxu0
        %v1785 = vadd.f32 0.0, %v1784
        %v1786 = vpop.f32.mrb[0].mxu0
        %v1787 = vadd.f32 0.0, %v1786
        %v1788 = vpop.f32.mrb[0].mxu0
        %v1789 = vadd.f32 0.0, %v1788
        %1790 = vmatprep.mubr.bf16.mxu0 %v1190
        %1791 = vmatmul.mubr.bf16.gmra.mrb[0].mxu0 %v1189
        %v1792 = vpop.f32.mrb[0].mxu0
        %v1793 = vadd.f32 0.0, %v1792
        %v1794 = vpop.f32.mrb[0].mxu0
        %v1795 = vadd.f32 0.0, %v1794
        %v1796 = vpop.f32.mrb[0].mxu0
        %v1797 = vadd.f32 0.0, %v1796
        %v1798 = vpop.f32.mrb[0].mxu0
        %v1799 = vadd.f32 0.0, %v1798
        %1800 = vmatprep.mubr.bf16.mxu0 %v1192
        %1801 = vmatmul.mubr.bf16.gmra.mrb[0].mxu0 %v1191
        %v1802 = vpop.f32.mrb[0].mxu0
        %v1803 = vadd.f32 0.0, %v1802
        %v1804 = vpop.f32.mrb[0].mxu0
        %v1805 = vadd.f32 0.0, %v1804
        %v1806 = vpop.f32.mrb[0].mxu0
        %v1807 = vadd.f32 0.0, %v1806
        %v1808 = vpop.f32.mrb[0].mxu0
        %v1809 = vadd.f32 0.0, %v1808
        %1810 = vmatprep.mubr.bf16.mxu0 %v1194
        %1811 = vmatmul.mubr.bf16.gmra.mrb[0].mxu0 %v1193
        %v1812 = vpop.f32.mrb[0].mxu0
        %v1813 = vadd.f32 0.0, %v1812
        %v1814 = vpop.f32.mrb[0].mxu0
        %v1815 = vadd.f32 0.0, %v1814
        %v1816 = vpop.f32.mrb[0].mxu0
        %v1817 = vadd.f32 0.0, %v1816
        %v1818 = vpop.f32.mrb[0].mxu0
        %v1819 = vadd.f32 0.0, %v1818
        %1820 = vmatprep.mubr.bf16.mxu0 %v1196
        %1821 = vmatmul.mubr.bf16.gmra.mrb[0].mxu0 %v1195
        %v1822 = vpop.f32.mrb[0].mxu0
        %v1823 = vadd.f32 0.0, %v1822
        %v1824 = vpop.f32.mrb[0].mxu0
        %v1825 = vadd.f32 0.0, %v1824
        %v1826 = vpop.f32.mrb[0].mxu0
        %v1827 = vadd.f32 0.0, %v1826
        %v1828 = vpop.f32.mrb[0].mxu0
        %v1829 = vadd.f32 0.0, %v1828
        %1830 = vmatprep.mubr.bf16.mxu0 %v1198
        %1831 = vmatmul.mubr.bf16.gmra.mrb[0].mxu0 %v1197
        %v1832 = vpop.f32.mrb[0].mxu0
        %v1833 = vadd.f32 0.0, %v1832
        %v1834 = vpop.f32.mrb[0].mxu0
        %v1835 = vadd.f32 0.0, %v1834
        %v1836 = vpop.f32.mrb[0].mxu0
        %v1837 = vadd.f32 0.0, %v1836
        %v1838 = vpop.f32.mrb[0].mxu0
        %v1839 = vadd.f32 0.0, %v1838
        %1840 = vmatprep.mubr.bf16.mxu0 %v1200
        %1841 = vmatmul.mubr.bf16.gmra.mrb[0].mxu0 %v1199
        %v1842 = vpop.f32.mrb[0].mxu0
        %v1843 = vadd.f32 0.0, %v1842
        %v1844 = vpop.f32.mrb[0].mxu0
        %v1845 = vadd.f32 0.0, %v1844
        %v1846 = vpop.f32.mrb[0].mxu0
        %v1847 = vadd.f32 0.0, %v1846
        %v1848 = vpop.f32.mrb[0].mxu0
        %v1849 = vadd.f32 0.0, %v1848
        %1850 = vmatprep.mubr.bf16.mxu0 %v1202
        %1851 = vmatmul.mubr.bf16.gmra.mrb[0].mxu0 %v1201
        %v1852 = vpop.f32.mrb[0].mxu0
        %v1853 = vadd.f32 0.0, %v1852
        %v1854 = vpop.f32.mrb[0].mxu0
        %v1855 = vadd.f32 0.0, %v1854
        %v1856 = vpop.f32.mrb[0].mxu0
        %v1857 = vadd.f32 0.0, %v1856
        %v1858 = vpop.f32.mrb[0].mxu0
        %v1859 = vadd.f32 0.0, %v1858
        %1860 = vmatprep.mubr.bf16.mxu0 %v1204
        %1861 = vmatmul.mubr.bf16.gmra.mrb[0].mxu0 %v1203
        %v1862 = vpop.f32.mrb[0].mxu0
        %v1863 = vadd.f32 0.0, %v1862
        %v1864 = vpop.f32.mrb[0].mxu0
        %v1865 = vadd.f32 0.0, %v1864
        %v1866 = vpop.f32.mrb[0].mxu0
        %v1867 = vadd.f32 0.0, %v1866
        %v1868 = vpop.f32.mrb[0].mxu0
        %v1869 = vadd.f32 0.0, %v1868
        %1870 = vmatprep.mubr.bf16.mxu0 %v1206
        %1871 = vmatmul.mubr.bf16.gmra.mrb[0].mxu0 %v1205
        %v1872 = vpop.f32.mrb[0].mxu0
        %v1873 = vadd.f32 0.0, %v1872
        %v1874 = vpop.f32.mrb[0].mxu0
        %v1875 = vadd.f32 0.0, %v1874
        %v1876 = vpop.f32.mrb[0].mxu0
        %v1877 = vadd.f32 0.0, %v1876
        %v1878 = vpop.f32.mrb[0].mxu0
        %v1879 = vadd.f32 0.0, %v1878
        %1880 = vmatprep.mubr.bf16.mxu0 %v1208
        %1881 = vmatmul.mubr.bf16.gmra.mrb[0].mxu0 %v1207
        %v1882 = vpop.f32.mrb[0].mxu0
        %v1883 = vadd.f32 0.0, %v1882
        %v1884 = vpop.f32.mrb[0].mxu0
        %v1885 = vadd.f32 0.0, %v1884
        %v1886 = vpop.f32.mrb[0].mxu0
        %v1887 = vadd.f32 0.0, %v1886
        %v1888 = vpop.f32.mrb[0].mxu0
        %v1889 = vadd.f32 0.0, %v1888
        %1890 = vmatprep.mubr.bf16.mxu0 %v1210
        %1891 = vmatmul.mubr.bf16.gmra.mrb[0].mxu0 %v1209
        %v1892 = vpop.f32.mrb[0].mxu0
        %v1893 = vadd.f32 0.0, %v1892
        %v1894 = vpop.f32.mrb[0].mxu0
        %v1895 = vadd.f32 0.0, %v1894
        %v1896 = vpop.f32.mrb[0].mxu0
        %v1897 = vadd.f32 0.0, %v1896
        %v1898 = vpop.f32.mrb[0].mxu0
        %v1899 = vadd.f32 0.0, %v1898
        %1900 = vmatprep.mubr.bf16.mxu0 %v1212
        %1901 = vmatmul.mubr.bf16.gmra.mrb[0].mxu0 %v1211
        %v1902 = vpop.f32.mrb[0].mxu0
        %v1903 = vadd.f32 0.0, %v1902
        %v1904 = vpop.f32.mrb[0].mxu0
        %v1905 = vadd.f32 0.0, %v1904
        %v1906 = vpop.f32.mrb[0].mxu0
        %v1907 = vadd.f32 0.0, %v1906
        %v1908 = vpop.f32.mrb[0].mxu0
        %v1909 = vadd.f32 0.0, %v1908
        %1910 = vmatprep.mubr.bf16.mxu0 %v1214
        %1911 = vmatmul.mubr.bf16.gmra.mrb[0].mxu0 %v1213
        %v1912 = vpop.f32.mrb[0].mxu0
        %v1913 = vadd.f32 0.0, %v1912
        %v1914 = vpop.f32.mrb[0].mxu0
        %v1915 = vadd.f32 0.0, %v1914
        %v1916 = vpop.f32.mrb[0].mxu0
        %v1917 = vadd.f32 0.0, %v1916
        %v1918 = vpop.f32.mrb[0].mxu0
        %v1919 = vadd.f32 0.0, %v1918
        %1920 = vmatprep.mubr.bf16.mxu0 %v1216
        %1921 = vmatmul.mubr.bf16.gmra.mrb[0].mxu0 %v1215
        %v1922 = vpop.f32.mrb[0].mxu0
        %v1923 = vadd.f32 0.0, %v1922
        %v1924 = vpop.f32.mrb[0].mxu0
        %v1925 = vadd.f32 0.0, %v1924
        %v1926 = vpop.f32.mrb[0].mxu0
        %v1927 = vadd.f32 0.0, %v1926
        %v1928 = vpop.f32.mrb[0].mxu0
        %v1929 = vadd.f32 0.0, %v1928
        %1930 = vmatprep.mubr.bf16.mxu0 %v1218
        %1931 = vmatmul.mubr.bf16.gmra.mrb[0].mxu0 %v1217
        %v1932 = vpop.f32.mrb[0].mxu0
        %v1933 = vadd.f32 0.0, %v1932
        %v1934 = vpop.f32.mrb[0].mxu0
        %v1935 = vadd.f32 0.0, %v1934
        %v1936 = vpop.f32.mrb[0].mxu0
        %v1937 = vadd.f32 0.0, %v1936
        %v1938 = vpop.f32.mrb[0].mxu0
        %v1939 = vadd.f32 0.0, %v1938
        %1940 = vmatprep.mubr.bf16.mxu0 %v1220
        %1941 = vmatmul.mubr.bf16.gmra.mrb[0].mxu0 %v1219
        %v1942 = vpop.f32.mrb[0].mxu0
        %v1943 = vadd.f32 0.0, %v1942
        %v1944 = vpop.f32.mrb[0].mxu0
        %v1945 = vadd.f32 0.0, %v1944
        %v1946 = vpop.f32.mrb[0].mxu0
        %v1947 = vadd.f32 0.0, %v1946
        %v1948 = vpop.f32.mrb[0].mxu0
        %v1949 = vadd.f32 0.0, %v1948
        %1950 = vmatprep.mubr.bf16.mxu0 %v1222
        %1951 = vmatmul.mubr.bf16.gmra.mrb[0].mxu0 %v1221
        %v1952 = vpop.f32.mrb[0].mxu0
        %v1953 = vadd.f32 0.0, %v1952
        %v1954 = vpop.f32.mrb[0].mxu0
        %v1955 = vadd.f32 0.0, %v1954
        %v1956 = vpop.f32.mrb[0].mxu0
        %v1957 = vadd.f32 0.0, %v1956
        %v1958 = vpop.f32.mrb[0].mxu0
        %v1959 = vadd.f32 0.0, %v1958
        %1960 = vmatprep.mubr.bf16.mxu0 %v1224
        %1961 = vmatmul.mubr.bf16.gmra.mrb[0].mxu0 %v1223
        %v1962 = vpop.f32.mrb[0].mxu0
        %v1963 = vadd.f32 0.0, %v1962
        %v1964 = vpop.f32.mrb[0].mxu0
        %v1965 = vadd.f32 0.0, %v1964
        %v1966 = vpop.f32.mrb[0].mxu0
        %v1967 = vadd.f32 0.0, %v1966
        %v1968 = vpop.f32.mrb[0].mxu0
        %v1969 = vadd.f32 0.0, %v1968
        %1970 = vmatprep.mubr.bf16.mxu0 %v1226
        %1971 = vmatmul.mubr.bf16.gmra.mrb[0].mxu0 %v1225
        %v1972 = vpop.f32.mrb[0].mxu0
        %v1973 = vadd.f32 0.0, %v1972
        %v1974 = vpop.f32.mrb[0].mxu0
        %v1975 = vadd.f32 0.0, %v1974
        %v1976 = vpop.f32.mrb[0].mxu0
        %v1977 = vadd.f32 0.0, %v1976
        %v1978 = vpop.f32.mrb[0].mxu0
        %v1979 = vadd.f32 0.0, %v1978
        %1980 = vmatprep.mubr.bf16.mxu0 %v1228
        %1981 = vmatmul.mubr.bf16.gmra.mrb[0].mxu0 %v1227
        %v1982 = vpop.f32.mrb[0].mxu0
        %v1983 = vadd.f32 0.0, %v1982
        %v1984 = vpop.f32.mrb[0].mxu0
        %v1985 = vadd.f32 0.0, %v1984
        %v1986 = vpop.f32.mrb[0].mxu0
        %v1987 = vadd.f32 0.0, %v1986
        %v1988 = vpop.f32.mrb[0].mxu0
        %v1989 = vadd.f32 0.0, %v1988
        %1990 = vmatprep.mubr.bf16.mxu0 %v1230
        %1991 = vmatmul.mubr.bf16.gmra.mrb[0].mxu0 %v1229
        %v1992 = vpop.f32.mrb[0].mxu0
        %v1993 = vadd.f32 0.0, %v1992
        %v1994 = vpop.f32.mrb[0].mxu0
        %v1995 = vadd.f32 0.0, %v1994
        %v1996 = vpop.f32.mrb[0].mxu0
        %v1997 = vadd.f32 0.0, %v1996
        %v1998 = vpop.f32.mrb[0].mxu0
        %v1999 = vadd.f32 0.0, %v1998
        %2000 = vdwg.mxu0
        %v2001 = vpack.c.bf16 %v1334, %v1330
        %v2002 = vpack.c.bf16 %v1336, %v1332
        %v2003 = vpack.c.bf16 %v1687, %v1683
        %v2004 = vpack.c.bf16 %v1689, %v1685
        %v2005 = vpack.c.bf16 %v1344, %v1340
        %v2006 = vpack.c.bf16 %v1346, %v1342
        %v2007 = vpack.c.bf16 %v1697, %v1693
        %v2008 = vpack.c.bf16 %v1699, %v1695
        %v2009 = vpack.c.bf16 %v1354, %v1350
        %v2010 = vpack.c.bf16 %v1356, %v1352
        %v2011 = vpack.c.bf16 %v1707, %v1703
        %v2012 = vpack.c.bf16 %v1709, %v1705
        %v2013 = vpack.c.bf16 %v1364, %v1360
        %v2014 = vpack.c.bf16 %v1366, %v1362
        %v2015 = vpack.c.bf16 %v1717, %v1713
        %v2016 = vpack.c.bf16 %v1719, %v1715
        %v2017 = vpack.c.bf16 %v1374, %v1370
        %v2018 = vpack.c.bf16 %v1376, %v1372
        %v2019 = vpack.c.bf16 %v1727, %v1723
        %v2020 = vpack.c.bf16 %v1729, %v1725
        %v2021 = vpack.c.bf16 %v1384, %v1380
        %v2022 = vpack.c.bf16 %v1386, %v1382
        %v2023 = vpack.c.bf16 %v1737, %v1733
        %v2024 = vpack.c.bf16 %v1739, %v1735
        %v2025 = vpack.c.bf16 %v1394, %v1390
        %v2026 = vpack.c.bf16 %v1396, %v1392
        %v2027 = vpack.c.bf16 %v1747, %v1743
        %v2028 = vpack.c.bf16 %v1749, %v1745
        %v2029 = vpack.c.bf16 %v1404, %v1400
        %v2030 = vpack.c.bf16 %v1406, %v1402
        %v2031 = vpack.c.bf16 %v1757, %v1753
        %v2032 = vpack.c.bf16 %v1759, %v1755
        %v2033 = vpack.c.bf16 %v1414, %v1410
        %v2034 = vpack.c.bf16 %v1416, %v1412
        %v2035 = vpack.c.bf16 %v1767, %v1763
        %v2036 = vpack.c.bf16 %v1769, %v1765
        %v2037 = vpack.c.bf16 %v1424, %v1420
        %v2038 = vpack.c.bf16 %v1426, %v1422
        %v2039 = vpack.c.bf16 %v1777, %v1773
        %v2040 = vpack.c.bf16 %v1779, %v1775
        %v2041 = vpack.c.bf16 %v1434, %v1430
        %v2042 = vpack.c.bf16 %v1436, %v1432
        %v2043 = vpack.c.bf16 %v1787, %v1783
        %v2044 = vpack.c.bf16 %v1789, %v1785
        %v2045 = vpack.c.bf16 %v1444, %v1440
        %v2046 = vpack.c.bf16 %v1446, %v1442
        %v2047 = vpack.c.bf16 %v1797, %v1793
        %v2048 = vpack.c.bf16 %v1799, %v1795
        %v2049 = vpack.c.bf16 %v1454, %v1450
        %v2050 = vpack.c.bf16 %v1456, %v1452
        %v2051 = vpack.c.bf16 %v1807, %v1803
        %v2052 = vpack.c.bf16 %v1809, %v1805
        %v2053 = vpack.c.bf16 %v1464, %v1460
        %v2054 = vpack.c.bf16 %v1466, %v1462
        %v2055 = vpack.c.bf16 %v1817, %v1813
        %v2056 = vpack.c.bf16 %v1819, %v1815
        %v2057 = vpack.c.bf16 %v1474, %v1470
        %v2058 = vpack.c.bf16 %v1476, %v1472
        %v2059 = vpack.c.bf16 %v1827, %v1823
        %v2060 = vpack.c.bf16 %v1829, %v1825
        %v2061 = vpack.c.bf16 %v1484, %v1480
        %v2062 = vpack.c.bf16 %v1486, %v1482
        %v2063 = vpack.c.bf16 %v1837, %v1833
        %v2064 = vpack.c.bf16 %v1839, %v1835
        %v2065 = vpack.c.bf16 %v1494, %v1490
        %v2066 = vpack.c.bf16 %v1496, %v1492
        %v2067 = vpack.c.bf16 %v1847, %v1843
        %v2068 = vpack.c.bf16 %v1849, %v1845
        %v2069 = vpack.c.bf16 %v1504, %v1500
        %v2070 = vpack.c.bf16 %v1506, %v1502
        %v2071 = vpack.c.bf16 %v1857, %v1853
        %v2072 = vpack.c.bf16 %v1859, %v1855
        %v2073 = vpack.c.bf16 %v1514, %v1510
        %v2074 = vpack.c.bf16 %v1516, %v1512
        %v2075 = vpack.c.bf16 %v1867, %v1863
        %v2076 = vpack.c.bf16 %v1869, %v1865
        %v2077 = vpack.c.bf16 %v1524, %v1520
        %v2078 = vpack.c.bf16 %v1526, %v1522
        %v2079 = vpack.c.bf16 %v1877, %v1873
        %v2080 = vpack.c.bf16 %v1879, %v1875
        %v2081 = vpack.c.bf16 %v1534, %v1530
        %v2082 = vpack.c.bf16 %v1536, %v1532
        %v2083 = vpack.c.bf16 %v1887, %v1883
        %v2084 = vpack.c.bf16 %v1889, %v1885
        %v2085 = vpack.c.bf16 %v1544, %v1540
        %v2086 = vpack.c.bf16 %v1546, %v1542
        %v2087 = vpack.c.bf16 %v1897, %v1893
        %v2088 = vpack.c.bf16 %v1899, %v1895
        %v2089 = vpack.c.bf16 %v1554, %v1550
        %v2090 = vpack.c.bf16 %v1556, %v1552
        %v2091 = vpack.c.bf16 %v1907, %v1903
        %v2092 = vpack.c.bf16 %v1909, %v1905
        %v2093 = vpack.c.bf16 %v1564, %v1560
        %v2094 = vpack.c.bf16 %v1566, %v1562
        %v2095 = vpack.c.bf16 %v1917, %v1913
        %v2096 = vpack.c.bf16 %v1919, %v1915
        %v2097 = vpack.c.bf16 %v1574, %v1570
        %v2098 = vpack.c.bf16 %v1576, %v1572
        %v2099 = vpack.c.bf16 %v1927, %v1923
        %v2100 = vpack.c.bf16 %v1929, %v1925
        %v2101 = vpack.c.bf16 %v1584, %v1580
        %v2102 = vpack.c.bf16 %v1586, %v1582
        %v2103 = vpack.c.bf16 %v1937, %v1933
        %v2104 = vpack.c.bf16 %v1939, %v1935
        %v2105 = vpack.c.bf16 %v1594, %v1590
        %v2106 = vpack.c.bf16 %v1596, %v1592
        %v2107 = vpack.c.bf16 %v1947, %v1943
        %v2108 = vpack.c.bf16 %v1949, %v1945
        %v2109 = vpack.c.bf16 %v1604, %v1600
        %v2110 = vpack.c.bf16 %v1606, %v1602
        %v2111 = vpack.c.bf16 %v1957, %v1953
        %v2112 = vpack.c.bf16 %v1959, %v1955
        %v2113 = vpack.c.bf16 %v1614, %v1610
        %v2114 = vpack.c.bf16 %v1616, %v1612
        %v2115 = vpack.c.bf16 %v1967, %v1963
        %v2116 = vpack.c.bf16 %v1969, %v1965
        %v2117 = vpack.c.bf16 %v1624, %v1620
        %v2118 = vpack.c.bf16 %v1626, %v1622
        %v2119 = vpack.c.bf16 %v1977, %v1973
        %v2120 = vpack.c.bf16 %v1979, %v1975
        %v2121 = vpack.c.bf16 %v1634, %v1630
        %v2122 = vpack.c.bf16 %v1636, %v1632
        %v2123 = vpack.c.bf16 %v1987, %v1983
        %v2124 = vpack.c.bf16 %v1989, %v1985
        %v2125 = vpack.c.bf16 %v1644, %v1640
        %v2126 = vpack.c.bf16 %v1646, %v1642
        %v2127 = vpack.c.bf16 %v1997, %v1993
        %v2128 = vpack.c.bf16 %v1999, %v1995
        %v2257 = vunpack.c.l.b16 %v463
        %v2258 = vunpack.c.h.b16 %v463
        %v2259 = vunpack.c.l.b16 %v464
        %v2260 = vunpack.c.h.b16 %v464
        %v2261 = vunpack.c.l.b16 %v465
        %v2262 = vunpack.c.h.b16 %v465
        %v2263 = vunpack.c.l.b16 %v466
        %v2264 = vunpack.c.h.b16 %v466
        %v2265 = vunpack.c.l.b16 %v467
        %v2266 = vunpack.c.h.b16 %v467
        %v2267 = vunpack.c.l.b16 %v468
        %v2268 = vunpack.c.h.b16 %v468
        %v2269 = vunpack.c.l.b16 %v469
        %v2270 = vunpack.c.h.b16 %v469
        %v2271 = vunpack.c.l.b16 %v470
        %v2272 = vunpack.c.h.b16 %v470
        %v2273 = vunpack.c.l.b16 %v471
        %v2274 = vunpack.c.h.b16 %v471
        %v2275 = vunpack.c.l.b16 %v472
        %v2276 = vunpack.c.h.b16 %v472
        %v2277 = vunpack.c.l.b16 %v473
        %v2278 = vunpack.c.h.b16 %v473
        %v2279 = vunpack.c.l.b16 %v474
        %v2280 = vunpack.c.h.b16 %v474
        %v2281 = vunpack.c.l.b16 %v475
        %v2282 = vunpack.c.h.b16 %v475
        %v2283 = vunpack.c.l.b16 %v476
        %v2284 = vunpack.c.h.b16 %v476
        %v2285 = vunpack.c.l.b16 %v477
        %v2286 = vunpack.c.h.b16 %v477
        %v2287 = vunpack.c.l.b16 %v478
        %v2288 = vunpack.c.h.b16 %v478
        %v2289 = vunpack.c.l.b16 %v479
        %v2290 = vunpack.c.h.b16 %v479
        %v2291 = vunpack.c.l.b16 %v480
        %v2292 = vunpack.c.h.b16 %v480
        %v2293 = vunpack.c.l.b16 %v481
        %v2294 = vunpack.c.h.b16 %v481
        %v2295 = vunpack.c.l.b16 %v482
        %v2296 = vunpack.c.h.b16 %v482
        %v2297 = vunpack.c.l.b16 %v483
        %v2298 = vunpack.c.h.b16 %v483
        %v2299 = vunpack.c.l.b16 %v484
        %v2300 = vunpack.c.h.b16 %v484
        %v2301 = vunpack.c.l.b16 %v485
        %v2302 = vunpack.c.h.b16 %v485
        %v2303 = vunpack.c.l.b16 %v486
        %v2304 = vunpack.c.h.b16 %v486
        %v2305 = vunpack.c.l.b16 %v487
        %v2306 = vunpack.c.h.b16 %v487
        %v2307 = vunpack.c.l.b16 %v488
        %v2308 = vunpack.c.h.b16 %v488
        %v2309 = vunpack.c.l.b16 %v489
        %v2310 = vunpack.c.h.b16 %v489
        %v2311 = vunpack.c.l.b16 %v490
        %v2312 = vunpack.c.h.b16 %v490
        %v2313 = vunpack.c.l.b16 %v491
        %v2314 = vunpack.c.h.b16 %v491
        %v2315 = vunpack.c.l.b16 %v492
        %v2316 = vunpack.c.h.b16 %v492
        %v2317 = vunpack.c.l.b16 %v493
        %v2318 = vunpack.c.h.b16 %v493
        %v2319 = vunpack.c.l.b16 %v494
        %v2320 = vunpack.c.h.b16 %v494
        %v2321 = vunpack.c.l.b16 %v495
        %v2322 = vunpack.c.h.b16 %v495
        %v2323 = vunpack.c.l.b16 %v496
        %v2324 = vunpack.c.h.b16 %v496
        %v2325 = vunpack.c.l.b16 %v497
        %v2326 = vunpack.c.h.b16 %v497
        %v2327 = vunpack.c.l.b16 %v498
        %v2328 = vunpack.c.h.b16 %v498
        %v2329 = vunpack.c.l.b16 %v499
        %v2330 = vunpack.c.h.b16 %v499
        %v2331 = vunpack.c.l.b16 %v500
        %v2332 = vunpack.c.h.b16 %v500
        %v2333 = vunpack.c.l.b16 %v501
        %v2334 = vunpack.c.h.b16 %v501
        %v2335 = vunpack.c.l.b16 %v502
        %v2336 = vunpack.c.h.b16 %v502
        %v2337 = vunpack.c.l.b16 %v503
        %v2338 = vunpack.c.h.b16 %v503
        %v2339 = vunpack.c.l.b16 %v504
        %v2340 = vunpack.c.h.b16 %v504
        %v2341 = vunpack.c.l.b16 %v505
        %v2342 = vunpack.c.h.b16 %v505
        %v2343 = vunpack.c.l.b16 %v506
        %v2344 = vunpack.c.h.b16 %v506
        %v2345 = vunpack.c.l.b16 %v507
        %v2346 = vunpack.c.h.b16 %v507
        %v2347 = vunpack.c.l.b16 %v508
        %v2348 = vunpack.c.h.b16 %v508
        %v2349 = vunpack.c.l.b16 %v509
        %v2350 = vunpack.c.h.b16 %v509
        %v2351 = vunpack.c.l.b16 %v510
        %v2352 = vunpack.c.h.b16 %v510
        %v2353 = vunpack.c.l.b16 %v511
        %v2354 = vunpack.c.h.b16 %v511
        %v2355 = vunpack.c.l.b16 %v512
        %v2356 = vunpack.c.h.b16 %v512
        %v2357 = vunpack.c.l.b16 %v513
        %v2358 = vunpack.c.h.b16 %v513
        %v2359 = vunpack.c.l.b16 %v514
        %v2360 = vunpack.c.h.b16 %v514
        %v2361 = vunpack.c.l.b16 %v515
        %v2362 = vunpack.c.h.b16 %v515
        %v2363 = vunpack.c.l.b16 %v516
        %v2364 = vunpack.c.h.b16 %v516
        %v2365 = vunpack.c.l.b16 %v517
        %v2366 = vunpack.c.h.b16 %v517
        %v2367 = vunpack.c.l.b16 %v518
        %v2368 = vunpack.c.h.b16 %v518
        %v2369 = vunpack.c.l.b16 %v519
        %v2370 = vunpack.c.h.b16 %v519
        %v2371 = vunpack.c.l.b16 %v520
        %v2372 = vunpack.c.h.b16 %v520
        %v2373 = vunpack.c.l.b16 %v521
        %v2374 = vunpack.c.h.b16 %v521
        %v2375 = vunpack.c.l.b16 %v522
        %v2376 = vunpack.c.h.b16 %v522
        %v2377 = vunpack.c.l.b16 %v523
        %v2378 = vunpack.c.h.b16 %v523
        %v2379 = vunpack.c.l.b16 %v524
        %v2380 = vunpack.c.h.b16 %v524
        %v2381 = vunpack.c.l.b16 %v525
        %v2382 = vunpack.c.h.b16 %v525
        %v2383 = vunpack.c.l.b16 %v526
        %v2384 = vunpack.c.h.b16 %v526
        %v2385 = vunpack.c.l.b16 %v527
        %v2386 = vunpack.c.h.b16 %v527
        %v2387 = vunpack.c.l.b16 %v528
        %v2388 = vunpack.c.h.b16 %v528
        %v2389 = vunpack.c.l.b16 %v529
        %v2390 = vunpack.c.h.b16 %v529
        %v2391 = vunpack.c.l.b16 %v530
        %v2392 = vunpack.c.h.b16 %v530
        %v2393 = vunpack.c.l.b16 %v531
        %v2394 = vunpack.c.h.b16 %v531
        %v2395 = vunpack.c.l.b16 %v532
        %v2396 = vunpack.c.h.b16 %v532
        %v2397 = vunpack.c.l.b16 %v533
        %v2398 = vunpack.c.h.b16 %v533
        %v2399 = vunpack.c.l.b16 %v534
        %v2400 = vunpack.c.h.b16 %v534
        %v2401 = vunpack.c.l.b16 %v535
        %v2402 = vunpack.c.h.b16 %v535
        %v2403 = vunpack.c.l.b16 %v536
        %v2404 = vunpack.c.h.b16 %v536
        %v2405 = vunpack.c.l.b16 %v537
        %v2406 = vunpack.c.h.b16 %v537
        %v2407 = vunpack.c.l.b16 %v538
        %v2408 = vunpack.c.h.b16 %v538
        %v2409 = vunpack.c.l.b16 %v539
        %v2410 = vunpack.c.h.b16 %v539
        %v2411 = vunpack.c.l.b16 %v540
        %v2412 = vunpack.c.h.b16 %v540
        %v2413 = vunpack.c.l.b16 %v541
        %v2414 = vunpack.c.h.b16 %v541
        %v2415 = vunpack.c.l.b16 %v542
        %v2416 = vunpack.c.h.b16 %v542
        %v2417 = vunpack.c.l.b16 %v543
        %v2418 = vunpack.c.h.b16 %v543
        %v2419 = vunpack.c.l.b16 %v544
        %v2420 = vunpack.c.h.b16 %v544
        %v2421 = vunpack.c.l.b16 %v545
        %v2422 = vunpack.c.h.b16 %v545
        %v2423 = vunpack.c.l.b16 %v546
        %v2424 = vunpack.c.h.b16 %v546
        %v2425 = vunpack.c.l.b16 %v547
        %v2426 = vunpack.c.h.b16 %v547
        %v2427 = vunpack.c.l.b16 %v548
        %v2428 = vunpack.c.h.b16 %v548
        %v2429 = vunpack.c.l.b16 %v549
        %v2430 = vunpack.c.h.b16 %v549
        %v2431 = vunpack.c.l.b16 %v550
        %v2432 = vunpack.c.h.b16 %v550
        %v2433 = vunpack.c.l.b16 %v551
        %v2434 = vunpack.c.h.b16 %v551
        %v2435 = vunpack.c.l.b16 %v552
        %v2436 = vunpack.c.h.b16 %v552
        %v2437 = vunpack.c.l.b16 %v553
        %v2438 = vunpack.c.h.b16 %v553
        %v2439 = vunpack.c.l.b16 %v554
        %v2440 = vunpack.c.h.b16 %v554
        %v2441 = vunpack.c.l.b16 %v555
        %v2442 = vunpack.c.h.b16 %v555
        %v2443 = vunpack.c.l.b16 %v556
        %v2444 = vunpack.c.h.b16 %v556
        %v2445 = vunpack.c.l.b16 %v557
        %v2446 = vunpack.c.h.b16 %v557
        %v2447 = vunpack.c.l.b16 %v558
        %v2448 = vunpack.c.h.b16 %v558
        %v2449 = vunpack.c.l.b16 %v559
        %v2450 = vunpack.c.h.b16 %v559
        %v2451 = vunpack.c.l.b16 %v560
        %v2452 = vunpack.c.h.b16 %v560
        %v2453 = vunpack.c.l.b16 %v561
        %v2454 = vunpack.c.h.b16 %v561
        %v2455 = vunpack.c.l.b16 %v562
        %v2456 = vunpack.c.h.b16 %v562
        %v2457 = vunpack.c.l.b16 %v563
        %v2458 = vunpack.c.h.b16 %v563
        %v2459 = vunpack.c.l.b16 %v564
        %v2460 = vunpack.c.h.b16 %v564
        %v2461 = vunpack.c.l.b16 %v565
        %v2462 = vunpack.c.h.b16 %v565
        %v2463 = vunpack.c.l.b16 %v566
        %v2464 = vunpack.c.h.b16 %v566
        %v2465 = vunpack.c.l.b16 %v567
        %v2466 = vunpack.c.h.b16 %v567
        %v2467 = vunpack.c.l.b16 %v568
        %v2468 = vunpack.c.h.b16 %v568
        %v2469 = vunpack.c.l.b16 %v569
        %v2470 = vunpack.c.h.b16 %v569
        %v2471 = vunpack.c.l.b16 %v570
        %v2472 = vunpack.c.h.b16 %v570
        %v2473 = vunpack.c.l.b16 %v571
        %v2474 = vunpack.c.h.b16 %v571
        %v2475 = vunpack.c.l.b16 %v572
        %v2476 = vunpack.c.h.b16 %v572
        %v2477 = vunpack.c.l.b16 %v573
        %v2478 = vunpack.c.h.b16 %v573
        %v2479 = vunpack.c.l.b16 %v574
        %v2480 = vunpack.c.h.b16 %v574
        %v2481 = vunpack.c.l.b16 %v575
        %v2482 = vunpack.c.h.b16 %v575
        %v2483 = vunpack.c.l.b16 %v576
        %v2484 = vunpack.c.h.b16 %v576
        %v2485 = vunpack.c.l.b16 %v577
        %v2486 = vunpack.c.h.b16 %v577
        %v2487 = vunpack.c.l.b16 %v578
        %v2488 = vunpack.c.h.b16 %v578
        %v2489 = vunpack.c.l.b16 %v579
        %v2490 = vunpack.c.h.b16 %v579
        %v2491 = vunpack.c.l.b16 %v580
        %v2492 = vunpack.c.h.b16 %v580
        %v2493 = vunpack.c.l.b16 %v581
        %v2494 = vunpack.c.h.b16 %v581
        %v2495 = vunpack.c.l.b16 %v582
        %v2496 = vunpack.c.h.b16 %v582
        %v2497 = vunpack.c.l.b16 %v583
        %v2498 = vunpack.c.h.b16 %v583
        %v2499 = vunpack.c.l.b16 %v584
        %v2500 = vunpack.c.h.b16 %v584
        %v2501 = vunpack.c.l.b16 %v585
        %v2502 = vunpack.c.h.b16 %v585
        %v2503 = vunpack.c.l.b16 %v586
        %v2504 = vunpack.c.h.b16 %v586
        %v2505 = vunpack.c.l.b16 %v587
        %v2506 = vunpack.c.h.b16 %v587
        %v2507 = vunpack.c.l.b16 %v588
        %v2508 = vunpack.c.h.b16 %v588
        %v2509 = vunpack.c.l.b16 %v589
        %v2510 = vunpack.c.h.b16 %v589
        %v2511 = vunpack.c.l.b16 %v590
        %v2512 = vunpack.c.h.b16 %v590
        %v2513 = vpack.c.b16 %v2261, %v2257
        %v2514 = vpack.c.b16 %v2262, %v2258
        %v2515 = vpack.c.b16 %v2263, %v2259
        %v2516 = vpack.c.b16 %v2264, %v2260
        %v2517 = vpack.c.b16 %v2269, %v2265
        %v2518 = vpack.c.b16 %v2270, %v2266
        %v2519 = vpack.c.b16 %v2271, %v2267
        %v2520 = vpack.c.b16 %v2272, %v2268
        %v2521 = vpack.c.b16 %v2277, %v2273
        %v2522 = vpack.c.b16 %v2278, %v2274
        %v2523 = vpack.c.b16 %v2279, %v2275
        %v2524 = vpack.c.b16 %v2280, %v2276
        %v2525 = vpack.c.b16 %v2285, %v2281
        %v2526 = vpack.c.b16 %v2286, %v2282
        %v2527 = vpack.c.b16 %v2287, %v2283
        %v2528 = vpack.c.b16 %v2288, %v2284
        %v2529 = vpack.c.b16 %v2293, %v2289
        %v2530 = vpack.c.b16 %v2294, %v2290
        %v2531 = vpack.c.b16 %v2295, %v2291
        %v2532 = vpack.c.b16 %v2296, %v2292
        %v2533 = vpack.c.b16 %v2301, %v2297
        %v2534 = vpack.c.b16 %v2302, %v2298
        %v2535 = vpack.c.b16 %v2303, %v2299
        %v2536 = vpack.c.b16 %v2304, %v2300
        %v2537 = vpack.c.b16 %v2309, %v2305
        %v2538 = vpack.c.b16 %v2310, %v2306
        %v2539 = vpack.c.b16 %v2311, %v2307
        %v2540 = vpack.c.b16 %v2312, %v2308
        %v2541 = vpack.c.b16 %v2317, %v2313
        %v2542 = vpack.c.b16 %v2318, %v2314
        %v2543 = vpack.c.b16 %v2319, %v2315
        %v2544 = vpack.c.b16 %v2320, %v2316
        %v2545 = vpack.c.b16 %v2325, %v2321
        %v2546 = vpack.c.b16 %v2326, %v2322
        %v2547 = vpack.c.b16 %v2327, %v2323
        %v2548 = vpack.c.b16 %v2328, %v2324
        %v2549 = vpack.c.b16 %v2333, %v2329
        %v2550 = vpack.c.b16 %v2334, %v2330
        %v2551 = vpack.c.b16 %v2335, %v2331
        %v2552 = vpack.c.b16 %v2336, %v2332
        %v2553 = vpack.c.b16 %v2341, %v2337
        %v2554 = vpack.c.b16 %v2342, %v2338
        %v2555 = vpack.c.b16 %v2343, %v2339
        %v2556 = vpack.c.b16 %v2344, %v2340
        %v2557 = vpack.c.b16 %v2349, %v2345
        %v2558 = vpack.c.b16 %v2350, %v2346
        %v2559 = vpack.c.b16 %v2351, %v2347
        %v2560 = vpack.c.b16 %v2352, %v2348
        %v2561 = vpack.c.b16 %v2357, %v2353
        %v2562 = vpack.c.b16 %v2358, %v2354
        %v2563 = vpack.c.b16 %v2359, %v2355
        %v2564 = vpack.c.b16 %v2360, %v2356
        %v2565 = vpack.c.b16 %v2365, %v2361
        %v2566 = vpack.c.b16 %v2366, %v2362
        %v2567 = vpack.c.b16 %v2367, %v2363
        %v2568 = vpack.c.b16 %v2368, %v2364
        %v2569 = vpack.c.b16 %v2373, %v2369
        %v2570 = vpack.c.b16 %v2374, %v2370
        %v2571 = vpack.c.b16 %v2375, %v2371
        %v2572 = vpack.c.b16 %v2376, %v2372
        %v2573 = vpack.c.b16 %v2381, %v2377
        %v2574 = vpack.c.b16 %v2382, %v2378
        %v2575 = vpack.c.b16 %v2383, %v2379
        %v2576 = vpack.c.b16 %v2384, %v2380
        %v2577 = vpack.c.b16 %v2389, %v2385
        %v2578 = vpack.c.b16 %v2390, %v2386
        %v2579 = vpack.c.b16 %v2391, %v2387
        %v2580 = vpack.c.b16 %v2392, %v2388
        %v2581 = vpack.c.b16 %v2397, %v2393
        %v2582 = vpack.c.b16 %v2398, %v2394
        %v2583 = vpack.c.b16 %v2399, %v2395
        %v2584 = vpack.c.b16 %v2400, %v2396
        %v2585 = vpack.c.b16 %v2405, %v2401
        %v2586 = vpack.c.b16 %v2406, %v2402
        %v2587 = vpack.c.b16 %v2407, %v2403
        %v2588 = vpack.c.b16 %v2408, %v2404
        %v2589 = vpack.c.b16 %v2413, %v2409
        %v2590 = vpack.c.b16 %v2414, %v2410
        %v2591 = vpack.c.b16 %v2415, %v2411
        %v2592 = vpack.c.b16 %v2416, %v2412
        %v2593 = vpack.c.b16 %v2421, %v2417
        %v2594 = vpack.c.b16 %v2422, %v2418
        %v2595 = vpack.c.b16 %v2423, %v2419
        %v2596 = vpack.c.b16 %v2424, %v2420
        %v2597 = vpack.c.b16 %v2429, %v2425
        %v2598 = vpack.c.b16 %v2430, %v2426
        %v2599 = vpack.c.b16 %v2431, %v2427
        %v2600 = vpack.c.b16 %v2432, %v2428
        %v2601 = vpack.c.b16 %v2437, %v2433
        %v2602 = vpack.c.b16 %v2438, %v2434
        %v2603 = vpack.c.b16 %v2439, %v2435
        %v2604 = vpack.c.b16 %v2440, %v2436
        %v2605 = vpack.c.b16 %v2445, %v2441
        %v2606 = vpack.c.b16 %v2446, %v2442
        %v2607 = vpack.c.b16 %v2447, %v2443
        %v2608 = vpack.c.b16 %v2448, %v2444
        %v2609 = vpack.c.b16 %v2453, %v2449
        %v2610 = vpack.c.b16 %v2454, %v2450
        %v2611 = vpack.c.b16 %v2455, %v2451
        %v2612 = vpack.c.b16 %v2456, %v2452
        %v2613 = vpack.c.b16 %v2461, %v2457
        %v2614 = vpack.c.b16 %v2462, %v2458
        %v2615 = vpack.c.b16 %v2463, %v2459
        %v2616 = vpack.c.b16 %v2464, %v2460
        %v2617 = vpack.c.b16 %v2469, %v2465
        %v2618 = vpack.c.b16 %v2470, %v2466
        %v2619 = vpack.c.b16 %v2471, %v2467
        %v2620 = vpack.c.b16 %v2472, %v2468
        %v2621 = vpack.c.b16 %v2477, %v2473
        %v2622 = vpack.c.b16 %v2478, %v2474
        %v2623 = vpack.c.b16 %v2479, %v2475
        %v2624 = vpack.c.b16 %v2480, %v2476
        %v2625 = vpack.c.b16 %v2485, %v2481
        %v2626 = vpack.c.b16 %v2486, %v2482
        %v2627 = vpack.c.b16 %v2487, %v2483
        %v2628 = vpack.c.b16 %v2488, %v2484
        %v2629 = vpack.c.b16 %v2493, %v2489
        %v2630 = vpack.c.b16 %v2494, %v2490
        %v2631 = vpack.c.b16 %v2495, %v2491
        %v2632 = vpack.c.b16 %v2496, %v2492
        %v2633 = vpack.c.b16 %v2501, %v2497
        %v2634 = vpack.c.b16 %v2502, %v2498
        %v2635 = vpack.c.b16 %v2503, %v2499
        %v2636 = vpack.c.b16 %v2504, %v2500
        %v2637 = vpack.c.b16 %v2509, %v2505
        %v2638 = vpack.c.b16 %v2510, %v2506
        %v2639 = vpack.c.b16 %v2511, %v2507
        %v2640 = vpack.c.b16 %v2512, %v2508
        %2769 = vmatprep.subr.bf16.mxu0 %v2514
        %2770 = vmatpush1.bf16.msra.mxu0 %v2513
        %2771 = vmatprep.subr.bf16.mxu0 %v2518
        %2772 = vmatpush1.bf16.msra.mxu0 %v2517
        %2773 = vmatprep.subr.bf16.mxu0 %v2522
        %2774 = vmatpush1.bf16.msra.mxu0 %v2521
        %2775 = vmatprep.subr.bf16.mxu0 %v2526
        %2776 = vmatpush1.bf16.msra.mxu0 %v2525
        %2777 = vmatprep.subr.bf16.mxu0 %v2530
        %2778 = vmatpush1.bf16.msra.mxu0 %v2529
        %2779 = vmatprep.subr.bf16.mxu0 %v2534
        %2780 = vmatpush1.bf16.msra.mxu0 %v2533
        %2781 = vmatprep.subr.bf16.mxu0 %v2538
        %2782 = vmatpush1.bf16.msra.mxu0 %v2537
        %2783 = vmatprep.subr.bf16.mxu0 %v2542
        %2784 = vmatpush1.bf16.msra.mxu0 %v2541
        %2785 = vmatprep.subr.bf16.mxu0 %v2546
        %2786 = vmatpush1.bf16.msra.mxu0 %v2545
        %2787 = vmatprep.subr.bf16.mxu0 %v2550
        %2788 = vmatpush1.bf16.msra.mxu0 %v2549
        %2789 = vmatprep.subr.bf16.mxu0 %v2554
        %2790 = vmatpush1.bf16.msra.mxu0 %v2553
        %2791 = vmatprep.subr.bf16.mxu0 %v2558
        %2792 = vmatpush1.bf16.msra.mxu0 %v2557
        %2793 = vmatprep.subr.bf16.mxu0 %v2562
        %2794 = vmatpush1.bf16.msra.mxu0 %v2561
        %2795 = vmatprep.subr.bf16.mxu0 %v2566
        %2796 = vmatpush1.bf16.msra.mxu0 %v2565
        %2797 = vmatprep.subr.bf16.mxu0 %v2570
        %2798 = vmatpush1.bf16.msra.mxu0 %v2569
        %2799 = vmatprep.subr.bf16.mxu0 %v2574
        %2800 = vmatpush1.bf16.msra.mxu0 %v2573
        %2801 = vmatprep.mubr.bf16.mxu0 %v2002
        %2802 = vmatmul.mubr.bf16.gmra.mrb[0].mxu0 %v2001
        %v2803 = vpop.f32.mrb[0].mxu0
        %v2804 = vadd.f32 0.0, %v2803
        %v2805 = vpop.f32.mrb[0].mxu0
        %v2806 = vadd.f32 0.0, %v2805
        %v2807 = vpop.f32.mrb[0].mxu0
        %v2808 = vadd.f32 0.0, %v2807
        %v2809 = vpop.f32.mrb[0].mxu0
        %v2810 = vadd.f32 0.0, %v2809
        %2811 = vmatprep.mubr.bf16.mxu0 %v2006
        %2812 = vmatmul.mubr.bf16.gmra.mrb[0].mxu0 %v2005
        %v2813 = vpop.f32.mrb[0].mxu0
        %v2814 = vadd.f32 0.0, %v2813
        %v2815 = vpop.f32.mrb[0].mxu0
        %v2816 = vadd.f32 0.0, %v2815
        %v2817 = vpop.f32.mrb[0].mxu0
        %v2818 = vadd.f32 0.0, %v2817
        %v2819 = vpop.f32.mrb[0].mxu0
        %v2820 = vadd.f32 0.0, %v2819
        %2821 = vmatprep.mubr.bf16.mxu0 %v2010
        %2822 = vmatmul.mubr.bf16.gmra.mrb[0].mxu0 %v2009
        %v2823 = vpop.f32.mrb[0].mxu0
        %v2824 = vadd.f32 0.0, %v2823
        %v2825 = vpop.f32.mrb[0].mxu0
        %v2826 = vadd.f32 0.0, %v2825
        %v2827 = vpop.f32.mrb[0].mxu0
        %v2828 = vadd.f32 0.0, %v2827
        %v2829 = vpop.f32.mrb[0].mxu0
        %v2830 = vadd.f32 0.0, %v2829
        %2831 = vmatprep.mubr.bf16.mxu0 %v2014
        %2832 = vmatmul.mubr.bf16.gmra.mrb[0].mxu0 %v2013
        %v2833 = vpop.f32.mrb[0].mxu0
        %v2834 = vadd.f32 0.0, %v2833
        %v2835 = vpop.f32.mrb[0].mxu0
        %v2836 = vadd.f32 0.0, %v2835
        %v2837 = vpop.f32.mrb[0].mxu0
        %v2838 = vadd.f32 0.0, %v2837
        %v2839 = vpop.f32.mrb[0].mxu0
        %v2840 = vadd.f32 0.0, %v2839
        %2841 = vmatprep.mubr.bf16.mxu0 %v2018
        %2842 = vmatmul.mubr.bf16.gmra.mrb[0].mxu0 %v2017
        %v2843 = vpop.f32.mrb[0].mxu0
        %v2844 = vadd.f32 0.0, %v2843
        %v2845 = vpop.f32.mrb[0].mxu0
        %v2846 = vadd.f32 0.0, %v2845
        %v2847 = vpop.f32.mrb[0].mxu0
        %v2848 = vadd.f32 0.0, %v2847
        %v2849 = vpop.f32.mrb[0].mxu0
        %v2850 = vadd.f32 0.0, %v2849
        %2851 = vmatprep.mubr.bf16.mxu0 %v2022
        %2852 = vmatmul.mubr.bf16.gmra.mrb[0].mxu0 %v2021
        %v2853 = vpop.f32.mrb[0].mxu0
        %v2854 = vadd.f32 0.0, %v2853
        %v2855 = vpop.f32.mrb[0].mxu0
        %v2856 = vadd.f32 0.0, %v2855
        %v2857 = vpop.f32.mrb[0].mxu0
        %v2858 = vadd.f32 0.0, %v2857
        %v2859 = vpop.f32.mrb[0].mxu0
        %v2860 = vadd.f32 0.0, %v2859
        %2861 = vmatprep.mubr.bf16.mxu0 %v2026
        %2862 = vmatmul.mubr.bf16.gmra.mrb[0].mxu0 %v2025
        %v2863 = vpop.f32.mrb[0].mxu0
        %v2864 = vadd.f32 0.0, %v2863
        %v2865 = vpop.f32.mrb[0].mxu0
        %v2866 = vadd.f32 0.0, %v2865
        %v2867 = vpop.f32.mrb[0].mxu0
        %v2868 = vadd.f32 0.0, %v2867
        %v2869 = vpop.f32.mrb[0].mxu0
        %v2870 = vadd.f32 0.0, %v2869
        %2871 = vmatprep.mubr.bf16.mxu0 %v2030
        %2872 = vmatmul.mubr.bf16.gmra.mrb[0].mxu0 %v2029
        %v2873 = vpop.f32.mrb[0].mxu0
        %v2874 = vadd.f32 0.0, %v2873
        %v2875 = vpop.f32.mrb[0].mxu0
        %v2876 = vadd.f32 0.0, %v2875
        %v2877 = vpop.f32.mrb[0].mxu0
        %v2878 = vadd.f32 0.0, %v2877
        %v2879 = vpop.f32.mrb[0].mxu0
        %v2880 = vadd.f32 0.0, %v2879
        %2881 = vmatprep.mubr.bf16.mxu0 %v2034
        %2882 = vmatmul.mubr.bf16.gmra.mrb[0].mxu0 %v2033
        %v2883 = vpop.f32.mrb[0].mxu0
        %v2884 = vadd.f32 0.0, %v2883
        %v2885 = vpop.f32.mrb[0].mxu0
        %v2886 = vadd.f32 0.0, %v2885
        %v2887 = vpop.f32.mrb[0].mxu0
        %v2888 = vadd.f32 0.0, %v2887
        %v2889 = vpop.f32.mrb[0].mxu0
        %v2890 = vadd.f32 0.0, %v2889
        %2891 = vmatprep.mubr.bf16.mxu0 %v2038
        %2892 = vmatmul.mubr.bf16.gmra.mrb[0].mxu0 %v2037
        %v2893 = vpop.f32.mrb[0].mxu0
        %v2894 = vadd.f32 0.0, %v2893
        %v2895 = vpop.f32.mrb[0].mxu0
        %v2896 = vadd.f32 0.0, %v2895
        %v2897 = vpop.f32.mrb[0].mxu0
        %v2898 = vadd.f32 0.0, %v2897
        %v2899 = vpop.f32.mrb[0].mxu0
        %v2900 = vadd.f32 0.0, %v2899
        %2901 = vmatprep.mubr.bf16.mxu0 %v2042
        %2902 = vmatmul.mubr.bf16.gmra.mrb[0].mxu0 %v2041
        %v2903 = vpop.f32.mrb[0].mxu0
        %v2904 = vadd.f32 0.0, %v2903
        %v2905 = vpop.f32.mrb[0].mxu0
        %v2906 = vadd.f32 0.0, %v2905
        %v2907 = vpop.f32.mrb[0].mxu0
        %v2908 = vadd.f32 0.0, %v2907
        %v2909 = vpop.f32.mrb[0].mxu0
        %v2910 = vadd.f32 0.0, %v2909
        %2911 = vmatprep.mubr.bf16.mxu0 %v2046
        %2912 = vmatmul.mubr.bf16.gmra.mrb[0].mxu0 %v2045
        %v2913 = vpop.f32.mrb[0].mxu0
        %v2914 = vadd.f32 0.0, %v2913
        %v2915 = vpop.f32.mrb[0].mxu0
        %v2916 = vadd.f32 0.0, %v2915
        %v2917 = vpop.f32.mrb[0].mxu0
        %v2918 = vadd.f32 0.0, %v2917
        %v2919 = vpop.f32.mrb[0].mxu0
        %v2920 = vadd.f32 0.0, %v2919
        %2921 = vmatprep.mubr.bf16.mxu0 %v2050
        %2922 = vmatmul.mubr.bf16.gmra.mrb[0].mxu0 %v2049
        %v2923 = vpop.f32.mrb[0].mxu0
        %v2924 = vadd.f32 0.0, %v2923
        %v2925 = vpop.f32.mrb[0].mxu0
        %v2926 = vadd.f32 0.0, %v2925
        %v2927 = vpop.f32.mrb[0].mxu0
        %v2928 = vadd.f32 0.0, %v2927
        %v2929 = vpop.f32.mrb[0].mxu0
        %v2930 = vadd.f32 0.0, %v2929
        %2931 = vmatprep.mubr.bf16.mxu0 %v2054
        %2932 = vmatmul.mubr.bf16.gmra.mrb[0].mxu0 %v2053
        %v2933 = vpop.f32.mrb[0].mxu0
        %v2934 = vadd.f32 0.0, %v2933
        %v2935 = vpop.f32.mrb[0].mxu0
        %v2936 = vadd.f32 0.0, %v2935
        %v2937 = vpop.f32.mrb[0].mxu0
        %v2938 = vadd.f32 0.0, %v2937
        %v2939 = vpop.f32.mrb[0].mxu0
        %v2940 = vadd.f32 0.0, %v2939
        %2941 = vmatprep.mubr.bf16.mxu0 %v2058
        %2942 = vmatmul.mubr.bf16.gmra.mrb[0].mxu0 %v2057
        %v2943 = vpop.f32.mrb[0].mxu0
        %v2944 = vadd.f32 0.0, %v2943
        %v2945 = vpop.f32.mrb[0].mxu0
        %v2946 = vadd.f32 0.0, %v2945
        %v2947 = vpop.f32.mrb[0].mxu0
        %v2948 = vadd.f32 0.0, %v2947
        %v2949 = vpop.f32.mrb[0].mxu0
        %v2950 = vadd.f32 0.0, %v2949
        %2951 = vmatprep.mubr.bf16.mxu0 %v2062
        %2952 = vmatmul.mubr.bf16.gmra.mrb[0].mxu0 %v2061
        %v2953 = vpop.f32.mrb[0].mxu0
        %v2954 = vadd.f32 0.0, %v2953
        %v2955 = vpop.f32.mrb[0].mxu0
        %v2956 = vadd.f32 0.0, %v2955
        %v2957 = vpop.f32.mrb[0].mxu0
        %v2958 = vadd.f32 0.0, %v2957
        %v2959 = vpop.f32.mrb[0].mxu0
        %v2960 = vadd.f32 0.0, %v2959
        %2961 = vmatprep.mubr.bf16.mxu0 %v2004
        %2962 = vmatmul.mubr.bf16.gmra.mrb[0].mxu0 %v2003
        %v2963 = vpop.f32.mrb[0].mxu0
        %v2964 = vadd.f32 0.0, %v2963
        %v2965 = vpop.f32.mrb[0].mxu0
        %v2966 = vadd.f32 0.0, %v2965
        %v2967 = vpop.f32.mrb[0].mxu0
        %v2968 = vadd.f32 0.0, %v2967
        %v2969 = vpop.f32.mrb[0].mxu0
        %v2970 = vadd.f32 0.0, %v2969
        %2971 = vmatprep.mubr.bf16.mxu0 %v2008
        %2972 = vmatmul.mubr.bf16.gmra.mrb[0].mxu0 %v2007
        %v2973 = vpop.f32.mrb[0].mxu0
        %v2974 = vadd.f32 0.0, %v2973
        %v2975 = vpop.f32.mrb[0].mxu0
        %v2976 = vadd.f32 0.0, %v2975
        %v2977 = vpop.f32.mrb[0].mxu0
        %v2978 = vadd.f32 0.0, %v2977
        %v2979 = vpop.f32.mrb[0].mxu0
        %v2980 = vadd.f32 0.0, %v2979
        %2981 = vmatprep.mubr.bf16.mxu0 %v2012
        %2982 = vmatmul.mubr.bf16.gmra.mrb[0].mxu0 %v2011
        %v2983 = vpop.f32.mrb[0].mxu0
        %v2984 = vadd.f32 0.0, %v2983
        %v2985 = vpop.f32.mrb[0].mxu0
        %v2986 = vadd.f32 0.0, %v2985
        %v2987 = vpop.f32.mrb[0].mxu0
        %v2988 = vadd.f32 0.0, %v2987
        %v2989 = vpop.f32.mrb[0].mxu0
        %v2990 = vadd.f32 0.0, %v2989
        %2991 = vmatprep.mubr.bf16.mxu0 %v2016
        %2992 = vmatmul.mubr.bf16.gmra.mrb[0].mxu0 %v2015
        %v2993 = vpop.f32.mrb[0].mxu0
        %v2994 = vadd.f32 0.0, %v2993
        %v2995 = vpop.f32.mrb[0].mxu0
        %v2996 = vadd.f32 0.0, %v2995
        %v2997 = vpop.f32.mrb[0].mxu0
        %v2998 = vadd.f32 0.0, %v2997
        %v2999 = vpop.f32.mrb[0].mxu0
        %v3000 = vadd.f32 0.0, %v2999
        %3001 = vmatprep.mubr.bf16.mxu0 %v2020
        %3002 = vmatmul.mubr.bf16.gmra.mrb[0].mxu0 %v2019
        %v3003 = vpop.f32.mrb[0].mxu0
        %v3004 = vadd.f32 0.0, %v3003
        %v3005 = vpop.f32.mrb[0].mxu0
        %v3006 = vadd.f32 0.0, %v3005
        %v3007 = vpop.f32.mrb[0].mxu0
        %v3008 = vadd.f32 0.0, %v3007
        %v3009 = vpop.f32.mrb[0].mxu0
        %v3010 = vadd.f32 0.0, %v3009
        %3011 = vmatprep.mubr.bf16.mxu0 %v2024
        %3012 = vmatmul.mubr.bf16.gmra.mrb[0].mxu0 %v2023
        %v3013 = vpop.f32.mrb[0].mxu0
        %v3014 = vadd.f32 0.0, %v3013
        %v3015 = vpop.f32.mrb[0].mxu0
        %v3016 = vadd.f32 0.0, %v3015
        %v3017 = vpop.f32.mrb[0].mxu0
        %v3018 = vadd.f32 0.0, %v3017
        %v3019 = vpop.f32.mrb[0].mxu0
        %v3020 = vadd.f32 0.0, %v3019
        %3021 = vmatprep.mubr.bf16.mxu0 %v2028
        %3022 = vmatmul.mubr.bf16.gmra.mrb[0].mxu0 %v2027
        %v3023 = vpop.f32.mrb[0].mxu0
        %v3024 = vadd.f32 0.0, %v3023
        %v3025 = vpop.f32.mrb[0].mxu0
        %v3026 = vadd.f32 0.0, %v3025
        %v3027 = vpop.f32.mrb[0].mxu0
        %v3028 = vadd.f32 0.0, %v3027
        %v3029 = vpop.f32.mrb[0].mxu0
        %v3030 = vadd.f32 0.0, %v3029
        %3031 = vmatprep.mubr.bf16.mxu0 %v2032
        %3032 = vmatmul.mubr.bf16.gmra.mrb[0].mxu0 %v2031
        %v3033 = vpop.f32.mrb[0].mxu0
        %v3034 = vadd.f32 0.0, %v3033
        %v3035 = vpop.f32.mrb[0].mxu0
        %v3036 = vadd.f32 0.0, %v3035
        %v3037 = vpop.f32.mrb[0].mxu0
        %v3038 = vadd.f32 0.0, %v3037
        %v3039 = vpop.f32.mrb[0].mxu0
        %v3040 = vadd.f32 0.0, %v3039
        %3041 = vmatprep.mubr.bf16.mxu0 %v2036
        %3042 = vmatmul.mubr.bf16.gmra.mrb[0].mxu0 %v2035
        %v3043 = vpop.f32.mrb[0].mxu0
        %v3044 = vadd.f32 0.0, %v3043
        %v3045 = vpop.f32.mrb[0].mxu0
        %v3046 = vadd.f32 0.0, %v3045
        %v3047 = vpop.f32.mrb[0].mxu0
        %v3048 = vadd.f32 0.0, %v3047
        %v3049 = vpop.f32.mrb[0].mxu0
        %v3050 = vadd.f32 0.0, %v3049
        %3051 = vmatprep.mubr.bf16.mxu0 %v2040
        %3052 = vmatmul.mubr.bf16.gmra.mrb[0].mxu0 %v2039
        %v3053 = vpop.f32.mrb[0].mxu0
        %v3054 = vadd.f32 0.0, %v3053
        %v3055 = vpop.f32.mrb[0].mxu0
        %v3056 = vadd.f32 0.0, %v3055
        %v3057 = vpop.f32.mrb[0].mxu0
        %v3058 = vadd.f32 0.0, %v3057
        %v3059 = vpop.f32.mrb[0].mxu0
        %v3060 = vadd.f32 0.0, %v3059
        %3061 = vmatprep.mubr.bf16.mxu0 %v2044
        %3062 = vmatmul.mubr.bf16.gmra.mrb[0].mxu0 %v2043
        %v3063 = vpop.f32.mrb[0].mxu0
        %v3064 = vadd.f32 0.0, %v3063
        %v3065 = vpop.f32.mrb[0].mxu0
        %v3066 = vadd.f32 0.0, %v3065
        %v3067 = vpop.f32.mrb[0].mxu0
        %v3068 = vadd.f32 0.0, %v3067
        %v3069 = vpop.f32.mrb[0].mxu0
        %v3070 = vadd.f32 0.0, %v3069
        %3071 = vmatprep.mubr.bf16.mxu0 %v2048
        %3072 = vmatmul.mubr.bf16.gmra.mrb[0].mxu0 %v2047
        %v3073 = vpop.f32.mrb[0].mxu0
        %v3074 = vadd.f32 0.0, %v3073
        %v3075 = vpop.f32.mrb[0].mxu0
        %v3076 = vadd.f32 0.0, %v3075
        %v3077 = vpop.f32.mrb[0].mxu0
        %v3078 = vadd.f32 0.0, %v3077
        %v3079 = vpop.f32.mrb[0].mxu0
        %v3080 = vadd.f32 0.0, %v3079
        %3081 = vmatprep.mubr.bf16.mxu0 %v2052
        %3082 = vmatmul.mubr.bf16.gmra.mrb[0].mxu0 %v2051
        %v3083 = vpop.f32.mrb[0].mxu0
        %v3084 = vadd.f32 0.0, %v3083
        %v3085 = vpop.f32.mrb[0].mxu0
        %v3086 = vadd.f32 0.0, %v3085
        %v3087 = vpop.f32.mrb[0].mxu0
        %v3088 = vadd.f32 0.0, %v3087
        %v3089 = vpop.f32.mrb[0].mxu0
        %v3090 = vadd.f32 0.0, %v3089
        %3091 = vmatprep.mubr.bf16.mxu0 %v2056
        %3092 = vmatmul.mubr.bf16.gmra.mrb[0].mxu0 %v2055
        %v3093 = vpop.f32.mrb[0].mxu0
        %v3094 = vadd.f32 0.0, %v3093
        %v3095 = vpop.f32.mrb[0].mxu0
        %v3096 = vadd.f32 0.0, %v3095
        %v3097 = vpop.f32.mrb[0].mxu0
        %v3098 = vadd.f32 0.0, %v3097
        %v3099 = vpop.f32.mrb[0].mxu0
        %v3100 = vadd.f32 0.0, %v3099
        %3101 = vmatprep.mubr.bf16.mxu0 %v2060
        %3102 = vmatmul.mubr.bf16.gmra.mrb[0].mxu0 %v2059
        %v3103 = vpop.f32.mrb[0].mxu0
        %v3104 = vadd.f32 0.0, %v3103
        %v3105 = vpop.f32.mrb[0].mxu0
        %v3106 = vadd.f32 0.0, %v3105
        %v3107 = vpop.f32.mrb[0].mxu0
        %v3108 = vadd.f32 0.0, %v3107
        %v3109 = vpop.f32.mrb[0].mxu0
        %v3110 = vadd.f32 0.0, %v3109
        %3111 = vmatprep.mubr.bf16.mxu0 %v2064
        %3112 = vmatmul.mubr.bf16.gmra.mrb[0].mxu0 %v2063
        %v3113 = vpop.f32.mrb[0].mxu0
        %v3114 = vadd.f32 0.0, %v3113
        %v3115 = vpop.f32.mrb[0].mxu0
        %v3116 = vadd.f32 0.0, %v3115
        %v3117 = vpop.f32.mrb[0].mxu0
        %v3118 = vadd.f32 0.0, %v3117
        %v3119 = vpop.f32.mrb[0].mxu0
        %v3120 = vadd.f32 0.0, %v3119
        %3121 = vdwg.mxu0
        %3122 = vmatprep.subr.bf16.mxu0 %v2578
        %3123 = vmatpush1.bf16.msra.mxu0 %v2577
        %3124 = vmatprep.subr.bf16.mxu0 %v2582
        %3125 = vmatpush1.bf16.msra.mxu0 %v2581
        %3126 = vmatprep.subr.bf16.mxu0 %v2586
        %3127 = vmatpush1.bf16.msra.mxu0 %v2585
        %3128 = vmatprep.subr.bf16.mxu0 %v2590
        %3129 = vmatpush1.bf16.msra.mxu0 %v2589
        %3130 = vmatprep.subr.bf16.mxu0 %v2594
        %3131 = vmatpush1.bf16.msra.mxu0 %v2593
        %3132 = vmatprep.subr.bf16.mxu0 %v2598
        %3133 = vmatpush1.bf16.msra.mxu0 %v2597
        %3134 = vmatprep.subr.bf16.mxu0 %v2602
        %3135 = vmatpush1.bf16.msra.mxu0 %v2601
        %3136 = vmatprep.subr.bf16.mxu0 %v2606
        %3137 = vmatpush1.bf16.msra.mxu0 %v2605
        %3138 = vmatprep.subr.bf16.mxu0 %v2610
        %3139 = vmatpush1.bf16.msra.mxu0 %v2609
        %3140 = vmatprep.subr.bf16.mxu0 %v2614
        %3141 = vmatpush1.bf16.msra.mxu0 %v2613
        %3142 = vmatprep.subr.bf16.mxu0 %v2618
        %3143 = vmatpush1.bf16.msra.mxu0 %v2617
        %3144 = vmatprep.subr.bf16.mxu0 %v2622
        %3145 = vmatpush1.bf16.msra.mxu0 %v2621
        %3146 = vmatprep.subr.bf16.mxu0 %v2626
        %3147 = vmatpush1.bf16.msra.mxu0 %v2625
        %3148 = vmatprep.subr.bf16.mxu0 %v2630
        %3149 = vmatpush1.bf16.msra.mxu0 %v2629
        %3150 = vmatprep.subr.bf16.mxu0 %v2634
        %3151 = vmatpush1.bf16.msra.mxu0 %v2633
        %3152 = vmatprep.subr.bf16.mxu0 %v2638
        %3153 = vmatpush1.bf16.msra.mxu0 %v2637
        %3154 = vmatprep.mubr.bf16.mxu0 %v2066
        %3155 = vmatmul.mubr.bf16.gmra.mrb[0].mxu0 %v2065
        %v3156 = vpop.f32.mrb[0].mxu0
        %v3157 = vadd.f32 %v2804, %v3156
        %v3158 = vpop.f32.mrb[0].mxu0
        %v3159 = vadd.f32 %v2806, %v3158
        %v3160 = vpop.f32.mrb[0].mxu0
        %v3161 = vadd.f32 %v2808, %v3160
        %v3162 = vpop.f32.mrb[0].mxu0
        %v3163 = vadd.f32 %v2810, %v3162
        %3164 = vmatprep.mubr.bf16.mxu0 %v2070
        %3165 = vmatmul.mubr.bf16.gmra.mrb[0].mxu0 %v2069
        %v3166 = vpop.f32.mrb[0].mxu0
        %v3167 = vadd.f32 %v2814, %v3166
        %v3168 = vpop.f32.mrb[0].mxu0
        %v3169 = vadd.f32 %v2816, %v3168
        %v3170 = vpop.f32.mrb[0].mxu0
        %v3171 = vadd.f32 %v2818, %v3170
        %v3172 = vpop.f32.mrb[0].mxu0
        %v3173 = vadd.f32 %v2820, %v3172
        %3174 = vmatprep.mubr.bf16.mxu0 %v2074
        %3175 = vmatmul.mubr.bf16.gmra.mrb[0].mxu0 %v2073
        %v3176 = vpop.f32.mrb[0].mxu0
        %v3177 = vadd.f32 %v2824, %v3176
        %v3178 = vpop.f32.mrb[0].mxu0
        %v3179 = vadd.f32 %v2826, %v3178
        %v3180 = vpop.f32.mrb[0].mxu0
        %v3181 = vadd.f32 %v2828, %v3180
        %v3182 = vpop.f32.mrb[0].mxu0
        %v3183 = vadd.f32 %v2830, %v3182
        %3184 = vmatprep.mubr.bf16.mxu0 %v2078
        %3185 = vmatmul.mubr.bf16.gmra.mrb[0].mxu0 %v2077
        %v3186 = vpop.f32.mrb[0].mxu0
        %v3187 = vadd.f32 %v2834, %v3186
        %v3188 = vpop.f32.mrb[0].mxu0
        %v3189 = vadd.f32 %v2836, %v3188
        %v3190 = vpop.f32.mrb[0].mxu0
        %v3191 = vadd.f32 %v2838, %v3190
        %v3192 = vpop.f32.mrb[0].mxu0
        %v3193 = vadd.f32 %v2840, %v3192
        %3194 = vmatprep.mubr.bf16.mxu0 %v2082
        %3195 = vmatmul.mubr.bf16.gmra.mrb[0].mxu0 %v2081
        %v3196 = vpop.f32.mrb[0].mxu0
        %v3197 = vadd.f32 %v2844, %v3196
        %v3198 = vpop.f32.mrb[0].mxu0
        %v3199 = vadd.f32 %v2846, %v3198
        %v3200 = vpop.f32.mrb[0].mxu0
        %v3201 = vadd.f32 %v2848, %v3200
        %v3202 = vpop.f32.mrb[0].mxu0
        %v3203 = vadd.f32 %v2850, %v3202
        %3204 = vmatprep.mubr.bf16.mxu0 %v2086
        %3205 = vmatmul.mubr.bf16.gmra.mrb[0].mxu0 %v2085
        %v3206 = vpop.f32.mrb[0].mxu0
        %v3207 = vadd.f32 %v2854, %v3206
        %v3208 = vpop.f32.mrb[0].mxu0
        %v3209 = vadd.f32 %v2856, %v3208
        %v3210 = vpop.f32.mrb[0].mxu0
        %v3211 = vadd.f32 %v2858, %v3210
        %v3212 = vpop.f32.mrb[0].mxu0
        %v3213 = vadd.f32 %v2860, %v3212
        %3214 = vmatprep.mubr.bf16.mxu0 %v2090
        %3215 = vmatmul.mubr.bf16.gmra.mrb[0].mxu0 %v2089
        %v3216 = vpop.f32.mrb[0].mxu0
        %v3217 = vadd.f32 %v2864, %v3216
        %v3218 = vpop.f32.mrb[0].mxu0
        %v3219 = vadd.f32 %v2866, %v3218
        %v3220 = vpop.f32.mrb[0].mxu0
        %v3221 = vadd.f32 %v2868, %v3220
        %v3222 = vpop.f32.mrb[0].mxu0
        %v3223 = vadd.f32 %v2870, %v3222
        %3224 = vmatprep.mubr.bf16.mxu0 %v2094
        %3225 = vmatmul.mubr.bf16.gmra.mrb[0].mxu0 %v2093
        %v3226 = vpop.f32.mrb[0].mxu0
        %v3227 = vadd.f32 %v2874, %v3226
        %v3228 = vpop.f32.mrb[0].mxu0
        %v3229 = vadd.f32 %v2876, %v3228
        %v3230 = vpop.f32.mrb[0].mxu0
        %v3231 = vadd.f32 %v2878, %v3230
        %v3232 = vpop.f32.mrb[0].mxu0
        %v3233 = vadd.f32 %v2880, %v3232
        %3234 = vmatprep.mubr.bf16.mxu0 %v2098
        %3235 = vmatmul.mubr.bf16.gmra.mrb[0].mxu0 %v2097
        %v3236 = vpop.f32.mrb[0].mxu0
        %v3237 = vadd.f32 %v2884, %v3236
        %v3238 = vpop.f32.mrb[0].mxu0
        %v3239 = vadd.f32 %v2886, %v3238
        %v3240 = vpop.f32.mrb[0].mxu0
        %v3241 = vadd.f32 %v2888, %v3240
        %v3242 = vpop.f32.mrb[0].mxu0
        %v3243 = vadd.f32 %v2890, %v3242
        %3244 = vmatprep.mubr.bf16.mxu0 %v2102
        %3245 = vmatmul.mubr.bf16.gmra.mrb[0].mxu0 %v2101
        %v3246 = vpop.f32.mrb[0].mxu0
        %v3247 = vadd.f32 %v2894, %v3246
        %v3248 = vpop.f32.mrb[0].mxu0
        %v3249 = vadd.f32 %v2896, %v3248
        %v3250 = vpop.f32.mrb[0].mxu0
        %v3251 = vadd.f32 %v2898, %v3250
        %v3252 = vpop.f32.mrb[0].mxu0
        %v3253 = vadd.f32 %v2900, %v3252
        %3254 = vmatprep.mubr.bf16.mxu0 %v2106
        %3255 = vmatmul.mubr.bf16.gmra.mrb[0].mxu0 %v2105
        %v3256 = vpop.f32.mrb[0].mxu0
        %v3257 = vadd.f32 %v2904, %v3256
        %v3258 = vpop.f32.mrb[0].mxu0
        %v3259 = vadd.f32 %v2906, %v3258
        %v3260 = vpop.f32.mrb[0].mxu0
        %v3261 = vadd.f32 %v2908, %v3260
        %v3262 = vpop.f32.mrb[0].mxu0
        %v3263 = vadd.f32 %v2910, %v3262
        %3264 = vmatprep.mubr.bf16.mxu0 %v2110
        %3265 = vmatmul.mubr.bf16.gmra.mrb[0].mxu0 %v2109
        %v3266 = vpop.f32.mrb[0].mxu0
        %v3267 = vadd.f32 %v2914, %v3266
        %v3268 = vpop.f32.mrb[0].mxu0
        %v3269 = vadd.f32 %v2916, %v3268
        %v3270 = vpop.f32.mrb[0].mxu0
        %v3271 = vadd.f32 %v2918, %v3270
        %v3272 = vpop.f32.mrb[0].mxu0
        %v3273 = vadd.f32 %v2920, %v3272
        %3274 = vmatprep.mubr.bf16.mxu0 %v2114
        %3275 = vmatmul.mubr.bf16.gmra.mrb[0].mxu0 %v2113
        %v3276 = vpop.f32.mrb[0].mxu0
        %v3277 = vadd.f32 %v2924, %v3276
        %v3278 = vpop.f32.mrb[0].mxu0
        %v3279 = vadd.f32 %v2926, %v3278
        %v3280 = vpop.f32.mrb[0].mxu0
        %v3281 = vadd.f32 %v2928, %v3280
        %v3282 = vpop.f32.mrb[0].mxu0
        %v3283 = vadd.f32 %v2930, %v3282
        %3284 = vmatprep.mubr.bf16.mxu0 %v2118
        %3285 = vmatmul.mubr.bf16.gmra.mrb[0].mxu0 %v2117
        %v3286 = vpop.f32.mrb[0].mxu0
        %v3287 = vadd.f32 %v2934, %v3286
        %v3288 = vpop.f32.mrb[0].mxu0
        %v3289 = vadd.f32 %v2936, %v3288
        %v3290 = vpop.f32.mrb[0].mxu0
        %v3291 = vadd.f32 %v2938, %v3290
        %v3292 = vpop.f32.mrb[0].mxu0
        %v3293 = vadd.f32 %v2940, %v3292
        %3294 = vmatprep.mubr.bf16.mxu0 %v2122
        %3295 = vmatmul.mubr.bf16.gmra.mrb[0].mxu0 %v2121
        %v3296 = vpop.f32.mrb[0].mxu0
        %v3297 = vadd.f32 %v2944, %v3296
        %v3298 = vpop.f32.mrb[0].mxu0
        %v3299 = vadd.f32 %v2946, %v3298
        %v3300 = vpop.f32.mrb[0].mxu0
        %v3301 = vadd.f32 %v2948, %v3300
        %v3302 = vpop.f32.mrb[0].mxu0
        %v3303 = vadd.f32 %v2950, %v3302
        %3304 = vmatprep.mubr.bf16.mxu0 %v2126
        %3305 = vmatmul.mubr.bf16.gmra.mrb[0].mxu0 %v2125
        %v3306 = vpop.f32.mrb[0].mxu0
        %v3307 = vadd.f32 %v2954, %v3306
        %v3308 = vpop.f32.mrb[0].mxu0
        %v3309 = vadd.f32 %v2956, %v3308
        %v3310 = vpop.f32.mrb[0].mxu0
        %v3311 = vadd.f32 %v2958, %v3310
        %v3312 = vpop.f32.mrb[0].mxu0
        %v3313 = vadd.f32 %v2960, %v3312
        %3314 = vmatprep.mubr.bf16.mxu0 %v2068
        %3315 = vmatmul.mubr.bf16.gmra.mrb[0].mxu0 %v2067
        %v3316 = vpop.f32.mrb[0].mxu0
        %v3317 = vadd.f32 %v2964, %v3316
        %v3318 = vpop.f32.mrb[0].mxu0
        %v3319 = vadd.f32 %v2966, %v3318
        %v3320 = vpop.f32.mrb[0].mxu0
        %v3321 = vadd.f32 %v2968, %v3320
        %v3322 = vpop.f32.mrb[0].mxu0
        %v3323 = vadd.f32 %v2970, %v3322
        %3324 = vmatprep.mubr.bf16.mxu0 %v2072
        %3325 = vmatmul.mubr.bf16.gmra.mrb[0].mxu0 %v2071
        %v3326 = vpop.f32.mrb[0].mxu0
        %v3327 = vadd.f32 %v2974, %v3326
        %v3328 = vpop.f32.mrb[0].mxu0
        %v3329 = vadd.f32 %v2976, %v3328
        %v3330 = vpop.f32.mrb[0].mxu0
        %v3331 = vadd.f32 %v2978, %v3330
        %v3332 = vpop.f32.mrb[0].mxu0
        %v3333 = vadd.f32 %v2980, %v3332
        %3334 = vmatprep.mubr.bf16.mxu0 %v2076
        %3335 = vmatmul.mubr.bf16.gmra.mrb[0].mxu0 %v2075
        %v3336 = vpop.f32.mrb[0].mxu0
        %v3337 = vadd.f32 %v2984, %v3336
        %v3338 = vpop.f32.mrb[0].mxu0
        %v3339 = vadd.f32 %v2986, %v3338
        %v3340 = vpop.f32.mrb[0].mxu0
        %v3341 = vadd.f32 %v2988, %v3340
        %v3342 = vpop.f32.mrb[0].mxu0
        %v3343 = vadd.f32 %v2990, %v3342
        %3344 = vmatprep.mubr.bf16.mxu0 %v2080
        %3345 = vmatmul.mubr.bf16.gmra.mrb[0].mxu0 %v2079
        %v3346 = vpop.f32.mrb[0].mxu0
        %v3347 = vadd.f32 %v2994, %v3346
        %v3348 = vpop.f32.mrb[0].mxu0
        %v3349 = vadd.f32 %v2996, %v3348
        %v3350 = vpop.f32.mrb[0].mxu0
        %v3351 = vadd.f32 %v2998, %v3350
        %v3352 = vpop.f32.mrb[0].mxu0
        %v3353 = vadd.f32 %v3000, %v3352
        %3354 = vmatprep.mubr.bf16.mxu0 %v2084
        %3355 = vmatmul.mubr.bf16.gmra.mrb[0].mxu0 %v2083
        %v3356 = vpop.f32.mrb[0].mxu0
        %v3357 = vadd.f32 %v3004, %v3356
        %v3358 = vpop.f32.mrb[0].mxu0
        %v3359 = vadd.f32 %v3006, %v3358
        %v3360 = vpop.f32.mrb[0].mxu0
        %v3361 = vadd.f32 %v3008, %v3360
        %v3362 = vpop.f32.mrb[0].mxu0
        %v3363 = vadd.f32 %v3010, %v3362
        %3364 = vmatprep.mubr.bf16.mxu0 %v2088
        %3365 = vmatmul.mubr.bf16.gmra.mrb[0].mxu0 %v2087
        %v3366 = vpop.f32.mrb[0].mxu0
        %v3367 = vadd.f32 %v3014, %v3366
        %v3368 = vpop.f32.mrb[0].mxu0
        %v3369 = vadd.f32 %v3016, %v3368
        %v3370 = vpop.f32.mrb[0].mxu0
        %v3371 = vadd.f32 %v3018, %v3370
        %v3372 = vpop.f32.mrb[0].mxu0
        %v3373 = vadd.f32 %v3020, %v3372
        %3374 = vmatprep.mubr.bf16.mxu0 %v2092
        %3375 = vmatmul.mubr.bf16.gmra.mrb[0].mxu0 %v2091
        %v3376 = vpop.f32.mrb[0].mxu0
        %v3377 = vadd.f32 %v3024, %v3376
        %v3378 = vpop.f32.mrb[0].mxu0
        %v3379 = vadd.f32 %v3026, %v3378
        %v3380 = vpop.f32.mrb[0].mxu0
        %v3381 = vadd.f32 %v3028, %v3380
        %v3382 = vpop.f32.mrb[0].mxu0
        %v3383 = vadd.f32 %v3030, %v3382
        %3384 = vmatprep.mubr.bf16.mxu0 %v2096
        %3385 = vmatmul.mubr.bf16.gmra.mrb[0].mxu0 %v2095
        %v3386 = vpop.f32.mrb[0].mxu0
        %v3387 = vadd.f32 %v3034, %v3386
        %v3388 = vpop.f32.mrb[0].mxu0
        %v3389 = vadd.f32 %v3036, %v3388
        %v3390 = vpop.f32.mrb[0].mxu0
        %v3391 = vadd.f32 %v3038, %v3390
        %v3392 = vpop.f32.mrb[0].mxu0
        %v3393 = vadd.f32 %v3040, %v3392
        %3394 = vmatprep.mubr.bf16.mxu0 %v2100
        %3395 = vmatmul.mubr.bf16.gmra.mrb[0].mxu0 %v2099
        %v3396 = vpop.f32.mrb[0].mxu0
        %v3397 = vadd.f32 %v3044, %v3396
        %v3398 = vpop.f32.mrb[0].mxu0
        %v3399 = vadd.f32 %v3046, %v3398
        %v3400 = vpop.f32.mrb[0].mxu0
        %v3401 = vadd.f32 %v3048, %v3400
        %v3402 = vpop.f32.mrb[0].mxu0
        %v3403 = vadd.f32 %v3050, %v3402
        %3404 = vmatprep.mubr.bf16.mxu0 %v2104
        %3405 = vmatmul.mubr.bf16.gmra.mrb[0].mxu0 %v2103
        %v3406 = vpop.f32.mrb[0].mxu0
        %v3407 = vadd.f32 %v3054, %v3406
        %v3408 = vpop.f32.mrb[0].mxu0
        %v3409 = vadd.f32 %v3056, %v3408
        %v3410 = vpop.f32.mrb[0].mxu0
        %v3411 = vadd.f32 %v3058, %v3410
        %v3412 = vpop.f32.mrb[0].mxu0
        %v3413 = vadd.f32 %v3060, %v3412
        %3414 = vmatprep.mubr.bf16.mxu0 %v2108
        %3415 = vmatmul.mubr.bf16.gmra.mrb[0].mxu0 %v2107
        %v3416 = vpop.f32.mrb[0].mxu0
        %v3417 = vadd.f32 %v3064, %v3416
        %v3418 = vpop.f32.mrb[0].mxu0
        %v3419 = vadd.f32 %v3066, %v3418
        %v3420 = vpop.f32.mrb[0].mxu0
        %v3421 = vadd.f32 %v3068, %v3420
        %v3422 = vpop.f32.mrb[0].mxu0
        %v3423 = vadd.f32 %v3070, %v3422
        %3424 = vmatprep.mubr.bf16.mxu0 %v2112
        %3425 = vmatmul.mubr.bf16.gmra.mrb[0].mxu0 %v2111
        %v3426 = vpop.f32.mrb[0].mxu0
        %v3427 = vadd.f32 %v3074, %v3426
        %v3428 = vpop.f32.mrb[0].mxu0
        %v3429 = vadd.f32 %v3076, %v3428
        %v3430 = vpop.f32.mrb[0].mxu0
        %v3431 = vadd.f32 %v3078, %v3430
        %v3432 = vpop.f32.mrb[0].mxu0
        %v3433 = vadd.f32 %v3080, %v3432
        %3434 = vmatprep.mubr.bf16.mxu0 %v2116
        %3435 = vmatmul.mubr.bf16.gmra.mrb[0].mxu0 %v2115
        %v3436 = vpop.f32.mrb[0].mxu0
        %v3437 = vadd.f32 %v3084, %v3436
        %v3438 = vpop.f32.mrb[0].mxu0
        %v3439 = vadd.f32 %v3086, %v3438
        %v3440 = vpop.f32.mrb[0].mxu0
        %v3441 = vadd.f32 %v3088, %v3440
        %v3442 = vpop.f32.mrb[0].mxu0
        %v3443 = vadd.f32 %v3090, %v3442
        %3444 = vmatprep.mubr.bf16.mxu0 %v2120
        %3445 = vmatmul.mubr.bf16.gmra.mrb[0].mxu0 %v2119
        %v3446 = vpop.f32.mrb[0].mxu0
        %v3447 = vadd.f32 %v3094, %v3446
        %v3448 = vpop.f32.mrb[0].mxu0
        %v3449 = vadd.f32 %v3096, %v3448
        %v3450 = vpop.f32.mrb[0].mxu0
        %v3451 = vadd.f32 %v3098, %v3450
        %v3452 = vpop.f32.mrb[0].mxu0
        %v3453 = vadd.f32 %v3100, %v3452
        %3454 = vmatprep.mubr.bf16.mxu0 %v2124
        %3455 = vmatmul.mubr.bf16.gmra.mrb[0].mxu0 %v2123
        %v3456 = vpop.f32.mrb[0].mxu0
        %v3457 = vadd.f32 %v3104, %v3456
        %v3458 = vpop.f32.mrb[0].mxu0
        %v3459 = vadd.f32 %v3106, %v3458
        %v3460 = vpop.f32.mrb[0].mxu0
        %v3461 = vadd.f32 %v3108, %v3460
        %v3462 = vpop.f32.mrb[0].mxu0
        %v3463 = vadd.f32 %v3110, %v3462
        %3464 = vmatprep.mubr.bf16.mxu0 %v2128
        %3465 = vmatmul.mubr.bf16.gmra.mrb[0].mxu0 %v2127
        %v3466 = vpop.f32.mrb[0].mxu0
        %v3467 = vadd.f32 %v3114, %v3466
        %v3468 = vpop.f32.mrb[0].mxu0
        %v3469 = vadd.f32 %v3116, %v3468
        %v3470 = vpop.f32.mrb[0].mxu0
        %v3471 = vadd.f32 %v3118, %v3470
        %v3472 = vpop.f32.mrb[0].mxu0
        %v3473 = vadd.f32 %v3120, %v3472
        %3474 = vdwg.mxu0
        %3475 = vmatprep.subr.bf16.mxu0 %v2516
        %3476 = vmatpush1.bf16.msra.mxu0 %v2515
        %3477 = vmatprep.subr.bf16.mxu0 %v2520
        %3478 = vmatpush1.bf16.msra.mxu0 %v2519
        %3479 = vmatprep.subr.bf16.mxu0 %v2524
        %3480 = vmatpush1.bf16.msra.mxu0 %v2523
        %3481 = vmatprep.subr.bf16.mxu0 %v2528
        %3482 = vmatpush1.bf16.msra.mxu0 %v2527
        %3483 = vmatprep.subr.bf16.mxu0 %v2532
        %3484 = vmatpush1.bf16.msra.mxu0 %v2531
        %3485 = vmatprep.subr.bf16.mxu0 %v2536
        %3486 = vmatpush1.bf16.msra.mxu0 %v2535
        %3487 = vmatprep.subr.bf16.mxu0 %v2540
        %3488 = vmatpush1.bf16.msra.mxu0 %v2539
        %3489 = vmatprep.subr.bf16.mxu0 %v2544
        %3490 = vmatpush1.bf16.msra.mxu0 %v2543
        %3491 = vmatprep.subr.bf16.mxu0 %v2548
        %3492 = vmatpush1.bf16.msra.mxu0 %v2547
        %3493 = vmatprep.subr.bf16.mxu0 %v2552
        %3494 = vmatpush1.bf16.msra.mxu0 %v2551
        %3495 = vmatprep.subr.bf16.mxu0 %v2556
        %3496 = vmatpush1.bf16.msra.mxu0 %v2555
        %3497 = vmatprep.subr.bf16.mxu0 %v2560
        %3498 = vmatpush1.bf16.msra.mxu0 %v2559
        %3499 = vmatprep.subr.bf16.mxu0 %v2564
        %3500 = vmatpush1.bf16.msra.mxu0 %v2563
        %3501 = vmatprep.subr.bf16.mxu0 %v2568
        %3502 = vmatpush1.bf16.msra.mxu0 %v2567
        %3503 = vmatprep.subr.bf16.mxu0 %v2572
        %3504 = vmatpush1.bf16.msra.mxu0 %v2571
        %3505 = vmatprep.subr.bf16.mxu0 %v2576
        %3506 = vmatpush1.bf16.msra.mxu0 %v2575
        %3507 = vmatprep.mubr.bf16.mxu0 %v2002
        %3508 = vmatmul.mubr.bf16.gmra.mrb[0].mxu0 %v2001
        %v3509 = vpop.f32.mrb[0].mxu0
        %v3510 = vadd.f32 0.0, %v3509
        %v3511 = vpop.f32.mrb[0].mxu0
        %v3512 = vadd.f32 0.0, %v3511
        %v3513 = vpop.f32.mrb[0].mxu0
        %v3514 = vadd.f32 0.0, %v3513
        %v3515 = vpop.f32.mrb[0].mxu0
        %v3516 = vadd.f32 0.0, %v3515
        %3517 = vmatprep.mubr.bf16.mxu0 %v2006
        %3518 = vmatmul.mubr.bf16.gmra.mrb[0].mxu0 %v2005
        %v3519 = vpop.f32.mrb[0].mxu0
        %v3520 = vadd.f32 0.0, %v3519
        %v3521 = vpop.f32.mrb[0].mxu0
        %v3522 = vadd.f32 0.0, %v3521
        %v3523 = vpop.f32.mrb[0].mxu0
        %v3524 = vadd.f32 0.0, %v3523
        %v3525 = vpop.f32.mrb[0].mxu0
        %v3526 = vadd.f32 0.0, %v3525
        %3527 = vmatprep.mubr.bf16.mxu0 %v2010
        %3528 = vmatmul.mubr.bf16.gmra.mrb[0].mxu0 %v2009
        %v3529 = vpop.f32.mrb[0].mxu0
        %v3530 = vadd.f32 0.0, %v3529
        %v3531 = vpop.f32.mrb[0].mxu0
        %v3532 = vadd.f32 0.0, %v3531
        %v3533 = vpop.f32.mrb[0].mxu0
        %v3534 = vadd.f32 0.0, %v3533
        %v3535 = vpop.f32.mrb[0].mxu0
        %v3536 = vadd.f32 0.0, %v3535
        %3537 = vmatprep.mubr.bf16.mxu0 %v2014
        %3538 = vmatmul.mubr.bf16.gmra.mrb[0].mxu0 %v2013
        %v3539 = vpop.f32.mrb[0].mxu0
        %v3540 = vadd.f32 0.0, %v3539
        %v3541 = vpop.f32.mrb[0].mxu0
        %v3542 = vadd.f32 0.0, %v3541
        %v3543 = vpop.f32.mrb[0].mxu0
        %v3544 = vadd.f32 0.0, %v3543
        %v3545 = vpop.f32.mrb[0].mxu0
        %v3546 = vadd.f32 0.0, %v3545
        %3547 = vmatprep.mubr.bf16.mxu0 %v2018
        %3548 = vmatmul.mubr.bf16.gmra.mrb[0].mxu0 %v2017
        %v3549 = vpop.f32.mrb[0].mxu0
        %v3550 = vadd.f32 0.0, %v3549
        %v3551 = vpop.f32.mrb[0].mxu0
        %v3552 = vadd.f32 0.0, %v3551
        %v3553 = vpop.f32.mrb[0].mxu0
        %v3554 = vadd.f32 0.0, %v3553
        %v3555 = vpop.f32.mrb[0].mxu0
        %v3556 = vadd.f32 0.0, %v3555
        %3557 = vmatprep.mubr.bf16.mxu0 %v2022
        %3558 = vmatmul.mubr.bf16.gmra.mrb[0].mxu0 %v2021
        %v3559 = vpop.f32.mrb[0].mxu0
        %v3560 = vadd.f32 0.0, %v3559
        %v3561 = vpop.f32.mrb[0].mxu0
        %v3562 = vadd.f32 0.0, %v3561
        %v3563 = vpop.f32.mrb[0].mxu0
        %v3564 = vadd.f32 0.0, %v3563
        %v3565 = vpop.f32.mrb[0].mxu0
        %v3566 = vadd.f32 0.0, %v3565
        %3567 = vmatprep.mubr.bf16.mxu0 %v2026
        %3568 = vmatmul.mubr.bf16.gmra.mrb[0].mxu0 %v2025
        %v3569 = vpop.f32.mrb[0].mxu0
        %v3570 = vadd.f32 0.0, %v3569
        %v3571 = vpop.f32.mrb[0].mxu0
        %v3572 = vadd.f32 0.0, %v3571
        %v3573 = vpop.f32.mrb[0].mxu0
        %v3574 = vadd.f32 0.0, %v3573
        %v3575 = vpop.f32.mrb[0].mxu0
        %v3576 = vadd.f32 0.0, %v3575
        %3577 = vmatprep.mubr.bf16.mxu0 %v2030
        %3578 = vmatmul.mubr.bf16.gmra.mrb[0].mxu0 %v2029
        %v3579 = vpop.f32.mrb[0].mxu0
        %v3580 = vadd.f32 0.0, %v3579
        %v3581 = vpop.f32.mrb[0].mxu0
        %v3582 = vadd.f32 0.0, %v3581
        %v3583 = vpop.f32.mrb[0].mxu0
        %v3584 = vadd.f32 0.0, %v3583
        %v3585 = vpop.f32.mrb[0].mxu0
        %v3586 = vadd.f32 0.0, %v3585
        %3587 = vmatprep.mubr.bf16.mxu0 %v2034
        %3588 = vmatmul.mubr.bf16.gmra.mrb[0].mxu0 %v2033
        %v3589 = vpop.f32.mrb[0].mxu0
        %v3590 = vadd.f32 0.0, %v3589
        %v3591 = vpop.f32.mrb[0].mxu0
        %v3592 = vadd.f32 0.0, %v3591
        %v3593 = vpop.f32.mrb[0].mxu0
        %v3594 = vadd.f32 0.0, %v3593
        %v3595 = vpop.f32.mrb[0].mxu0
        %v3596 = vadd.f32 0.0, %v3595
        %3597 = vmatprep.mubr.bf16.mxu0 %v2038
        %3598 = vmatmul.mubr.bf16.gmra.mrb[0].mxu0 %v2037
        %v3599 = vpop.f32.mrb[0].mxu0
        %v3600 = vadd.f32 0.0, %v3599
        %v3601 = vpop.f32.mrb[0].mxu0
        %v3602 = vadd.f32 0.0, %v3601
        %v3603 = vpop.f32.mrb[0].mxu0
        %v3604 = vadd.f32 0.0, %v3603
        %v3605 = vpop.f32.mrb[0].mxu0
        %v3606 = vadd.f32 0.0, %v3605
        %3607 = vmatprep.mubr.bf16.mxu0 %v2042
        %3608 = vmatmul.mubr.bf16.gmra.mrb[0].mxu0 %v2041
        %v3609 = vpop.f32.mrb[0].mxu0
        %v3610 = vadd.f32 0.0, %v3609
        %v3611 = vpop.f32.mrb[0].mxu0
        %v3612 = vadd.f32 0.0, %v3611
        %v3613 = vpop.f32.mrb[0].mxu0
        %v3614 = vadd.f32 0.0, %v3613
        %v3615 = vpop.f32.mrb[0].mxu0
        %v3616 = vadd.f32 0.0, %v3615
        %3617 = vmatprep.mubr.bf16.mxu0 %v2046
        %3618 = vmatmul.mubr.bf16.gmra.mrb[0].mxu0 %v2045
        %v3619 = vpop.f32.mrb[0].mxu0
        %v3620 = vadd.f32 0.0, %v3619
        %v3621 = vpop.f32.mrb[0].mxu0
        %v3622 = vadd.f32 0.0, %v3621
        %v3623 = vpop.f32.mrb[0].mxu0
        %v3624 = vadd.f32 0.0, %v3623
        %v3625 = vpop.f32.mrb[0].mxu0
        %v3626 = vadd.f32 0.0, %v3625
        %3627 = vmatprep.mubr.bf16.mxu0 %v2050
        %3628 = vmatmul.mubr.bf16.gmra.mrb[0].mxu0 %v2049
        %v3629 = vpop.f32.mrb[0].mxu0
        %v3630 = vadd.f32 0.0, %v3629
        %v3631 = vpop.f32.mrb[0].mxu0
        %v3632 = vadd.f32 0.0, %v3631
        %v3633 = vpop.f32.mrb[0].mxu0
        %v3634 = vadd.f32 0.0, %v3633
        %v3635 = vpop.f32.mrb[0].mxu0
        %v3636 = vadd.f32 0.0, %v3635
        %3637 = vmatprep.mubr.bf16.mxu0 %v2054
        %3638 = vmatmul.mubr.bf16.gmra.mrb[0].mxu0 %v2053
        %v3639 = vpop.f32.mrb[0].mxu0
        %v3640 = vadd.f32 0.0, %v3639
        %v3641 = vpop.f32.mrb[0].mxu0
        %v3642 = vadd.f32 0.0, %v3641
        %v3643 = vpop.f32.mrb[0].mxu0
        %v3644 = vadd.f32 0.0, %v3643
        %v3645 = vpop.f32.mrb[0].mxu0
        %v3646 = vadd.f32 0.0, %v3645
        %3647 = vmatprep.mubr.bf16.mxu0 %v2058
        %3648 = vmatmul.mubr.bf16.gmra.mrb[0].mxu0 %v2057
        %v3649 = vpop.f32.mrb[0].mxu0
        %v3650 = vadd.f32 0.0, %v3649
        %v3651 = vpop.f32.mrb[0].mxu0
        %v3652 = vadd.f32 0.0, %v3651
        %v3653 = vpop.f32.mrb[0].mxu0
        %v3654 = vadd.f32 0.0, %v3653
        %v3655 = vpop.f32.mrb[0].mxu0
        %v3656 = vadd.f32 0.0, %v3655
        %3657 = vmatprep.mubr.bf16.mxu0 %v2062
        %3658 = vmatmul.mubr.bf16.gmra.mrb[0].mxu0 %v2061
        %v3659 = vpop.f32.mrb[0].mxu0
        %v3660 = vadd.f32 0.0, %v3659
        %v3661 = vpop.f32.mrb[0].mxu0
        %v3662 = vadd.f32 0.0, %v3661
        %v3663 = vpop.f32.mrb[0].mxu0
        %v3664 = vadd.f32 0.0, %v3663
        %v3665 = vpop.f32.mrb[0].mxu0
        %v3666 = vadd.f32 0.0, %v3665
        %3667 = vmatprep.mubr.bf16.mxu0 %v2004
        %3668 = vmatmul.mubr.bf16.gmra.mrb[0].mxu0 %v2003
        %v3669 = vpop.f32.mrb[0].mxu0
        %v3670 = vadd.f32 0.0, %v3669
        %v3671 = vpop.f32.mrb[0].mxu0
        %v3672 = vadd.f32 0.0, %v3671
        %v3673 = vpop.f32.mrb[0].mxu0
        %v3674 = vadd.f32 0.0, %v3673
        %v3675 = vpop.f32.mrb[0].mxu0
        %v3676 = vadd.f32 0.0, %v3675
        %3677 = vmatprep.mubr.bf16.mxu0 %v2008
        %3678 = vmatmul.mubr.bf16.gmra.mrb[0].mxu0 %v2007
        %v3679 = vpop.f32.mrb[0].mxu0
        %v3680 = vadd.f32 0.0, %v3679
        %v3681 = vpop.f32.mrb[0].mxu0
        %v3682 = vadd.f32 0.0, %v3681
        %v3683 = vpop.f32.mrb[0].mxu0
        %v3684 = vadd.f32 0.0, %v3683
        %v3685 = vpop.f32.mrb[0].mxu0
        %v3686 = vadd.f32 0.0, %v3685
        %3687 = vmatprep.mubr.bf16.mxu0 %v2012
        %3688 = vmatmul.mubr.bf16.gmra.mrb[0].mxu0 %v2011
        %v3689 = vpop.f32.mrb[0].mxu0
        %v3690 = vadd.f32 0.0, %v3689
        %v3691 = vpop.f32.mrb[0].mxu0
        %v3692 = vadd.f32 0.0, %v3691
        %v3693 = vpop.f32.mrb[0].mxu0
        %v3694 = vadd.f32 0.0, %v3693
        %v3695 = vpop.f32.mrb[0].mxu0
        %v3696 = vadd.f32 0.0, %v3695
        %3697 = vmatprep.mubr.bf16.mxu0 %v2016
        %3698 = vmatmul.mubr.bf16.gmra.mrb[0].mxu0 %v2015
        %v3699 = vpop.f32.mrb[0].mxu0
        %v3700 = vadd.f32 0.0, %v3699
        %v3701 = vpop.f32.mrb[0].mxu0
        %v3702 = vadd.f32 0.0, %v3701
        %v3703 = vpop.f32.mrb[0].mxu0
        %v3704 = vadd.f32 0.0, %v3703
        %v3705 = vpop.f32.mrb[0].mxu0
        %v3706 = vadd.f32 0.0, %v3705
        %3707 = vmatprep.mubr.bf16.mxu0 %v2020
        %3708 = vmatmul.mubr.bf16.gmra.mrb[0].mxu0 %v2019
        %v3709 = vpop.f32.mrb[0].mxu0
        %v3710 = vadd.f32 0.0, %v3709
        %v3711 = vpop.f32.mrb[0].mxu0
        %v3712 = vadd.f32 0.0, %v3711
        %v3713 = vpop.f32.mrb[0].mxu0
        %v3714 = vadd.f32 0.0, %v3713
        %v3715 = vpop.f32.mrb[0].mxu0
        %v3716 = vadd.f32 0.0, %v3715
        %3717 = vmatprep.mubr.bf16.mxu0 %v2024
        %3718 = vmatmul.mubr.bf16.gmra.mrb[0].mxu0 %v2023
        %v3719 = vpop.f32.mrb[0].mxu0
        %v3720 = vadd.f32 0.0, %v3719
        %v3721 = vpop.f32.mrb[0].mxu0
        %v3722 = vadd.f32 0.0, %v3721
        %v3723 = vpop.f32.mrb[0].mxu0
        %v3724 = vadd.f32 0.0, %v3723
        %v3725 = vpop.f32.mrb[0].mxu0
        %v3726 = vadd.f32 0.0, %v3725
        %3727 = vmatprep.mubr.bf16.mxu0 %v2028
        %3728 = vmatmul.mubr.bf16.gmra.mrb[0].mxu0 %v2027
        %v3729 = vpop.f32.mrb[0].mxu0
        %v3730 = vadd.f32 0.0, %v3729
        %v3731 = vpop.f32.mrb[0].mxu0
        %v3732 = vadd.f32 0.0, %v3731
        %v3733 = vpop.f32.mrb[0].mxu0
        %v3734 = vadd.f32 0.0, %v3733
        %v3735 = vpop.f32.mrb[0].mxu0
        %v3736 = vadd.f32 0.0, %v3735
        %3737 = vmatprep.mubr.bf16.mxu0 %v2032
        %3738 = vmatmul.mubr.bf16.gmra.mrb[0].mxu0 %v2031
        %v3739 = vpop.f32.mrb[0].mxu0
        %v3740 = vadd.f32 0.0, %v3739
        %v3741 = vpop.f32.mrb[0].mxu0
        %v3742 = vadd.f32 0.0, %v3741
        %v3743 = vpop.f32.mrb[0].mxu0
        %v3744 = vadd.f32 0.0, %v3743
        %v3745 = vpop.f32.mrb[0].mxu0
        %v3746 = vadd.f32 0.0, %v3745
        %3747 = vmatprep.mubr.bf16.mxu0 %v2036
        %3748 = vmatmul.mubr.bf16.gmra.mrb[0].mxu0 %v2035
        %v3749 = vpop.f32.mrb[0].mxu0
        %v3750 = vadd.f32 0.0, %v3749
        %v3751 = vpop.f32.mrb[0].mxu0
        %v3752 = vadd.f32 0.0, %v3751
        %v3753 = vpop.f32.mrb[0].mxu0
        %v3754 = vadd.f32 0.0, %v3753
        %v3755 = vpop.f32.mrb[0].mxu0
        %v3756 = vadd.f32 0.0, %v3755
        %3757 = vmatprep.mubr.bf16.mxu0 %v2040
        %3758 = vmatmul.mubr.bf16.gmra.mrb[0].mxu0 %v2039
        %v3759 = vpop.f32.mrb[0].mxu0
        %v3760 = vadd.f32 0.0, %v3759
        %v3761 = vpop.f32.mrb[0].mxu0
        %v3762 = vadd.f32 0.0, %v3761
        %v3763 = vpop.f32.mrb[0].mxu0
        %v3764 = vadd.f32 0.0, %v3763
        %v3765 = vpop.f32.mrb[0].mxu0
        %v3766 = vadd.f32 0.0, %v3765
        %3767 = vmatprep.mubr.bf16.mxu0 %v2044
        %3768 = vmatmul.mubr.bf16.gmra.mrb[0].mxu0 %v2043
        %v3769 = vpop.f32.mrb[0].mxu0
        %v3770 = vadd.f32 0.0, %v3769
        %v3771 = vpop.f32.mrb[0].mxu0
        %v3772 = vadd.f32 0.0, %v3771
        %v3773 = vpop.f32.mrb[0].mxu0
        %v3774 = vadd.f32 0.0, %v3773
        %v3775 = vpop.f32.mrb[0].mxu0
        %v3776 = vadd.f32 0.0, %v3775
        %3777 = vmatprep.mubr.bf16.mxu0 %v2048
        %3778 = vmatmul.mubr.bf16.gmra.mrb[0].mxu0 %v2047
        %v3779 = vpop.f32.mrb[0].mxu0
        %v3780 = vadd.f32 0.0, %v3779
        %v3781 = vpop.f32.mrb[0].mxu0
        %v3782 = vadd.f32 0.0, %v3781
        %v3783 = vpop.f32.mrb[0].mxu0
        %v3784 = vadd.f32 0.0, %v3783
        %v3785 = vpop.f32.mrb[0].mxu0
        %v3786 = vadd.f32 0.0, %v3785
        %3787 = vmatprep.mubr.bf16.mxu0 %v2052
        %3788 = vmatmul.mubr.bf16.gmra.mrb[0].mxu0 %v2051
        %v3789 = vpop.f32.mrb[0].mxu0
        %v3790 = vadd.f32 0.0, %v3789
        %v3791 = vpop.f32.mrb[0].mxu0
        %v3792 = vadd.f32 0.0, %v3791
        %v3793 = vpop.f32.mrb[0].mxu0
        %v3794 = vadd.f32 0.0, %v3793
        %v3795 = vpop.f32.mrb[0].mxu0
        %v3796 = vadd.f32 0.0, %v3795
        %3797 = vmatprep.mubr.bf16.mxu0 %v2056
        %3798 = vmatmul.mubr.bf16.gmra.mrb[0].mxu0 %v2055
        %v3799 = vpop.f32.mrb[0].mxu0
        %v3800 = vadd.f32 0.0, %v3799
        %v3801 = vpop.f32.mrb[0].mxu0
        %v3802 = vadd.f32 0.0, %v3801
        %v3803 = vpop.f32.mrb[0].mxu0
        %v3804 = vadd.f32 0.0, %v3803
        %v3805 = vpop.f32.mrb[0].mxu0
        %v3806 = vadd.f32 0.0, %v3805
        %3807 = vmatprep.mubr.bf16.mxu0 %v2060
        %3808 = vmatmul.mubr.bf16.gmra.mrb[0].mxu0 %v2059
        %v3809 = vpop.f32.mrb[0].mxu0
        %v3810 = vadd.f32 0.0, %v3809
        %v3811 = vpop.f32.mrb[0].mxu0
        %v3812 = vadd.f32 0.0, %v3811
        %v3813 = vpop.f32.mrb[0].mxu0
        %v3814 = vadd.f32 0.0, %v3813
        %v3815 = vpop.f32.mrb[0].mxu0
        %v3816 = vadd.f32 0.0, %v3815
        %3817 = vmatprep.mubr.bf16.mxu0 %v2064
        %3818 = vmatmul.mubr.bf16.gmra.mrb[0].mxu0 %v2063
        %v3819 = vpop.f32.mrb[0].mxu0
        %v3820 = vadd.f32 0.0, %v3819
        %v3821 = vpop.f32.mrb[0].mxu0
        %v3822 = vadd.f32 0.0, %v3821
        %v3823 = vpop.f32.mrb[0].mxu0
        %v3824 = vadd.f32 0.0, %v3823
        %v3825 = vpop.f32.mrb[0].mxu0
        %v3826 = vadd.f32 0.0, %v3825
        %3827 = vdwg.mxu0
        %3828 = vmatprep.subr.bf16.mxu0 %v2580
        %3829 = vmatpush1.bf16.msra.mxu0 %v2579
        %3830 = vmatprep.subr.bf16.mxu0 %v2584
        %3831 = vmatpush1.bf16.msra.mxu0 %v2583
        %3832 = vmatprep.subr.bf16.mxu0 %v2588
        %3833 = vmatpush1.bf16.msra.mxu0 %v2587
        %3834 = vmatprep.subr.bf16.mxu0 %v2592
        %3835 = vmatpush1.bf16.msra.mxu0 %v2591
        %3836 = vmatprep.subr.bf16.mxu0 %v2596
        %3837 = vmatpush1.bf16.msra.mxu0 %v2595
        %3838 = vmatprep.subr.bf16.mxu0 %v2600
        %3839 = vmatpush1.bf16.msra.mxu0 %v2599
        %3840 = vmatprep.subr.bf16.mxu0 %v2604
        %3841 = vmatpush1.bf16.msra.mxu0 %v2603
        %3842 = vmatprep.subr.bf16.mxu0 %v2608
        %3843 = vmatpush1.bf16.msra.mxu0 %v2607
        %3844 = vmatprep.subr.bf16.mxu0 %v2612
        %3845 = vmatpush1.bf16.msra.mxu0 %v2611
        %3846 = vmatprep.subr.bf16.mxu0 %v2616
        %3847 = vmatpush1.bf16.msra.mxu0 %v2615
        %3848 = vmatprep.subr.bf16.mxu0 %v2620
        %3849 = vmatpush1.bf16.msra.mxu0 %v2619
        %3850 = vmatprep.subr.bf16.mxu0 %v2624
        %3851 = vmatpush1.bf16.msra.mxu0 %v2623
        %3852 = vmatprep.subr.bf16.mxu0 %v2628
        %3853 = vmatpush1.bf16.msra.mxu0 %v2627
        %3854 = vmatprep.subr.bf16.mxu0 %v2632
        %3855 = vmatpush1.bf16.msra.mxu0 %v2631
        %3856 = vmatprep.subr.bf16.mxu0 %v2636
        %3857 = vmatpush1.bf16.msra.mxu0 %v2635
        %3858 = vmatprep.subr.bf16.mxu0 %v2640
        %3859 = vmatpush1.bf16.msra.mxu0 %v2639
        %3860 = vmatprep.mubr.bf16.mxu0 %v2066
        %3861 = vmatmul.mubr.bf16.gmra.mrb[0].mxu0 %v2065
        %v3862 = vpop.f32.mrb[0].mxu0
        %v3863 = vadd.f32 %v3510, %v3862
        %v3864 = vpop.f32.mrb[0].mxu0
        %v3865 = vadd.f32 %v3512, %v3864
        %v3866 = vpop.f32.mrb[0].mxu0
        %v3867 = vadd.f32 %v3514, %v3866
        %v3868 = vpop.f32.mrb[0].mxu0
        %v3869 = vadd.f32 %v3516, %v3868
        %3870 = vmatprep.mubr.bf16.mxu0 %v2070
        %3871 = vmatmul.mubr.bf16.gmra.mrb[0].mxu0 %v2069
        %v3872 = vpop.f32.mrb[0].mxu0
        %v3873 = vadd.f32 %v3520, %v3872
        %v3874 = vpop.f32.mrb[0].mxu0
        %v3875 = vadd.f32 %v3522, %v3874
        %v3876 = vpop.f32.mrb[0].mxu0
        %v3877 = vadd.f32 %v3524, %v3876
        %v3878 = vpop.f32.mrb[0].mxu0
        %v3879 = vadd.f32 %v3526, %v3878
        %3880 = vmatprep.mubr.bf16.mxu0 %v2074
        %3881 = vmatmul.mubr.bf16.gmra.mrb[0].mxu0 %v2073
        %v3882 = vpop.f32.mrb[0].mxu0
        %v3883 = vadd.f32 %v3530, %v3882
        %v3884 = vpop.f32.mrb[0].mxu0
        %v3885 = vadd.f32 %v3532, %v3884
        %v3886 = vpop.f32.mrb[0].mxu0
        %v3887 = vadd.f32 %v3534, %v3886
        %v3888 = vpop.f32.mrb[0].mxu0
        %v3889 = vadd.f32 %v3536, %v3888
        %3890 = vmatprep.mubr.bf16.mxu0 %v2078
        %3891 = vmatmul.mubr.bf16.gmra.mrb[0].mxu0 %v2077
        %v3892 = vpop.f32.mrb[0].mxu0
        %v3893 = vadd.f32 %v3540, %v3892
        %v3894 = vpop.f32.mrb[0].mxu0
        %v3895 = vadd.f32 %v3542, %v3894
        %v3896 = vpop.f32.mrb[0].mxu0
        %v3897 = vadd.f32 %v3544, %v3896
        %v3898 = vpop.f32.mrb[0].mxu0
        %v3899 = vadd.f32 %v3546, %v3898
        %3900 = vmatprep.mubr.bf16.mxu0 %v2082
        %3901 = vmatmul.mubr.bf16.gmra.mrb[0].mxu0 %v2081
        %v3902 = vpop.f32.mrb[0].mxu0
        %v3903 = vadd.f32 %v3550, %v3902
        %v3904 = vpop.f32.mrb[0].mxu0
        %v3905 = vadd.f32 %v3552, %v3904
        %v3906 = vpop.f32.mrb[0].mxu0
        %v3907 = vadd.f32 %v3554, %v3906
        %v3908 = vpop.f32.mrb[0].mxu0
        %v3909 = vadd.f32 %v3556, %v3908
        %3910 = vmatprep.mubr.bf16.mxu0 %v2086
        %3911 = vmatmul.mubr.bf16.gmra.mrb[0].mxu0 %v2085
        %v3912 = vpop.f32.mrb[0].mxu0
        %v3913 = vadd.f32 %v3560, %v3912
        %v3914 = vpop.f32.mrb[0].mxu0
        %v3915 = vadd.f32 %v3562, %v3914
        %v3916 = vpop.f32.mrb[0].mxu0
        %v3917 = vadd.f32 %v3564, %v3916
        %v3918 = vpop.f32.mrb[0].mxu0
        %v3919 = vadd.f32 %v3566, %v3918
        %3920 = vmatprep.mubr.bf16.mxu0 %v2090
        %3921 = vmatmul.mubr.bf16.gmra.mrb[0].mxu0 %v2089
        %v3922 = vpop.f32.mrb[0].mxu0
        %v3923 = vadd.f32 %v3570, %v3922
        %v3924 = vpop.f32.mrb[0].mxu0
        %v3925 = vadd.f32 %v3572, %v3924
        %v3926 = vpop.f32.mrb[0].mxu0
        %v3927 = vadd.f32 %v3574, %v3926
        %v3928 = vpop.f32.mrb[0].mxu0
        %v3929 = vadd.f32 %v3576, %v3928
        %3930 = vmatprep.mubr.bf16.mxu0 %v2094
        %3931 = vmatmul.mubr.bf16.gmra.mrb[0].mxu0 %v2093
        %v3932 = vpop.f32.mrb[0].mxu0
        %v3933 = vadd.f32 %v3580, %v3932
        %v3934 = vpop.f32.mrb[0].mxu0
        %v3935 = vadd.f32 %v3582, %v3934
        %v3936 = vpop.f32.mrb[0].mxu0
        %v3937 = vadd.f32 %v3584, %v3936
        %v3938 = vpop.f32.mrb[0].mxu0
        %v3939 = vadd.f32 %v3586, %v3938
        %3940 = vmatprep.mubr.bf16.mxu0 %v2098
        %3941 = vmatmul.mubr.bf16.gmra.mrb[0].mxu0 %v2097
        %v3942 = vpop.f32.mrb[0].mxu0
        %v3943 = vadd.f32 %v3590, %v3942
        %v3944 = vpop.f32.mrb[0].mxu0
        %v3945 = vadd.f32 %v3592, %v3944
        %v3946 = vpop.f32.mrb[0].mxu0
        %v3947 = vadd.f32 %v3594, %v3946
        %v3948 = vpop.f32.mrb[0].mxu0
        %v3949 = vadd.f32 %v3596, %v3948
        %3950 = vmatprep.mubr.bf16.mxu0 %v2102
        %3951 = vmatmul.mubr.bf16.gmra.mrb[0].mxu0 %v2101
        %v3952 = vpop.f32.mrb[0].mxu0
        %v3953 = vadd.f32 %v3600, %v3952
        %v3954 = vpop.f32.mrb[0].mxu0
        %v3955 = vadd.f32 %v3602, %v3954
        %v3956 = vpop.f32.mrb[0].mxu0
        %v3957 = vadd.f32 %v3604, %v3956
        %v3958 = vpop.f32.mrb[0].mxu0
        %v3959 = vadd.f32 %v3606, %v3958
        %3960 = vmatprep.mubr.bf16.mxu0 %v2106
        %3961 = vmatmul.mubr.bf16.gmra.mrb[0].mxu0 %v2105
        %v3962 = vpop.f32.mrb[0].mxu0
        %v3963 = vadd.f32 %v3610, %v3962
        %v3964 = vpop.f32.mrb[0].mxu0
        %v3965 = vadd.f32 %v3612, %v3964
        %v3966 = vpop.f32.mrb[0].mxu0
        %v3967 = vadd.f32 %v3614, %v3966
        %v3968 = vpop.f32.mrb[0].mxu0
        %v3969 = vadd.f32 %v3616, %v3968
        %3970 = vmatprep.mubr.bf16.mxu0 %v2110
        %3971 = vmatmul.mubr.bf16.gmra.mrb[0].mxu0 %v2109
        %v3972 = vpop.f32.mrb[0].mxu0
        %v3973 = vadd.f32 %v3620, %v3972
        %v3974 = vpop.f32.mrb[0].mxu0
        %v3975 = vadd.f32 %v3622, %v3974
        %v3976 = vpop.f32.mrb[0].mxu0
        %v3977 = vadd.f32 %v3624, %v3976
        %v3978 = vpop.f32.mrb[0].mxu0
        %v3979 = vadd.f32 %v3626, %v3978
        %3980 = vmatprep.mubr.bf16.mxu0 %v2114
        %3981 = vmatmul.mubr.bf16.gmra.mrb[0].mxu0 %v2113
        %v3982 = vpop.f32.mrb[0].mxu0
        %v3983 = vadd.f32 %v3630, %v3982
        %v3984 = vpop.f32.mrb[0].mxu0
        %v3985 = vadd.f32 %v3632, %v3984
        %v3986 = vpop.f32.mrb[0].mxu0
        %v3987 = vadd.f32 %v3634, %v3986
        %v3988 = vpop.f32.mrb[0].mxu0
        %v3989 = vadd.f32 %v3636, %v3988
        %3990 = vmatprep.mubr.bf16.mxu0 %v2118
        %3991 = vmatmul.mubr.bf16.gmra.mrb[0].mxu0 %v2117
        %v3992 = vpop.f32.mrb[0].mxu0
        %v3993 = vadd.f32 %v3640, %v3992
        %v3994 = vpop.f32.mrb[0].mxu0
        %v3995 = vadd.f32 %v3642, %v3994
        %v3996 = vpop.f32.mrb[0].mxu0
        %v3997 = vadd.f32 %v3644, %v3996
        %v3998 = vpop.f32.mrb[0].mxu0
        %v3999 = vadd.f32 %v3646, %v3998
        %4000 = vmatprep.mubr.bf16.mxu0 %v2122
        %4001 = vmatmul.mubr.bf16.gmra.mrb[0].mxu0 %v2121
        %v4002 = vpop.f32.mrb[0].mxu0
        %v4003 = vadd.f32 %v3650, %v4002
        %v4004 = vpop.f32.mrb[0].mxu0
        %v4005 = vadd.f32 %v3652, %v4004
        %v4006 = vpop.f32.mrb[0].mxu0
        %v4007 = vadd.f32 %v3654, %v4006
        %v4008 = vpop.f32.mrb[0].mxu0
        %v4009 = vadd.f32 %v3656, %v4008
        %4010 = vmatprep.mubr.bf16.mxu0 %v2126
        %4011 = vmatmul.mubr.bf16.gmra.mrb[0].mxu0 %v2125
        %v4012 = vpop.f32.mrb[0].mxu0
        %v4013 = vadd.f32 %v3660, %v4012
        %v4014 = vpop.f32.mrb[0].mxu0
        %v4015 = vadd.f32 %v3662, %v4014
        %v4016 = vpop.f32.mrb[0].mxu0
        %v4017 = vadd.f32 %v3664, %v4016
        %v4018 = vpop.f32.mrb[0].mxu0
        %v4019 = vadd.f32 %v3666, %v4018
        %4020 = vmatprep.mubr.bf16.mxu0 %v2068
        %4021 = vmatmul.mubr.bf16.gmra.mrb[0].mxu0 %v2067
        %v4022 = vpop.f32.mrb[0].mxu0
        %v4023 = vadd.f32 %v3670, %v4022
        %v4024 = vpop.f32.mrb[0].mxu0
        %v4025 = vadd.f32 %v3672, %v4024
        %v4026 = vpop.f32.mrb[0].mxu0
        %v4027 = vadd.f32 %v3674, %v4026
        %v4028 = vpop.f32.mrb[0].mxu0
        %v4029 = vadd.f32 %v3676, %v4028
        %4030 = vmatprep.mubr.bf16.mxu0 %v2072
        %4031 = vmatmul.mubr.bf16.gmra.mrb[0].mxu0 %v2071
        %v4032 = vpop.f32.mrb[0].mxu0
        %v4033 = vadd.f32 %v3680, %v4032
        %v4034 = vpop.f32.mrb[0].mxu0
        %v4035 = vadd.f32 %v3682, %v4034
        %v4036 = vpop.f32.mrb[0].mxu0
        %v4037 = vadd.f32 %v3684, %v4036
        %v4038 = vpop.f32.mrb[0].mxu0
        %v4039 = vadd.f32 %v3686, %v4038
        %4040 = vmatprep.mubr.bf16.mxu0 %v2076
        %4041 = vmatmul.mubr.bf16.gmra.mrb[0].mxu0 %v2075
        %v4042 = vpop.f32.mrb[0].mxu0
        %v4043 = vadd.f32 %v3690, %v4042
        %v4044 = vpop.f32.mrb[0].mxu0
        %v4045 = vadd.f32 %v3692, %v4044
        %v4046 = vpop.f32.mrb[0].mxu0
        %v4047 = vadd.f32 %v3694, %v4046
        %v4048 = vpop.f32.mrb[0].mxu0
        %v4049 = vadd.f32 %v3696, %v4048
        %4050 = vmatprep.mubr.bf16.mxu0 %v2080
        %4051 = vmatmul.mubr.bf16.gmra.mrb[0].mxu0 %v2079
        %v4052 = vpop.f32.mrb[0].mxu0
        %v4053 = vadd.f32 %v3700, %v4052
        %v4054 = vpop.f32.mrb[0].mxu0
        %v4055 = vadd.f32 %v3702, %v4054
        %v4056 = vpop.f32.mrb[0].mxu0
        %v4057 = vadd.f32 %v3704, %v4056
        %v4058 = vpop.f32.mrb[0].mxu0
        %v4059 = vadd.f32 %v3706, %v4058
        %4060 = vmatprep.mubr.bf16.mxu0 %v2084
        %4061 = vmatmul.mubr.bf16.gmra.mrb[0].mxu0 %v2083
        %v4062 = vpop.f32.mrb[0].mxu0
        %v4063 = vadd.f32 %v3710, %v4062
        %v4064 = vpop.f32.mrb[0].mxu0
        %v4065 = vadd.f32 %v3712, %v4064
        %v4066 = vpop.f32.mrb[0].mxu0
        %v4067 = vadd.f32 %v3714, %v4066
        %v4068 = vpop.f32.mrb[0].mxu0
        %v4069 = vadd.f32 %v3716, %v4068
        %4070 = vmatprep.mubr.bf16.mxu0 %v2088
        %4071 = vmatmul.mubr.bf16.gmra.mrb[0].mxu0 %v2087
        %v4072 = vpop.f32.mrb[0].mxu0
        %v4073 = vadd.f32 %v3720, %v4072
        %v4074 = vpop.f32.mrb[0].mxu0
        %v4075 = vadd.f32 %v3722, %v4074
        %v4076 = vpop.f32.mrb[0].mxu0
        %v4077 = vadd.f32 %v3724, %v4076
        %v4078 = vpop.f32.mrb[0].mxu0
        %v4079 = vadd.f32 %v3726, %v4078
        %4080 = vmatprep.mubr.bf16.mxu0 %v2092
        %4081 = vmatmul.mubr.bf16.gmra.mrb[0].mxu0 %v2091
        %v4082 = vpop.f32.mrb[0].mxu0
        %v4083 = vadd.f32 %v3730, %v4082
        %v4084 = vpop.f32.mrb[0].mxu0
        %v4085 = vadd.f32 %v3732, %v4084
        %v4086 = vpop.f32.mrb[0].mxu0
        %v4087 = vadd.f32 %v3734, %v4086
        %v4088 = vpop.f32.mrb[0].mxu0
        %v4089 = vadd.f32 %v3736, %v4088
        %4090 = vmatprep.mubr.bf16.mxu0 %v2096
        %4091 = vmatmul.mubr.bf16.gmra.mrb[0].mxu0 %v2095
        %v4092 = vpop.f32.mrb[0].mxu0
        %v4093 = vadd.f32 %v3740, %v4092
        %v4094 = vpop.f32.mrb[0].mxu0
        %v4095 = vadd.f32 %v3742, %v4094
        %v4096 = vpop.f32.mrb[0].mxu0
        %v4097 = vadd.f32 %v3744, %v4096
        %v4098 = vpop.f32.mrb[0].mxu0
        %v4099 = vadd.f32 %v3746, %v4098
        %4100 = vmatprep.mubr.bf16.mxu0 %v2100
        %4101 = vmatmul.mubr.bf16.gmra.mrb[0].mxu0 %v2099
        %v4102 = vpop.f32.mrb[0].mxu0
        %v4103 = vadd.f32 %v3750, %v4102
        %v4104 = vpop.f32.mrb[0].mxu0
        %v4105 = vadd.f32 %v3752, %v4104
        %v4106 = vpop.f32.mrb[0].mxu0
        %v4107 = vadd.f32 %v3754, %v4106
        %v4108 = vpop.f32.mrb[0].mxu0
        %v4109 = vadd.f32 %v3756, %v4108
        %4110 = vmatprep.mubr.bf16.mxu0 %v2104
        %4111 = vmatmul.mubr.bf16.gmra.mrb[0].mxu0 %v2103
        %v4112 = vpop.f32.mrb[0].mxu0
        %v4113 = vadd.f32 %v3760, %v4112
        %v4114 = vpop.f32.mrb[0].mxu0
        %v4115 = vadd.f32 %v3762, %v4114
        %v4116 = vpop.f32.mrb[0].mxu0
        %v4117 = vadd.f32 %v3764, %v4116
        %v4118 = vpop.f32.mrb[0].mxu0
        %v4119 = vadd.f32 %v3766, %v4118
        %4120 = vmatprep.mubr.bf16.mxu0 %v2108
        %4121 = vmatmul.mubr.bf16.gmra.mrb[0].mxu0 %v2107
        %v4122 = vpop.f32.mrb[0].mxu0
        %v4123 = vadd.f32 %v3770, %v4122
        %v4124 = vpop.f32.mrb[0].mxu0
        %v4125 = vadd.f32 %v3772, %v4124
        %v4126 = vpop.f32.mrb[0].mxu0
        %v4127 = vadd.f32 %v3774, %v4126
        %v4128 = vpop.f32.mrb[0].mxu0
        %v4129 = vadd.f32 %v3776, %v4128
        %4130 = vmatprep.mubr.bf16.mxu0 %v2112
        %4131 = vmatmul.mubr.bf16.gmra.mrb[0].mxu0 %v2111
        %v4132 = vpop.f32.mrb[0].mxu0
        %v4133 = vadd.f32 %v3780, %v4132
        %v4134 = vpop.f32.mrb[0].mxu0
        %v4135 = vadd.f32 %v3782, %v4134
        %v4136 = vpop.f32.mrb[0].mxu0
        %v4137 = vadd.f32 %v3784, %v4136
        %v4138 = vpop.f32.mrb[0].mxu0
        %v4139 = vadd.f32 %v3786, %v4138
        %4140 = vmatprep.mubr.bf16.mxu0 %v2116
        %4141 = vmatmul.mubr.bf16.gmra.mrb[0].mxu0 %v2115
        %v4142 = vpop.f32.mrb[0].mxu0
        %v4143 = vadd.f32 %v3790, %v4142
        %v4144 = vpop.f32.mrb[0].mxu0
        %v4145 = vadd.f32 %v3792, %v4144
        %v4146 = vpop.f32.mrb[0].mxu0
        %v4147 = vadd.f32 %v3794, %v4146
        %v4148 = vpop.f32.mrb[0].mxu0
        %v4149 = vadd.f32 %v3796, %v4148
        %4150 = vmatprep.mubr.bf16.mxu0 %v2120
        %4151 = vmatmul.mubr.bf16.gmra.mrb[0].mxu0 %v2119
        %v4152 = vpop.f32.mrb[0].mxu0
        %v4153 = vadd.f32 %v3800, %v4152
        %v4154 = vpop.f32.mrb[0].mxu0
        %v4155 = vadd.f32 %v3802, %v4154
        %v4156 = vpop.f32.mrb[0].mxu0
        %v4157 = vadd.f32 %v3804, %v4156
        %v4158 = vpop.f32.mrb[0].mxu0
        %v4159 = vadd.f32 %v3806, %v4158
        %4160 = vmatprep.mubr.bf16.mxu0 %v2124
        %4161 = vmatmul.mubr.bf16.gmra.mrb[0].mxu0 %v2123
        %v4162 = vpop.f32.mrb[0].mxu0
        %v4163 = vadd.f32 %v3810, %v4162
        %v4164 = vpop.f32.mrb[0].mxu0
        %v4165 = vadd.f32 %v3812, %v4164
        %v4166 = vpop.f32.mrb[0].mxu0
        %v4167 = vadd.f32 %v3814, %v4166
        %v4168 = vpop.f32.mrb[0].mxu0
        %v4169 = vadd.f32 %v3816, %v4168
        %4170 = vmatprep.mubr.bf16.mxu0 %v2128
        %4171 = vmatmul.mubr.bf16.gmra.mrb[0].mxu0 %v2127
        %v4172 = vpop.f32.mrb[0].mxu0
        %v4173 = vadd.f32 %v3820, %v4172
        %v4174 = vpop.f32.mrb[0].mxu0
        %v4175 = vadd.f32 %v3822, %v4174
        %v4176 = vpop.f32.mrb[0].mxu0
        %v4177 = vadd.f32 %v3824, %v4176
        %v4178 = vpop.f32.mrb[0].mxu0
        %v4179 = vadd.f32 %v3826, %v4178
        %4180 = vdwg.mxu0
        %v4181 = vmul.f32 %v3157, %v3317
        %v4182 = vmul.f32 %v3159, %v3319
        %v4183 = vmul.f32 %v3161, %v3321
        %v4184 = vmul.f32 %v3163, %v3323
        %v4185 = vmul.f32 %v3167, %v3327
        %v4186 = vmul.f32 %v3169, %v3329
        %v4187 = vmul.f32 %v3171, %v3331
        %v4188 = vmul.f32 %v3173, %v3333
        %v4189 = vmul.f32 %v3177, %v3337
        %v4190 = vmul.f32 %v3179, %v3339
        %v4191 = vmul.f32 %v3181, %v3341
        %v4192 = vmul.f32 %v3183, %v3343
        %v4193 = vmul.f32 %v3187, %v3347
        %v4194 = vmul.f32 %v3189, %v3349
        %v4195 = vmul.f32 %v3191, %v3351
        %v4196 = vmul.f32 %v3193, %v3353
        %v4197 = vmul.f32 %v3197, %v3357
        %v4198 = vmul.f32 %v3199, %v3359
        %v4199 = vmul.f32 %v3201, %v3361
        %v4200 = vmul.f32 %v3203, %v3363
        %v4201 = vmul.f32 %v3207, %v3367
        %v4202 = vmul.f32 %v3209, %v3369
        %v4203 = vmul.f32 %v3211, %v3371
        %v4204 = vmul.f32 %v3213, %v3373
        %v4205 = vmul.f32 %v3217, %v3377
        %v4206 = vmul.f32 %v3219, %v3379
        %v4207 = vmul.f32 %v3221, %v3381
        %v4208 = vmul.f32 %v3223, %v3383
        %v4209 = vmul.f32 %v3227, %v3387
        %v4210 = vmul.f32 %v3229, %v3389
        %v4211 = vmul.f32 %v3231, %v3391
        %v4212 = vmul.f32 %v3233, %v3393
        %v4213 = vmul.f32 %v3237, %v3397
        %v4214 = vmul.f32 %v3239, %v3399
        %v4215 = vmul.f32 %v3241, %v3401
        %v4216 = vmul.f32 %v3243, %v3403
        %v4217 = vmul.f32 %v3247, %v3407
        %v4218 = vmul.f32 %v3249, %v3409
        %v4219 = vmul.f32 %v3251, %v3411
        %v4220 = vmul.f32 %v3253, %v3413
        %v4221 = vmul.f32 %v3257, %v3417
        %v4222 = vmul.f32 %v3259, %v3419
        %v4223 = vmul.f32 %v3261, %v3421
        %v4224 = vmul.f32 %v3263, %v3423
        %v4225 = vmul.f32 %v3267, %v3427
        %v4226 = vmul.f32 %v3269, %v3429
        %v4227 = vmul.f32 %v3271, %v3431
        %v4228 = vmul.f32 %v3273, %v3433
        %v4229 = vmul.f32 %v3277, %v3437
        %v4230 = vmul.f32 %v3279, %v3439
        %v4231 = vmul.f32 %v3281, %v3441
        %v4232 = vmul.f32 %v3283, %v3443
        %v4233 = vmul.f32 %v3287, %v3447
        %v4234 = vmul.f32 %v3289, %v3449
        %v4235 = vmul.f32 %v3291, %v3451
        %v4236 = vmul.f32 %v3293, %v3453
        %v4237 = vmul.f32 %v3297, %v3457
        %v4238 = vmul.f32 %v3299, %v3459
        %v4239 = vmul.f32 %v3301, %v3461
        %v4240 = vmul.f32 %v3303, %v3463
        %v4241 = vmul.f32 %v3307, %v3467
        %v4242 = vmul.f32 %v3309, %v3469
        %v4243 = vmul.f32 %v3311, %v3471
        %v4244 = vmul.f32 %v3313, %v3473
        %v4245 = vmul.f32 %v3863, %v4023
        %v4246 = vmul.f32 %v3865, %v4025
        %v4247 = vmul.f32 %v3867, %v4027
        %v4248 = vmul.f32 %v3869, %v4029
        %v4249 = vmul.f32 %v3873, %v4033
        %v4250 = vmul.f32 %v3875, %v4035
        %v4251 = vmul.f32 %v3877, %v4037
        %v4252 = vmul.f32 %v3879, %v4039
        %v4253 = vmul.f32 %v3883, %v4043
        %v4254 = vmul.f32 %v3885, %v4045
        %v4255 = vmul.f32 %v3887, %v4047
        %v4256 = vmul.f32 %v3889, %v4049
        %v4257 = vmul.f32 %v3893, %v4053
        %v4258 = vmul.f32 %v3895, %v4055
        %v4259 = vmul.f32 %v3897, %v4057
        %v4260 = vmul.f32 %v3899, %v4059
        %v4261 = vmul.f32 %v3903, %v4063
        %v4262 = vmul.f32 %v3905, %v4065
        %v4263 = vmul.f32 %v3907, %v4067
        %v4264 = vmul.f32 %v3909, %v4069
        %v4265 = vmul.f32 %v3913, %v4073
        %v4266 = vmul.f32 %v3915, %v4075
        %v4267 = vmul.f32 %v3917, %v4077
        %v4268 = vmul.f32 %v3919, %v4079
        %v4269 = vmul.f32 %v3923, %v4083
        %v4270 = vmul.f32 %v3925, %v4085
        %v4271 = vmul.f32 %v3927, %v4087
        %v4272 = vmul.f32 %v3929, %v4089
        %v4273 = vmul.f32 %v3933, %v4093
        %v4274 = vmul.f32 %v3935, %v4095
        %v4275 = vmul.f32 %v3937, %v4097
        %v4276 = vmul.f32 %v3939, %v4099
        %v4277 = vmul.f32 %v3943, %v4103
        %v4278 = vmul.f32 %v3945, %v4105
        %v4279 = vmul.f32 %v3947, %v4107
        %v4280 = vmul.f32 %v3949, %v4109
        %v4281 = vmul.f32 %v3953, %v4113
        %v4282 = vmul.f32 %v3955, %v4115
        %v4283 = vmul.f32 %v3957, %v4117
        %v4284 = vmul.f32 %v3959, %v4119
        %v4285 = vmul.f32 %v3963, %v4123
        %v4286 = vmul.f32 %v3965, %v4125
        %v4287 = vmul.f32 %v3967, %v4127
        %v4288 = vmul.f32 %v3969, %v4129
        %v4289 = vmul.f32 %v3973, %v4133
        %v4290 = vmul.f32 %v3975, %v4135
        %v4291 = vmul.f32 %v3977, %v4137
        %v4292 = vmul.f32 %v3979, %v4139
        %v4293 = vmul.f32 %v3983, %v4143
        %v4294 = vmul.f32 %v3985, %v4145
        %v4295 = vmul.f32 %v3987, %v4147
        %v4296 = vmul.f32 %v3989, %v4149
        %v4297 = vmul.f32 %v3993, %v4153
        %v4298 = vmul.f32 %v3995, %v4155
        %v4299 = vmul.f32 %v3997, %v4157
        %v4300 = vmul.f32 %v3999, %v4159
        %v4301 = vmul.f32 %v4003, %v4163
        %v4302 = vmul.f32 %v4005, %v4165
        %v4303 = vmul.f32 %v4007, %v4167
        %v4304 = vmul.f32 %v4009, %v4169
        %v4305 = vmul.f32 %v4013, %v4173
        %v4306 = vmul.f32 %v4015, %v4175
        %v4307 = vmul.f32 %v4017, %v4177
        %v4308 = vmul.f32 %v4019, %v4179
        %v4309 = vadd.f32 %v4181, %v4245
        %v4310 = vadd.f32 %v4182, %v4246
        %v4311 = vadd.f32 %v4183, %v4247
        %v4312 = vadd.f32 %v4184, %v4248
        %v4313 = vadd.f32 %v4185, %v4249
        %v4314 = vadd.f32 %v4186, %v4250
        %v4315 = vadd.f32 %v4187, %v4251
        %v4316 = vadd.f32 %v4188, %v4252
        %v4317 = vadd.f32 %v4189, %v4253
        %v4318 = vadd.f32 %v4190, %v4254
        %v4319 = vadd.f32 %v4191, %v4255
        %v4320 = vadd.f32 %v4192, %v4256
        %v4321 = vadd.f32 %v4193, %v4257
        %v4322 = vadd.f32 %v4194, %v4258
        %v4323 = vadd.f32 %v4195, %v4259
        %v4324 = vadd.f32 %v4196, %v4260
        %v4325 = vadd.f32 %v4197, %v4261
        %v4326 = vadd.f32 %v4198, %v4262
        %v4327 = vadd.f32 %v4199, %v4263
        %v4328 = vadd.f32 %v4200, %v4264
        %v4329 = vadd.f32 %v4201, %v4265
        %v4330 = vadd.f32 %v4202, %v4266
        %v4331 = vadd.f32 %v4203, %v4267
        %v4332 = vadd.f32 %v4204, %v4268
        %v4333 = vadd.f32 %v4205, %v4269
        %v4334 = vadd.f32 %v4206, %v4270
        %v4335 = vadd.f32 %v4207, %v4271
        %v4336 = vadd.f32 %v4208, %v4272
        %v4337 = vadd.f32 %v4209, %v4273
        %v4338 = vadd.f32 %v4210, %v4274
        %v4339 = vadd.f32 %v4211, %v4275
        %v4340 = vadd.f32 %v4212, %v4276
        %v4341 = vadd.f32 %v4213, %v4277
        %v4342 = vadd.f32 %v4214, %v4278
        %v4343 = vadd.f32 %v4215, %v4279
        %v4344 = vadd.f32 %v4216, %v4280
        %v4345 = vadd.f32 %v4217, %v4281
        %v4346 = vadd.f32 %v4218, %v4282
        %v4347 = vadd.f32 %v4219, %v4283
        %v4348 = vadd.f32 %v4220, %v4284
        %v4349 = vadd.f32 %v4221, %v4285
        %v4350 = vadd.f32 %v4222, %v4286
        %v4351 = vadd.f32 %v4223, %v4287
        %v4352 = vadd.f32 %v4224, %v4288
        %v4353 = vadd.f32 %v4225, %v4289
        %v4354 = vadd.f32 %v4226, %v4290
        %v4355 = vadd.f32 %v4227, %v4291
        %v4356 = vadd.f32 %v4228, %v4292
        %v4357 = vadd.f32 %v4229, %v4293
        %v4358 = vadd.f32 %v4230, %v4294
        %v4359 = vadd.f32 %v4231, %v4295
        %v4360 = vadd.f32 %v4232, %v4296
        %v4361 = vadd.f32 %v4233, %v4297
        %v4362 = vadd.f32 %v4234, %v4298
        %v4363 = vadd.f32 %v4235, %v4299
        %v4364 = vadd.f32 %v4236, %v4300
        %v4365 = vadd.f32 %v4237, %v4301
        %v4366 = vadd.f32 %v4238, %v4302
        %v4367 = vadd.f32 %v4239, %v4303
        %v4368 = vadd.f32 %v4240, %v4304
        %v4369 = vadd.f32 %v4241, %v4305
        %v4370 = vadd.f32 %v4242, %v4306
        %v4371 = vadd.f32 %v4243, %v4307
        %v4372 = vadd.f32 %v4244, %v4308
        %v4373 = vmul.f32 %v3157, %v4023
        %v4374 = vmul.f32 %v3159, %v4025
        %v4375 = vmul.f32 %v3161, %v4027
        %v4376 = vmul.f32 %v3163, %v4029
        %v4377 = vmul.f32 %v3167, %v4033
        %v4378 = vmul.f32 %v3169, %v4035
        %v4379 = vmul.f32 %v3171, %v4037
        %v4380 = vmul.f32 %v3173, %v4039
        %v4381 = vmul.f32 %v3177, %v4043
        %v4382 = vmul.f32 %v3179, %v4045
        %v4383 = vmul.f32 %v3181, %v4047
        %v4384 = vmul.f32 %v3183, %v4049
        %v4385 = vmul.f32 %v3187, %v4053
        %v4386 = vmul.f32 %v3189, %v4055
        %v4387 = vmul.f32 %v3191, %v4057
        %v4388 = vmul.f32 %v3193, %v4059
        %v4389 = vmul.f32 %v3197, %v4063
        %v4390 = vmul.f32 %v3199, %v4065
        %v4391 = vmul.f32 %v3201, %v4067
        %v4392 = vmul.f32 %v3203, %v4069
        %v4393 = vmul.f32 %v3207, %v4073
        %v4394 = vmul.f32 %v3209, %v4075
        %v4395 = vmul.f32 %v3211, %v4077
        %v4396 = vmul.f32 %v3213, %v4079
        %v4397 = vmul.f32 %v3217, %v4083
        %v4398 = vmul.f32 %v3219, %v4085
        %v4399 = vmul.f32 %v3221, %v4087
        %v4400 = vmul.f32 %v3223, %v4089
        %v4401 = vmul.f32 %v3227, %v4093
        %v4402 = vmul.f32 %v3229, %v4095
        %v4403 = vmul.f32 %v3231, %v4097
        %v4404 = vmul.f32 %v3233, %v4099
        %v4405 = vmul.f32 %v3237, %v4103
        %v4406 = vmul.f32 %v3239, %v4105
        %v4407 = vmul.f32 %v3241, %v4107
        %v4408 = vmul.f32 %v3243, %v4109
        %v4409 = vmul.f32 %v3247, %v4113
        %v4410 = vmul.f32 %v3249, %v4115
        %v4411 = vmul.f32 %v3251, %v4117
        %v4412 = vmul.f32 %v3253, %v4119
        %v4413 = vmul.f32 %v3257, %v4123
        %v4414 = vmul.f32 %v3259, %v4125
        %v4415 = vmul.f32 %v3261, %v4127
        %v4416 = vmul.f32 %v3263, %v4129
        %v4417 = vmul.f32 %v3267, %v4133
        %v4418 = vmul.f32 %v3269, %v4135
        %v4419 = vmul.f32 %v3271, %v4137
        %v4420 = vmul.f32 %v3273, %v4139
        %v4421 = vmul.f32 %v3277, %v4143
        %v4422 = vmul.f32 %v3279, %v4145
        %v4423 = vmul.f32 %v3281, %v4147
        %v4424 = vmul.f32 %v3283, %v4149
        %v4425 = vmul.f32 %v3287, %v4153
        %v4426 = vmul.f32 %v3289, %v4155
        %v4427 = vmul.f32 %v3291, %v4157
        %v4428 = vmul.f32 %v3293, %v4159
        %v4429 = vmul.f32 %v3297, %v4163
        %v4430 = vmul.f32 %v3299, %v4165
        %v4431 = vmul.f32 %v3301, %v4167
        %v4432 = vmul.f32 %v3303, %v4169
        %v4433 = vmul.f32 %v3307, %v4173
        %v4434 = vmul.f32 %v3309, %v4175
        %v4435 = vmul.f32 %v3311, %v4177
        %v4436 = vmul.f32 %v3313, %v4179
        %v4437 = vmul.f32 %v3317, %v3863
        %v4438 = vmul.f32 %v3319, %v3865
        %v4439 = vmul.f32 %v3321, %v3867
        %v4440 = vmul.f32 %v3323, %v3869
        %v4441 = vmul.f32 %v3327, %v3873
        %v4442 = vmul.f32 %v3329, %v3875
        %v4443 = vmul.f32 %v3331, %v3877
        %v4444 = vmul.f32 %v3333, %v3879
        %v4445 = vmul.f32 %v3337, %v3883
        %v4446 = vmul.f32 %v3339, %v3885
        %v4447 = vmul.f32 %v3341, %v3887
        %v4448 = vmul.f32 %v3343, %v3889
        %v4449 = vmul.f32 %v3347, %v3893
        %v4450 = vmul.f32 %v3349, %v3895
        %v4451 = vmul.f32 %v3351, %v3897
        %v4452 = vmul.f32 %v3353, %v3899
        %v4453 = vmul.f32 %v3357, %v3903
        %v4454 = vmul.f32 %v3359, %v3905
        %v4455 = vmul.f32 %v3361, %v3907
        %v4456 = vmul.f32 %v3363, %v3909
        %v4457 = vmul.f32 %v3367, %v3913
        %v4458 = vmul.f32 %v3369, %v3915
        %v4459 = vmul.f32 %v3371, %v3917
        %v4460 = vmul.f32 %v3373, %v3919
        %v4461 = vmul.f32 %v3377, %v3923
        %v4462 = vmul.f32 %v3379, %v3925
        %v4463 = vmul.f32 %v3381, %v3927
        %v4464 = vmul.f32 %v3383, %v3929
        %v4465 = vmul.f32 %v3387, %v3933
        %v4466 = vmul.f32 %v3389, %v3935
        %v4467 = vmul.f32 %v3391, %v3937
        %v4468 = vmul.f32 %v3393, %v3939
        %v4469 = vmul.f32 %v3397, %v3943
        %v4470 = vmul.f32 %v3399, %v3945
        %v4471 = vmul.f32 %v3401, %v3947
        %v4472 = vmul.f32 %v3403, %v3949
        %v4473 = vmul.f32 %v3407, %v3953
        %v4474 = vmul.f32 %v3409, %v3955
        %v4475 = vmul.f32 %v3411, %v3957
        %v4476 = vmul.f32 %v3413, %v3959
        %v4477 = vmul.f32 %v3417, %v3963
        %v4478 = vmul.f32 %v3419, %v3965
        %v4479 = vmul.f32 %v3421, %v3967
        %v4480 = vmul.f32 %v3423, %v3969
        %v4481 = vmul.f32 %v3427, %v3973
        %v4482 = vmul.f32 %v3429, %v3975
        %v4483 = vmul.f32 %v3431, %v3977
        %v4484 = vmul.f32 %v3433, %v3979
        %v4485 = vmul.f32 %v3437, %v3983
        %v4486 = vmul.f32 %v3439, %v3985
        %v4487 = vmul.f32 %v3441, %v3987
        %v4488 = vmul.f32 %v3443, %v3989
        %v4489 = vmul.f32 %v3447, %v3993
        %v4490 = vmul.f32 %v3449, %v3995
        %v4491 = vmul.f32 %v3451, %v3997
        %v4492 = vmul.f32 %v3453, %v3999
        %v4493 = vmul.f32 %v3457, %v4003
        %v4494 = vmul.f32 %v3459, %v4005
        %v4495 = vmul.f32 %v3461, %v4007
        %v4496 = vmul.f32 %v3463, %v4009
        %v4497 = vmul.f32 %v3467, %v4013
        %v4498 = vmul.f32 %v3469, %v4015
        %v4499 = vmul.f32 %v3471, %v4017
        %v4500 = vmul.f32 %v3473, %v4019
        %v4501 = vsub.f32 %v4373, %v4437
        %v4502 = vsub.f32 %v4374, %v4438
        %v4503 = vsub.f32 %v4375, %v4439
        %v4504 = vsub.f32 %v4376, %v4440
        %v4505 = vsub.f32 %v4377, %v4441
        %v4506 = vsub.f32 %v4378, %v4442
        %v4507 = vsub.f32 %v4379, %v4443
        %v4508 = vsub.f32 %v4380, %v4444
        %v4509 = vsub.f32 %v4381, %v4445
        %v4510 = vsub.f32 %v4382, %v4446
        %v4511 = vsub.f32 %v4383, %v4447
        %v4512 = vsub.f32 %v4384, %v4448
        %v4513 = vsub.f32 %v4385, %v4449
        %v4514 = vsub.f32 %v4386, %v4450
        %v4515 = vsub.f32 %v4387, %v4451
        %v4516 = vsub.f32 %v4388, %v4452
        %v4517 = vsub.f32 %v4389, %v4453
        %v4518 = vsub.f32 %v4390, %v4454
        %v4519 = vsub.f32 %v4391, %v4455
        %v4520 = vsub.f32 %v4392, %v4456
        %v4521 = vsub.f32 %v4393, %v4457
        %v4522 = vsub.f32 %v4394, %v4458
        %v4523 = vsub.f32 %v4395, %v4459
        %v4524 = vsub.f32 %v4396, %v4460
        %v4525 = vsub.f32 %v4397, %v4461
        %v4526 = vsub.f32 %v4398, %v4462
        %v4527 = vsub.f32 %v4399, %v4463
        %v4528 = vsub.f32 %v4400, %v4464
        %v4529 = vsub.f32 %v4401, %v4465
        %v4530 = vsub.f32 %v4402, %v4466
        %v4531 = vsub.f32 %v4403, %v4467
        %v4532 = vsub.f32 %v4404, %v4468
        %v4533 = vsub.f32 %v4405, %v4469
        %v4534 = vsub.f32 %v4406, %v4470
        %v4535 = vsub.f32 %v4407, %v4471
        %v4536 = vsub.f32 %v4408, %v4472
        %v4537 = vsub.f32 %v4409, %v4473
        %v4538 = vsub.f32 %v4410, %v4474
        %v4539 = vsub.f32 %v4411, %v4475
        %v4540 = vsub.f32 %v4412, %v4476
        %v4541 = vsub.f32 %v4413, %v4477
        %v4542 = vsub.f32 %v4414, %v4478
        %v4543 = vsub.f32 %v4415, %v4479
        %v4544 = vsub.f32 %v4416, %v4480
        %v4545 = vsub.f32 %v4417, %v4481
        %v4546 = vsub.f32 %v4418, %v4482
        %v4547 = vsub.f32 %v4419, %v4483
        %v4548 = vsub.f32 %v4420, %v4484
        %v4549 = vsub.f32 %v4421, %v4485
        %v4550 = vsub.f32 %v4422, %v4486
        %v4551 = vsub.f32 %v4423, %v4487
        %v4552 = vsub.f32 %v4424, %v4488
        %v4553 = vsub.f32 %v4425, %v4489
        %v4554 = vsub.f32 %v4426, %v4490
        %v4555 = vsub.f32 %v4427, %v4491
        %v4556 = vsub.f32 %v4428, %v4492
        %v4557 = vsub.f32 %v4429, %v4493
        %v4558 = vsub.f32 %v4430, %v4494
        %v4559 = vsub.f32 %v4431, %v4495
        %v4560 = vsub.f32 %v4432, %v4496
        %v4561 = vsub.f32 %v4433, %v4497
        %v4562 = vsub.f32 %v4434, %v4498
        %v4563 = vsub.f32 %v4435, %v4499
        %v4564 = vsub.f32 %v4436, %v4500
        %v4565 = vmul.f32 %v3157, %v3157
        %v4566 = vmul.f32 %v3159, %v3159
        %v4567 = vmul.f32 %v3161, %v3161
        %v4568 = vmul.f32 %v3163, %v3163
        %v4569 = vmul.f32 %v3167, %v3167
        %v4570 = vmul.f32 %v3169, %v3169
        %v4571 = vmul.f32 %v3171, %v3171
        %v4572 = vmul.f32 %v3173, %v3173
        %v4573 = vmul.f32 %v3177, %v3177
        %v4574 = vmul.f32 %v3179, %v3179
        %v4575 = vmul.f32 %v3181, %v3181
        %v4576 = vmul.f32 %v3183, %v3183
        %v4577 = vmul.f32 %v3187, %v3187
        %v4578 = vmul.f32 %v3189, %v3189
        %v4579 = vmul.f32 %v3191, %v3191
        %v4580 = vmul.f32 %v3193, %v3193
        %v4581 = vmul.f32 %v3197, %v3197
        %v4582 = vmul.f32 %v3199, %v3199
        %v4583 = vmul.f32 %v3201, %v3201
        %v4584 = vmul.f32 %v3203, %v3203
        %v4585 = vmul.f32 %v3207, %v3207
        %v4586 = vmul.f32 %v3209, %v3209
        %v4587 = vmul.f32 %v3211, %v3211
        %v4588 = vmul.f32 %v3213, %v3213
        %v4589 = vmul.f32 %v3217, %v3217
        %v4590 = vmul.f32 %v3219, %v3219
        %v4591 = vmul.f32 %v3221, %v3221
        %v4592 = vmul.f32 %v3223, %v3223
        %v4593 = vmul.f32 %v3227, %v3227
        %v4594 = vmul.f32 %v3229, %v3229
        %v4595 = vmul.f32 %v3231, %v3231
        %v4596 = vmul.f32 %v3233, %v3233
        %v4597 = vmul.f32 %v3237, %v3237
        %v4598 = vmul.f32 %v3239, %v3239
        %v4599 = vmul.f32 %v3241, %v3241
        %v4600 = vmul.f32 %v3243, %v3243
        %v4601 = vmul.f32 %v3247, %v3247
        %v4602 = vmul.f32 %v3249, %v3249
        %v4603 = vmul.f32 %v3251, %v3251
        %v4604 = vmul.f32 %v3253, %v3253
        %v4605 = vmul.f32 %v3257, %v3257
        %v4606 = vmul.f32 %v3259, %v3259
        %v4607 = vmul.f32 %v3261, %v3261
        %v4608 = vmul.f32 %v3263, %v3263
        %v4609 = vmul.f32 %v3267, %v3267
        %v4610 = vmul.f32 %v3269, %v3269
        %v4611 = vmul.f32 %v3271, %v3271
        %v4612 = vmul.f32 %v3273, %v3273
        %v4613 = vmul.f32 %v3277, %v3277
        %v4614 = vmul.f32 %v3279, %v3279
        %v4615 = vmul.f32 %v3281, %v3281
        %v4616 = vmul.f32 %v3283, %v3283
        %v4617 = vmul.f32 %v3287, %v3287
        %v4618 = vmul.f32 %v3289, %v3289
        %v4619 = vmul.f32 %v3291, %v3291
        %v4620 = vmul.f32 %v3293, %v3293
        %v4621 = vmul.f32 %v3297, %v3297
        %v4622 = vmul.f32 %v3299, %v3299
        %v4623 = vmul.f32 %v3301, %v3301
        %v4624 = vmul.f32 %v3303, %v3303
        %v4625 = vmul.f32 %v3307, %v3307
        %v4626 = vmul.f32 %v3309, %v3309
        %v4627 = vmul.f32 %v3311, %v3311
        %v4628 = vmul.f32 %v3313, %v3313
        %v4629 = vmul.f32 %v3863, %v3863
        %v4630 = vmul.f32 %v3865, %v3865
        %v4631 = vmul.f32 %v3867, %v3867
        %v4632 = vmul.f32 %v3869, %v3869
        %v4633 = vmul.f32 %v3873, %v3873
        %v4634 = vmul.f32 %v3875, %v3875
        %v4635 = vmul.f32 %v3877, %v3877
        %v4636 = vmul.f32 %v3879, %v3879
        %v4637 = vmul.f32 %v3883, %v3883
        %v4638 = vmul.f32 %v3885, %v3885
        %v4639 = vmul.f32 %v3887, %v3887
        %v4640 = vmul.f32 %v3889, %v3889
        %v4641 = vmul.f32 %v3893, %v3893
        %v4642 = vmul.f32 %v3895, %v3895
        %v4643 = vmul.f32 %v3897, %v3897
        %v4644 = vmul.f32 %v3899, %v3899
        %v4645 = vmul.f32 %v3903, %v3903
        %v4646 = vmul.f32 %v3905, %v3905
        %v4647 = vmul.f32 %v3907, %v3907
        %v4648 = vmul.f32 %v3909, %v3909
        %v4649 = vmul.f32 %v3913, %v3913
        %v4650 = vmul.f32 %v3915, %v3915
        %v4651 = vmul.f32 %v3917, %v3917
        %v4652 = vmul.f32 %v3919, %v3919
        %v4653 = vmul.f32 %v3923, %v3923
        %v4654 = vmul.f32 %v3925, %v3925
        %v4655 = vmul.f32 %v3927, %v3927
        %v4656 = vmul.f32 %v3929, %v3929
        %v4657 = vmul.f32 %v3933, %v3933
        %v4658 = vmul.f32 %v3935, %v3935
        %v4659 = vmul.f32 %v3937, %v3937
        %v4660 = vmul.f32 %v3939, %v3939
        %v4661 = vmul.f32 %v3943, %v3943
        %v4662 = vmul.f32 %v3945, %v3945
        %v4663 = vmul.f32 %v3947, %v3947
        %v4664 = vmul.f32 %v3949, %v3949
        %v4665 = vmul.f32 %v3953, %v3953
        %v4666 = vmul.f32 %v3955, %v3955
        %v4667 = vmul.f32 %v3957, %v3957
        %v4668 = vmul.f32 %v3959, %v3959
        %v4669 = vmul.f32 %v3963, %v3963
        %v4670 = vmul.f32 %v3965, %v3965
        %v4671 = vmul.f32 %v3967, %v3967
        %v4672 = vmul.f32 %v3969, %v3969
        %v4673 = vmul.f32 %v3973, %v3973
        %v4674 = vmul.f32 %v3975, %v3975
        %v4675 = vmul.f32 %v3977, %v3977
        %v4676 = vmul.f32 %v3979, %v3979
        %v4677 = vmul.f32 %v3983, %v3983
        %v4678 = vmul.f32 %v3985, %v3985
        %v4679 = vmul.f32 %v3987, %v3987
        %v4680 = vmul.f32 %v3989, %v3989
        %v4681 = vmul.f32 %v3993, %v3993
        %v4682 = vmul.f32 %v3995, %v3995
        %v4683 = vmul.f32 %v3997, %v3997
        %v4684 = vmul.f32 %v3999, %v3999
        %v4685 = vmul.f32 %v4003, %v4003
        %v4686 = vmul.f32 %v4005, %v4005
        %v4687 = vmul.f32 %v4007, %v4007
        %v4688 = vmul.f32 %v4009, %v4009
        %v4689 = vmul.f32 %v4013, %v4013
        %v4690 = vmul.f32 %v4015, %v4015
        %v4691 = vmul.f32 %v4017, %v4017
        %v4692 = vmul.f32 %v4019, %v4019
        %v4693 = vadd.f32 %v4565, %v4629
        %v4694 = vadd.f32 %v4566, %v4630
        %v4695 = vadd.f32 %v4567, %v4631
        %v4696 = vadd.f32 %v4568, %v4632
        %v4697 = vadd.f32 %v4569, %v4633
        %v4698 = vadd.f32 %v4570, %v4634
        %v4699 = vadd.f32 %v4571, %v4635
        %v4700 = vadd.f32 %v4572, %v4636
        %v4701 = vadd.f32 %v4573, %v4637
        %v4702 = vadd.f32 %v4574, %v4638
        %v4703 = vadd.f32 %v4575, %v4639
        %v4704 = vadd.f32 %v4576, %v4640
        %v4705 = vadd.f32 %v4577, %v4641
        %v4706 = vadd.f32 %v4578, %v4642
        %v4707 = vadd.f32 %v4579, %v4643
        %v4708 = vadd.f32 %v4580, %v4644
        %v4709 = vadd.f32 %v4581, %v4645
        %v4710 = vadd.f32 %v4582, %v4646
        %v4711 = vadd.f32 %v4583, %v4647
        %v4712 = vadd.f32 %v4584, %v4648
        %v4713 = vadd.f32 %v4585, %v4649
        %v4714 = vadd.f32 %v4586, %v4650
        %v4715 = vadd.f32 %v4587, %v4651
        %v4716 = vadd.f32 %v4588, %v4652
        %v4717 = vadd.f32 %v4589, %v4653
        %v4718 = vadd.f32 %v4590, %v4654
        %v4719 = vadd.f32 %v4591, %v4655
        %v4720 = vadd.f32 %v4592, %v4656
        %v4721 = vadd.f32 %v4593, %v4657
        %v4722 = vadd.f32 %v4594, %v4658
        %v4723 = vadd.f32 %v4595, %v4659
        %v4724 = vadd.f32 %v4596, %v4660
        %v4725 = vadd.f32 %v4597, %v4661
        %v4726 = vadd.f32 %v4598, %v4662
        %v4727 = vadd.f32 %v4599, %v4663
        %v4728 = vadd.f32 %v4600, %v4664
        %v4729 = vadd.f32 %v4601, %v4665
        %v4730 = vadd.f32 %v4602, %v4666
        %v4731 = vadd.f32 %v4603, %v4667
        %v4732 = vadd.f32 %v4604, %v4668
        %v4733 = vadd.f32 %v4605, %v4669
        %v4734 = vadd.f32 %v4606, %v4670
        %v4735 = vadd.f32 %v4607, %v4671
        %v4736 = vadd.f32 %v4608, %v4672
        %v4737 = vadd.f32 %v4609, %v4673
        %v4738 = vadd.f32 %v4610, %v4674
        %v4739 = vadd.f32 %v4611, %v4675
        %v4740 = vadd.f32 %v4612, %v4676
        %v4741 = vadd.f32 %v4613, %v4677
        %v4742 = vadd.f32 %v4614, %v4678
        %v4743 = vadd.f32 %v4615, %v4679
        %v4744 = vadd.f32 %v4616, %v4680
        %v4745 = vadd.f32 %v4617, %v4681
        %v4746 = vadd.f32 %v4618, %v4682
        %v4747 = vadd.f32 %v4619, %v4683
        %v4748 = vadd.f32 %v4620, %v4684
        %v4749 = vadd.f32 %v4621, %v4685
        %v4750 = vadd.f32 %v4622, %v4686
        %v4751 = vadd.f32 %v4623, %v4687
        %v4752 = vadd.f32 %v4624, %v4688
        %v4753 = vadd.f32 %v4625, %v4689
        %v4754 = vadd.f32 %v4626, %v4690
        %v4755 = vadd.f32 %v4627, %v4691
        %v4756 = vadd.f32 %v4628, %v4692
        %v4757 = vadd.f32 %v4693, 1e-15
        %v4758 = vadd.f32 %v4694, 1e-15
        %v4759 = vadd.f32 %v4695, 1e-15
        %v4760 = vadd.f32 %v4696, 1e-15
        %v4761 = vadd.f32 %v4697, 1e-15
        %v4762 = vadd.f32 %v4698, 1e-15
        %v4763 = vadd.f32 %v4699, 1e-15
        %v4764 = vadd.f32 %v4700, 1e-15
        %v4765 = vadd.f32 %v4701, 1e-15
        %v4766 = vadd.f32 %v4702, 1e-15
        %v4767 = vadd.f32 %v4703, 1e-15
        %v4768 = vadd.f32 %v4704, 1e-15
        %v4769 = vadd.f32 %v4705, 1e-15
        %v4770 = vadd.f32 %v4706, 1e-15
        %v4771 = vadd.f32 %v4707, 1e-15
        %v4772 = vadd.f32 %v4708, 1e-15
        %v4773 = vadd.f32 %v4709, 1e-15
        %v4774 = vadd.f32 %v4710, 1e-15
        %v4775 = vadd.f32 %v4711, 1e-15
        %v4776 = vadd.f32 %v4712, 1e-15
        %v4777 = vadd.f32 %v4713, 1e-15
        %v4778 = vadd.f32 %v4714, 1e-15
        %v4779 = vadd.f32 %v4715, 1e-15
        %v4780 = vadd.f32 %v4716, 1e-15
        %v4781 = vadd.f32 %v4717, 1e-15
        %v4782 = vadd.f32 %v4718, 1e-15
        %v4783 = vadd.f32 %v4719, 1e-15
        %v4784 = vadd.f32 %v4720, 1e-15
        %v4785 = vadd.f32 %v4721, 1e-15
        %v4786 = vadd.f32 %v4722, 1e-15
        %v4787 = vadd.f32 %v4723, 1e-15
        %v4788 = vadd.f32 %v4724, 1e-15
        %v4789 = vadd.f32 %v4725, 1e-15
        %v4790 = vadd.f32 %v4726, 1e-15
        %v4791 = vadd.f32 %v4727, 1e-15
        %v4792 = vadd.f32 %v4728, 1e-15
        %v4793 = vadd.f32 %v4729, 1e-15
        %v4794 = vadd.f32 %v4730, 1e-15
        %v4795 = vadd.f32 %v4731, 1e-15
        %v4796 = vadd.f32 %v4732, 1e-15
        %v4797 = vadd.f32 %v4733, 1e-15
        %v4798 = vadd.f32 %v4734, 1e-15
        %v4799 = vadd.f32 %v4735, 1e-15
        %v4800 = vadd.f32 %v4736, 1e-15
        %v4801 = vadd.f32 %v4737, 1e-15
        %v4802 = vadd.f32 %v4738, 1e-15
        %v4803 = vadd.f32 %v4739, 1e-15
        %v4804 = vadd.f32 %v4740, 1e-15
        %v4805 = vadd.f32 %v4741, 1e-15
        %v4806 = vadd.f32 %v4742, 1e-15
        %v4807 = vadd.f32 %v4743, 1e-15
        %v4808 = vadd.f32 %v4744, 1e-15
        %v4809 = vadd.f32 %v4745, 1e-15
        %v4810 = vadd.f32 %v4746, 1e-15
        %v4811 = vadd.f32 %v4747, 1e-15
        %v4812 = vadd.f32 %v4748, 1e-15
        %v4813 = vadd.f32 %v4749, 1e-15
        %v4814 = vadd.f32 %v4750, 1e-15
        %v4815 = vadd.f32 %v4751, 1e-15
        %v4816 = vadd.f32 %v4752, 1e-15
        %v4817 = vadd.f32 %v4753, 1e-15
        %v4818 = vadd.f32 %v4754, 1e-15
        %v4819 = vadd.f32 %v4755, 1e-15
        %v4820 = vadd.f32 %v4756, 1e-15
        %v4821 = vmul.f32 %v3317, %v3317
        %v4822 = vmul.f32 %v3319, %v3319
        %v4823 = vmul.f32 %v3321, %v3321
        %v4824 = vmul.f32 %v3323, %v3323
        %v4825 = vmul.f32 %v3327, %v3327
        %v4826 = vmul.f32 %v3329, %v3329
        %v4827 = vmul.f32 %v3331, %v3331
        %v4828 = vmul.f32 %v3333, %v3333
        %v4829 = vmul.f32 %v3337, %v3337
        %v4830 = vmul.f32 %v3339, %v3339
        %v4831 = vmul.f32 %v3341, %v3341
        %v4832 = vmul.f32 %v3343, %v3343
        %v4833 = vmul.f32 %v3347, %v3347
        %v4834 = vmul.f32 %v3349, %v3349
        %v4835 = vmul.f32 %v3351, %v3351
        %v4836 = vmul.f32 %v3353, %v3353
        %v4837 = vmul.f32 %v3357, %v3357
        %v4838 = vmul.f32 %v3359, %v3359
        %v4839 = vmul.f32 %v3361, %v3361
        %v4840 = vmul.f32 %v3363, %v3363
        %v4841 = vmul.f32 %v3367, %v3367
        %v4842 = vmul.f32 %v3369, %v3369
        %v4843 = vmul.f32 %v3371, %v3371
        %v4844 = vmul.f32 %v3373, %v3373
        %v4845 = vmul.f32 %v3377, %v3377
        %v4846 = vmul.f32 %v3379, %v3379
        %v4847 = vmul.f32 %v3381, %v3381
        %v4848 = vmul.f32 %v3383, %v3383
        %v4849 = vmul.f32 %v3387, %v3387
        %v4850 = vmul.f32 %v3389, %v3389
        %v4851 = vmul.f32 %v3391, %v3391
        %v4852 = vmul.f32 %v3393, %v3393
        %v4853 = vmul.f32 %v3397, %v3397
        %v4854 = vmul.f32 %v3399, %v3399
        %v4855 = vmul.f32 %v3401, %v3401
        %v4856 = vmul.f32 %v3403, %v3403
        %v4857 = vmul.f32 %v3407, %v3407
        %v4858 = vmul.f32 %v3409, %v3409
        %v4859 = vmul.f32 %v3411, %v3411
        %v4860 = vmul.f32 %v3413, %v3413
        %v4861 = vmul.f32 %v3417, %v3417
        %v4862 = vmul.f32 %v3419, %v3419
        %v4863 = vmul.f32 %v3421, %v3421
        %v4864 = vmul.f32 %v3423, %v3423
        %v4865 = vmul.f32 %v3427, %v3427
        %v4866 = vmul.f32 %v3429, %v3429
        %v4867 = vmul.f32 %v3431, %v3431
        %v4868 = vmul.f32 %v3433, %v3433
        %v4869 = vmul.f32 %v3437, %v3437
        %v4870 = vmul.f32 %v3439, %v3439
        %v4871 = vmul.f32 %v3441, %v3441
        %v4872 = vmul.f32 %v3443, %v3443
        %v4873 = vmul.f32 %v3447, %v3447
        %v4874 = vmul.f32 %v3449, %v3449
        %v4875 = vmul.f32 %v3451, %v3451
        %v4876 = vmul.f32 %v3453, %v3453
        %v4877 = vmul.f32 %v3457, %v3457
        %v4878 = vmul.f32 %v3459, %v3459
        %v4879 = vmul.f32 %v3461, %v3461
        %v4880 = vmul.f32 %v3463, %v3463
        %v4881 = vmul.f32 %v3467, %v3467
        %v4882 = vmul.f32 %v3469, %v3469
        %v4883 = vmul.f32 %v3471, %v3471
        %v4884 = vmul.f32 %v3473, %v3473
        %v4885 = vmul.f32 %v4023, %v4023
        %v4886 = vmul.f32 %v4025, %v4025
        %v4887 = vmul.f32 %v4027, %v4027
        %v4888 = vmul.f32 %v4029, %v4029
        %v4889 = vmul.f32 %v4033, %v4033
        %v4890 = vmul.f32 %v4035, %v4035
        %v4891 = vmul.f32 %v4037, %v4037
        %v4892 = vmul.f32 %v4039, %v4039
        %v4893 = vmul.f32 %v4043, %v4043
        %v4894 = vmul.f32 %v4045, %v4045
        %v4895 = vmul.f32 %v4047, %v4047
        %v4896 = vmul.f32 %v4049, %v4049
        %v4897 = vmul.f32 %v4053, %v4053
        %v4898 = vmul.f32 %v4055, %v4055
        %v4899 = vmul.f32 %v4057, %v4057
        %v4900 = vmul.f32 %v4059, %v4059
        %v4901 = vmul.f32 %v4063, %v4063
        %v4902 = vmul.f32 %v4065, %v4065
        %v4903 = vmul.f32 %v4067, %v4067
        %v4904 = vmul.f32 %v4069, %v4069
        %v4905 = vmul.f32 %v4073, %v4073
        %v4906 = vmul.f32 %v4075, %v4075
        %v4907 = vmul.f32 %v4077, %v4077
        %v4908 = vmul.f32 %v4079, %v4079
        %v4909 = vmul.f32 %v4083, %v4083
        %v4910 = vmul.f32 %v4085, %v4085
        %v4911 = vmul.f32 %v4087, %v4087
        %v4912 = vmul.f32 %v4089, %v4089
        %v4913 = vmul.f32 %v4093, %v4093
        %v4914 = vmul.f32 %v4095, %v4095
        %v4915 = vmul.f32 %v4097, %v4097
        %v4916 = vmul.f32 %v4099, %v4099
        %v4917 = vmul.f32 %v4103, %v4103
        %v4918 = vmul.f32 %v4105, %v4105
        %v4919 = vmul.f32 %v4107, %v4107
        %v4920 = vmul.f32 %v4109, %v4109
        %v4921 = vmul.f32 %v4113, %v4113
        %v4922 = vmul.f32 %v4115, %v4115
        %v4923 = vmul.f32 %v4117, %v4117
        %v4924 = vmul.f32 %v4119, %v4119
        %v4925 = vmul.f32 %v4123, %v4123
        %v4926 = vmul.f32 %v4125, %v4125
        %v4927 = vmul.f32 %v4127, %v4127
        %v4928 = vmul.f32 %v4129, %v4129
        %v4929 = vmul.f32 %v4133, %v4133
        %v4930 = vmul.f32 %v4135, %v4135
        %v4931 = vmul.f32 %v4137, %v4137
        %v4932 = vmul.f32 %v4139, %v4139
        %v4933 = vmul.f32 %v4143, %v4143
        %v4934 = vmul.f32 %v4145, %v4145
        %v4935 = vmul.f32 %v4147, %v4147
        %v4936 = vmul.f32 %v4149, %v4149
        %v4937 = vmul.f32 %v4153, %v4153
        %v4938 = vmul.f32 %v4155, %v4155
        %v4939 = vmul.f32 %v4157, %v4157
        %v4940 = vmul.f32 %v4159, %v4159
        %v4941 = vmul.f32 %v4163, %v4163
        %v4942 = vmul.f32 %v4165, %v4165
        %v4943 = vmul.f32 %v4167, %v4167
        %v4944 = vmul.f32 %v4169, %v4169
        %v4945 = vmul.f32 %v4173, %v4173
        %v4946 = vmul.f32 %v4175, %v4175
        %v4947 = vmul.f32 %v4177, %v4177
        %v4948 = vmul.f32 %v4179, %v4179
        %v4949 = vadd.f32 %v4821, %v4885
        %v4950 = vadd.f32 %v4822, %v4886
        %v4951 = vadd.f32 %v4823, %v4887
        %v4952 = vadd.f32 %v4824, %v4888
        %v4953 = vadd.f32 %v4825, %v4889
        %v4954 = vadd.f32 %v4826, %v4890
        %v4955 = vadd.f32 %v4827, %v4891
        %v4956 = vadd.f32 %v4828, %v4892
        %v4957 = vadd.f32 %v4829, %v4893
        %v4958 = vadd.f32 %v4830, %v4894
        %v4959 = vadd.f32 %v4831, %v4895
        %v4960 = vadd.f32 %v4832, %v4896
        %v4961 = vadd.f32 %v4833, %v4897
        %v4962 = vadd.f32 %v4834, %v4898
        %v4963 = vadd.f32 %v4835, %v4899
        %v4964 = vadd.f32 %v4836, %v4900
        %v4965 = vadd.f32 %v4837, %v4901
        %v4966 = vadd.f32 %v4838, %v4902
        %v4967 = vadd.f32 %v4839, %v4903
        %v4968 = vadd.f32 %v4840, %v4904
        %v4969 = vadd.f32 %v4841, %v4905
        %v4970 = vadd.f32 %v4842, %v4906
        %v4971 = vadd.f32 %v4843, %v4907
        %v4972 = vadd.f32 %v4844, %v4908
        %v4973 = vadd.f32 %v4845, %v4909
        %v4974 = vadd.f32 %v4846, %v4910
        %v4975 = vadd.f32 %v4847, %v4911
        %v4976 = vadd.f32 %v4848, %v4912
        %v4977 = vadd.f32 %v4849, %v4913
        %v4978 = vadd.f32 %v4850, %v4914
        %v4979 = vadd.f32 %v4851, %v4915
        %v4980 = vadd.f32 %v4852, %v4916
        %v4981 = vadd.f32 %v4853, %v4917
        %v4982 = vadd.f32 %v4854, %v4918
        %v4983 = vadd.f32 %v4855, %v4919
        %v4984 = vadd.f32 %v4856, %v4920
        %v4985 = vadd.f32 %v4857, %v4921
        %v4986 = vadd.f32 %v4858, %v4922
        %v4987 = vadd.f32 %v4859, %v4923
        %v4988 = vadd.f32 %v4860, %v4924
        %v4989 = vadd.f32 %v4861, %v4925
        %v4990 = vadd.f32 %v4862, %v4926
        %v4991 = vadd.f32 %v4863, %v4927
        %v4992 = vadd.f32 %v4864, %v4928
        %v4993 = vadd.f32 %v4865, %v4929
        %v4994 = vadd.f32 %v4866, %v4930
        %v4995 = vadd.f32 %v4867, %v4931
        %v4996 = vadd.f32 %v4868, %v4932
        %v4997 = vadd.f32 %v4869, %v4933
        %v4998 = vadd.f32 %v4870, %v4934
        %v4999 = vadd.f32 %v4871, %v4935
        %v5000 = vadd.f32 %v4872, %v4936
        %v5001 = vadd.f32 %v4873, %v4937
        %v5002 = vadd.f32 %v4874, %v4938
        %v5003 = vadd.f32 %v4875, %v4939
        %v5004 = vadd.f32 %v4876, %v4940
        %v5005 = vadd.f32 %v4877, %v4941
        %v5006 = vadd.f32 %v4878, %v4942
        %v5007 = vadd.f32 %v4879, %v4943
        %v5008 = vadd.f32 %v4880, %v4944
        %v5009 = vadd.f32 %v4881, %v4945
        %v5010 = vadd.f32 %v4882, %v4946
        %v5011 = vadd.f32 %v4883, %v4947
        %v5012 = vadd.f32 %v4884, %v4948
        %v5013 = vadd.f32 %v4949, 1e-15
        %v5014 = vadd.f32 %v4950, 1e-15
        %v5015 = vadd.f32 %v4951, 1e-15
        %v5016 = vadd.f32 %v4952, 1e-15
        %v5017 = vadd.f32 %v4953, 1e-15
        %v5018 = vadd.f32 %v4954, 1e-15
        %v5019 = vadd.f32 %v4955, 1e-15
        %v5020 = vadd.f32 %v4956, 1e-15
        %v5021 = vadd.f32 %v4957, 1e-15
        %v5022 = vadd.f32 %v4958, 1e-15
        %v5023 = vadd.f32 %v4959, 1e-15
        %v5024 = vadd.f32 %v4960, 1e-15
        %v5025 = vadd.f32 %v4961, 1e-15
        %v5026 = vadd.f32 %v4962, 1e-15
        %v5027 = vadd.f32 %v4963, 1e-15
        %v5028 = vadd.f32 %v4964, 1e-15
        %v5029 = vadd.f32 %v4965, 1e-15
        %v5030 = vadd.f32 %v4966, 1e-15
        %v5031 = vadd.f32 %v4967, 1e-15
        %v5032 = vadd.f32 %v4968, 1e-15
        %v5033 = vadd.f32 %v4969, 1e-15
        %v5034 = vadd.f32 %v4970, 1e-15
        %v5035 = vadd.f32 %v4971, 1e-15
        %v5036 = vadd.f32 %v4972, 1e-15
        %v5037 = vadd.f32 %v4973, 1e-15
        %v5038 = vadd.f32 %v4974, 1e-15
        %v5039 = vadd.f32 %v4975, 1e-15
        %v5040 = vadd.f32 %v4976, 1e-15
        %v5041 = vadd.f32 %v4977, 1e-15
        %v5042 = vadd.f32 %v4978, 1e-15
        %v5043 = vadd.f32 %v4979, 1e-15
        %v5044 = vadd.f32 %v4980, 1e-15
        %v5045 = vadd.f32 %v4981, 1e-15
        %v5046 = vadd.f32 %v4982, 1e-15
        %v5047 = vadd.f32 %v4983, 1e-15
        %v5048 = vadd.f32 %v4984, 1e-15
        %v5049 = vadd.f32 %v4985, 1e-15
        %v5050 = vadd.f32 %v4986, 1e-15
        %v5051 = vadd.f32 %v4987, 1e-15
        %v5052 = vadd.f32 %v4988, 1e-15
        %v5053 = vadd.f32 %v4989, 1e-15
        %v5054 = vadd.f32 %v4990, 1e-15
        %v5055 = vadd.f32 %v4991, 1e-15
        %v5056 = vadd.f32 %v4992, 1e-15
        %v5057 = vadd.f32 %v4993, 1e-15
        %v5058 = vadd.f32 %v4994, 1e-15
        %v5059 = vadd.f32 %v4995, 1e-15
        %v5060 = vadd.f32 %v4996, 1e-15
        %v5061 = vadd.f32 %v4997, 1e-15
        %v5062 = vadd.f32 %v4998, 1e-15
        %v5063 = vadd.f32 %v4999, 1e-15
        %v5064 = vadd.f32 %v5000, 1e-15
        %v5065 = vadd.f32 %v5001, 1e-15
        %v5066 = vadd.f32 %v5002, 1e-15
        %v5067 = vadd.f32 %v5003, 1e-15
        %v5068 = vadd.f32 %v5004, 1e-15
        %v5069 = vadd.f32 %v5005, 1e-15
        %v5070 = vadd.f32 %v5006, 1e-15
        %v5071 = vadd.f32 %v5007, 1e-15
        %v5072 = vadd.f32 %v5008, 1e-15
        %v5073 = vadd.f32 %v5009, 1e-15
        %v5074 = vadd.f32 %v5010, 1e-15
        %v5075 = vadd.f32 %v5011, 1e-15
        %v5076 = vadd.f32 %v5012, 1e-15
        %v5077 = vmul.f32 %v4757, %v5013
        %v5078 = vmul.f32 %v4758, %v5014
        %v5079 = vmul.f32 %v4759, %v5015
        %v5080 = vmul.f32 %v4760, %v5016
        %v5081 = vmul.f32 %v4761, %v5017
        %v5082 = vmul.f32 %v4762, %v5018
        %v5083 = vmul.f32 %v4763, %v5019
        %v5084 = vmul.f32 %v4764, %v5020
        %v5085 = vmul.f32 %v4765, %v5021
        %v5086 = vmul.f32 %v4766, %v5022
        %v5087 = vmul.f32 %v4767, %v5023
        %v5088 = vmul.f32 %v4768, %v5024
        %v5089 = vmul.f32 %v4769, %v5025
        %v5090 = vmul.f32 %v4770, %v5026
        %v5091 = vmul.f32 %v4771, %v5027
        %v5092 = vmul.f32 %v4772, %v5028
        %v5093 = vmul.f32 %v4773, %v5029
        %v5094 = vmul.f32 %v4774, %v5030
        %v5095 = vmul.f32 %v4775, %v5031
        %v5096 = vmul.f32 %v4776, %v5032
        %v5097 = vmul.f32 %v4777, %v5033
        %v5098 = vmul.f32 %v4778, %v5034
        %v5099 = vmul.f32 %v4779, %v5035
        %v5100 = vmul.f32 %v4780, %v5036
        %v5101 = vmul.f32 %v4781, %v5037
        %v5102 = vmul.f32 %v4782, %v5038
        %v5103 = vmul.f32 %v4783, %v5039
        %v5104 = vmul.f32 %v4784, %v5040
        %v5105 = vmul.f32 %v4785, %v5041
        %v5106 = vmul.f32 %v4786, %v5042
        %v5107 = vmul.f32 %v4787, %v5043
        %v5108 = vmul.f32 %v4788, %v5044
        %v5109 = vmul.f32 %v4789, %v5045
        %v5110 = vmul.f32 %v4790, %v5046
        %v5111 = vmul.f32 %v4791, %v5047
        %v5112 = vmul.f32 %v4792, %v5048
        %v5113 = vmul.f32 %v4793, %v5049
        %v5114 = vmul.f32 %v4794, %v5050
        %v5115 = vmul.f32 %v4795, %v5051
        %v5116 = vmul.f32 %v4796, %v5052
        %v5117 = vmul.f32 %v4797, %v5053
        %v5118 = vmul.f32 %v4798, %v5054
        %v5119 = vmul.f32 %v4799, %v5055
        %v5120 = vmul.f32 %v4800, %v5056
        %v5121 = vmul.f32 %v4801, %v5057
        %v5122 = vmul.f32 %v4802, %v5058
        %v5123 = vmul.f32 %v4803, %v5059
        %v5124 = vmul.f32 %v4804, %v5060
        %v5125 = vmul.f32 %v4805, %v5061
        %v5126 = vmul.f32 %v4806, %v5062
        %v5127 = vmul.f32 %v4807, %v5063
        %v5128 = vmul.f32 %v4808, %v5064
        %v5129 = vmul.f32 %v4809, %v5065
        %v5130 = vmul.f32 %v4810, %v5066
        %v5131 = vmul.f32 %v4811, %v5067
        %v5132 = vmul.f32 %v4812, %v5068
        %v5133 = vmul.f32 %v4813, %v5069
        %v5134 = vmul.f32 %v4814, %v5070
        %v5135 = vmul.f32 %v4815, %v5071
        %v5136 = vmul.f32 %v4816, %v5072
        %v5137 = vmul.f32 %v4817, %v5073
        %v5138 = vmul.f32 %v4818, %v5074
        %v5139 = vmul.f32 %v4819, %v5075
        %v5140 = vmul.f32 %v4820, %v5076
        %v5141 = vrsqrt.pop %v5077
        %v5142 = vrsqrt.pop %v5078
        %v5143 = vrsqrt.pop %v5079
        %v5144 = vrsqrt.pop %v5080
        %v5145 = vrsqrt.pop %v5081
        %v5146 = vrsqrt.pop %v5082
        %v5147 = vrsqrt.pop %v5083
        %v5148 = vrsqrt.pop %v5084
        %v5149 = vrsqrt.pop %v5085
        %v5150 = vrsqrt.pop %v5086
        %v5151 = vrsqrt.pop %v5087
        %v5152 = vrsqrt.pop %v5088
        %v5153 = vrsqrt.pop %v5089
        %v5154 = vrsqrt.pop %v5090
        %v5155 = vrsqrt.pop %v5091
        %v5156 = vrsqrt.pop %v5092
        %v5157 = vrsqrt.pop %v5093
        %v5158 = vrsqrt.pop %v5094
        %v5159 = vrsqrt.pop %v5095
        %v5160 = vrsqrt.pop %v5096
        %v5161 = vrsqrt.pop %v5097
        %v5162 = vrsqrt.pop %v5098
        %v5163 = vrsqrt.pop %v5099
        %v5164 = vrsqrt.pop %v5100
        %v5165 = vrsqrt.pop %v5101
        %v5166 = vrsqrt.pop %v5102
        %v5167 = vrsqrt.pop %v5103
        %v5168 = vrsqrt.pop %v5104
        %v5169 = vrsqrt.pop %v5105
        %v5170 = vrsqrt.pop %v5106
        %v5171 = vrsqrt.pop %v5107
        %v5172 = vrsqrt.pop %v5108
        %v5173 = vrsqrt.pop %v5109
        %v5174 = vrsqrt.pop %v5110
        %v5175 = vrsqrt.pop %v5111
        %v5176 = vrsqrt.pop %v5112
        %v5177 = vrsqrt.pop %v5113
        %v5178 = vrsqrt.pop %v5114
        %v5179 = vrsqrt.pop %v5115
        %v5180 = vrsqrt.pop %v5116
        %v5181 = vrsqrt.pop %v5117
        %v5182 = vrsqrt.pop %v5118
        %v5183 = vrsqrt.pop %v5119
        %v5184 = vrsqrt.pop %v5120
        %v5185 = vrsqrt.pop %v5121
        %v5186 = vrsqrt.pop %v5122
        %v5187 = vrsqrt.pop %v5123
        %v5188 = vrsqrt.pop %v5124
        %v5189 = vrsqrt.pop %v5125
        %v5190 = vrsqrt.pop %v5126
        %v5191 = vrsqrt.pop %v5127
        %v5192 = vrsqrt.pop %v5128
        %v5193 = vrsqrt.pop %v5129
        %v5194 = vrsqrt.pop %v5130
        %v5195 = vrsqrt.pop %v5131
        %v5196 = vrsqrt.pop %v5132
        %v5197 = vrsqrt.pop %v5133
        %v5198 = vrsqrt.pop %v5134
        %v5199 = vrsqrt.pop %v5135
        %v5200 = vrsqrt.pop %v5136
        %v5201 = vrsqrt.pop %v5137
        %v5202 = vrsqrt.pop %v5138
        %v5203 = vrsqrt.pop %v5139
        %v5204 = vrsqrt.pop %v5140
        %v5205 = vmul.f32 %v4309, %v5141
        %v5206 = vmul.f32 %v4310, %v5142
        %v5207 = vmul.f32 %v4311, %v5143
        %v5208 = vmul.f32 %v4312, %v5144
        %v5209 = vmul.f32 %v4313, %v5145
        %v5210 = vmul.f32 %v4314, %v5146
        %v5211 = vmul.f32 %v4315, %v5147
        %v5212 = vmul.f32 %v4316, %v5148
        %v5213 = vmul.f32 %v4317, %v5149
        %v5214 = vmul.f32 %v4318, %v5150
        %v5215 = vmul.f32 %v4319, %v5151
        %v5216 = vmul.f32 %v4320, %v5152
        %v5217 = vmul.f32 %v4321, %v5153
        %v5218 = vmul.f32 %v4322, %v5154
        %v5219 = vmul.f32 %v4323, %v5155
        %v5220 = vmul.f32 %v4324, %v5156
        %v5221 = vmul.f32 %v4325, %v5157
        %v5222 = vmul.f32 %v4326, %v5158
        %v5223 = vmul.f32 %v4327, %v5159
        %v5224 = vmul.f32 %v4328, %v5160
        %v5225 = vmul.f32 %v4329, %v5161
        %v5226 = vmul.f32 %v4330, %v5162
        %v5227 = vmul.f32 %v4331, %v5163
        %v5228 = vmul.f32 %v4332, %v5164
        %v5229 = vmul.f32 %v4333, %v5165
        %v5230 = vmul.f32 %v4334, %v5166
        %v5231 = vmul.f32 %v4335, %v5167
        %v5232 = vmul.f32 %v4336, %v5168
        %v5233 = vmul.f32 %v4337, %v5169
        %v5234 = vmul.f32 %v4338, %v5170
        %v5235 = vmul.f32 %v4339, %v5171
        %v5236 = vmul.f32 %v4340, %v5172
        %v5237 = vmul.f32 %v4341, %v5173
        %v5238 = vmul.f32 %v4342, %v5174
        %v5239 = vmul.f32 %v4343, %v5175
        %v5240 = vmul.f32 %v4344, %v5176
        %v5241 = vmul.f32 %v4345, %v5177
        %v5242 = vmul.f32 %v4346, %v5178
        %v5243 = vmul.f32 %v4347, %v5179
        %v5244 = vmul.f32 %v4348, %v5180
        %v5245 = vmul.f32 %v4349, %v5181
        %v5246 = vmul.f32 %v4350, %v5182
        %v5247 = vmul.f32 %v4351, %v5183
        %v5248 = vmul.f32 %v4352, %v5184
        %v5249 = vmul.f32 %v4353, %v5185
        %v5250 = vmul.f32 %v4354, %v5186
        %v5251 = vmul.f32 %v4355, %v5187
        %v5252 = vmul.f32 %v4356, %v5188
        %v5253 = vmul.f32 %v4357, %v5189
        %v5254 = vmul.f32 %v4358, %v5190
        %v5255 = vmul.f32 %v4359, %v5191
        %v5256 = vmul.f32 %v4360, %v5192
        %v5257 = vmul.f32 %v4361, %v5193
        %v5258 = vmul.f32 %v4362, %v5194
        %v5259 = vmul.f32 %v4363, %v5195
        %v5260 = vmul.f32 %v4364, %v5196
        %v5261 = vmul.f32 %v4365, %v5197
        %v5262 = vmul.f32 %v4366, %v5198
        %v5263 = vmul.f32 %v4367, %v5199
        %v5264 = vmul.f32 %v4368, %v5200
        %v5265 = vmul.f32 %v4369, %v5201
        %v5266 = vmul.f32 %v4370, %v5202
        %v5267 = vmul.f32 %v4371, %v5203
        %v5268 = vmul.f32 %v4372, %v5204
        %v5269 = vpack.c.bf16 %v5207, %v5205
        %v5270 = vpack.c.bf16 %v5208, %v5206
        %v5271 = vpack.c.bf16 %v5211, %v5209
        %v5272 = vpack.c.bf16 %v5212, %v5210
        %v5273 = vpack.c.bf16 %v5215, %v5213
        %v5274 = vpack.c.bf16 %v5216, %v5214
        %v5275 = vpack.c.bf16 %v5219, %v5217
        %v5276 = vpack.c.bf16 %v5220, %v5218
        %v5277 = vpack.c.bf16 %v5223, %v5221
        %v5278 = vpack.c.bf16 %v5224, %v5222
        %v5279 = vpack.c.bf16 %v5227, %v5225
        %v5280 = vpack.c.bf16 %v5228, %v5226
        %v5281 = vpack.c.bf16 %v5231, %v5229
        %v5282 = vpack.c.bf16 %v5232, %v5230
        %v5283 = vpack.c.bf16 %v5235, %v5233
        %v5284 = vpack.c.bf16 %v5236, %v5234
        %v5285 = vpack.c.bf16 %v5239, %v5237
        %v5286 = vpack.c.bf16 %v5240, %v5238
        %v5287 = vpack.c.bf16 %v5243, %v5241
        %v5288 = vpack.c.bf16 %v5244, %v5242
        %v5289 = vpack.c.bf16 %v5247, %v5245
        %v5290 = vpack.c.bf16 %v5248, %v5246
        %v5291 = vpack.c.bf16 %v5251, %v5249
        %v5292 = vpack.c.bf16 %v5252, %v5250
        %v5293 = vpack.c.bf16 %v5255, %v5253
        %v5294 = vpack.c.bf16 %v5256, %v5254
        %v5295 = vpack.c.bf16 %v5259, %v5257
        %v5296 = vpack.c.bf16 %v5260, %v5258
        %v5297 = vpack.c.bf16 %v5263, %v5261
        %v5298 = vpack.c.bf16 %v5264, %v5262
        %v5299 = vpack.c.bf16 %v5267, %v5265
        %v5300 = vpack.c.bf16 %v5268, %v5266
        %v5301 = vmul.f32 %v4501, %v5141
        %v5302 = vmul.f32 %v4502, %v5142
        %v5303 = vmul.f32 %v4503, %v5143
        %v5304 = vmul.f32 %v4504, %v5144
        %v5305 = vmul.f32 %v4505, %v5145
        %v5306 = vmul.f32 %v4506, %v5146
        %v5307 = vmul.f32 %v4507, %v5147
        %v5308 = vmul.f32 %v4508, %v5148
        %v5309 = vmul.f32 %v4509, %v5149
        %v5310 = vmul.f32 %v4510, %v5150
        %v5311 = vmul.f32 %v4511, %v5151
        %v5312 = vmul.f32 %v4512, %v5152
        %v5313 = vmul.f32 %v4513, %v5153
        %v5314 = vmul.f32 %v4514, %v5154
        %v5315 = vmul.f32 %v4515, %v5155
        %v5316 = vmul.f32 %v4516, %v5156
        %v5317 = vmul.f32 %v4517, %v5157
        %v5318 = vmul.f32 %v4518, %v5158
        %v5319 = vmul.f32 %v4519, %v5159
        %v5320 = vmul.f32 %v4520, %v5160
        %v5321 = vmul.f32 %v4521, %v5161
        %v5322 = vmul.f32 %v4522, %v5162
        %v5323 = vmul.f32 %v4523, %v5163
        %v5324 = vmul.f32 %v4524, %v5164
        %v5325 = vmul.f32 %v4525, %v5165
        %v5326 = vmul.f32 %v4526, %v5166
        %v5327 = vmul.f32 %v4527, %v5167
        %v5328 = vmul.f32 %v4528, %v5168
        %v5329 = vmul.f32 %v4529, %v5169
        %v5330 = vmul.f32 %v4530, %v5170
        %v5331 = vmul.f32 %v4531, %v5171
        %v5332 = vmul.f32 %v4532, %v5172
        %v5333 = vmul.f32 %v4533, %v5173
        %v5334 = vmul.f32 %v4534, %v5174
        %v5335 = vmul.f32 %v4535, %v5175
        %v5336 = vmul.f32 %v4536, %v5176
        %v5337 = vmul.f32 %v4537, %v5177
        %v5338 = vmul.f32 %v4538, %v5178
        %v5339 = vmul.f32 %v4539, %v5179
        %v5340 = vmul.f32 %v4540, %v5180
        %v5341 = vmul.f32 %v4541, %v5181
        %v5342 = vmul.f32 %v4542, %v5182
        %v5343 = vmul.f32 %v4543, %v5183
        %v5344 = vmul.f32 %v4544, %v5184
        %v5345 = vmul.f32 %v4545, %v5185
        %v5346 = vmul.f32 %v4546, %v5186
        %v5347 = vmul.f32 %v4547, %v5187
        %v5348 = vmul.f32 %v4548, %v5188
        %v5349 = vmul.f32 %v4549, %v5189
        %v5350 = vmul.f32 %v4550, %v5190
        %v5351 = vmul.f32 %v4551, %v5191
        %v5352 = vmul.f32 %v4552, %v5192
        %v5353 = vmul.f32 %v4553, %v5193
        %v5354 = vmul.f32 %v4554, %v5194
        %v5355 = vmul.f32 %v4555, %v5195
        %v5356 = vmul.f32 %v4556, %v5196
        %v5357 = vmul.f32 %v4557, %v5197
        %v5358 = vmul.f32 %v4558, %v5198
        %v5359 = vmul.f32 %v4559, %v5199
        %v5360 = vmul.f32 %v4560, %v5200
        %v5361 = vmul.f32 %v4561, %v5201
        %v5362 = vmul.f32 %v4562, %v5202
        %v5363 = vmul.f32 %v4563, %v5203
        %v5364 = vmul.f32 %v4564, %v5204
        %v5365 = vpack.c.bf16 %v5303, %v5301
        %v5366 = vpack.c.bf16 %v5304, %v5302
        %v5367 = vpack.c.bf16 %v5307, %v5305
        %v5368 = vpack.c.bf16 %v5308, %v5306
        %v5369 = vpack.c.bf16 %v5311, %v5309
        %v5370 = vpack.c.bf16 %v5312, %v5310
        %v5371 = vpack.c.bf16 %v5315, %v5313
        %v5372 = vpack.c.bf16 %v5316, %v5314
        %v5373 = vpack.c.bf16 %v5319, %v5317
        %v5374 = vpack.c.bf16 %v5320, %v5318
        %v5375 = vpack.c.bf16 %v5323, %v5321
        %v5376 = vpack.c.bf16 %v5324, %v5322
        %v5377 = vpack.c.bf16 %v5327, %v5325
        %v5378 = vpack.c.bf16 %v5328, %v5326
        %v5379 = vpack.c.bf16 %v5331, %v5329
        %v5380 = vpack.c.bf16 %v5332, %v5330
        %v5381 = vpack.c.bf16 %v5335, %v5333
        %v5382 = vpack.c.bf16 %v5336, %v5334
        %v5383 = vpack.c.bf16 %v5339, %v5337
        %v5384 = vpack.c.bf16 %v5340, %v5338
        %v5385 = vpack.c.bf16 %v5343, %v5341
        %v5386 = vpack.c.bf16 %v5344, %v5342
        %v5387 = vpack.c.bf16 %v5347, %v5345
        %v5388 = vpack.c.bf16 %v5348, %v5346
        %v5389 = vpack.c.bf16 %v5351, %v5349
        %v5390 = vpack.c.bf16 %v5352, %v5350
        %v5391 = vpack.c.bf16 %v5355, %v5353
        %v5392 = vpack.c.bf16 %v5356, %v5354
        %v5393 = vpack.c.bf16 %v5359, %v5357
        %v5394 = vpack.c.bf16 %v5360, %v5358
        %v5395 = vpack.c.bf16 %v5363, %v5361
        %v5396 = vpack.c.bf16 %v5364, %v5362
        %v5461 = vunpack.c.l.b16 %v655
        %v5462 = vunpack.c.h.b16 %v655
        %v5463 = vunpack.c.l.b16 %v656
        %v5464 = vunpack.c.h.b16 %v656
        %v5465 = vunpack.c.l.b16 %v657
        %v5466 = vunpack.c.h.b16 %v657
        %v5467 = vunpack.c.l.b16 %v658
        %v5468 = vunpack.c.h.b16 %v658
        %v5469 = vunpack.c.l.b16 %v659
        %v5470 = vunpack.c.h.b16 %v659
        %v5471 = vunpack.c.l.b16 %v660
        %v5472 = vunpack.c.h.b16 %v660
        %v5473 = vunpack.c.l.b16 %v661
        %v5474 = vunpack.c.h.b16 %v661
        %v5475 = vunpack.c.l.b16 %v662
        %v5476 = vunpack.c.h.b16 %v662
        %v5477 = vunpack.c.l.b16 %v663
        %v5478 = vunpack.c.h.b16 %v663
        %v5479 = vunpack.c.l.b16 %v664
        %v5480 = vunpack.c.h.b16 %v664
        %v5481 = vunpack.c.l.b16 %v665
        %v5482 = vunpack.c.h.b16 %v665
        %v5483 = vunpack.c.l.b16 %v666
        %v5484 = vunpack.c.h.b16 %v666
        %v5485 = vunpack.c.l.b16 %v667
        %v5486 = vunpack.c.h.b16 %v667
        %v5487 = vunpack.c.l.b16 %v668
        %v5488 = vunpack.c.h.b16 %v668
        %v5489 = vunpack.c.l.b16 %v669
        %v5490 = vunpack.c.h.b16 %v669
        %v5491 = vunpack.c.l.b16 %v670
        %v5492 = vunpack.c.h.b16 %v670
        %v5493 = vunpack.c.l.b16 %v671
        %v5494 = vunpack.c.h.b16 %v671
        %v5495 = vunpack.c.l.b16 %v672
        %v5496 = vunpack.c.h.b16 %v672
        %v5497 = vunpack.c.l.b16 %v673
        %v5498 = vunpack.c.h.b16 %v673
        %v5499 = vunpack.c.l.b16 %v674
        %v5500 = vunpack.c.h.b16 %v674
        %v5501 = vunpack.c.l.b16 %v675
        %v5502 = vunpack.c.h.b16 %v675
        %v5503 = vunpack.c.l.b16 %v676
        %v5504 = vunpack.c.h.b16 %v676
        %v5505 = vunpack.c.l.b16 %v677
        %v5506 = vunpack.c.h.b16 %v677
        %v5507 = vunpack.c.l.b16 %v678
        %v5508 = vunpack.c.h.b16 %v678
        %v5509 = vunpack.c.l.b16 %v679
        %v5510 = vunpack.c.h.b16 %v679
        %v5511 = vunpack.c.l.b16 %v680
        %v5512 = vunpack.c.h.b16 %v680
        %v5513 = vunpack.c.l.b16 %v681
        %v5514 = vunpack.c.h.b16 %v681
        %v5515 = vunpack.c.l.b16 %v682
        %v5516 = vunpack.c.h.b16 %v682
        %v5517 = vunpack.c.l.b16 %v683
        %v5518 = vunpack.c.h.b16 %v683
        %v5519 = vunpack.c.l.b16 %v684
        %v5520 = vunpack.c.h.b16 %v684
        %v5521 = vunpack.c.l.b16 %v685
        %v5522 = vunpack.c.h.b16 %v685
        %v5523 = vunpack.c.l.b16 %v686
        %v5524 = vunpack.c.h.b16 %v686
        %v5525 = vunpack.c.l.b16 %v687
        %v5526 = vunpack.c.h.b16 %v687
        %v5527 = vunpack.c.l.b16 %v688
        %v5528 = vunpack.c.h.b16 %v688
        %v5529 = vunpack.c.l.b16 %v689
        %v5530 = vunpack.c.h.b16 %v689
        %v5531 = vunpack.c.l.b16 %v690
        %v5532 = vunpack.c.h.b16 %v690
        %v5533 = vunpack.c.l.b16 %v691
        %v5534 = vunpack.c.h.b16 %v691
        %v5535 = vunpack.c.l.b16 %v692
        %v5536 = vunpack.c.h.b16 %v692
        %v5537 = vunpack.c.l.b16 %v693
        %v5538 = vunpack.c.h.b16 %v693
        %v5539 = vunpack.c.l.b16 %v694
        %v5540 = vunpack.c.h.b16 %v694
        %v5541 = vunpack.c.l.b16 %v695
        %v5542 = vunpack.c.h.b16 %v695
        %v5543 = vunpack.c.l.b16 %v696
        %v5544 = vunpack.c.h.b16 %v696
        %v5545 = vunpack.c.l.b16 %v697
        %v5546 = vunpack.c.h.b16 %v697
        %v5547 = vunpack.c.l.b16 %v698
        %v5548 = vunpack.c.h.b16 %v698
        %v5549 = vunpack.c.l.b16 %v699
        %v5550 = vunpack.c.h.b16 %v699
        %v5551 = vunpack.c.l.b16 %v700
        %v5552 = vunpack.c.h.b16 %v700
        %v5553 = vunpack.c.l.b16 %v701
        %v5554 = vunpack.c.h.b16 %v701
        %v5555 = vunpack.c.l.b16 %v702
        %v5556 = vunpack.c.h.b16 %v702
        %v5557 = vunpack.c.l.b16 %v703
        %v5558 = vunpack.c.h.b16 %v703
        %v5559 = vunpack.c.l.b16 %v704
        %v5560 = vunpack.c.h.b16 %v704
        %v5561 = vunpack.c.l.b16 %v705
        %v5562 = vunpack.c.h.b16 %v705
        %v5563 = vunpack.c.l.b16 %v706
        %v5564 = vunpack.c.h.b16 %v706
        %v5565 = vunpack.c.l.b16 %v707
        %v5566 = vunpack.c.h.b16 %v707
        %v5567 = vunpack.c.l.b16 %v708
        %v5568 = vunpack.c.h.b16 %v708
        %v5569 = vunpack.c.l.b16 %v709
        %v5570 = vunpack.c.h.b16 %v709
        %v5571 = vunpack.c.l.b16 %v710
        %v5572 = vunpack.c.h.b16 %v710
        %v5573 = vunpack.c.l.b16 %v711
        %v5574 = vunpack.c.h.b16 %v711
        %v5575 = vunpack.c.l.b16 %v712
        %v5576 = vunpack.c.h.b16 %v712
        %v5577 = vunpack.c.l.b16 %v713
        %v5578 = vunpack.c.h.b16 %v713
        %v5579 = vunpack.c.l.b16 %v714
        %v5580 = vunpack.c.h.b16 %v714
        %v5581 = vunpack.c.l.b16 %v715
        %v5582 = vunpack.c.h.b16 %v715
        %v5583 = vunpack.c.l.b16 %v716
        %v5584 = vunpack.c.h.b16 %v716
        %v5585 = vunpack.c.l.b16 %v717
        %v5586 = vunpack.c.h.b16 %v717
        %v5587 = vunpack.c.l.b16 %v718
        %v5588 = vunpack.c.h.b16 %v718
        %v5589 = vpack.c.b16 %v5463, %v5461
        %v5590 = vpack.c.b16 %v5464, %v5462
        %v5591 = vpack.c.b16 %v5467, %v5465
        %v5592 = vpack.c.b16 %v5468, %v5466
        %v5593 = vpack.c.b16 %v5471, %v5469
        %v5594 = vpack.c.b16 %v5472, %v5470
        %v5595 = vpack.c.b16 %v5475, %v5473
        %v5596 = vpack.c.b16 %v5476, %v5474
        %v5597 = vpack.c.b16 %v5479, %v5477
        %v5598 = vpack.c.b16 %v5480, %v5478
        %v5599 = vpack.c.b16 %v5483, %v5481
        %v5600 = vpack.c.b16 %v5484, %v5482
        %v5601 = vpack.c.b16 %v5487, %v5485
        %v5602 = vpack.c.b16 %v5488, %v5486
        %v5603 = vpack.c.b16 %v5491, %v5489
        %v5604 = vpack.c.b16 %v5492, %v5490
        %v5605 = vpack.c.b16 %v5495, %v5493
        %v5606 = vpack.c.b16 %v5496, %v5494
        %v5607 = vpack.c.b16 %v5499, %v5497
        %v5608 = vpack.c.b16 %v5500, %v5498
        %v5609 = vpack.c.b16 %v5503, %v5501
        %v5610 = vpack.c.b16 %v5504, %v5502
        %v5611 = vpack.c.b16 %v5507, %v5505
        %v5612 = vpack.c.b16 %v5508, %v5506
        %v5613 = vpack.c.b16 %v5511, %v5509
        %v5614 = vpack.c.b16 %v5512, %v5510
        %v5615 = vpack.c.b16 %v5515, %v5513
        %v5616 = vpack.c.b16 %v5516, %v5514
        %v5617 = vpack.c.b16 %v5519, %v5517
        %v5618 = vpack.c.b16 %v5520, %v5518
        %v5619 = vpack.c.b16 %v5523, %v5521
        %v5620 = vpack.c.b16 %v5524, %v5522
        %v5621 = vpack.c.b16 %v5527, %v5525
        %v5622 = vpack.c.b16 %v5528, %v5526
        %v5623 = vpack.c.b16 %v5531, %v5529
        %v5624 = vpack.c.b16 %v5532, %v5530
        %v5625 = vpack.c.b16 %v5535, %v5533
        %v5626 = vpack.c.b16 %v5536, %v5534
        %v5627 = vpack.c.b16 %v5539, %v5537
        %v5628 = vpack.c.b16 %v5540, %v5538
        %v5629 = vpack.c.b16 %v5543, %v5541
        %v5630 = vpack.c.b16 %v5544, %v5542
        %v5631 = vpack.c.b16 %v5547, %v5545
        %v5632 = vpack.c.b16 %v5548, %v5546
        %v5633 = vpack.c.b16 %v5551, %v5549
        %v5634 = vpack.c.b16 %v5552, %v5550
        %v5635 = vpack.c.b16 %v5555, %v5553
        %v5636 = vpack.c.b16 %v5556, %v5554
        %v5637 = vpack.c.b16 %v5559, %v5557
        %v5638 = vpack.c.b16 %v5560, %v5558
        %v5639 = vpack.c.b16 %v5563, %v5561
        %v5640 = vpack.c.b16 %v5564, %v5562
        %v5641 = vpack.c.b16 %v5567, %v5565
        %v5642 = vpack.c.b16 %v5568, %v5566
        %v5643 = vpack.c.b16 %v5571, %v5569
        %v5644 = vpack.c.b16 %v5572, %v5570
        %v5645 = vpack.c.b16 %v5575, %v5573
        %v5646 = vpack.c.b16 %v5576, %v5574
        %v5647 = vpack.c.b16 %v5579, %v5577
        %v5648 = vpack.c.b16 %v5580, %v5578
        %v5649 = vpack.c.b16 %v5583, %v5581
        %v5650 = vpack.c.b16 %v5584, %v5582
        %v5651 = vpack.c.b16 %v5587, %v5585
        %v5652 = vpack.c.b16 %v5588, %v5586
        %5717 = vmatprep.subr.bf16.mxu0 %v5366
        %5718 = vmatpush1.bf16.msra.mxu0 %v5365
        %5719 = vmatprep.subr.bf16.mxu0 %v5368
        %5720 = vmatpush1.bf16.msra.mxu0 %v5367
        %5721 = vmatprep.subr.bf16.mxu0 %v5370
        %5722 = vmatpush1.bf16.msra.mxu0 %v5369
        %5723 = vmatprep.subr.bf16.mxu0 %v5372
        %5724 = vmatpush1.bf16.msra.mxu0 %v5371
        %5725 = vmatprep.subr.bf16.mxu0 %v5374
        %5726 = vmatpush1.bf16.msra.mxu0 %v5373
        %5727 = vmatprep.subr.bf16.mxu0 %v5376
        %5728 = vmatpush1.bf16.msra.mxu0 %v5375
        %5729 = vmatprep.subr.bf16.mxu0 %v5378
        %5730 = vmatpush1.bf16.msra.mxu0 %v5377
        %5731 = vmatprep.subr.bf16.mxu0 %v5380
        %5732 = vmatpush1.bf16.msra.mxu0 %v5379
        %5733 = vmatprep.subr.bf16.mxu0 %v5382
        %5734 = vmatpush1.bf16.msra.mxu0 %v5381
        %5735 = vmatprep.subr.bf16.mxu0 %v5384
        %5736 = vmatpush1.bf16.msra.mxu0 %v5383
        %5737 = vmatprep.subr.bf16.mxu0 %v5386
        %5738 = vmatpush1.bf16.msra.mxu0 %v5385
        %5739 = vmatprep.subr.bf16.mxu0 %v5388
        %5740 = vmatpush1.bf16.msra.mxu0 %v5387
        %5741 = vmatprep.subr.bf16.mxu0 %v5390
        %5742 = vmatpush1.bf16.msra.mxu0 %v5389
        %5743 = vmatprep.subr.bf16.mxu0 %v5392
        %5744 = vmatpush1.bf16.msra.mxu0 %v5391
        %5745 = vmatprep.subr.bf16.mxu0 %v5394
        %5746 = vmatpush1.bf16.msra.mxu0 %v5393
        %5747 = vmatprep.subr.bf16.mxu0 %v5396
        %5748 = vmatpush1.bf16.msra.mxu0 %v5395
        %5749 = vmatprep.mubr.bf16.mxu0 %v5590
        %5750 = vmatmul.mubr.bf16.gmra.mrb[0].mxu0 %v5589
        %v5751 = vpop.f32.mrb[0].mxu0
        %v5752 = vadd.f32 0.0, %v5751
        %v5753 = vpop.f32.mrb[0].mxu0
        %v5754 = vadd.f32 0.0, %v5753
        %v5755 = vpop.f32.mrb[0].mxu0
        %v5756 = vadd.f32 0.0, %v5755
        %v5757 = vpop.f32.mrb[0].mxu0
        %v5758 = vadd.f32 0.0, %v5757
        %5759 = vmatprep.mubr.bf16.mxu0 %v5592
        %5760 = vmatmul.mubr.bf16.gmra.mrb[0].mxu0 %v5591
        %v5761 = vpop.f32.mrb[0].mxu0
        %v5762 = vadd.f32 0.0, %v5761
        %v5763 = vpop.f32.mrb[0].mxu0
        %v5764 = vadd.f32 0.0, %v5763
        %v5765 = vpop.f32.mrb[0].mxu0
        %v5766 = vadd.f32 0.0, %v5765
        %v5767 = vpop.f32.mrb[0].mxu0
        %v5768 = vadd.f32 0.0, %v5767
        %5769 = vmatprep.mubr.bf16.mxu0 %v5594
        %5770 = vmatmul.mubr.bf16.gmra.mrb[0].mxu0 %v5593
        %v5771 = vpop.f32.mrb[0].mxu0
        %v5772 = vadd.f32 0.0, %v5771
        %v5773 = vpop.f32.mrb[0].mxu0
        %v5774 = vadd.f32 0.0, %v5773
        %v5775 = vpop.f32.mrb[0].mxu0
        %v5776 = vadd.f32 0.0, %v5775
        %v5777 = vpop.f32.mrb[0].mxu0
        %v5778 = vadd.f32 0.0, %v5777
        %5779 = vmatprep.mubr.bf16.mxu0 %v5596
        %5780 = vmatmul.mubr.bf16.gmra.mrb[0].mxu0 %v5595
        %v5781 = vpop.f32.mrb[0].mxu0
        %v5782 = vadd.f32 0.0, %v5781
        %v5783 = vpop.f32.mrb[0].mxu0
        %v5784 = vadd.f32 0.0, %v5783
        %v5785 = vpop.f32.mrb[0].mxu0
        %v5786 = vadd.f32 0.0, %v5785
        %v5787 = vpop.f32.mrb[0].mxu0
        %v5788 = vadd.f32 0.0, %v5787
        %5789 = vmatprep.mubr.bf16.mxu0 %v5598
        %5790 = vmatmul.mubr.bf16.gmra.mrb[0].mxu0 %v5597
        %v5791 = vpop.f32.mrb[0].mxu0
        %v5792 = vadd.f32 0.0, %v5791
        %v5793 = vpop.f32.mrb[0].mxu0
        %v5794 = vadd.f32 0.0, %v5793
        %v5795 = vpop.f32.mrb[0].mxu0
        %v5796 = vadd.f32 0.0, %v5795
        %v5797 = vpop.f32.mrb[0].mxu0
        %v5798 = vadd.f32 0.0, %v5797
        %5799 = vmatprep.mubr.bf16.mxu0 %v5600
        %5800 = vmatmul.mubr.bf16.gmra.mrb[0].mxu0 %v5599
        %v5801 = vpop.f32.mrb[0].mxu0
        %v5802 = vadd.f32 0.0, %v5801
        %v5803 = vpop.f32.mrb[0].mxu0
        %v5804 = vadd.f32 0.0, %v5803
        %v5805 = vpop.f32.mrb[0].mxu0
        %v5806 = vadd.f32 0.0, %v5805
        %v5807 = vpop.f32.mrb[0].mxu0
        %v5808 = vadd.f32 0.0, %v5807
        %5809 = vmatprep.mubr.bf16.mxu0 %v5602
        %5810 = vmatmul.mubr.bf16.gmra.mrb[0].mxu0 %v5601
        %v5811 = vpop.f32.mrb[0].mxu0
        %v5812 = vadd.f32 0.0, %v5811
        %v5813 = vpop.f32.mrb[0].mxu0
        %v5814 = vadd.f32 0.0, %v5813
        %v5815 = vpop.f32.mrb[0].mxu0
        %v5816 = vadd.f32 0.0, %v5815
        %v5817 = vpop.f32.mrb[0].mxu0
        %v5818 = vadd.f32 0.0, %v5817
        %5819 = vmatprep.mubr.bf16.mxu0 %v5604
        %5820 = vmatmul.mubr.bf16.gmra.mrb[0].mxu0 %v5603
        %v5821 = vpop.f32.mrb[0].mxu0
        %v5822 = vadd.f32 0.0, %v5821
        %v5823 = vpop.f32.mrb[0].mxu0
        %v5824 = vadd.f32 0.0, %v5823
        %v5825 = vpop.f32.mrb[0].mxu0
        %v5826 = vadd.f32 0.0, %v5825
        %v5827 = vpop.f32.mrb[0].mxu0
        %v5828 = vadd.f32 0.0, %v5827
        %5829 = vmatprep.mubr.bf16.mxu0 %v5606
        %5830 = vmatmul.mubr.bf16.gmra.mrb[0].mxu0 %v5605
        %v5831 = vpop.f32.mrb[0].mxu0
        %v5832 = vadd.f32 0.0, %v5831
        %v5833 = vpop.f32.mrb[0].mxu0
        %v5834 = vadd.f32 0.0, %v5833
        %v5835 = vpop.f32.mrb[0].mxu0
        %v5836 = vadd.f32 0.0, %v5835
        %v5837 = vpop.f32.mrb[0].mxu0
        %v5838 = vadd.f32 0.0, %v5837
        %5839 = vmatprep.mubr.bf16.mxu0 %v5608
        %5840 = vmatmul.mubr.bf16.gmra.mrb[0].mxu0 %v5607
        %v5841 = vpop.f32.mrb[0].mxu0
        %v5842 = vadd.f32 0.0, %v5841
        %v5843 = vpop.f32.mrb[0].mxu0
        %v5844 = vadd.f32 0.0, %v5843
        %v5845 = vpop.f32.mrb[0].mxu0
        %v5846 = vadd.f32 0.0, %v5845
        %v5847 = vpop.f32.mrb[0].mxu0
        %v5848 = vadd.f32 0.0, %v5847
        %5849 = vmatprep.mubr.bf16.mxu0 %v5610
        %5850 = vmatmul.mubr.bf16.gmra.mrb[0].mxu0 %v5609
        %v5851 = vpop.f32.mrb[0].mxu0
        %v5852 = vadd.f32 0.0, %v5851
        %v5853 = vpop.f32.mrb[0].mxu0
        %v5854 = vadd.f32 0.0, %v5853
        %v5855 = vpop.f32.mrb[0].mxu0
        %v5856 = vadd.f32 0.0, %v5855
        %v5857 = vpop.f32.mrb[0].mxu0
        %v5858 = vadd.f32 0.0, %v5857
        %5859 = vmatprep.mubr.bf16.mxu0 %v5612
        %5860 = vmatmul.mubr.bf16.gmra.mrb[0].mxu0 %v5611
        %v5861 = vpop.f32.mrb[0].mxu0
        %v5862 = vadd.f32 0.0, %v5861
        %v5863 = vpop.f32.mrb[0].mxu0
        %v5864 = vadd.f32 0.0, %v5863
        %v5865 = vpop.f32.mrb[0].mxu0
        %v5866 = vadd.f32 0.0, %v5865
        %v5867 = vpop.f32.mrb[0].mxu0
        %v5868 = vadd.f32 0.0, %v5867
        %5869 = vmatprep.mubr.bf16.mxu0 %v5614
        %5870 = vmatmul.mubr.bf16.gmra.mrb[0].mxu0 %v5613
        %v5871 = vpop.f32.mrb[0].mxu0
        %v5872 = vadd.f32 0.0, %v5871
        %v5873 = vpop.f32.mrb[0].mxu0
        %v5874 = vadd.f32 0.0, %v5873
        %v5875 = vpop.f32.mrb[0].mxu0
        %v5876 = vadd.f32 0.0, %v5875
        %v5877 = vpop.f32.mrb[0].mxu0
        %v5878 = vadd.f32 0.0, %v5877
        %5879 = vmatprep.mubr.bf16.mxu0 %v5616
        %5880 = vmatmul.mubr.bf16.gmra.mrb[0].mxu0 %v5615
        %v5881 = vpop.f32.mrb[0].mxu0
        %v5882 = vadd.f32 0.0, %v5881
        %v5883 = vpop.f32.mrb[0].mxu0
        %v5884 = vadd.f32 0.0, %v5883
        %v5885 = vpop.f32.mrb[0].mxu0
        %v5886 = vadd.f32 0.0, %v5885
        %v5887 = vpop.f32.mrb[0].mxu0
        %v5888 = vadd.f32 0.0, %v5887
        %5889 = vmatprep.mubr.bf16.mxu0 %v5618
        %5890 = vmatmul.mubr.bf16.gmra.mrb[0].mxu0 %v5617
        %v5891 = vpop.f32.mrb[0].mxu0
        %v5892 = vadd.f32 0.0, %v5891
        %v5893 = vpop.f32.mrb[0].mxu0
        %v5894 = vadd.f32 0.0, %v5893
        %v5895 = vpop.f32.mrb[0].mxu0
        %v5896 = vadd.f32 0.0, %v5895
        %v5897 = vpop.f32.mrb[0].mxu0
        %v5898 = vadd.f32 0.0, %v5897
        %5899 = vmatprep.mubr.bf16.mxu0 %v5620
        %5900 = vmatmul.mubr.bf16.gmra.mrb[0].mxu0 %v5619
        %v5901 = vpop.f32.mrb[0].mxu0
        %v5902 = vadd.f32 0.0, %v5901
        %v5903 = vpop.f32.mrb[0].mxu0
        %v5904 = vadd.f32 0.0, %v5903
        %v5905 = vpop.f32.mrb[0].mxu0
        %v5906 = vadd.f32 0.0, %v5905
        %v5907 = vpop.f32.mrb[0].mxu0
        %v5908 = vadd.f32 0.0, %v5907
        %5909 = vmatprep.mubr.bf16.mxu0 %v5622
        %5910 = vmatmul.mubr.bf16.gmra.mrb[0].mxu0 %v5621
        %v5911 = vpop.f32.mrb[0].mxu0
        %v5912 = vadd.f32 0.0, %v5911
        %v5913 = vpop.f32.mrb[0].mxu0
        %v5914 = vadd.f32 0.0, %v5913
        %v5915 = vpop.f32.mrb[0].mxu0
        %v5916 = vadd.f32 0.0, %v5915
        %v5917 = vpop.f32.mrb[0].mxu0
        %v5918 = vadd.f32 0.0, %v5917
        %5919 = vmatprep.mubr.bf16.mxu0 %v5624
        %5920 = vmatmul.mubr.bf16.gmra.mrb[0].mxu0 %v5623
        %v5921 = vpop.f32.mrb[0].mxu0
        %v5922 = vadd.f32 0.0, %v5921
        %v5923 = vpop.f32.mrb[0].mxu0
        %v5924 = vadd.f32 0.0, %v5923
        %v5925 = vpop.f32.mrb[0].mxu0
        %v5926 = vadd.f32 0.0, %v5925
        %v5927 = vpop.f32.mrb[0].mxu0
        %v5928 = vadd.f32 0.0, %v5927
        %5929 = vmatprep.mubr.bf16.mxu0 %v5626
        %5930 = vmatmul.mubr.bf16.gmra.mrb[0].mxu0 %v5625
        %v5931 = vpop.f32.mrb[0].mxu0
        %v5932 = vadd.f32 0.0, %v5931
        %v5933 = vpop.f32.mrb[0].mxu0
        %v5934 = vadd.f32 0.0, %v5933
        %v5935 = vpop.f32.mrb[0].mxu0
        %v5936 = vadd.f32 0.0, %v5935
        %v5937 = vpop.f32.mrb[0].mxu0
        %v5938 = vadd.f32 0.0, %v5937
        %5939 = vmatprep.mubr.bf16.mxu0 %v5628
        %5940 = vmatmul.mubr.bf16.gmra.mrb[0].mxu0 %v5627
        %v5941 = vpop.f32.mrb[0].mxu0
        %v5942 = vadd.f32 0.0, %v5941
        %v5943 = vpop.f32.mrb[0].mxu0
        %v5944 = vadd.f32 0.0, %v5943
        %v5945 = vpop.f32.mrb[0].mxu0
        %v5946 = vadd.f32 0.0, %v5945
        %v5947 = vpop.f32.mrb[0].mxu0
        %v5948 = vadd.f32 0.0, %v5947
        %5949 = vmatprep.mubr.bf16.mxu0 %v5630
        %5950 = vmatmul.mubr.bf16.gmra.mrb[0].mxu0 %v5629
        %v5951 = vpop.f32.mrb[0].mxu0
        %v5952 = vadd.f32 0.0, %v5951
        %v5953 = vpop.f32.mrb[0].mxu0
        %v5954 = vadd.f32 0.0, %v5953
        %v5955 = vpop.f32.mrb[0].mxu0
        %v5956 = vadd.f32 0.0, %v5955
        %v5957 = vpop.f32.mrb[0].mxu0
        %v5958 = vadd.f32 0.0, %v5957
        %5959 = vmatprep.mubr.bf16.mxu0 %v5632
        %5960 = vmatmul.mubr.bf16.gmra.mrb[0].mxu0 %v5631
        %v5961 = vpop.f32.mrb[0].mxu0
        %v5962 = vadd.f32 0.0, %v5961
        %v5963 = vpop.f32.mrb[0].mxu0
        %v5964 = vadd.f32 0.0, %v5963
        %v5965 = vpop.f32.mrb[0].mxu0
        %v5966 = vadd.f32 0.0, %v5965
        %v5967 = vpop.f32.mrb[0].mxu0
        %v5968 = vadd.f32 0.0, %v5967
        %5969 = vmatprep.mubr.bf16.mxu0 %v5634
        %5970 = vmatmul.mubr.bf16.gmra.mrb[0].mxu0 %v5633
        %v5971 = vpop.f32.mrb[0].mxu0
        %v5972 = vadd.f32 0.0, %v5971
        %v5973 = vpop.f32.mrb[0].mxu0
        %v5974 = vadd.f32 0.0, %v5973
        %v5975 = vpop.f32.mrb[0].mxu0
        %v5976 = vadd.f32 0.0, %v5975
        %v5977 = vpop.f32.mrb[0].mxu0
        %v5978 = vadd.f32 0.0, %v5977
        %5979 = vmatprep.mubr.bf16.mxu0 %v5636
        %5980 = vmatmul.mubr.bf16.gmra.mrb[0].mxu0 %v5635
        %v5981 = vpop.f32.mrb[0].mxu0
        %v5982 = vadd.f32 0.0, %v5981
        %v5983 = vpop.f32.mrb[0].mxu0
        %v5984 = vadd.f32 0.0, %v5983
        %v5985 = vpop.f32.mrb[0].mxu0
        %v5986 = vadd.f32 0.0, %v5985
        %v5987 = vpop.f32.mrb[0].mxu0
        %v5988 = vadd.f32 0.0, %v5987
        %5989 = vmatprep.mubr.bf16.mxu0 %v5638
        %5990 = vmatmul.mubr.bf16.gmra.mrb[0].mxu0 %v5637
        %v5991 = vpop.f32.mrb[0].mxu0
        %v5992 = vadd.f32 0.0, %v5991
        %v5993 = vpop.f32.mrb[0].mxu0
        %v5994 = vadd.f32 0.0, %v5993
        %v5995 = vpop.f32.mrb[0].mxu0
        %v5996 = vadd.f32 0.0, %v5995
        %v5997 = vpop.f32.mrb[0].mxu0
        %v5998 = vadd.f32 0.0, %v5997
        %5999 = vmatprep.mubr.bf16.mxu0 %v5640
        %6000 = vmatmul.mubr.bf16.gmra.mrb[0].mxu0 %v5639
        %v6001 = vpop.f32.mrb[0].mxu0
        %v6002 = vadd.f32 0.0, %v6001
        %v6003 = vpop.f32.mrb[0].mxu0
        %v6004 = vadd.f32 0.0, %v6003
        %v6005 = vpop.f32.mrb[0].mxu0
        %v6006 = vadd.f32 0.0, %v6005
        %v6007 = vpop.f32.mrb[0].mxu0
        %v6008 = vadd.f32 0.0, %v6007
        %6009 = vmatprep.mubr.bf16.mxu0 %v5642
        %6010 = vmatmul.mubr.bf16.gmra.mrb[0].mxu0 %v5641
        %v6011 = vpop.f32.mrb[0].mxu0
        %v6012 = vadd.f32 0.0, %v6011
        %v6013 = vpop.f32.mrb[0].mxu0
        %v6014 = vadd.f32 0.0, %v6013
        %v6015 = vpop.f32.mrb[0].mxu0
        %v6016 = vadd.f32 0.0, %v6015
        %v6017 = vpop.f32.mrb[0].mxu0
        %v6018 = vadd.f32 0.0, %v6017
        %6019 = vmatprep.mubr.bf16.mxu0 %v5644
        %6020 = vmatmul.mubr.bf16.gmra.mrb[0].mxu0 %v5643
        %v6021 = vpop.f32.mrb[0].mxu0
        %v6022 = vadd.f32 0.0, %v6021
        %v6023 = vpop.f32.mrb[0].mxu0
        %v6024 = vadd.f32 0.0, %v6023
        %v6025 = vpop.f32.mrb[0].mxu0
        %v6026 = vadd.f32 0.0, %v6025
        %v6027 = vpop.f32.mrb[0].mxu0
        %v6028 = vadd.f32 0.0, %v6027
        %6029 = vmatprep.mubr.bf16.mxu0 %v5646
        %6030 = vmatmul.mubr.bf16.gmra.mrb[0].mxu0 %v5645
        %v6031 = vpop.f32.mrb[0].mxu0
        %v6032 = vadd.f32 0.0, %v6031
        %v6033 = vpop.f32.mrb[0].mxu0
        %v6034 = vadd.f32 0.0, %v6033
        %v6035 = vpop.f32.mrb[0].mxu0
        %v6036 = vadd.f32 0.0, %v6035
        %v6037 = vpop.f32.mrb[0].mxu0
        %v6038 = vadd.f32 0.0, %v6037
        %6039 = vmatprep.mubr.bf16.mxu0 %v5648
        %6040 = vmatmul.mubr.bf16.gmra.mrb[0].mxu0 %v5647
        %v6041 = vpop.f32.mrb[0].mxu0
        %v6042 = vadd.f32 0.0, %v6041
        %v6043 = vpop.f32.mrb[0].mxu0
        %v6044 = vadd.f32 0.0, %v6043
        %v6045 = vpop.f32.mrb[0].mxu0
        %v6046 = vadd.f32 0.0, %v6045
        %v6047 = vpop.f32.mrb[0].mxu0
        %v6048 = vadd.f32 0.0, %v6047
        %6049 = vmatprep.mubr.bf16.mxu0 %v5650
        %6050 = vmatmul.mubr.bf16.gmra.mrb[0].mxu0 %v5649
        %v6051 = vpop.f32.mrb[0].mxu0
        %v6052 = vadd.f32 0.0, %v6051
        %v6053 = vpop.f32.mrb[0].mxu0
        %v6054 = vadd.f32 0.0, %v6053
        %v6055 = vpop.f32.mrb[0].mxu0
        %v6056 = vadd.f32 0.0, %v6055
        %v6057 = vpop.f32.mrb[0].mxu0
        %v6058 = vadd.f32 0.0, %v6057
        %6059 = vmatprep.mubr.bf16.mxu0 %v5652
        %6060 = vmatmul.mubr.bf16.gmra.mrb[0].mxu0 %v5651
        %v6061 = vpop.f32.mrb[0].mxu0
        %v6062 = vadd.f32 0.0, %v6061
        %v6063 = vpop.f32.mrb[0].mxu0
        %v6064 = vadd.f32 0.0, %v6063
        %v6065 = vpop.f32.mrb[0].mxu0
        %v6066 = vadd.f32 0.0, %v6065
        %v6067 = vpop.f32.mrb[0].mxu0
        %v6068 = vadd.f32 0.0, %v6067
        %6069 = vdwg.mxu0
        %v6134 = vunpack.c.l.b16 %v591
        %v6135 = vunpack.c.h.b16 %v591
        %v6136 = vunpack.c.l.b16 %v592
        %v6137 = vunpack.c.h.b16 %v592
        %v6138 = vunpack.c.l.b16 %v593
        %v6139 = vunpack.c.h.b16 %v593
        %v6140 = vunpack.c.l.b16 %v594
        %v6141 = vunpack.c.h.b16 %v594
        %v6142 = vunpack.c.l.b16 %v595
        %v6143 = vunpack.c.h.b16 %v595
        %v6144 = vunpack.c.l.b16 %v596
        %v6145 = vunpack.c.h.b16 %v596
        %v6146 = vunpack.c.l.b16 %v597
        %v6147 = vunpack.c.h.b16 %v597
        %v6148 = vunpack.c.l.b16 %v598
        %v6149 = vunpack.c.h.b16 %v598
        %v6150 = vunpack.c.l.b16 %v599
        %v6151 = vunpack.c.h.b16 %v599
        %v6152 = vunpack.c.l.b16 %v600
        %v6153 = vunpack.c.h.b16 %v600
        %v6154 = vunpack.c.l.b16 %v601
        %v6155 = vunpack.c.h.b16 %v601
        %v6156 = vunpack.c.l.b16 %v602
        %v6157 = vunpack.c.h.b16 %v602
        %v6158 = vunpack.c.l.b16 %v603
        %v6159 = vunpack.c.h.b16 %v603
        %v6160 = vunpack.c.l.b16 %v604
        %v6161 = vunpack.c.h.b16 %v604
        %v6162 = vunpack.c.l.b16 %v605
        %v6163 = vunpack.c.h.b16 %v605
        %v6164 = vunpack.c.l.b16 %v606
        %v6165 = vunpack.c.h.b16 %v606
        %v6166 = vunpack.c.l.b16 %v607
        %v6167 = vunpack.c.h.b16 %v607
        %v6168 = vunpack.c.l.b16 %v608
        %v6169 = vunpack.c.h.b16 %v608
        %v6170 = vunpack.c.l.b16 %v609
        %v6171 = vunpack.c.h.b16 %v609
        %v6172 = vunpack.c.l.b16 %v610
        %v6173 = vunpack.c.h.b16 %v610
        %v6174 = vunpack.c.l.b16 %v611
        %v6175 = vunpack.c.h.b16 %v611
        %v6176 = vunpack.c.l.b16 %v612
        %v6177 = vunpack.c.h.b16 %v612
        %v6178 = vunpack.c.l.b16 %v613
        %v6179 = vunpack.c.h.b16 %v613
        %v6180 = vunpack.c.l.b16 %v614
        %v6181 = vunpack.c.h.b16 %v614
        %v6182 = vunpack.c.l.b16 %v615
        %v6183 = vunpack.c.h.b16 %v615
        %v6184 = vunpack.c.l.b16 %v616
        %v6185 = vunpack.c.h.b16 %v616
        %v6186 = vunpack.c.l.b16 %v617
        %v6187 = vunpack.c.h.b16 %v617
        %v6188 = vunpack.c.l.b16 %v618
        %v6189 = vunpack.c.h.b16 %v618
        %v6190 = vunpack.c.l.b16 %v619
        %v6191 = vunpack.c.h.b16 %v619
        %v6192 = vunpack.c.l.b16 %v620
        %v6193 = vunpack.c.h.b16 %v620
        %v6194 = vunpack.c.l.b16 %v621
        %v6195 = vunpack.c.h.b16 %v621
        %v6196 = vunpack.c.l.b16 %v622
        %v6197 = vunpack.c.h.b16 %v622
        %v6198 = vunpack.c.l.b16 %v623
        %v6199 = vunpack.c.h.b16 %v623
        %v6200 = vunpack.c.l.b16 %v624
        %v6201 = vunpack.c.h.b16 %v624
        %v6202 = vunpack.c.l.b16 %v625
        %v6203 = vunpack.c.h.b16 %v625
        %v6204 = vunpack.c.l.b16 %v626
        %v6205 = vunpack.c.h.b16 %v626
        %v6206 = vunpack.c.l.b16 %v627
        %v6207 = vunpack.c.h.b16 %v627
        %v6208 = vunpack.c.l.b16 %v628
        %v6209 = vunpack.c.h.b16 %v628
        %v6210 = vunpack.c.l.b16 %v629
        %v6211 = vunpack.c.h.b16 %v629
        %v6212 = vunpack.c.l.b16 %v630
        %v6213 = vunpack.c.h.b16 %v630
        %v6214 = vunpack.c.l.b16 %v631
        %v6215 = vunpack.c.h.b16 %v631
        %v6216 = vunpack.c.l.b16 %v632
        %v6217 = vunpack.c.h.b16 %v632
        %v6218 = vunpack.c.l.b16 %v633
        %v6219 = vunpack.c.h.b16 %v633
        %v6220 = vunpack.c.l.b16 %v634
        %v6221 = vunpack.c.h.b16 %v634
        %v6222 = vunpack.c.l.b16 %v635
        %v6223 = vunpack.c.h.b16 %v635
        %v6224 = vunpack.c.l.b16 %v636
        %v6225 = vunpack.c.h.b16 %v636
        %v6226 = vunpack.c.l.b16 %v637
        %v6227 = vunpack.c.h.b16 %v637
        %v6228 = vunpack.c.l.b16 %v638
        %v6229 = vunpack.c.h.b16 %v638
        %v6230 = vunpack.c.l.b16 %v639
        %v6231 = vunpack.c.h.b16 %v639
        %v6232 = vunpack.c.l.b16 %v640
        %v6233 = vunpack.c.h.b16 %v640
        %v6234 = vunpack.c.l.b16 %v641
        %v6235 = vunpack.c.h.b16 %v641
        %v6236 = vunpack.c.l.b16 %v642
        %v6237 = vunpack.c.h.b16 %v642
        %v6238 = vunpack.c.l.b16 %v643
        %v6239 = vunpack.c.h.b16 %v643
        %v6240 = vunpack.c.l.b16 %v644
        %v6241 = vunpack.c.h.b16 %v644
        %v6242 = vunpack.c.l.b16 %v645
        %v6243 = vunpack.c.h.b16 %v645
        %v6244 = vunpack.c.l.b16 %v646
        %v6245 = vunpack.c.h.b16 %v646
        %v6246 = vunpack.c.l.b16 %v647
        %v6247 = vunpack.c.h.b16 %v647
        %v6248 = vunpack.c.l.b16 %v648
        %v6249 = vunpack.c.h.b16 %v648
        %v6250 = vunpack.c.l.b16 %v649
        %v6251 = vunpack.c.h.b16 %v649
        %v6252 = vunpack.c.l.b16 %v650
        %v6253 = vunpack.c.h.b16 %v650
        %v6254 = vunpack.c.l.b16 %v651
        %v6255 = vunpack.c.h.b16 %v651
        %v6256 = vunpack.c.l.b16 %v652
        %v6257 = vunpack.c.h.b16 %v652
        %v6258 = vunpack.c.l.b16 %v653
        %v6259 = vunpack.c.h.b16 %v653
        %v6260 = vunpack.c.l.b16 %v654
        %v6261 = vunpack.c.h.b16 %v654
        %v6262 = vpack.c.b16 %v6136, %v6134
        %v6263 = vpack.c.b16 %v6137, %v6135
        %v6264 = vpack.c.b16 %v6140, %v6138
        %v6265 = vpack.c.b16 %v6141, %v6139
        %v6266 = vpack.c.b16 %v6144, %v6142
        %v6267 = vpack.c.b16 %v6145, %v6143
        %v6268 = vpack.c.b16 %v6148, %v6146
        %v6269 = vpack.c.b16 %v6149, %v6147
        %v6270 = vpack.c.b16 %v6152, %v6150
        %v6271 = vpack.c.b16 %v6153, %v6151
        %v6272 = vpack.c.b16 %v6156, %v6154
        %v6273 = vpack.c.b16 %v6157, %v6155
        %v6274 = vpack.c.b16 %v6160, %v6158
        %v6275 = vpack.c.b16 %v6161, %v6159
        %v6276 = vpack.c.b16 %v6164, %v6162
        %v6277 = vpack.c.b16 %v6165, %v6163
        %v6278 = vpack.c.b16 %v6168, %v6166
        %v6279 = vpack.c.b16 %v6169, %v6167
        %v6280 = vpack.c.b16 %v6172, %v6170
        %v6281 = vpack.c.b16 %v6173, %v6171
        %v6282 = vpack.c.b16 %v6176, %v6174
        %v6283 = vpack.c.b16 %v6177, %v6175
        %v6284 = vpack.c.b16 %v6180, %v6178
        %v6285 = vpack.c.b16 %v6181, %v6179
        %v6286 = vpack.c.b16 %v6184, %v6182
        %v6287 = vpack.c.b16 %v6185, %v6183
        %v6288 = vpack.c.b16 %v6188, %v6186
        %v6289 = vpack.c.b16 %v6189, %v6187
        %v6290 = vpack.c.b16 %v6192, %v6190
        %v6291 = vpack.c.b16 %v6193, %v6191
        %v6292 = vpack.c.b16 %v6196, %v6194
        %v6293 = vpack.c.b16 %v6197, %v6195
        %v6294 = vpack.c.b16 %v6200, %v6198
        %v6295 = vpack.c.b16 %v6201, %v6199
        %v6296 = vpack.c.b16 %v6204, %v6202
        %v6297 = vpack.c.b16 %v6205, %v6203
        %v6298 = vpack.c.b16 %v6208, %v6206
        %v6299 = vpack.c.b16 %v6209, %v6207
        %v6300 = vpack.c.b16 %v6212, %v6210
        %v6301 = vpack.c.b16 %v6213, %v6211
        %v6302 = vpack.c.b16 %v6216, %v6214
        %v6303 = vpack.c.b16 %v6217, %v6215
        %v6304 = vpack.c.b16 %v6220, %v6218
        %v6305 = vpack.c.b16 %v6221, %v6219
        %v6306 = vpack.c.b16 %v6224, %v6222
        %v6307 = vpack.c.b16 %v6225, %v6223
        %v6308 = vpack.c.b16 %v6228, %v6226
        %v6309 = vpack.c.b16 %v6229, %v6227
        %v6310 = vpack.c.b16 %v6232, %v6230
        %v6311 = vpack.c.b16 %v6233, %v6231
        %v6312 = vpack.c.b16 %v6236, %v6234
        %v6313 = vpack.c.b16 %v6237, %v6235
        %v6314 = vpack.c.b16 %v6240, %v6238
        %v6315 = vpack.c.b16 %v6241, %v6239
        %v6316 = vpack.c.b16 %v6244, %v6242
        %v6317 = vpack.c.b16 %v6245, %v6243
        %v6318 = vpack.c.b16 %v6248, %v6246
        %v6319 = vpack.c.b16 %v6249, %v6247
        %v6320 = vpack.c.b16 %v6252, %v6250
        %v6321 = vpack.c.b16 %v6253, %v6251
        %v6322 = vpack.c.b16 %v6256, %v6254
        %v6323 = vpack.c.b16 %v6257, %v6255
        %v6324 = vpack.c.b16 %v6260, %v6258
        %v6325 = vpack.c.b16 %v6261, %v6259
        %6390 = vmatprep.subr.bf16.mxu0 %v5270
        %6391 = vmatpush1.bf16.msra.mxu0 %v5269
        %6392 = vmatprep.subr.bf16.mxu0 %v5272
        %6393 = vmatpush1.bf16.msra.mxu0 %v5271
        %6394 = vmatprep.subr.bf16.mxu0 %v5274
        %6395 = vmatpush1.bf16.msra.mxu0 %v5273
        %6396 = vmatprep.subr.bf16.mxu0 %v5276
        %6397 = vmatpush1.bf16.msra.mxu0 %v5275
        %6398 = vmatprep.subr.bf16.mxu0 %v5278
        %6399 = vmatpush1.bf16.msra.mxu0 %v5277
        %6400 = vmatprep.subr.bf16.mxu0 %v5280
        %6401 = vmatpush1.bf16.msra.mxu0 %v5279
        %6402 = vmatprep.subr.bf16.mxu0 %v5282
        %6403 = vmatpush1.bf16.msra.mxu0 %v5281
        %6404 = vmatprep.subr.bf16.mxu0 %v5284
        %6405 = vmatpush1.bf16.msra.mxu0 %v5283
        %6406 = vmatprep.subr.bf16.mxu0 %v5286
        %6407 = vmatpush1.bf16.msra.mxu0 %v5285
        %6408 = vmatprep.subr.bf16.mxu0 %v5288
        %6409 = vmatpush1.bf16.msra.mxu0 %v5287
        %6410 = vmatprep.subr.bf16.mxu0 %v5290
        %6411 = vmatpush1.bf16.msra.mxu0 %v5289
        %6412 = vmatprep.subr.bf16.mxu0 %v5292
        %6413 = vmatpush1.bf16.msra.mxu0 %v5291
        %6414 = vmatprep.subr.bf16.mxu0 %v5294
        %6415 = vmatpush1.bf16.msra.mxu0 %v5293
        %6416 = vmatprep.subr.bf16.mxu0 %v5296
        %6417 = vmatpush1.bf16.msra.mxu0 %v5295
        %6418 = vmatprep.subr.bf16.mxu0 %v5298
        %6419 = vmatpush1.bf16.msra.mxu0 %v5297
        %6420 = vmatprep.subr.bf16.mxu0 %v5300
        %6421 = vmatpush1.bf16.msra.mxu0 %v5299
        %6422 = vmatprep.mubr.bf16.mxu0 %v6263
        %6423 = vmatmul.mubr.bf16.gmra.mrb[0].mxu0 %v6262
        %v6424 = vpop.f32.mrb[0].mxu0
        %v6425 = vadd.f32 %v5752, %v6424
        %v6426 = vpop.f32.mrb[0].mxu0
        %v6427 = vadd.f32 %v5754, %v6426
        %v6428 = vpop.f32.mrb[0].mxu0
        %v6429 = vadd.f32 %v5756, %v6428
        %v6430 = vpop.f32.mrb[0].mxu0
        %v6431 = vadd.f32 %v5758, %v6430
        %6432 = vmatprep.mubr.bf16.mxu0 %v6265
        %6433 = vmatmul.mubr.bf16.gmra.mrb[0].mxu0 %v6264
        %v6434 = vpop.f32.mrb[0].mxu0
        %v6435 = vadd.f32 %v5762, %v6434
        %v6436 = vpop.f32.mrb[0].mxu0
        %v6437 = vadd.f32 %v5764, %v6436
        %v6438 = vpop.f32.mrb[0].mxu0
        %v6439 = vadd.f32 %v5766, %v6438
        %v6440 = vpop.f32.mrb[0].mxu0
        %v6441 = vadd.f32 %v5768, %v6440
        %6442 = vmatprep.mubr.bf16.mxu0 %v6267
        %6443 = vmatmul.mubr.bf16.gmra.mrb[0].mxu0 %v6266
        %v6444 = vpop.f32.mrb[0].mxu0
        %v6445 = vadd.f32 %v5772, %v6444
        %v6446 = vpop.f32.mrb[0].mxu0
        %v6447 = vadd.f32 %v5774, %v6446
        %v6448 = vpop.f32.mrb[0].mxu0
        %v6449 = vadd.f32 %v5776, %v6448
        %v6450 = vpop.f32.mrb[0].mxu0
        %v6451 = vadd.f32 %v5778, %v6450
        %6452 = vmatprep.mubr.bf16.mxu0 %v6269
        %6453 = vmatmul.mubr.bf16.gmra.mrb[0].mxu0 %v6268
        %v6454 = vpop.f32.mrb[0].mxu0
        %v6455 = vadd.f32 %v5782, %v6454
        %v6456 = vpop.f32.mrb[0].mxu0
        %v6457 = vadd.f32 %v5784, %v6456
        %v6458 = vpop.f32.mrb[0].mxu0
        %v6459 = vadd.f32 %v5786, %v6458
        %v6460 = vpop.f32.mrb[0].mxu0
        %v6461 = vadd.f32 %v5788, %v6460
        %6462 = vmatprep.mubr.bf16.mxu0 %v6271
        %6463 = vmatmul.mubr.bf16.gmra.mrb[0].mxu0 %v6270
        %v6464 = vpop.f32.mrb[0].mxu0
        %v6465 = vadd.f32 %v5792, %v6464
        %v6466 = vpop.f32.mrb[0].mxu0
        %v6467 = vadd.f32 %v5794, %v6466
        %v6468 = vpop.f32.mrb[0].mxu0
        %v6469 = vadd.f32 %v5796, %v6468
        %v6470 = vpop.f32.mrb[0].mxu0
        %v6471 = vadd.f32 %v5798, %v6470
        %6472 = vmatprep.mubr.bf16.mxu0 %v6273
        %6473 = vmatmul.mubr.bf16.gmra.mrb[0].mxu0 %v6272
        %v6474 = vpop.f32.mrb[0].mxu0
        %v6475 = vadd.f32 %v5802, %v6474
        %v6476 = vpop.f32.mrb[0].mxu0
        %v6477 = vadd.f32 %v5804, %v6476
        %v6478 = vpop.f32.mrb[0].mxu0
        %v6479 = vadd.f32 %v5806, %v6478
        %v6480 = vpop.f32.mrb[0].mxu0
        %v6481 = vadd.f32 %v5808, %v6480
        %6482 = vmatprep.mubr.bf16.mxu0 %v6275
        %6483 = vmatmul.mubr.bf16.gmra.mrb[0].mxu0 %v6274
        %v6484 = vpop.f32.mrb[0].mxu0
        %v6485 = vadd.f32 %v5812, %v6484
        %v6486 = vpop.f32.mrb[0].mxu0
        %v6487 = vadd.f32 %v5814, %v6486
        %v6488 = vpop.f32.mrb[0].mxu0
        %v6489 = vadd.f32 %v5816, %v6488
        %v6490 = vpop.f32.mrb[0].mxu0
        %v6491 = vadd.f32 %v5818, %v6490
        %6492 = vmatprep.mubr.bf16.mxu0 %v6277
        %6493 = vmatmul.mubr.bf16.gmra.mrb[0].mxu0 %v6276
        %v6494 = vpop.f32.mrb[0].mxu0
        %v6495 = vadd.f32 %v5822, %v6494
        %v6496 = vpop.f32.mrb[0].mxu0
        %v6497 = vadd.f32 %v5824, %v6496
        %v6498 = vpop.f32.mrb[0].mxu0
        %v6499 = vadd.f32 %v5826, %v6498
        %v6500 = vpop.f32.mrb[0].mxu0
        %v6501 = vadd.f32 %v5828, %v6500
        %6502 = vmatprep.mubr.bf16.mxu0 %v6279
        %6503 = vmatmul.mubr.bf16.gmra.mrb[0].mxu0 %v6278
        %v6504 = vpop.f32.mrb[0].mxu0
        %v6505 = vadd.f32 %v5832, %v6504
        %v6506 = vpop.f32.mrb[0].mxu0
        %v6507 = vadd.f32 %v5834, %v6506
        %v6508 = vpop.f32.mrb[0].mxu0
        %v6509 = vadd.f32 %v5836, %v6508
        %v6510 = vpop.f32.mrb[0].mxu0
        %v6511 = vadd.f32 %v5838, %v6510
        %6512 = vmatprep.mubr.bf16.mxu0 %v6281
        %6513 = vmatmul.mubr.bf16.gmra.mrb[0].mxu0 %v6280
        %v6514 = vpop.f32.mrb[0].mxu0
        %v6515 = vadd.f32 %v5842, %v6514
        %v6516 = vpop.f32.mrb[0].mxu0
        %v6517 = vadd.f32 %v5844, %v6516
        %v6518 = vpop.f32.mrb[0].mxu0
        %v6519 = vadd.f32 %v5846, %v6518
        %v6520 = vpop.f32.mrb[0].mxu0
        %v6521 = vadd.f32 %v5848, %v6520
        %6522 = vmatprep.mubr.bf16.mxu0 %v6283
        %6523 = vmatmul.mubr.bf16.gmra.mrb[0].mxu0 %v6282
        %v6524 = vpop.f32.mrb[0].mxu0
        %v6525 = vadd.f32 %v5852, %v6524
        %v6526 = vpop.f32.mrb[0].mxu0
        %v6527 = vadd.f32 %v5854, %v6526
        %v6528 = vpop.f32.mrb[0].mxu0
        %v6529 = vadd.f32 %v5856, %v6528
        %v6530 = vpop.f32.mrb[0].mxu0
        %v6531 = vadd.f32 %v5858, %v6530
        %6532 = vmatprep.mubr.bf16.mxu0 %v6285
        %6533 = vmatmul.mubr.bf16.gmra.mrb[0].mxu0 %v6284
        %v6534 = vpop.f32.mrb[0].mxu0
        %v6535 = vadd.f32 %v5862, %v6534
        %v6536 = vpop.f32.mrb[0].mxu0
        %v6537 = vadd.f32 %v5864, %v6536
        %v6538 = vpop.f32.mrb[0].mxu0
        %v6539 = vadd.f32 %v5866, %v6538
        %v6540 = vpop.f32.mrb[0].mxu0
        %v6541 = vadd.f32 %v5868, %v6540
        %6542 = vmatprep.mubr.bf16.mxu0 %v6287
        %6543 = vmatmul.mubr.bf16.gmra.mrb[0].mxu0 %v6286
        %v6544 = vpop.f32.mrb[0].mxu0
        %v6545 = vadd.f32 %v5872, %v6544
        %v6546 = vpop.f32.mrb[0].mxu0
        %v6547 = vadd.f32 %v5874, %v6546
        %v6548 = vpop.f32.mrb[0].mxu0
        %v6549 = vadd.f32 %v5876, %v6548
        %v6550 = vpop.f32.mrb[0].mxu0
        %v6551 = vadd.f32 %v5878, %v6550
        %6552 = vmatprep.mubr.bf16.mxu0 %v6289
        %6553 = vmatmul.mubr.bf16.gmra.mrb[0].mxu0 %v6288
        %v6554 = vpop.f32.mrb[0].mxu0
        %v6555 = vadd.f32 %v5882, %v6554
        %v6556 = vpop.f32.mrb[0].mxu0
        %v6557 = vadd.f32 %v5884, %v6556
        %v6558 = vpop.f32.mrb[0].mxu0
        %v6559 = vadd.f32 %v5886, %v6558
        %v6560 = vpop.f32.mrb[0].mxu0
        %v6561 = vadd.f32 %v5888, %v6560
        %6562 = vmatprep.mubr.bf16.mxu0 %v6291
        %6563 = vmatmul.mubr.bf16.gmra.mrb[0].mxu0 %v6290
        %v6564 = vpop.f32.mrb[0].mxu0
        %v6565 = vadd.f32 %v5892, %v6564
        %v6566 = vpop.f32.mrb[0].mxu0
        %v6567 = vadd.f32 %v5894, %v6566
        %v6568 = vpop.f32.mrb[0].mxu0
        %v6569 = vadd.f32 %v5896, %v6568
        %v6570 = vpop.f32.mrb[0].mxu0
        %v6571 = vadd.f32 %v5898, %v6570
        %6572 = vmatprep.mubr.bf16.mxu0 %v6293
        %6573 = vmatmul.mubr.bf16.gmra.mrb[0].mxu0 %v6292
        %v6574 = vpop.f32.mrb[0].mxu0
        %v6575 = vadd.f32 %v5902, %v6574
        %v6576 = vpop.f32.mrb[0].mxu0
        %v6577 = vadd.f32 %v5904, %v6576
        %v6578 = vpop.f32.mrb[0].mxu0
        %v6579 = vadd.f32 %v5906, %v6578
        %v6580 = vpop.f32.mrb[0].mxu0
        %v6581 = vadd.f32 %v5908, %v6580
        %6582 = vmatprep.mubr.bf16.mxu0 %v6295
        %6583 = vmatmul.mubr.bf16.gmra.mrb[0].mxu0 %v6294
        %v6584 = vpop.f32.mrb[0].mxu0
        %v6585 = vadd.f32 %v5912, %v6584
        %v6586 = vpop.f32.mrb[0].mxu0
        %v6587 = vadd.f32 %v5914, %v6586
        %v6588 = vpop.f32.mrb[0].mxu0
        %v6589 = vadd.f32 %v5916, %v6588
        %v6590 = vpop.f32.mrb[0].mxu0
        %v6591 = vadd.f32 %v5918, %v6590
        %6592 = vmatprep.mubr.bf16.mxu0 %v6297
        %6593 = vmatmul.mubr.bf16.gmra.mrb[0].mxu0 %v6296
        %v6594 = vpop.f32.mrb[0].mxu0
        %v6595 = vadd.f32 %v5922, %v6594
        %v6596 = vpop.f32.mrb[0].mxu0
        %v6597 = vadd.f32 %v5924, %v6596
        %v6598 = vpop.f32.mrb[0].mxu0
        %v6599 = vadd.f32 %v5926, %v6598
        %v6600 = vpop.f32.mrb[0].mxu0
        %v6601 = vadd.f32 %v5928, %v6600
        %6602 = vmatprep.mubr.bf16.mxu0 %v6299
        %6603 = vmatmul.mubr.bf16.gmra.mrb[0].mxu0 %v6298
        %v6604 = vpop.f32.mrb[0].mxu0
        %v6605 = vadd.f32 %v5932, %v6604
        %v6606 = vpop.f32.mrb[0].mxu0
        %v6607 = vadd.f32 %v5934, %v6606
        %v6608 = vpop.f32.mrb[0].mxu0
        %v6609 = vadd.f32 %v5936, %v6608
        %v6610 = vpop.f32.mrb[0].mxu0
        %v6611 = vadd.f32 %v5938, %v6610
        %6612 = vmatprep.mubr.bf16.mxu0 %v6301
        %6613 = vmatmul.mubr.bf16.gmra.mrb[0].mxu0 %v6300
        %v6614 = vpop.f32.mrb[0].mxu0
        %v6615 = vadd.f32 %v5942, %v6614
        %v6616 = vpop.f32.mrb[0].mxu0
        %v6617 = vadd.f32 %v5944, %v6616
        %v6618 = vpop.f32.mrb[0].mxu0
        %v6619 = vadd.f32 %v5946, %v6618
        %v6620 = vpop.f32.mrb[0].mxu0
        %v6621 = vadd.f32 %v5948, %v6620
        %6622 = vmatprep.mubr.bf16.mxu0 %v6303
        %6623 = vmatmul.mubr.bf16.gmra.mrb[0].mxu0 %v6302
        %v6624 = vpop.f32.mrb[0].mxu0
        %v6625 = vadd.f32 %v5952, %v6624
        %v6626 = vpop.f32.mrb[0].mxu0
        %v6627 = vadd.f32 %v5954, %v6626
        %v6628 = vpop.f32.mrb[0].mxu0
        %v6629 = vadd.f32 %v5956, %v6628
        %v6630 = vpop.f32.mrb[0].mxu0
        %v6631 = vadd.f32 %v5958, %v6630
        %6632 = vmatprep.mubr.bf16.mxu0 %v6305
        %6633 = vmatmul.mubr.bf16.gmra.mrb[0].mxu0 %v6304
        %v6634 = vpop.f32.mrb[0].mxu0
        %v6635 = vadd.f32 %v5962, %v6634
        %v6636 = vpop.f32.mrb[0].mxu0
        %v6637 = vadd.f32 %v5964, %v6636
        %v6638 = vpop.f32.mrb[0].mxu0
        %v6639 = vadd.f32 %v5966, %v6638
        %v6640 = vpop.f32.mrb[0].mxu0
        %v6641 = vadd.f32 %v5968, %v6640
        %6642 = vmatprep.mubr.bf16.mxu0 %v6307
        %6643 = vmatmul.mubr.bf16.gmra.mrb[0].mxu0 %v6306
        %v6644 = vpop.f32.mrb[0].mxu0
        %v6645 = vadd.f32 %v5972, %v6644
        %v6646 = vpop.f32.mrb[0].mxu0
        %v6647 = vadd.f32 %v5974, %v6646
        %v6648 = vpop.f32.mrb[0].mxu0
        %v6649 = vadd.f32 %v5976, %v6648
        %v6650 = vpop.f32.mrb[0].mxu0
        %v6651 = vadd.f32 %v5978, %v6650
        %6652 = vmatprep.mubr.bf16.mxu0 %v6309
        %6653 = vmatmul.mubr.bf16.gmra.mrb[0].mxu0 %v6308
        %v6654 = vpop.f32.mrb[0].mxu0
        %v6655 = vadd.f32 %v5982, %v6654
        %v6656 = vpop.f32.mrb[0].mxu0
        %v6657 = vadd.f32 %v5984, %v6656
        %v6658 = vpop.f32.mrb[0].mxu0
        %v6659 = vadd.f32 %v5986, %v6658
        %v6660 = vpop.f32.mrb[0].mxu0
        %v6661 = vadd.f32 %v5988, %v6660
        %6662 = vmatprep.mubr.bf16.mxu0 %v6311
        %6663 = vmatmul.mubr.bf16.gmra.mrb[0].mxu0 %v6310
        %v6664 = vpop.f32.mrb[0].mxu0
        %v6665 = vadd.f32 %v5992, %v6664
        %v6666 = vpop.f32.mrb[0].mxu0
        %v6667 = vadd.f32 %v5994, %v6666
        %v6668 = vpop.f32.mrb[0].mxu0
        %v6669 = vadd.f32 %v5996, %v6668
        %v6670 = vpop.f32.mrb[0].mxu0
        %v6671 = vadd.f32 %v5998, %v6670
        %6672 = vmatprep.mubr.bf16.mxu0 %v6313
        %6673 = vmatmul.mubr.bf16.gmra.mrb[0].mxu0 %v6312
        %v6674 = vpop.f32.mrb[0].mxu0
        %v6675 = vadd.f32 %v6002, %v6674
        %v6676 = vpop.f32.mrb[0].mxu0
        %v6677 = vadd.f32 %v6004, %v6676
        %v6678 = vpop.f32.mrb[0].mxu0
        %v6679 = vadd.f32 %v6006, %v6678
        %v6680 = vpop.f32.mrb[0].mxu0
        %v6681 = vadd.f32 %v6008, %v6680
        %6682 = vmatprep.mubr.bf16.mxu0 %v6315
        %6683 = vmatmul.mubr.bf16.gmra.mrb[0].mxu0 %v6314
        %v6684 = vpop.f32.mrb[0].mxu0
        %v6685 = vadd.f32 %v6012, %v6684
        %v6686 = vpop.f32.mrb[0].mxu0
        %v6687 = vadd.f32 %v6014, %v6686
        %v6688 = vpop.f32.mrb[0].mxu0
        %v6689 = vadd.f32 %v6016, %v6688
        %v6690 = vpop.f32.mrb[0].mxu0
        %v6691 = vadd.f32 %v6018, %v6690
        %6692 = vmatprep.mubr.bf16.mxu0 %v6317
        %6693 = vmatmul.mubr.bf16.gmra.mrb[0].mxu0 %v6316
        %v6694 = vpop.f32.mrb[0].mxu0
        %v6695 = vadd.f32 %v6022, %v6694
        %v6696 = vpop.f32.mrb[0].mxu0
        %v6697 = vadd.f32 %v6024, %v6696
        %v6698 = vpop.f32.mrb[0].mxu0
        %v6699 = vadd.f32 %v6026, %v6698
        %v6700 = vpop.f32.mrb[0].mxu0
        %v6701 = vadd.f32 %v6028, %v6700
        %6702 = vmatprep.mubr.bf16.mxu0 %v6319
        %6703 = vmatmul.mubr.bf16.gmra.mrb[0].mxu0 %v6318
        %v6704 = vpop.f32.mrb[0].mxu0
        %v6705 = vadd.f32 %v6032, %v6704
        %v6706 = vpop.f32.mrb[0].mxu0
        %v6707 = vadd.f32 %v6034, %v6706
        %v6708 = vpop.f32.mrb[0].mxu0
        %v6709 = vadd.f32 %v6036, %v6708
        %v6710 = vpop.f32.mrb[0].mxu0
        %v6711 = vadd.f32 %v6038, %v6710
        %6712 = vmatprep.mubr.bf16.mxu0 %v6321
        %6713 = vmatmul.mubr.bf16.gmra.mrb[0].mxu0 %v6320
        %v6714 = vpop.f32.mrb[0].mxu0
        %v6715 = vadd.f32 %v6042, %v6714
        %v6716 = vpop.f32.mrb[0].mxu0
        %v6717 = vadd.f32 %v6044, %v6716
        %v6718 = vpop.f32.mrb[0].mxu0
        %v6719 = vadd.f32 %v6046, %v6718
        %v6720 = vpop.f32.mrb[0].mxu0
        %v6721 = vadd.f32 %v6048, %v6720
        %6722 = vmatprep.mubr.bf16.mxu0 %v6323
        %6723 = vmatmul.mubr.bf16.gmra.mrb[0].mxu0 %v6322
        %v6724 = vpop.f32.mrb[0].mxu0
        %v6725 = vadd.f32 %v6052, %v6724
        %v6726 = vpop.f32.mrb[0].mxu0
        %v6727 = vadd.f32 %v6054, %v6726
        %v6728 = vpop.f32.mrb[0].mxu0
        %v6729 = vadd.f32 %v6056, %v6728
        %v6730 = vpop.f32.mrb[0].mxu0
        %v6731 = vadd.f32 %v6058, %v6730
        %6732 = vmatprep.mubr.bf16.mxu0 %v6325
        %6733 = vmatmul.mubr.bf16.gmra.mrb[0].mxu0 %v6324
        %v6734 = vpop.f32.mrb[0].mxu0
        %v6735 = vadd.f32 %v6062, %v6734
        %v6736 = vpop.f32.mrb[0].mxu0
        %v6737 = vadd.f32 %v6064, %v6736
        %v6738 = vpop.f32.mrb[0].mxu0
        %v6739 = vadd.f32 %v6066, %v6738
        %v6740 = vpop.f32.mrb[0].mxu0
        %v6741 = vadd.f32 %v6068, %v6740
        %6742 = vdwg.mxu0
        %v6743 = vpack.c.bf16 %v6429, %v6425
        %v6744 = vpack.c.bf16 %v6431, %v6427
        %v6745 = vpack.c.bf16 %v6439, %v6435
        %v6746 = vpack.c.bf16 %v6441, %v6437
        %v6747 = vpack.c.bf16 %v6449, %v6445
        %v6748 = vpack.c.bf16 %v6451, %v6447
        %v6749 = vpack.c.bf16 %v6459, %v6455
        %v6750 = vpack.c.bf16 %v6461, %v6457
        %v6751 = vpack.c.bf16 %v6469, %v6465
        %v6752 = vpack.c.bf16 %v6471, %v6467
        %v6753 = vpack.c.bf16 %v6479, %v6475
        %v6754 = vpack.c.bf16 %v6481, %v6477
        %v6755 = vpack.c.bf16 %v6489, %v6485
        %v6756 = vpack.c.bf16 %v6491, %v6487
        %v6757 = vpack.c.bf16 %v6499, %v6495
        %v6758 = vpack.c.bf16 %v6501, %v6497
        %v6759 = vpack.c.bf16 %v6509, %v6505
        %v6760 = vpack.c.bf16 %v6511, %v6507
        %v6761 = vpack.c.bf16 %v6519, %v6515
        %v6762 = vpack.c.bf16 %v6521, %v6517
        %v6763 = vpack.c.bf16 %v6529, %v6525
        %v6764 = vpack.c.bf16 %v6531, %v6527
        %v6765 = vpack.c.bf16 %v6539, %v6535
        %v6766 = vpack.c.bf16 %v6541, %v6537
        %v6767 = vpack.c.bf16 %v6549, %v6545
        %v6768 = vpack.c.bf16 %v6551, %v6547
        %v6769 = vpack.c.bf16 %v6559, %v6555
        %v6770 = vpack.c.bf16 %v6561, %v6557
        %v6771 = vpack.c.bf16 %v6569, %v6565
        %v6772 = vpack.c.bf16 %v6571, %v6567
        %v6773 = vpack.c.bf16 %v6579, %v6575
        %v6774 = vpack.c.bf16 %v6581, %v6577
        %v6775 = vpack.c.bf16 %v6589, %v6585
        %v6776 = vpack.c.bf16 %v6591, %v6587
        %v6777 = vpack.c.bf16 %v6599, %v6595
        %v6778 = vpack.c.bf16 %v6601, %v6597
        %v6779 = vpack.c.bf16 %v6609, %v6605
        %v6780 = vpack.c.bf16 %v6611, %v6607
        %v6781 = vpack.c.bf16 %v6619, %v6615
        %v6782 = vpack.c.bf16 %v6621, %v6617
        %v6783 = vpack.c.bf16 %v6629, %v6625
        %v6784 = vpack.c.bf16 %v6631, %v6627
        %v6785 = vpack.c.bf16 %v6639, %v6635
        %v6786 = vpack.c.bf16 %v6641, %v6637
        %v6787 = vpack.c.bf16 %v6649, %v6645
        %v6788 = vpack.c.bf16 %v6651, %v6647
        %v6789 = vpack.c.bf16 %v6659, %v6655
        %v6790 = vpack.c.bf16 %v6661, %v6657
        %v6791 = vpack.c.bf16 %v6669, %v6665
        %v6792 = vpack.c.bf16 %v6671, %v6667
        %v6793 = vpack.c.bf16 %v6679, %v6675
        %v6794 = vpack.c.bf16 %v6681, %v6677
        %v6795 = vpack.c.bf16 %v6689, %v6685
        %v6796 = vpack.c.bf16 %v6691, %v6687
        %v6797 = vpack.c.bf16 %v6699, %v6695
        %v6798 = vpack.c.bf16 %v6701, %v6697
        %v6799 = vpack.c.bf16 %v6709, %v6705
        %v6800 = vpack.c.bf16 %v6711, %v6707
        %v6801 = vpack.c.bf16 %v6719, %v6715
        %v6802 = vpack.c.bf16 %v6721, %v6717
        %v6803 = vpack.c.bf16 %v6729, %v6725
        %v6804 = vpack.c.bf16 %v6731, %v6727
        %v6805 = vpack.c.bf16 %v6739, %v6735
        %v6806 = vpack.c.bf16 %v6741, %v6737
        %v6839 = vunpack.c.l.b16 %v719
        %v6840 = vunpack.c.h.b16 %v719
        %v6841 = vunpack.c.l.b16 %v720
        %v6842 = vunpack.c.h.b16 %v720
        %v6843 = vunpack.c.l.b16 %v721
        %v6844 = vunpack.c.h.b16 %v721
        %v6845 = vunpack.c.l.b16 %v722
        %v6846 = vunpack.c.h.b16 %v722
        %v6847 = vunpack.c.l.b16 %v723
        %v6848 = vunpack.c.h.b16 %v723
        %v6849 = vunpack.c.l.b16 %v724
        %v6850 = vunpack.c.h.b16 %v724
        %v6851 = vunpack.c.l.b16 %v725
        %v6852 = vunpack.c.h.b16 %v725
        %v6853 = vunpack.c.l.b16 %v726
        %v6854 = vunpack.c.h.b16 %v726
        %v6855 = vunpack.c.l.b16 %v727
        %v6856 = vunpack.c.h.b16 %v727
        %v6857 = vunpack.c.l.b16 %v728
        %v6858 = vunpack.c.h.b16 %v728
        %v6859 = vunpack.c.l.b16 %v729
        %v6860 = vunpack.c.h.b16 %v729
        %v6861 = vunpack.c.l.b16 %v730
        %v6862 = vunpack.c.h.b16 %v730
        %v6863 = vunpack.c.l.b16 %v731
        %v6864 = vunpack.c.h.b16 %v731
        %v6865 = vunpack.c.l.b16 %v732
        %v6866 = vunpack.c.h.b16 %v732
        %v6867 = vunpack.c.l.b16 %v733
        %v6868 = vunpack.c.h.b16 %v733
        %v6869 = vunpack.c.l.b16 %v734
        %v6870 = vunpack.c.h.b16 %v734
        %v6871 = vunpack.c.l.b16 %v735
        %v6872 = vunpack.c.h.b16 %v735
        %v6873 = vunpack.c.l.b16 %v736
        %v6874 = vunpack.c.h.b16 %v736
        %v6875 = vunpack.c.l.b16 %v737
        %v6876 = vunpack.c.h.b16 %v737
        %v6877 = vunpack.c.l.b16 %v738
        %v6878 = vunpack.c.h.b16 %v738
        %v6879 = vunpack.c.l.b16 %v739
        %v6880 = vunpack.c.h.b16 %v739
        %v6881 = vunpack.c.l.b16 %v740
        %v6882 = vunpack.c.h.b16 %v740
        %v6883 = vunpack.c.l.b16 %v741
        %v6884 = vunpack.c.h.b16 %v741
        %v6885 = vunpack.c.l.b16 %v742
        %v6886 = vunpack.c.h.b16 %v742
        %v6887 = vunpack.c.l.b16 %v743
        %v6888 = vunpack.c.h.b16 %v743
        %v6889 = vunpack.c.l.b16 %v744
        %v6890 = vunpack.c.h.b16 %v744
        %v6891 = vunpack.c.l.b16 %v745
        %v6892 = vunpack.c.h.b16 %v745
        %v6893 = vunpack.c.l.b16 %v746
        %v6894 = vunpack.c.h.b16 %v746
        %v6895 = vunpack.c.l.b16 %v747
        %v6896 = vunpack.c.h.b16 %v747
        %v6897 = vunpack.c.l.b16 %v748
        %v6898 = vunpack.c.h.b16 %v748
        %v6899 = vunpack.c.l.b16 %v749
        %v6900 = vunpack.c.h.b16 %v749
        %v6901 = vunpack.c.l.b16 %v750
        %v6902 = vunpack.c.h.b16 %v750
        %v6903 = vpack.c.b16 %v6841, %v6839
        %v6904 = vpack.c.b16 %v6842, %v6840
        %v6905 = vpack.c.b16 %v6845, %v6843
        %v6906 = vpack.c.b16 %v6846, %v6844
        %v6907 = vpack.c.b16 %v6849, %v6847
        %v6908 = vpack.c.b16 %v6850, %v6848
        %v6909 = vpack.c.b16 %v6853, %v6851
        %v6910 = vpack.c.b16 %v6854, %v6852
        %v6911 = vpack.c.b16 %v6857, %v6855
        %v6912 = vpack.c.b16 %v6858, %v6856
        %v6913 = vpack.c.b16 %v6861, %v6859
        %v6914 = vpack.c.b16 %v6862, %v6860
        %v6915 = vpack.c.b16 %v6865, %v6863
        %v6916 = vpack.c.b16 %v6866, %v6864
        %v6917 = vpack.c.b16 %v6869, %v6867
        %v6918 = vpack.c.b16 %v6870, %v6868
        %v6919 = vpack.c.b16 %v6873, %v6871
        %v6920 = vpack.c.b16 %v6874, %v6872
        %v6921 = vpack.c.b16 %v6877, %v6875
        %v6922 = vpack.c.b16 %v6878, %v6876
        %v6923 = vpack.c.b16 %v6881, %v6879
        %v6924 = vpack.c.b16 %v6882, %v6880
        %v6925 = vpack.c.b16 %v6885, %v6883
        %v6926 = vpack.c.b16 %v6886, %v6884
        %v6927 = vpack.c.b16 %v6889, %v6887
        %v6928 = vpack.c.b16 %v6890, %v6888
        %v6929 = vpack.c.b16 %v6893, %v6891
        %v6930 = vpack.c.b16 %v6894, %v6892
        %v6931 = vpack.c.b16 %v6897, %v6895
        %v6932 = vpack.c.b16 %v6898, %v6896
        %v6933 = vpack.c.b16 %v6901, %v6899
        %v6934 = vpack.c.b16 %v6902, %v6900
        %6967 = vmatprep.subr.bf16.mxu0 %v6904
        %6968 = vmatpush1.bf16.msra.mxu0 %v6903
        %6969 = vmatprep.subr.bf16.mxu0 %v6906
        %6970 = vmatpush1.bf16.msra.mxu0 %v6905
        %6971 = vmatprep.subr.bf16.mxu0 %v6908
        %6972 = vmatpush1.bf16.msra.mxu0 %v6907
        %6973 = vmatprep.subr.bf16.mxu0 %v6910
        %6974 = vmatpush1.bf16.msra.mxu0 %v6909
        %6975 = vmatprep.subr.bf16.mxu0 %v6912
        %6976 = vmatpush1.bf16.msra.mxu0 %v6911
        %6977 = vmatprep.subr.bf16.mxu0 %v6914
        %6978 = vmatpush1.bf16.msra.mxu0 %v6913
        %6979 = vmatprep.subr.bf16.mxu0 %v6916
        %6980 = vmatpush1.bf16.msra.mxu0 %v6915
        %6981 = vmatprep.subr.bf16.mxu0 %v6918
        %6982 = vmatpush1.bf16.msra.mxu0 %v6917
        %6983 = vmatprep.subr.bf16.mxu0 %v6920
        %6984 = vmatpush1.bf16.msra.mxu0 %v6919
        %6985 = vmatprep.subr.bf16.mxu0 %v6922
        %6986 = vmatpush1.bf16.msra.mxu0 %v6921
        %6987 = vmatprep.subr.bf16.mxu0 %v6924
        %6988 = vmatpush1.bf16.msra.mxu0 %v6923
        %6989 = vmatprep.subr.bf16.mxu0 %v6926
        %6990 = vmatpush1.bf16.msra.mxu0 %v6925
        %6991 = vmatprep.subr.bf16.mxu0 %v6928
        %6992 = vmatpush1.bf16.msra.mxu0 %v6927
        %6993 = vmatprep.subr.bf16.mxu0 %v6930
        %6994 = vmatpush1.bf16.msra.mxu0 %v6929
        %6995 = vmatprep.subr.bf16.mxu0 %v6932
        %6996 = vmatpush1.bf16.msra.mxu0 %v6931
        %6997 = vmatprep.subr.bf16.mxu0 %v6934
        %6998 = vmatpush1.bf16.msra.mxu0 %v6933
        %6999 = vmatprep.mubr.bf16.mxu0 %v6744
        %7000 = vmatmul.mubr.bf16.gmra.mrb[0].mxu0 %v6743
        %v7001 = vpop.f32.mrb[0].mxu0
        %v7002 = vadd.f32 0.0, %v7001
        %v7003 = vpop.f32.mrb[0].mxu0
        %v7004 = vadd.f32 0.0, %v7003
        %v7005 = vpop.f32.mrb[0].mxu0
        %v7006 = vadd.f32 0.0, %v7005
        %v7007 = vpop.f32.mrb[0].mxu0
        %v7008 = vadd.f32 0.0, %v7007
        %7009 = vmatprep.mubr.bf16.mxu0 %v6746
        %7010 = vmatmul.mubr.bf16.gmra.mrb[0].mxu0 %v6745
        %v7011 = vpop.f32.mrb[0].mxu0
        %v7012 = vadd.f32 0.0, %v7011
        %v7013 = vpop.f32.mrb[0].mxu0
        %v7014 = vadd.f32 0.0, %v7013
        %v7015 = vpop.f32.mrb[0].mxu0
        %v7016 = vadd.f32 0.0, %v7015
        %v7017 = vpop.f32.mrb[0].mxu0
        %v7018 = vadd.f32 0.0, %v7017
        %7019 = vmatprep.mubr.bf16.mxu0 %v6748
        %7020 = vmatmul.mubr.bf16.gmra.mrb[0].mxu0 %v6747
        %v7021 = vpop.f32.mrb[0].mxu0
        %v7022 = vadd.f32 0.0, %v7021
        %v7023 = vpop.f32.mrb[0].mxu0
        %v7024 = vadd.f32 0.0, %v7023
        %v7025 = vpop.f32.mrb[0].mxu0
        %v7026 = vadd.f32 0.0, %v7025
        %v7027 = vpop.f32.mrb[0].mxu0
        %v7028 = vadd.f32 0.0, %v7027
        %7029 = vmatprep.mubr.bf16.mxu0 %v6750
        %7030 = vmatmul.mubr.bf16.gmra.mrb[0].mxu0 %v6749
        %v7031 = vpop.f32.mrb[0].mxu0
        %v7032 = vadd.f32 0.0, %v7031
        %v7033 = vpop.f32.mrb[0].mxu0
        %v7034 = vadd.f32 0.0, %v7033
        %v7035 = vpop.f32.mrb[0].mxu0
        %v7036 = vadd.f32 0.0, %v7035
        %v7037 = vpop.f32.mrb[0].mxu0
        %v7038 = vadd.f32 0.0, %v7037
        %7039 = vmatprep.mubr.bf16.mxu0 %v6752
        %7040 = vmatmul.mubr.bf16.gmra.mrb[0].mxu0 %v6751
        %v7041 = vpop.f32.mrb[0].mxu0
        %v7042 = vadd.f32 0.0, %v7041
        %v7043 = vpop.f32.mrb[0].mxu0
        %v7044 = vadd.f32 0.0, %v7043
        %v7045 = vpop.f32.mrb[0].mxu0
        %v7046 = vadd.f32 0.0, %v7045
        %v7047 = vpop.f32.mrb[0].mxu0
        %v7048 = vadd.f32 0.0, %v7047
        %7049 = vmatprep.mubr.bf16.mxu0 %v6754
        %7050 = vmatmul.mubr.bf16.gmra.mrb[0].mxu0 %v6753
        %v7051 = vpop.f32.mrb[0].mxu0
        %v7052 = vadd.f32 0.0, %v7051
        %v7053 = vpop.f32.mrb[0].mxu0
        %v7054 = vadd.f32 0.0, %v7053
        %v7055 = vpop.f32.mrb[0].mxu0
        %v7056 = vadd.f32 0.0, %v7055
        %v7057 = vpop.f32.mrb[0].mxu0
        %v7058 = vadd.f32 0.0, %v7057
        %7059 = vmatprep.mubr.bf16.mxu0 %v6756
        %7060 = vmatmul.mubr.bf16.gmra.mrb[0].mxu0 %v6755
        %v7061 = vpop.f32.mrb[0].mxu0
        %v7062 = vadd.f32 0.0, %v7061
        %v7063 = vpop.f32.mrb[0].mxu0
        %v7064 = vadd.f32 0.0, %v7063
        %v7065 = vpop.f32.mrb[0].mxu0
        %v7066 = vadd.f32 0.0, %v7065
        %v7067 = vpop.f32.mrb[0].mxu0
        %v7068 = vadd.f32 0.0, %v7067
        %7069 = vmatprep.mubr.bf16.mxu0 %v6758
        %7070 = vmatmul.mubr.bf16.gmra.mrb[0].mxu0 %v6757
        %v7071 = vpop.f32.mrb[0].mxu0
        %v7072 = vadd.f32 0.0, %v7071
        %v7073 = vpop.f32.mrb[0].mxu0
        %v7074 = vadd.f32 0.0, %v7073
        %v7075 = vpop.f32.mrb[0].mxu0
        %v7076 = vadd.f32 0.0, %v7075
        %v7077 = vpop.f32.mrb[0].mxu0
        %v7078 = vadd.f32 0.0, %v7077
        %7079 = vmatprep.mubr.bf16.mxu0 %v6760
        %7080 = vmatmul.mubr.bf16.gmra.mrb[0].mxu0 %v6759
        %v7081 = vpop.f32.mrb[0].mxu0
        %v7082 = vadd.f32 0.0, %v7081
        %v7083 = vpop.f32.mrb[0].mxu0
        %v7084 = vadd.f32 0.0, %v7083
        %v7085 = vpop.f32.mrb[0].mxu0
        %v7086 = vadd.f32 0.0, %v7085
        %v7087 = vpop.f32.mrb[0].mxu0
        %v7088 = vadd.f32 0.0, %v7087
        %7089 = vmatprep.mubr.bf16.mxu0 %v6762
        %7090 = vmatmul.mubr.bf16.gmra.mrb[0].mxu0 %v6761
        %v7091 = vpop.f32.mrb[0].mxu0
        %v7092 = vadd.f32 0.0, %v7091
        %v7093 = vpop.f32.mrb[0].mxu0
        %v7094 = vadd.f32 0.0, %v7093
        %v7095 = vpop.f32.mrb[0].mxu0
        %v7096 = vadd.f32 0.0, %v7095
        %v7097 = vpop.f32.mrb[0].mxu0
        %v7098 = vadd.f32 0.0, %v7097
        %7099 = vmatprep.mubr.bf16.mxu0 %v6764
        %7100 = vmatmul.mubr.bf16.gmra.mrb[0].mxu0 %v6763
        %v7101 = vpop.f32.mrb[0].mxu0
        %v7102 = vadd.f32 0.0, %v7101
        %v7103 = vpop.f32.mrb[0].mxu0
        %v7104 = vadd.f32 0.0, %v7103
        %v7105 = vpop.f32.mrb[0].mxu0
        %v7106 = vadd.f32 0.0, %v7105
        %v7107 = vpop.f32.mrb[0].mxu0
        %v7108 = vadd.f32 0.0, %v7107
        %7109 = vmatprep.mubr.bf16.mxu0 %v6766
        %7110 = vmatmul.mubr.bf16.gmra.mrb[0].mxu0 %v6765
        %v7111 = vpop.f32.mrb[0].mxu0
        %v7112 = vadd.f32 0.0, %v7111
        %v7113 = vpop.f32.mrb[0].mxu0
        %v7114 = vadd.f32 0.0, %v7113
        %v7115 = vpop.f32.mrb[0].mxu0
        %v7116 = vadd.f32 0.0, %v7115
        %v7117 = vpop.f32.mrb[0].mxu0
        %v7118 = vadd.f32 0.0, %v7117
        %7119 = vmatprep.mubr.bf16.mxu0 %v6768
        %7120 = vmatmul.mubr.bf16.gmra.mrb[0].mxu0 %v6767
        %v7121 = vpop.f32.mrb[0].mxu0
        %v7122 = vadd.f32 0.0, %v7121
        %v7123 = vpop.f32.mrb[0].mxu0
        %v7124 = vadd.f32 0.0, %v7123
        %v7125 = vpop.f32.mrb[0].mxu0
        %v7126 = vadd.f32 0.0, %v7125
        %v7127 = vpop.f32.mrb[0].mxu0
        %v7128 = vadd.f32 0.0, %v7127
        %7129 = vmatprep.mubr.bf16.mxu0 %v6770
        %7130 = vmatmul.mubr.bf16.gmra.mrb[0].mxu0 %v6769
        %v7131 = vpop.f32.mrb[0].mxu0
        %v7132 = vadd.f32 0.0, %v7131
        %v7133 = vpop.f32.mrb[0].mxu0
        %v7134 = vadd.f32 0.0, %v7133
        %v7135 = vpop.f32.mrb[0].mxu0
        %v7136 = vadd.f32 0.0, %v7135
        %v7137 = vpop.f32.mrb[0].mxu0
        %v7138 = vadd.f32 0.0, %v7137
        %7139 = vmatprep.mubr.bf16.mxu0 %v6772
        %7140 = vmatmul.mubr.bf16.gmra.mrb[0].mxu0 %v6771
        %v7141 = vpop.f32.mrb[0].mxu0
        %v7142 = vadd.f32 0.0, %v7141
        %v7143 = vpop.f32.mrb[0].mxu0
        %v7144 = vadd.f32 0.0, %v7143
        %v7145 = vpop.f32.mrb[0].mxu0
        %v7146 = vadd.f32 0.0, %v7145
        %v7147 = vpop.f32.mrb[0].mxu0
        %v7148 = vadd.f32 0.0, %v7147
        %7149 = vmatprep.mubr.bf16.mxu0 %v6774
        %7150 = vmatmul.mubr.bf16.gmra.mrb[0].mxu0 %v6773
        %v7151 = vpop.f32.mrb[0].mxu0
        %v7152 = vadd.f32 0.0, %v7151
        %v7153 = vpop.f32.mrb[0].mxu0
        %v7154 = vadd.f32 0.0, %v7153
        %v7155 = vpop.f32.mrb[0].mxu0
        %v7156 = vadd.f32 0.0, %v7155
        %v7157 = vpop.f32.mrb[0].mxu0
        %v7158 = vadd.f32 0.0, %v7157
        %7159 = vdwg.mxu0
        %v7192 = vunpack.c.l.b16 %v751
        %v7193 = vunpack.c.h.b16 %v751
        %v7194 = vunpack.c.l.b16 %v752
        %v7195 = vunpack.c.h.b16 %v752
        %v7196 = vunpack.c.l.b16 %v753
        %v7197 = vunpack.c.h.b16 %v753
        %v7198 = vunpack.c.l.b16 %v754
        %v7199 = vunpack.c.h.b16 %v754
        %v7200 = vunpack.c.l.b16 %v755
        %v7201 = vunpack.c.h.b16 %v755
        %v7202 = vunpack.c.l.b16 %v756
        %v7203 = vunpack.c.h.b16 %v756
        %v7204 = vunpack.c.l.b16 %v757
        %v7205 = vunpack.c.h.b16 %v757
        %v7206 = vunpack.c.l.b16 %v758
        %v7207 = vunpack.c.h.b16 %v758
        %v7208 = vunpack.c.l.b16 %v759
        %v7209 = vunpack.c.h.b16 %v759
        %v7210 = vunpack.c.l.b16 %v760
        %v7211 = vunpack.c.h.b16 %v760
        %v7212 = vunpack.c.l.b16 %v761
        %v7213 = vunpack.c.h.b16 %v761
        %v7214 = vunpack.c.l.b16 %v762
        %v7215 = vunpack.c.h.b16 %v762
        %v7216 = vunpack.c.l.b16 %v763
        %v7217 = vunpack.c.h.b16 %v763
        %v7218 = vunpack.c.l.b16 %v764
        %v7219 = vunpack.c.h.b16 %v764
        %v7220 = vunpack.c.l.b16 %v765
        %v7221 = vunpack.c.h.b16 %v765
        %v7222 = vunpack.c.l.b16 %v766
        %v7223 = vunpack.c.h.b16 %v766
        %v7224 = vunpack.c.l.b16 %v767
        %v7225 = vunpack.c.h.b16 %v767
        %v7226 = vunpack.c.l.b16 %v768
        %v7227 = vunpack.c.h.b16 %v768
        %v7228 = vunpack.c.l.b16 %v769
        %v7229 = vunpack.c.h.b16 %v769
        %v7230 = vunpack.c.l.b16 %v770
        %v7231 = vunpack.c.h.b16 %v770
        %v7232 = vunpack.c.l.b16 %v771
        %v7233 = vunpack.c.h.b16 %v771
        %v7234 = vunpack.c.l.b16 %v772
        %v7235 = vunpack.c.h.b16 %v772
        %v7236 = vunpack.c.l.b16 %v773
        %v7237 = vunpack.c.h.b16 %v773
        %v7238 = vunpack.c.l.b16 %v774
        %v7239 = vunpack.c.h.b16 %v774
        %v7240 = vunpack.c.l.b16 %v775
        %v7241 = vunpack.c.h.b16 %v775
        %v7242 = vunpack.c.l.b16 %v776
        %v7243 = vunpack.c.h.b16 %v776
        %v7244 = vunpack.c.l.b16 %v777
        %v7245 = vunpack.c.h.b16 %v777
        %v7246 = vunpack.c.l.b16 %v778
        %v7247 = vunpack.c.h.b16 %v778
        %v7248 = vunpack.c.l.b16 %v779
        %v7249 = vunpack.c.h.b16 %v779
        %v7250 = vunpack.c.l.b16 %v780
        %v7251 = vunpack.c.h.b16 %v780
        %v7252 = vunpack.c.l.b16 %v781
        %v7253 = vunpack.c.h.b16 %v781
        %v7254 = vunpack.c.l.b16 %v782
        %v7255 = vunpack.c.h.b16 %v782
        %v7256 = vpack.c.b16 %v7194, %v7192
        %v7257 = vpack.c.b16 %v7195, %v7193
        %v7258 = vpack.c.b16 %v7198, %v7196
        %v7259 = vpack.c.b16 %v7199, %v7197
        %v7260 = vpack.c.b16 %v7202, %v7200
        %v7261 = vpack.c.b16 %v7203, %v7201
        %v7262 = vpack.c.b16 %v7206, %v7204
        %v7263 = vpack.c.b16 %v7207, %v7205
        %v7264 = vpack.c.b16 %v7210, %v7208
        %v7265 = vpack.c.b16 %v7211, %v7209
        %v7266 = vpack.c.b16 %v7214, %v7212
        %v7267 = vpack.c.b16 %v7215, %v7213
        %v7268 = vpack.c.b16 %v7218, %v7216
        %v7269 = vpack.c.b16 %v7219, %v7217
        %v7270 = vpack.c.b16 %v7222, %v7220
        %v7271 = vpack.c.b16 %v7223, %v7221
        %v7272 = vpack.c.b16 %v7226, %v7224
        %v7273 = vpack.c.b16 %v7227, %v7225
        %v7274 = vpack.c.b16 %v7230, %v7228
        %v7275 = vpack.c.b16 %v7231, %v7229
        %v7276 = vpack.c.b16 %v7234, %v7232
        %v7277 = vpack.c.b16 %v7235, %v7233
        %v7278 = vpack.c.b16 %v7238, %v7236
        %v7279 = vpack.c.b16 %v7239, %v7237
        %v7280 = vpack.c.b16 %v7242, %v7240
        %v7281 = vpack.c.b16 %v7243, %v7241
        %v7282 = vpack.c.b16 %v7246, %v7244
        %v7283 = vpack.c.b16 %v7247, %v7245
        %v7284 = vpack.c.b16 %v7250, %v7248
        %v7285 = vpack.c.b16 %v7251, %v7249
        %v7286 = vpack.c.b16 %v7254, %v7252
        %v7287 = vpack.c.b16 %v7255, %v7253
        %7320 = vmatprep.subr.bf16.mxu0 %v7257
        %7321 = vmatpush1.bf16.msra.mxu0 %v7256
        %7322 = vmatprep.subr.bf16.mxu0 %v7259
        %7323 = vmatpush1.bf16.msra.mxu0 %v7258
        %7324 = vmatprep.subr.bf16.mxu0 %v7261
        %7325 = vmatpush1.bf16.msra.mxu0 %v7260
        %7326 = vmatprep.subr.bf16.mxu0 %v7263
        %7327 = vmatpush1.bf16.msra.mxu0 %v7262
        %7328 = vmatprep.subr.bf16.mxu0 %v7265
        %7329 = vmatpush1.bf16.msra.mxu0 %v7264
        %7330 = vmatprep.subr.bf16.mxu0 %v7267
        %7331 = vmatpush1.bf16.msra.mxu0 %v7266
        %7332 = vmatprep.subr.bf16.mxu0 %v7269
        %7333 = vmatpush1.bf16.msra.mxu0 %v7268
        %7334 = vmatprep.subr.bf16.mxu0 %v7271
        %7335 = vmatpush1.bf16.msra.mxu0 %v7270
        %7336 = vmatprep.subr.bf16.mxu0 %v7273
        %7337 = vmatpush1.bf16.msra.mxu0 %v7272
        %7338 = vmatprep.subr.bf16.mxu0 %v7275
        %7339 = vmatpush1.bf16.msra.mxu0 %v7274
        %7340 = vmatprep.subr.bf16.mxu0 %v7277
        %7341 = vmatpush1.bf16.msra.mxu0 %v7276
        %7342 = vmatprep.subr.bf16.mxu0 %v7279
        %7343 = vmatpush1.bf16.msra.mxu0 %v7278
        %7344 = vmatprep.subr.bf16.mxu0 %v7281
        %7345 = vmatpush1.bf16.msra.mxu0 %v7280
        %7346 = vmatprep.subr.bf16.mxu0 %v7283
        %7347 = vmatpush1.bf16.msra.mxu0 %v7282
        %7348 = vmatprep.subr.bf16.mxu0 %v7285
        %7349 = vmatpush1.bf16.msra.mxu0 %v7284
        %7350 = vmatprep.subr.bf16.mxu0 %v7287
        %7351 = vmatpush1.bf16.msra.mxu0 %v7286
        %7352 = vmatprep.mubr.bf16.mxu0 %v6776
        %7353 = vmatmul.mubr.bf16.gmra.mrb[0].mxu0 %v6775
        %v7354 = vpop.f32.mrb[0].mxu0
        %v7355 = vadd.f32 0.0, %v7354
        %v7356 = vpop.f32.mrb[0].mxu0
        %v7357 = vadd.f32 0.0, %v7356
        %v7358 = vpop.f32.mrb[0].mxu0
        %v7359 = vadd.f32 0.0, %v7358
        %v7360 = vpop.f32.mrb[0].mxu0
        %v7361 = vadd.f32 0.0, %v7360
        %7362 = vmatprep.mubr.bf16.mxu0 %v6778
        %7363 = vmatmul.mubr.bf16.gmra.mrb[0].mxu0 %v6777
        %v7364 = vpop.f32.mrb[0].mxu0
        %v7365 = vadd.f32 0.0, %v7364
        %v7366 = vpop.f32.mrb[0].mxu0
        %v7367 = vadd.f32 0.0, %v7366
        %v7368 = vpop.f32.mrb[0].mxu0
        %v7369 = vadd.f32 0.0, %v7368
        %v7370 = vpop.f32.mrb[0].mxu0
        %v7371 = vadd.f32 0.0, %v7370
        %7372 = vmatprep.mubr.bf16.mxu0 %v6780
        %7373 = vmatmul.mubr.bf16.gmra.mrb[0].mxu0 %v6779
        %v7374 = vpop.f32.mrb[0].mxu0
        %v7375 = vadd.f32 0.0, %v7374
        %v7376 = vpop.f32.mrb[0].mxu0
        %v7377 = vadd.f32 0.0, %v7376
        %v7378 = vpop.f32.mrb[0].mxu0
        %v7379 = vadd.f32 0.0, %v7378
        %v7380 = vpop.f32.mrb[0].mxu0
        %v7381 = vadd.f32 0.0, %v7380
        %7382 = vmatprep.mubr.bf16.mxu0 %v6782
        %7383 = vmatmul.mubr.bf16.gmra.mrb[0].mxu0 %v6781
        %v7384 = vpop.f32.mrb[0].mxu0
        %v7385 = vadd.f32 0.0, %v7384
        %v7386 = vpop.f32.mrb[0].mxu0
        %v7387 = vadd.f32 0.0, %v7386
        %v7388 = vpop.f32.mrb[0].mxu0
        %v7389 = vadd.f32 0.0, %v7388
        %v7390 = vpop.f32.mrb[0].mxu0
        %v7391 = vadd.f32 0.0, %v7390
        %7392 = vmatprep.mubr.bf16.mxu0 %v6784
        %7393 = vmatmul.mubr.bf16.gmra.mrb[0].mxu0 %v6783
        %v7394 = vpop.f32.mrb[0].mxu0
        %v7395 = vadd.f32 0.0, %v7394
        %v7396 = vpop.f32.mrb[0].mxu0
        %v7397 = vadd.f32 0.0, %v7396
        %v7398 = vpop.f32.mrb[0].mxu0
        %v7399 = vadd.f32 0.0, %v7398
        %v7400 = vpop.f32.mrb[0].mxu0
        %v7401 = vadd.f32 0.0, %v7400
        %7402 = vmatprep.mubr.bf16.mxu0 %v6786
        %7403 = vmatmul.mubr.bf16.gmra.mrb[0].mxu0 %v6785
        %v7404 = vpop.f32.mrb[0].mxu0
        %v7405 = vadd.f32 0.0, %v7404
        %v7406 = vpop.f32.mrb[0].mxu0
        %v7407 = vadd.f32 0.0, %v7406
        %v7408 = vpop.f32.mrb[0].mxu0
        %v7409 = vadd.f32 0.0, %v7408
        %v7410 = vpop.f32.mrb[0].mxu0
        %v7411 = vadd.f32 0.0, %v7410
        %7412 = vmatprep.mubr.bf16.mxu0 %v6788
        %7413 = vmatmul.mubr.bf16.gmra.mrb[0].mxu0 %v6787
        %v7414 = vpop.f32.mrb[0].mxu0
        %v7415 = vadd.f32 0.0, %v7414
        %v7416 = vpop.f32.mrb[0].mxu0
        %v7417 = vadd.f32 0.0, %v7416
        %v7418 = vpop.f32.mrb[0].mxu0
        %v7419 = vadd.f32 0.0, %v7418
        %v7420 = vpop.f32.mrb[0].mxu0
        %v7421 = vadd.f32 0.0, %v7420
        %7422 = vmatprep.mubr.bf16.mxu0 %v6790
        %7423 = vmatmul.mubr.bf16.gmra.mrb[0].mxu0 %v6789
        %v7424 = vpop.f32.mrb[0].mxu0
        %v7425 = vadd.f32 0.0, %v7424
        %v7426 = vpop.f32.mrb[0].mxu0
        %v7427 = vadd.f32 0.0, %v7426
        %v7428 = vpop.f32.mrb[0].mxu0
        %v7429 = vadd.f32 0.0, %v7428
        %v7430 = vpop.f32.mrb[0].mxu0
        %v7431 = vadd.f32 0.0, %v7430
        %7432 = vmatprep.mubr.bf16.mxu0 %v6792
        %7433 = vmatmul.mubr.bf16.gmra.mrb[0].mxu0 %v6791
        %v7434 = vpop.f32.mrb[0].mxu0
        %v7435 = vadd.f32 0.0, %v7434
        %v7436 = vpop.f32.mrb[0].mxu0
        %v7437 = vadd.f32 0.0, %v7436
        %v7438 = vpop.f32.mrb[0].mxu0
        %v7439 = vadd.f32 0.0, %v7438
        %v7440 = vpop.f32.mrb[0].mxu0
        %v7441 = vadd.f32 0.0, %v7440
        %7442 = vmatprep.mubr.bf16.mxu0 %v6794
        %7443 = vmatmul.mubr.bf16.gmra.mrb[0].mxu0 %v6793
        %v7444 = vpop.f32.mrb[0].mxu0
        %v7445 = vadd.f32 0.0, %v7444
        %v7446 = vpop.f32.mrb[0].mxu0
        %v7447 = vadd.f32 0.0, %v7446
        %v7448 = vpop.f32.mrb[0].mxu0
        %v7449 = vadd.f32 0.0, %v7448
        %v7450 = vpop.f32.mrb[0].mxu0
        %v7451 = vadd.f32 0.0, %v7450
        %7452 = vmatprep.mubr.bf16.mxu0 %v6796
        %7453 = vmatmul.mubr.bf16.gmra.mrb[0].mxu0 %v6795
        %v7454 = vpop.f32.mrb[0].mxu0
        %v7455 = vadd.f32 0.0, %v7454
        %v7456 = vpop.f32.mrb[0].mxu0
        %v7457 = vadd.f32 0.0, %v7456
        %v7458 = vpop.f32.mrb[0].mxu0
        %v7459 = vadd.f32 0.0, %v7458
        %v7460 = vpop.f32.mrb[0].mxu0
        %v7461 = vadd.f32 0.0, %v7460
        %7462 = vmatprep.mubr.bf16.mxu0 %v6798
        %7463 = vmatmul.mubr.bf16.gmra.mrb[0].mxu0 %v6797
        %v7464 = vpop.f32.mrb[0].mxu0
        %v7465 = vadd.f32 0.0, %v7464
        %v7466 = vpop.f32.mrb[0].mxu0
        %v7467 = vadd.f32 0.0, %v7466
        %v7468 = vpop.f32.mrb[0].mxu0
        %v7469 = vadd.f32 0.0, %v7468
        %v7470 = vpop.f32.mrb[0].mxu0
        %v7471 = vadd.f32 0.0, %v7470
        %7472 = vmatprep.mubr.bf16.mxu0 %v6800
        %7473 = vmatmul.mubr.bf16.gmra.mrb[0].mxu0 %v6799
        %v7474 = vpop.f32.mrb[0].mxu0
        %v7475 = vadd.f32 0.0, %v7474
        %v7476 = vpop.f32.mrb[0].mxu0
        %v7477 = vadd.f32 0.0, %v7476
        %v7478 = vpop.f32.mrb[0].mxu0
        %v7479 = vadd.f32 0.0, %v7478
        %v7480 = vpop.f32.mrb[0].mxu0
        %v7481 = vadd.f32 0.0, %v7480
        %7482 = vmatprep.mubr.bf16.mxu0 %v6802
        %7483 = vmatmul.mubr.bf16.gmra.mrb[0].mxu0 %v6801
        %v7484 = vpop.f32.mrb[0].mxu0
        %v7485 = vadd.f32 0.0, %v7484
        %v7486 = vpop.f32.mrb[0].mxu0
        %v7487 = vadd.f32 0.0, %v7486
        %v7488 = vpop.f32.mrb[0].mxu0
        %v7489 = vadd.f32 0.0, %v7488
        %v7490 = vpop.f32.mrb[0].mxu0
        %v7491 = vadd.f32 0.0, %v7490
        %7492 = vmatprep.mubr.bf16.mxu0 %v6804
        %7493 = vmatmul.mubr.bf16.gmra.mrb[0].mxu0 %v6803
        %v7494 = vpop.f32.mrb[0].mxu0
        %v7495 = vadd.f32 0.0, %v7494
        %v7496 = vpop.f32.mrb[0].mxu0
        %v7497 = vadd.f32 0.0, %v7496
        %v7498 = vpop.f32.mrb[0].mxu0
        %v7499 = vadd.f32 0.0, %v7498
        %v7500 = vpop.f32.mrb[0].mxu0
        %v7501 = vadd.f32 0.0, %v7500
        %7502 = vmatprep.mubr.bf16.mxu0 %v6806
        %7503 = vmatmul.mubr.bf16.gmra.mrb[0].mxu0 %v6805
        %v7504 = vpop.f32.mrb[0].mxu0
        %v7505 = vadd.f32 0.0, %v7504
        %v7506 = vpop.f32.mrb[0].mxu0
        %v7507 = vadd.f32 0.0, %v7506
        %v7508 = vpop.f32.mrb[0].mxu0
        %v7509 = vadd.f32 0.0, %v7508
        %v7510 = vpop.f32.mrb[0].mxu0
        %v7511 = vadd.f32 0.0, %v7510
        %7512 = vdwg.mxu0
        %v7513 = vsub.f32 %v7002, %v7355
        %v7514 = vsub.f32 %v7004, %v7357
        %v7515 = vsub.f32 %v7006, %v7359
        %v7516 = vsub.f32 %v7008, %v7361
        %v7517 = vsub.f32 %v7012, %v7365
        %v7518 = vsub.f32 %v7014, %v7367
        %v7519 = vsub.f32 %v7016, %v7369
        %v7520 = vsub.f32 %v7018, %v7371
        %v7521 = vsub.f32 %v7022, %v7375
        %v7522 = vsub.f32 %v7024, %v7377
        %v7523 = vsub.f32 %v7026, %v7379
        %v7524 = vsub.f32 %v7028, %v7381
        %v7525 = vsub.f32 %v7032, %v7385
        %v7526 = vsub.f32 %v7034, %v7387
        %v7527 = vsub.f32 %v7036, %v7389
        %v7528 = vsub.f32 %v7038, %v7391
        %v7529 = vsub.f32 %v7042, %v7395
        %v7530 = vsub.f32 %v7044, %v7397
        %v7531 = vsub.f32 %v7046, %v7399
        %v7532 = vsub.f32 %v7048, %v7401
        %v7533 = vsub.f32 %v7052, %v7405
        %v7534 = vsub.f32 %v7054, %v7407
        %v7535 = vsub.f32 %v7056, %v7409
        %v7536 = vsub.f32 %v7058, %v7411
        %v7537 = vsub.f32 %v7062, %v7415
        %v7538 = vsub.f32 %v7064, %v7417
        %v7539 = vsub.f32 %v7066, %v7419
        %v7540 = vsub.f32 %v7068, %v7421
        %v7541 = vsub.f32 %v7072, %v7425
        %v7542 = vsub.f32 %v7074, %v7427
        %v7543 = vsub.f32 %v7076, %v7429
        %v7544 = vsub.f32 %v7078, %v7431
        %v7545 = vsub.f32 %v7082, %v7435
        %v7546 = vsub.f32 %v7084, %v7437
        %v7547 = vsub.f32 %v7086, %v7439
        %v7548 = vsub.f32 %v7088, %v7441
        %v7549 = vsub.f32 %v7092, %v7445
        %v7550 = vsub.f32 %v7094, %v7447
        %v7551 = vsub.f32 %v7096, %v7449
        %v7552 = vsub.f32 %v7098, %v7451
        %v7553 = vsub.f32 %v7102, %v7455
        %v7554 = vsub.f32 %v7104, %v7457
        %v7555 = vsub.f32 %v7106, %v7459
        %v7556 = vsub.f32 %v7108, %v7461
        %v7557 = vsub.f32 %v7112, %v7465
        %v7558 = vsub.f32 %v7114, %v7467
        %v7559 = vsub.f32 %v7116, %v7469
        %v7560 = vsub.f32 %v7118, %v7471
        %v7561 = vsub.f32 %v7122, %v7475
        %v7562 = vsub.f32 %v7124, %v7477
        %v7563 = vsub.f32 %v7126, %v7479
        %v7564 = vsub.f32 %v7128, %v7481
        %v7565 = vsub.f32 %v7132, %v7485
        %v7566 = vsub.f32 %v7134, %v7487
        %v7567 = vsub.f32 %v7136, %v7489
        %v7568 = vsub.f32 %v7138, %v7491
        %v7569 = vsub.f32 %v7142, %v7495
        %v7570 = vsub.f32 %v7144, %v7497
        %v7571 = vsub.f32 %v7146, %v7499
        %v7572 = vsub.f32 %v7148, %v7501
        %v7573 = vsub.f32 %v7152, %v7505
        %v7574 = vsub.f32 %v7154, %v7507
        %v7575 = vsub.f32 %v7156, %v7509
        %v7576 = vsub.f32 %v7158, %v7511
        %v7577 = vand.u32 2147483647, %v7513
        %v7578 = vand.u32 2147483647, %v7514
        %v7579 = vand.u32 2147483647, %v7515
        %v7580 = vand.u32 2147483647, %v7516
        %v7581 = vand.u32 2147483647, %v7517
        %v7582 = vand.u32 2147483647, %v7518
        %v7583 = vand.u32 2147483647, %v7519
        %v7584 = vand.u32 2147483647, %v7520
        %v7585 = vand.u32 2147483647, %v7521
        %v7586 = vand.u32 2147483647, %v7522
        %v7587 = vand.u32 2147483647, %v7523
        %v7588 = vand.u32 2147483647, %v7524
        %v7589 = vand.u32 2147483647, %v7525
        %v7590 = vand.u32 2147483647, %v7526
        %v7591 = vand.u32 2147483647, %v7527
        %v7592 = vand.u32 2147483647, %v7528
        %v7593 = vand.u32 2147483647, %v7529
        %v7594 = vand.u32 2147483647, %v7530
        %v7595 = vand.u32 2147483647, %v7531
        %v7596 = vand.u32 2147483647, %v7532
        %v7597 = vand.u32 2147483647, %v7533
        %v7598 = vand.u32 2147483647, %v7534
        %v7599 = vand.u32 2147483647, %v7535
        %v7600 = vand.u32 2147483647, %v7536
        %v7601 = vand.u32 2147483647, %v7537
        %v7602 = vand.u32 2147483647, %v7538
        %v7603 = vand.u32 2147483647, %v7539
        %v7604 = vand.u32 2147483647, %v7540
        %v7605 = vand.u32 2147483647, %v7541
        %v7606 = vand.u32 2147483647, %v7542
        %v7607 = vand.u32 2147483647, %v7543
        %v7608 = vand.u32 2147483647, %v7544
        %v7609 = vand.u32 2147483647, %v7545
        %v7610 = vand.u32 2147483647, %v7546
        %v7611 = vand.u32 2147483647, %v7547
        %v7612 = vand.u32 2147483647, %v7548
        %v7613 = vand.u32 2147483647, %v7549
        %v7614 = vand.u32 2147483647, %v7550
        %v7615 = vand.u32 2147483647, %v7551
        %v7616 = vand.u32 2147483647, %v7552
        %v7617 = vand.u32 2147483647, %v7553
        %v7618 = vand.u32 2147483647, %v7554
        %v7619 = vand.u32 2147483647, %v7555
        %v7620 = vand.u32 2147483647, %v7556
        %v7621 = vand.u32 2147483647, %v7557
        %v7622 = vand.u32 2147483647, %v7558
        %v7623 = vand.u32 2147483647, %v7559
        %v7624 = vand.u32 2147483647, %v7560
        %v7625 = vand.u32 2147483647, %v7561
        %v7626 = vand.u32 2147483647, %v7562
        %v7627 = vand.u32 2147483647, %v7563
        %v7628 = vand.u32 2147483647, %v7564
        %v7629 = vand.u32 2147483647, %v7565
        %v7630 = vand.u32 2147483647, %v7566
        %v7631 = vand.u32 2147483647, %v7567
        %v7632 = vand.u32 2147483647, %v7568
        %v7633 = vand.u32 2147483647, %v7569
        %v7634 = vand.u32 2147483647, %v7570
        %v7635 = vand.u32 2147483647, %v7571
        %v7636 = vand.u32 2147483647, %v7572
        %v7637 = vand.u32 2147483647, %v7573
        %v7638 = vand.u32 2147483647, %v7574
        %v7639 = vand.u32 2147483647, %v7575
        %v7640 = vand.u32 2147483647, %v7576
        %7641 = vst [vmem:[%s368] sm:$0xff] %v7577
        %7642 = vst [vmem:[%s368 + $0x8] sm:$0xff] %v7578
        %7643 = vst [vmem:[%s368 + $0x10] sm:$0xff] %v7579
        %7644 = vst [vmem:[%s368 + $0x18] sm:$0xff] %v7580
        %7645 = vst [vmem:[%s368 + $0x20] sm:$0xff] %v7581
        %7646 = vst [vmem:[%s368 + $0x28] sm:$0xff] %v7582
        %7647 = vst [vmem:[%s368 + $0x30] sm:$0xff] %v7583
        %7648 = vst [vmem:[%s368 + $0x38] sm:$0xff] %v7584
        %7649 = vst [vmem:[%s368 + $0x40] sm:$0xff] %v7585
        %7650 = vst [vmem:[%s368 + $0x48] sm:$0xff] %v7586
        %7651 = vst [vmem:[%s368 + $0x50] sm:$0xff] %v7587
        %7652 = vst [vmem:[%s368 + $0x58] sm:$0xff] %v7588
        %7653 = vst [vmem:[%s368 + $0x60] sm:$0xff] %v7589
        %7654 = vst [vmem:[%s368 + $0x68] sm:$0xff] %v7590
        %7655 = vst [vmem:[%s368 + $0x70] sm:$0xff] %v7591
        %7656 = vst [vmem:[%s368 + $0x78] sm:$0xff] %v7592
        %7657 = vst [vmem:[%s368 + $0x80] sm:$0xff] %v7593
        %7658 = vst [vmem:[%s368 + $0x88] sm:$0xff] %v7594
        %7659 = vst [vmem:[%s368 + $0x90] sm:$0xff] %v7595
        %7660 = vst [vmem:[%s368 + $0x98] sm:$0xff] %v7596
        %7661 = vst [vmem:[%s368 + $0xa0] sm:$0xff] %v7597
        %7662 = vst [vmem:[%s368 + $0xa8] sm:$0xff] %v7598
        %7663 = vst [vmem:[%s368 + $0xb0] sm:$0xff] %v7599
        %7664 = vst [vmem:[%s368 + $0xb8] sm:$0xff] %v7600
        %7665 = vst [vmem:[%s368 + $0xc0] sm:$0xff] %v7601
        %7666 = vst [vmem:[%s368 + $0xc8] sm:$0xff] %v7602
        %7667 = vst [vmem:[%s368 + $0xd0] sm:$0xff] %v7603
        %7668 = vst [vmem:[%s368 + $0xd8] sm:$0xff] %v7604
        %7669 = vst [vmem:[%s368 + $0xe0] sm:$0xff] %v7605
        %7670 = vst [vmem:[%s368 + $0xe8] sm:$0xff] %v7606
        %7671 = vst [vmem:[%s368 + $0xf0] sm:$0xff] %v7607
        %7672 = vst [vmem:[%s368 + $0xf8] sm:$0xff] %v7608
        %7673 = vst [vmem:[%s368 + $0x100] sm:$0xff] %v7609
        %7674 = vst [vmem:[%s368 + $0x108] sm:$0xff] %v7610
        %7675 = vst [vmem:[%s368 + $0x110] sm:$0xff] %v7611
        %7676 = vst [vmem:[%s368 + $0x118] sm:$0xff] %v7612
        %7677 = vst [vmem:[%s368 + $0x120] sm:$0xff] %v7613
        %7678 = vst [vmem:[%s368 + $0x128] sm:$0xff] %v7614
        %7679 = vst [vmem:[%s368 + $0x130] sm:$0xff] %v7615
        %7680 = vst [vmem:[%s368 + $0x138] sm:$0xff] %v7616
        %7681 = vst [vmem:[%s368 + $0x140] sm:$0xff] %v7617
        %7682 = vst [vmem:[%s368 + $0x148] sm:$0xff] %v7618
        %7683 = vst [vmem:[%s368 + $0x150] sm:$0xff] %v7619
        %7684 = vst [vmem:[%s368 + $0x158] sm:$0xff] %v7620
        %7685 = vst [vmem:[%s368 + $0x160] sm:$0xff] %v7621
        %7686 = vst [vmem:[%s368 + $0x168] sm:$0xff] %v7622
        %7687 = vst [vmem:[%s368 + $0x170] sm:$0xff] %v7623
        %7688 = vst [vmem:[%s368 + $0x178] sm:$0xff] %v7624
        %7689 = vst [vmem:[%s368 + $0x180] sm:$0xff] %v7625
        %7690 = vst [vmem:[%s368 + $0x188] sm:$0xff] %v7626
        %7691 = vst [vmem:[%s368 + $0x190] sm:$0xff] %v7627
        %7692 = vst [vmem:[%s368 + $0x198] sm:$0xff] %v7628
        %7693 = vst [vmem:[%s368 + $0x1a0] sm:$0xff] %v7629
        %7694 = vst [vmem:[%s368 + $0x1a8] sm:$0xff] %v7630
        %7695 = vst [vmem:[%s368 + $0x1b0] sm:$0xff] %v7631
        %7696 = vst [vmem:[%s368 + $0x1b8] sm:$0xff] %v7632
        %7697 = vst [vmem:[%s368 + $0x1c0] sm:$0xff] %v7633
        %7698 = vst [vmem:[%s368 + $0x1c8] sm:$0xff] %v7634
        %7699 = vst [vmem:[%s368 + $0x1d0] sm:$0xff] %v7635
        %7700 = vst [vmem:[%s368 + $0x1d8] sm:$0xff] %v7636
        %7701 = vst [vmem:[%s368 + $0x1e0] sm:$0xff] %v7637
        %7702 = vst [vmem:[%s368 + $0x1e8] sm:$0xff] %v7638
        %7703 = vst [vmem:[%s368 + $0x1f0] sm:$0xff] %v7639
        %7704 = vst [vmem:[%s368 + $0x1f8] sm:$0xff] %v7640
        %v7705 = vadd.f32 %v7577, %v7578
        %7706 = vadd.xlane.f32.xlu0 %v7705
        %v7707 = vpop.xlane.xlu0 %7706
        %v7708 = vadd.f32 %v7579, %v7580
        %7709 = vadd.xlane.f32.xlu0 %v7708
        %v7710 = vpop.xlane.xlu0 %7709
        %v7711 = vadd.f32 %v7581, %v7582
        %7712 = vadd.xlane.f32.xlu0 %v7711
        %v7713 = vpop.xlane.xlu0 %7712
        %v7714 = vadd.f32 %v7583, %v7584
        %7715 = vadd.xlane.f32.xlu0 %v7714
        %v7716 = vpop.xlane.xlu0 %7715
        %v7717 = vadd.f32 %v7585, %v7586
        %7718 = vadd.xlane.f32.xlu0 %v7717
        %v7719 = vpop.xlane.xlu0 %7718
        %v7720 = vadd.f32 %v7587, %v7588
        %7721 = vadd.xlane.f32.xlu0 %v7720
        %v7722 = vpop.xlane.xlu0 %7721
        %v7723 = vadd.f32 %v7589, %v7590
        %7724 = vadd.xlane.f32.xlu0 %v7723
        %v7725 = vpop.xlane.xlu0 %7724
        %v7726 = vadd.f32 %v7591, %v7592
        %7727 = vadd.xlane.f32.xlu0 %v7726
        %v7728 = vpop.xlane.xlu0 %7727
        %v7729 = vadd.f32 %v7593, %v7594
        %7730 = vadd.xlane.f32.xlu0 %v7729
        %v7731 = vpop.xlane.xlu0 %7730
        %v7732 = vadd.f32 %v7595, %v7596
        %7733 = vadd.xlane.f32.xlu0 %v7732
        %v7734 = vpop.xlane.xlu0 %7733
        %v7735 = vadd.f32 %v7597, %v7598
        %7736 = vadd.xlane.f32.xlu0 %v7735
        %v7737 = vpop.xlane.xlu0 %7736
        %v7738 = vadd.f32 %v7599, %v7600
        %7739 = vadd.xlane.f32.xlu0 %v7738
        %v7740 = vpop.xlane.xlu0 %7739
        %v7741 = vadd.f32 %v7601, %v7602
        %7742 = vadd.xlane.f32.xlu0 %v7741
        %v7743 = vpop.xlane.xlu0 %7742
        %v7744 = vadd.f32 %v7603, %v7604
        %7745 = vadd.xlane.f32.xlu0 %v7744
        %v7746 = vpop.xlane.xlu0 %7745
        %v7747 = vadd.f32 %v7605, %v7606
        %7748 = vadd.xlane.f32.xlu0 %v7747
        %v7749 = vpop.xlane.xlu0 %7748
        %v7750 = vadd.f32 %v7607, %v7608
        %7751 = vadd.xlane.f32.xlu0 %v7750
        %v7752 = vpop.xlane.xlu0 %7751
        %v7753 = vadd.f32 %v7609, %v7610
        %7754 = vadd.xlane.f32.xlu0 %v7753
        %v7755 = vpop.xlane.xlu0 %7754
        %v7756 = vadd.f32 %v7611, %v7612
        %7757 = vadd.xlane.f32.xlu0 %v7756
        %v7758 = vpop.xlane.xlu0 %7757
        %v7759 = vadd.f32 %v7613, %v7614
        %7760 = vadd.xlane.f32.xlu0 %v7759
        %v7761 = vpop.xlane.xlu0 %7760
        %v7762 = vadd.f32 %v7615, %v7616
        %7763 = vadd.xlane.f32.xlu0 %v7762
        %v7764 = vpop.xlane.xlu0 %7763
        %v7765 = vadd.f32 %v7617, %v7618
        %7766 = vadd.xlane.f32.xlu0 %v7765
        %v7767 = vpop.xlane.xlu0 %7766
        %v7768 = vadd.f32 %v7619, %v7620
        %7769 = vadd.xlane.f32.xlu0 %v7768
        %v7770 = vpop.xlane.xlu0 %7769
        %v7771 = vadd.f32 %v7621, %v7622
        %7772 = vadd.xlane.f32.xlu0 %v7771
        %v7773 = vpop.xlane.xlu0 %7772
        %v7774 = vadd.f32 %v7623, %v7624
        %7775 = vadd.xlane.f32.xlu0 %v7774
        %v7776 = vpop.xlane.xlu0 %7775
        %v7777 = vadd.f32 %v7625, %v7626
        %7778 = vadd.xlane.f32.xlu0 %v7777
        %v7779 = vpop.xlane.xlu0 %7778
        %v7780 = vadd.f32 %v7627, %v7628
        %7781 = vadd.xlane.f32.xlu0 %v7780
        %v7782 = vpop.xlane.xlu0 %7781
        %v7783 = vadd.f32 %v7629, %v7630
        %7784 = vadd.xlane.f32.xlu0 %v7783
        %v7785 = vpop.xlane.xlu0 %7784
        %v7786 = vadd.f32 %v7631, %v7632
        %7787 = vadd.xlane.f32.xlu0 %v7786
        %v7788 = vpop.xlane.xlu0 %7787
        %v7789 = vadd.f32 %v7633, %v7634
        %7790 = vadd.xlane.f32.xlu0 %v7789
        %v7791 = vpop.xlane.xlu0 %7790
        %v7792 = vadd.f32 %v7635, %v7636
        %7793 = vadd.xlane.f32.xlu0 %v7792
        %v7794 = vpop.xlane.xlu0 %7793
        %v7795 = vadd.f32 %v7637, %v7638
        %7796 = vadd.xlane.f32.xlu0 %v7795
        %v7797 = vpop.xlane.xlu0 %7796
        %v7798 = vadd.f32 %v7639, %v7640
        %7799 = vadd.xlane.f32.xlu0 %v7798
        %v7800 = vpop.xlane.xlu0 %7799
        %v7833 = vlaneseq
        %v7834 = vshrl.u32 %v7833, 7
        %v7835 = vsub.s32 0, %v7834
        %v7836 = vrot.slane %v7707, %v7835
        %v7837 = vlaneseq
        %v7838 = vshrl.u32 %v7837, 7
        %v7839 = vsub.s32 1, %v7838
        %v7840 = vrot.slane %v7707, %v7839
        %v7841 = vlaneseq
        %v7842 = vshrl.u32 %v7841, 7
        %v7843 = vsub.s32 2, %v7842
        %v7844 = vrot.slane %v7707, %v7843
        %v7845 = vlaneseq
        %v7846 = vshrl.u32 %v7845, 7
        %v7847 = vsub.s32 3, %v7846
        %v7848 = vrot.slane %v7707, %v7847
        %v7849 = vlaneseq
        %v7850 = vshrl.u32 %v7849, 7
        %v7851 = vsub.s32 4, %v7850
        %v7852 = vrot.slane %v7707, %v7851
        %v7853 = vlaneseq
        %v7854 = vshrl.u32 %v7853, 7
        %v7855 = vsub.s32 5, %v7854
        %v7856 = vrot.slane %v7707, %v7855
        %v7857 = vlaneseq
        %v7858 = vshrl.u32 %v7857, 7
        %v7859 = vsub.s32 6, %v7858
        %v7860 = vrot.slane %v7707, %v7859
        %v7861 = vlaneseq
        %v7862 = vshrl.u32 %v7861, 7
        %v7863 = vsub.s32 7, %v7862
        %v7864 = vrot.slane %v7707, %v7863
        %v7865 = vlaneseq
        %v7866 = vshrl.u32 %v7865, 7
        %v7867 = vsub.s32 0, %v7866
        %v7868 = vrot.slane %v7710, %v7867
        %v7869 = vlaneseq
        %v7870 = vshrl.u32 %v7869, 7
        %v7871 = vsub.s32 1, %v7870
        %v7872 = vrot.slane %v7710, %v7871
        %v7873 = vlaneseq
        %v7874 = vshrl.u32 %v7873, 7
        %v7875 = vsub.s32 2, %v7874
        %v7876 = vrot.slane %v7710, %v7875
        %v7877 = vlaneseq
        %v7878 = vshrl.u32 %v7877, 7
        %v7879 = vsub.s32 3, %v7878
        %v7880 = vrot.slane %v7710, %v7879
        %v7881 = vlaneseq
        %v7882 = vshrl.u32 %v7881, 7
        %v7883 = vsub.s32 4, %v7882
        %v7884 = vrot.slane %v7710, %v7883
        %v7885 = vlaneseq
        %v7886 = vshrl.u32 %v7885, 7
        %v7887 = vsub.s32 5, %v7886
        %v7888 = vrot.slane %v7710, %v7887
        %v7889 = vlaneseq
        %v7890 = vshrl.u32 %v7889, 7
        %v7891 = vsub.s32 6, %v7890
        %v7892 = vrot.slane %v7710, %v7891
        %v7893 = vlaneseq
        %v7894 = vshrl.u32 %v7893, 7
        %v7895 = vsub.s32 7, %v7894
        %v7896 = vrot.slane %v7710, %v7895
        %v7897 = vlaneseq
        %v7898 = vshrl.u32 %v7897, 7
        %v7899 = vsub.s32 0, %v7898
        %v7900 = vrot.slane %v7713, %v7899
        %v7901 = vlaneseq
        %v7902 = vshrl.u32 %v7901, 7
        %v7903 = vsub.s32 1, %v7902
        %v7904 = vrot.slane %v7713, %v7903
        %v7905 = vlaneseq
        %v7906 = vshrl.u32 %v7905, 7
        %v7907 = vsub.s32 2, %v7906
        %v7908 = vrot.slane %v7713, %v7907
        %v7909 = vlaneseq
        %v7910 = vshrl.u32 %v7909, 7
        %v7911 = vsub.s32 3, %v7910
        %v7912 = vrot.slane %v7713, %v7911
        %v7913 = vlaneseq
        %v7914 = vshrl.u32 %v7913, 7
        %v7915 = vsub.s32 4, %v7914
        %v7916 = vrot.slane %v7713, %v7915
        %v7917 = vlaneseq
        %v7918 = vshrl.u32 %v7917, 7
        %v7919 = vsub.s32 5, %v7918
        %v7920 = vrot.slane %v7713, %v7919
        %v7921 = vlaneseq
        %v7922 = vshrl.u32 %v7921, 7
        %v7923 = vsub.s32 6, %v7922
        %v7924 = vrot.slane %v7713, %v7923
        %v7925 = vlaneseq
        %v7926 = vshrl.u32 %v7925, 7
        %v7927 = vsub.s32 7, %v7926
        %v7928 = vrot.slane %v7713, %v7927
        %v7929 = vlaneseq
        %v7930 = vshrl.u32 %v7929, 7
        %v7931 = vsub.s32 0, %v7930
        %v7932 = vrot.slane %v7716, %v7931
        %v7933 = vlaneseq
        %v7934 = vshrl.u32 %v7933, 7
        %v7935 = vsub.s32 1, %v7934
        %v7936 = vrot.slane %v7716, %v7935
        %v7937 = vlaneseq
        %v7938 = vshrl.u32 %v7937, 7
        %v7939 = vsub.s32 2, %v7938
        %v7940 = vrot.slane %v7716, %v7939
        %v7941 = vlaneseq
        %v7942 = vshrl.u32 %v7941, 7
        %v7943 = vsub.s32 3, %v7942
        %v7944 = vrot.slane %v7716, %v7943
        %v7945 = vlaneseq
        %v7946 = vshrl.u32 %v7945, 7
        %v7947 = vsub.s32 4, %v7946
        %v7948 = vrot.slane %v7716, %v7947
        %v7949 = vlaneseq
        %v7950 = vshrl.u32 %v7949, 7
        %v7951 = vsub.s32 5, %v7950
        %v7952 = vrot.slane %v7716, %v7951
        %v7953 = vlaneseq
        %v7954 = vshrl.u32 %v7953, 7
        %v7955 = vsub.s32 6, %v7954
        %v7956 = vrot.slane %v7716, %v7955
        %v7957 = vlaneseq
        %v7958 = vshrl.u32 %v7957, 7
        %v7959 = vsub.s32 7, %v7958
        %v7960 = vrot.slane %v7716, %v7959
        %v7961 = vlaneseq
        %v7962 = vshrl.u32 %v7961, 7
        %v7963 = vsub.s32 0, %v7962
        %v7964 = vrot.slane %v7719, %v7963
        %v7965 = vlaneseq
        %v7966 = vshrl.u32 %v7965, 7
        %v7967 = vsub.s32 1, %v7966
        %v7968 = vrot.slane %v7719, %v7967
        %v7969 = vlaneseq
        %v7970 = vshrl.u32 %v7969, 7
        %v7971 = vsub.s32 2, %v7970
        %v7972 = vrot.slane %v7719, %v7971
        %v7973 = vlaneseq
        %v7974 = vshrl.u32 %v7973, 7
        %v7975 = vsub.s32 3, %v7974
        %v7976 = vrot.slane %v7719, %v7975
        %v7977 = vlaneseq
        %v7978 = vshrl.u32 %v7977, 7
        %v7979 = vsub.s32 4, %v7978
        %v7980 = vrot.slane %v7719, %v7979
        %v7981 = vlaneseq
        %v7982 = vshrl.u32 %v7981, 7
        %v7983 = vsub.s32 5, %v7982
        %v7984 = vrot.slane %v7719, %v7983
        %v7985 = vlaneseq
        %v7986 = vshrl.u32 %v7985, 7
        %v7987 = vsub.s32 6, %v7986
        %v7988 = vrot.slane %v7719, %v7987
        %v7989 = vlaneseq
        %v7990 = vshrl.u32 %v7989, 7
        %v7991 = vsub.s32 7, %v7990
        %v7992 = vrot.slane %v7719, %v7991
        %v7993 = vlaneseq
        %v7994 = vshrl.u32 %v7993, 7
        %v7995 = vsub.s32 0, %v7994
        %v7996 = vrot.slane %v7722, %v7995
        %v7997 = vlaneseq
        %v7998 = vshrl.u32 %v7997, 7
        %v7999 = vsub.s32 1, %v7998
        %v8000 = vrot.slane %v7722, %v7999
        %v8001 = vlaneseq
        %v8002 = vshrl.u32 %v8001, 7
        %v8003 = vsub.s32 2, %v8002
        %v8004 = vrot.slane %v7722, %v8003
        %v8005 = vlaneseq
        %v8006 = vshrl.u32 %v8005, 7
        %v8007 = vsub.s32 3, %v8006
        %v8008 = vrot.slane %v7722, %v8007
        %v8009 = vlaneseq
        %v8010 = vshrl.u32 %v8009, 7
        %v8011 = vsub.s32 4, %v8010
        %v8012 = vrot.slane %v7722, %v8011
        %v8013 = vlaneseq
        %v8014 = vshrl.u32 %v8013, 7
        %v8015 = vsub.s32 5, %v8014
        %v8016 = vrot.slane %v7722, %v8015
        %v8017 = vlaneseq
        %v8018 = vshrl.u32 %v8017, 7
        %v8019 = vsub.s32 6, %v8018
        %v8020 = vrot.slane %v7722, %v8019
        %v8021 = vlaneseq
        %v8022 = vshrl.u32 %v8021, 7
        %v8023 = vsub.s32 7, %v8022
        %v8024 = vrot.slane %v7722, %v8023
        %v8025 = vlaneseq
        %v8026 = vshrl.u32 %v8025, 7
        %v8027 = vsub.s32 0, %v8026
        %v8028 = vrot.slane %v7725, %v8027
        %v8029 = vlaneseq
        %v8030 = vshrl.u32 %v8029, 7
        %v8031 = vsub.s32 1, %v8030
        %v8032 = vrot.slane %v7725, %v8031
        %v8033 = vlaneseq
        %v8034 = vshrl.u32 %v8033, 7
        %v8035 = vsub.s32 2, %v8034
        %v8036 = vrot.slane %v7725, %v8035
        %v8037 = vlaneseq
        %v8038 = vshrl.u32 %v8037, 7
        %v8039 = vsub.s32 3, %v8038
        %v8040 = vrot.slane %v7725, %v8039
        %v8041 = vlaneseq
        %v8042 = vshrl.u32 %v8041, 7
        %v8043 = vsub.s32 4, %v8042
        %v8044 = vrot.slane %v7725, %v8043
        %v8045 = vlaneseq
        %v8046 = vshrl.u32 %v8045, 7
        %v8047 = vsub.s32 5, %v8046
        %v8048 = vrot.slane %v7725, %v8047
        %v8049 = vlaneseq
        %v8050 = vshrl.u32 %v8049, 7
        %v8051 = vsub.s32 6, %v8050
        %v8052 = vrot.slane %v7725, %v8051
        %v8053 = vlaneseq
        %v8054 = vshrl.u32 %v8053, 7
        %v8055 = vsub.s32 7, %v8054
        %v8056 = vrot.slane %v7725, %v8055
        %v8057 = vlaneseq
        %v8058 = vshrl.u32 %v8057, 7
        %v8059 = vsub.s32 0, %v8058
        %v8060 = vrot.slane %v7728, %v8059
        %v8061 = vlaneseq
        %v8062 = vshrl.u32 %v8061, 7
        %v8063 = vsub.s32 1, %v8062
        %v8064 = vrot.slane %v7728, %v8063
        %v8065 = vlaneseq
        %v8066 = vshrl.u32 %v8065, 7
        %v8067 = vsub.s32 2, %v8066
        %v8068 = vrot.slane %v7728, %v8067
        %v8069 = vlaneseq
        %v8070 = vshrl.u32 %v8069, 7
        %v8071 = vsub.s32 3, %v8070
        %v8072 = vrot.slane %v7728, %v8071
        %v8073 = vlaneseq
        %v8074 = vshrl.u32 %v8073, 7
        %v8075 = vsub.s32 4, %v8074
        %v8076 = vrot.slane %v7728, %v8075
        %v8077 = vlaneseq
        %v8078 = vshrl.u32 %v8077, 7
        %v8079 = vsub.s32 5, %v8078
        %v8080 = vrot.slane %v7728, %v8079
        %v8081 = vlaneseq
        %v8082 = vshrl.u32 %v8081, 7
        %v8083 = vsub.s32 6, %v8082
        %v8084 = vrot.slane %v7728, %v8083
        %v8085 = vlaneseq
        %v8086 = vshrl.u32 %v8085, 7
        %v8087 = vsub.s32 7, %v8086
        %v8088 = vrot.slane %v7728, %v8087
        %v8089 = vlaneseq
        %v8090 = vshrl.u32 %v8089, 7
        %v8091 = vsub.s32 0, %v8090
        %v8092 = vrot.slane %v7731, %v8091
        %v8093 = vlaneseq
        %v8094 = vshrl.u32 %v8093, 7
        %v8095 = vsub.s32 1, %v8094
        %v8096 = vrot.slane %v7731, %v8095
        %v8097 = vlaneseq
        %v8098 = vshrl.u32 %v8097, 7
        %v8099 = vsub.s32 2, %v8098
        %v8100 = vrot.slane %v7731, %v8099
        %v8101 = vlaneseq
        %v8102 = vshrl.u32 %v8101, 7
        %v8103 = vsub.s32 3, %v8102
        %v8104 = vrot.slane %v7731, %v8103
        %v8105 = vlaneseq
        %v8106 = vshrl.u32 %v8105, 7
        %v8107 = vsub.s32 4, %v8106
        %v8108 = vrot.slane %v7731, %v8107
        %v8109 = vlaneseq
        %v8110 = vshrl.u32 %v8109, 7
        %v8111 = vsub.s32 5, %v8110
        %v8112 = vrot.slane %v7731, %v8111
        %v8113 = vlaneseq
        %v8114 = vshrl.u32 %v8113, 7
        %v8115 = vsub.s32 6, %v8114
        %v8116 = vrot.slane %v7731, %v8115
        %v8117 = vlaneseq
        %v8118 = vshrl.u32 %v8117, 7
        %v8119 = vsub.s32 7, %v8118
        %v8120 = vrot.slane %v7731, %v8119
        %v8121 = vlaneseq
        %v8122 = vshrl.u32 %v8121, 7
        %v8123 = vsub.s32 0, %v8122
        %v8124 = vrot.slane %v7734, %v8123
        %v8125 = vlaneseq
        %v8126 = vshrl.u32 %v8125, 7
        %v8127 = vsub.s32 1, %v8126
        %v8128 = vrot.slane %v7734, %v8127
        %v8129 = vlaneseq
        %v8130 = vshrl.u32 %v8129, 7
        %v8131 = vsub.s32 2, %v8130
        %v8132 = vrot.slane %v7734, %v8131
        %v8133 = vlaneseq
        %v8134 = vshrl.u32 %v8133, 7
        %v8135 = vsub.s32 3, %v8134
        %v8136 = vrot.slane %v7734, %v8135
        %v8137 = vlaneseq
        %v8138 = vshrl.u32 %v8137, 7
        %v8139 = vsub.s32 4, %v8138
        %v8140 = vrot.slane %v7734, %v8139
        %v8141 = vlaneseq
        %v8142 = vshrl.u32 %v8141, 7
        %v8143 = vsub.s32 5, %v8142
        %v8144 = vrot.slane %v7734, %v8143
        %v8145 = vlaneseq
        %v8146 = vshrl.u32 %v8145, 7
        %v8147 = vsub.s32 6, %v8146
        %v8148 = vrot.slane %v7734, %v8147
        %v8149 = vlaneseq
        %v8150 = vshrl.u32 %v8149, 7
        %v8151 = vsub.s32 7, %v8150
        %v8152 = vrot.slane %v7734, %v8151
        %v8153 = vlaneseq
        %v8154 = vshrl.u32 %v8153, 7
        %v8155 = vsub.s32 0, %v8154
        %v8156 = vrot.slane %v7737, %v8155
        %v8157 = vlaneseq
        %v8158 = vshrl.u32 %v8157, 7
        %v8159 = vsub.s32 1, %v8158
        %v8160 = vrot.slane %v7737, %v8159
        %v8161 = vlaneseq
        %v8162 = vshrl.u32 %v8161, 7
        %v8163 = vsub.s32 2, %v8162
        %v8164 = vrot.slane %v7737, %v8163
        %v8165 = vlaneseq
        %v8166 = vshrl.u32 %v8165, 7
        %v8167 = vsub.s32 3, %v8166
        %v8168 = vrot.slane %v7737, %v8167
        %v8169 = vlaneseq
        %v8170 = vshrl.u32 %v8169, 7
        %v8171 = vsub.s32 4, %v8170
        %v8172 = vrot.slane %v7737, %v8171
        %v8173 = vlaneseq
        %v8174 = vshrl.u32 %v8173, 7
        %v8175 = vsub.s32 5, %v8174
        %v8176 = vrot.slane %v7737, %v8175
        %v8177 = vlaneseq
        %v8178 = vshrl.u32 %v8177, 7
        %v8179 = vsub.s32 6, %v8178
        %v8180 = vrot.slane %v7737, %v8179
        %v8181 = vlaneseq
        %v8182 = vshrl.u32 %v8181, 7
        %v8183 = vsub.s32 7, %v8182
        %v8184 = vrot.slane %v7737, %v8183
        %v8185 = vlaneseq
        %v8186 = vshrl.u32 %v8185, 7
        %v8187 = vsub.s32 0, %v8186
        %v8188 = vrot.slane %v7740, %v8187
        %v8189 = vlaneseq
        %v8190 = vshrl.u32 %v8189, 7
        %v8191 = vsub.s32 1, %v8190
        %v8192 = vrot.slane %v7740, %v8191
        %v8193 = vlaneseq
        %v8194 = vshrl.u32 %v8193, 7
        %v8195 = vsub.s32 2, %v8194
        %v8196 = vrot.slane %v7740, %v8195
        %v8197 = vlaneseq
        %v8198 = vshrl.u32 %v8197, 7
        %v8199 = vsub.s32 3, %v8198
        %v8200 = vrot.slane %v7740, %v8199
        %v8201 = vlaneseq
        %v8202 = vshrl.u32 %v8201, 7
        %v8203 = vsub.s32 4, %v8202
        %v8204 = vrot.slane %v7740, %v8203
        %v8205 = vlaneseq
        %v8206 = vshrl.u32 %v8205, 7
        %v8207 = vsub.s32 5, %v8206
        %v8208 = vrot.slane %v7740, %v8207
        %v8209 = vlaneseq
        %v8210 = vshrl.u32 %v8209, 7
        %v8211 = vsub.s32 6, %v8210
        %v8212 = vrot.slane %v7740, %v8211
        %v8213 = vlaneseq
        %v8214 = vshrl.u32 %v8213, 7
        %v8215 = vsub.s32 7, %v8214
        %v8216 = vrot.slane %v7740, %v8215
        %v8217 = vlaneseq
        %v8218 = vshrl.u32 %v8217, 7
        %v8219 = vsub.s32 0, %v8218
        %v8220 = vrot.slane %v7743, %v8219
        %v8221 = vlaneseq
        %v8222 = vshrl.u32 %v8221, 7
        %v8223 = vsub.s32 1, %v8222
        %v8224 = vrot.slane %v7743, %v8223
        %v8225 = vlaneseq
        %v8226 = vshrl.u32 %v8225, 7
        %v8227 = vsub.s32 2, %v8226
        %v8228 = vrot.slane %v7743, %v8227
        %v8229 = vlaneseq
        %v8230 = vshrl.u32 %v8229, 7
        %v8231 = vsub.s32 3, %v8230
        %v8232 = vrot.slane %v7743, %v8231
        %v8233 = vlaneseq
        %v8234 = vshrl.u32 %v8233, 7
        %v8235 = vsub.s32 4, %v8234
        %v8236 = vrot.slane %v7743, %v8235
        %v8237 = vlaneseq
        %v8238 = vshrl.u32 %v8237, 7
        %v8239 = vsub.s32 5, %v8238
        %v8240 = vrot.slane %v7743, %v8239
        %v8241 = vlaneseq
        %v8242 = vshrl.u32 %v8241, 7
        %v8243 = vsub.s32 6, %v8242
        %v8244 = vrot.slane %v7743, %v8243
        %v8245 = vlaneseq
        %v8246 = vshrl.u32 %v8245, 7
        %v8247 = vsub.s32 7, %v8246
        %v8248 = vrot.slane %v7743, %v8247
        %v8249 = vlaneseq
        %v8250 = vshrl.u32 %v8249, 7
        %v8251 = vsub.s32 0, %v8250
        %v8252 = vrot.slane %v7746, %v8251
        %v8253 = vlaneseq
        %v8254 = vshrl.u32 %v8253, 7
        %v8255 = vsub.s32 1, %v8254
        %v8256 = vrot.slane %v7746, %v8255
        %v8257 = vlaneseq
        %v8258 = vshrl.u32 %v8257, 7
        %v8259 = vsub.s32 2, %v8258
        %v8260 = vrot.slane %v7746, %v8259
        %v8261 = vlaneseq
        %v8262 = vshrl.u32 %v8261, 7
        %v8263 = vsub.s32 3, %v8262
        %v8264 = vrot.slane %v7746, %v8263
        %v8265 = vlaneseq
        %v8266 = vshrl.u32 %v8265, 7
        %v8267 = vsub.s32 4, %v8266
        %v8268 = vrot.slane %v7746, %v8267
        %v8269 = vlaneseq
        %v8270 = vshrl.u32 %v8269, 7
        %v8271 = vsub.s32 5, %v8270
        %v8272 = vrot.slane %v7746, %v8271
        %v8273 = vlaneseq
        %v8274 = vshrl.u32 %v8273, 7
        %v8275 = vsub.s32 6, %v8274
        %v8276 = vrot.slane %v7746, %v8275
        %v8277 = vlaneseq
        %v8278 = vshrl.u32 %v8277, 7
        %v8279 = vsub.s32 7, %v8278
        %v8280 = vrot.slane %v7746, %v8279
        %v8281 = vlaneseq
        %v8282 = vshrl.u32 %v8281, 7
        %v8283 = vsub.s32 0, %v8282
        %v8284 = vrot.slane %v7749, %v8283
        %v8285 = vlaneseq
        %v8286 = vshrl.u32 %v8285, 7
        %v8287 = vsub.s32 1, %v8286
        %v8288 = vrot.slane %v7749, %v8287
        %v8289 = vlaneseq
        %v8290 = vshrl.u32 %v8289, 7
        %v8291 = vsub.s32 2, %v8290
        %v8292 = vrot.slane %v7749, %v8291
        %v8293 = vlaneseq
        %v8294 = vshrl.u32 %v8293, 7
        %v8295 = vsub.s32 3, %v8294
        %v8296 = vrot.slane %v7749, %v8295
        %v8297 = vlaneseq
        %v8298 = vshrl.u32 %v8297, 7
        %v8299 = vsub.s32 4, %v8298
        %v8300 = vrot.slane %v7749, %v8299
        %v8301 = vlaneseq
        %v8302 = vshrl.u32 %v8301, 7
        %v8303 = vsub.s32 5, %v8302
        %v8304 = vrot.slane %v7749, %v8303
        %v8305 = vlaneseq
        %v8306 = vshrl.u32 %v8305, 7
        %v8307 = vsub.s32 6, %v8306
        %v8308 = vrot.slane %v7749, %v8307
        %v8309 = vlaneseq
        %v8310 = vshrl.u32 %v8309, 7
        %v8311 = vsub.s32 7, %v8310
        %v8312 = vrot.slane %v7749, %v8311
        %v8313 = vlaneseq
        %v8314 = vshrl.u32 %v8313, 7
        %v8315 = vsub.s32 0, %v8314
        %v8316 = vrot.slane %v7752, %v8315
        %v8317 = vlaneseq
        %v8318 = vshrl.u32 %v8317, 7
        %v8319 = vsub.s32 1, %v8318
        %v8320 = vrot.slane %v7752, %v8319
        %v8321 = vlaneseq
        %v8322 = vshrl.u32 %v8321, 7
        %v8323 = vsub.s32 2, %v8322
        %v8324 = vrot.slane %v7752, %v8323
        %v8325 = vlaneseq
        %v8326 = vshrl.u32 %v8325, 7
        %v8327 = vsub.s32 3, %v8326
        %v8328 = vrot.slane %v7752, %v8327
        %v8329 = vlaneseq
        %v8330 = vshrl.u32 %v8329, 7
        %v8331 = vsub.s32 4, %v8330
        %v8332 = vrot.slane %v7752, %v8331
        %v8333 = vlaneseq
        %v8334 = vshrl.u32 %v8333, 7
        %v8335 = vsub.s32 5, %v8334
        %v8336 = vrot.slane %v7752, %v8335
        %v8337 = vlaneseq
        %v8338 = vshrl.u32 %v8337, 7
        %v8339 = vsub.s32 6, %v8338
        %v8340 = vrot.slane %v7752, %v8339
        %v8341 = vlaneseq
        %v8342 = vshrl.u32 %v8341, 7
        %v8343 = vsub.s32 7, %v8342
        %v8344 = vrot.slane %v7752, %v8343
        %v8345 = vlaneseq
        %v8346 = vshrl.u32 %v8345, 7
        %v8347 = vsub.s32 0, %v8346
        %v8348 = vrot.slane %v7755, %v8347
        %v8349 = vlaneseq
        %v8350 = vshrl.u32 %v8349, 7
        %v8351 = vsub.s32 1, %v8350
        %v8352 = vrot.slane %v7755, %v8351
        %v8353 = vlaneseq
        %v8354 = vshrl.u32 %v8353, 7
        %v8355 = vsub.s32 2, %v8354
        %v8356 = vrot.slane %v7755, %v8355
        %v8357 = vlaneseq
        %v8358 = vshrl.u32 %v8357, 7
        %v8359 = vsub.s32 3, %v8358
        %v8360 = vrot.slane %v7755, %v8359
        %v8361 = vlaneseq
        %v8362 = vshrl.u32 %v8361, 7
        %v8363 = vsub.s32 4, %v8362
        %v8364 = vrot.slane %v7755, %v8363
        %v8365 = vlaneseq
        %v8366 = vshrl.u32 %v8365, 7
        %v8367 = vsub.s32 5, %v8366
        %v8368 = vrot.slane %v7755, %v8367
        %v8369 = vlaneseq
        %v8370 = vshrl.u32 %v8369, 7
        %v8371 = vsub.s32 6, %v8370
        %v8372 = vrot.slane %v7755, %v8371
        %v8373 = vlaneseq
        %v8374 = vshrl.u32 %v8373, 7
        %v8375 = vsub.s32 7, %v8374
        %v8376 = vrot.slane %v7755, %v8375
        %v8377 = vlaneseq
        %v8378 = vshrl.u32 %v8377, 7
        %v8379 = vsub.s32 0, %v8378
        %v8380 = vrot.slane %v7758, %v8379
        %v8381 = vlaneseq
        %v8382 = vshrl.u32 %v8381, 7
        %v8383 = vsub.s32 1, %v8382
        %v8384 = vrot.slane %v7758, %v8383
        %v8385 = vlaneseq
        %v8386 = vshrl.u32 %v8385, 7
        %v8387 = vsub.s32 2, %v8386
        %v8388 = vrot.slane %v7758, %v8387
        %v8389 = vlaneseq
        %v8390 = vshrl.u32 %v8389, 7
        %v8391 = vsub.s32 3, %v8390
        %v8392 = vrot.slane %v7758, %v8391
        %v8393 = vlaneseq
        %v8394 = vshrl.u32 %v8393, 7
        %v8395 = vsub.s32 4, %v8394
        %v8396 = vrot.slane %v7758, %v8395
        %v8397 = vlaneseq
        %v8398 = vshrl.u32 %v8397, 7
        %v8399 = vsub.s32 5, %v8398
        %v8400 = vrot.slane %v7758, %v8399
        %v8401 = vlaneseq
        %v8402 = vshrl.u32 %v8401, 7
        %v8403 = vsub.s32 6, %v8402
        %v8404 = vrot.slane %v7758, %v8403
        %v8405 = vlaneseq
        %v8406 = vshrl.u32 %v8405, 7
        %v8407 = vsub.s32 7, %v8406
        %v8408 = vrot.slane %v7758, %v8407
        %v8409 = vlaneseq
        %v8410 = vshrl.u32 %v8409, 7
        %v8411 = vsub.s32 0, %v8410
        %v8412 = vrot.slane %v7761, %v8411
        %v8413 = vlaneseq
        %v8414 = vshrl.u32 %v8413, 7
        %v8415 = vsub.s32 1, %v8414
        %v8416 = vrot.slane %v7761, %v8415
        %v8417 = vlaneseq
        %v8418 = vshrl.u32 %v8417, 7
        %v8419 = vsub.s32 2, %v8418
        %v8420 = vrot.slane %v7761, %v8419
        %v8421 = vlaneseq
        %v8422 = vshrl.u32 %v8421, 7
        %v8423 = vsub.s32 3, %v8422
        %v8424 = vrot.slane %v7761, %v8423
        %v8425 = vlaneseq
        %v8426 = vshrl.u32 %v8425, 7
        %v8427 = vsub.s32 4, %v8426
        %v8428 = vrot.slane %v7761, %v8427
        %v8429 = vlaneseq
        %v8430 = vshrl.u32 %v8429, 7
        %v8431 = vsub.s32 5, %v8430
        %v8432 = vrot.slane %v7761, %v8431
        %v8433 = vlaneseq
        %v8434 = vshrl.u32 %v8433, 7
        %v8435 = vsub.s32 6, %v8434
        %v8436 = vrot.slane %v7761, %v8435
        %v8437 = vlaneseq
        %v8438 = vshrl.u32 %v8437, 7
        %v8439 = vsub.s32 7, %v8438
        %v8440 = vrot.slane %v7761, %v8439
        %v8441 = vlaneseq
        %v8442 = vshrl.u32 %v8441, 7
        %v8443 = vsub.s32 0, %v8442
        %v8444 = vrot.slane %v7764, %v8443
        %v8445 = vlaneseq
        %v8446 = vshrl.u32 %v8445, 7
        %v8447 = vsub.s32 1, %v8446
        %v8448 = vrot.slane %v7764, %v8447
        %v8449 = vlaneseq
        %v8450 = vshrl.u32 %v8449, 7
        %v8451 = vsub.s32 2, %v8450
        %v8452 = vrot.slane %v7764, %v8451
        %v8453 = vlaneseq
        %v8454 = vshrl.u32 %v8453, 7
        %v8455 = vsub.s32 3, %v8454
        %v8456 = vrot.slane %v7764, %v8455
        %v8457 = vlaneseq
        %v8458 = vshrl.u32 %v8457, 7
        %v8459 = vsub.s32 4, %v8458
        %v8460 = vrot.slane %v7764, %v8459
        %v8461 = vlaneseq
        %v8462 = vshrl.u32 %v8461, 7
        %v8463 = vsub.s32 5, %v8462
        %v8464 = vrot.slane %v7764, %v8463
        %v8465 = vlaneseq
        %v8466 = vshrl.u32 %v8465, 7
        %v8467 = vsub.s32 6, %v8466
        %v8468 = vrot.slane %v7764, %v8467
        %v8469 = vlaneseq
        %v8470 = vshrl.u32 %v8469, 7
        %v8471 = vsub.s32 7, %v8470
        %v8472 = vrot.slane %v7764, %v8471
        %v8473 = vlaneseq
        %v8474 = vshrl.u32 %v8473, 7
        %v8475 = vsub.s32 0, %v8474
        %v8476 = vrot.slane %v7767, %v8475
        %v8477 = vlaneseq
        %v8478 = vshrl.u32 %v8477, 7
        %v8479 = vsub.s32 1, %v8478
        %v8480 = vrot.slane %v7767, %v8479
        %v8481 = vlaneseq
        %v8482 = vshrl.u32 %v8481, 7
        %v8483 = vsub.s32 2, %v8482
        %v8484 = vrot.slane %v7767, %v8483
        %v8485 = vlaneseq
        %v8486 = vshrl.u32 %v8485, 7
        %v8487 = vsub.s32 3, %v8486
        %v8488 = vrot.slane %v7767, %v8487
        %v8489 = vlaneseq
        %v8490 = vshrl.u32 %v8489, 7
        %v8491 = vsub.s32 4, %v8490
        %v8492 = vrot.slane %v7767, %v8491
        %v8493 = vlaneseq
        %v8494 = vshrl.u32 %v8493, 7
        %v8495 = vsub.s32 5, %v8494
        %v8496 = vrot.slane %v7767, %v8495
        %v8497 = vlaneseq
        %v8498 = vshrl.u32 %v8497, 7
        %v8499 = vsub.s32 6, %v8498
        %v8500 = vrot.slane %v7767, %v8499
        %v8501 = vlaneseq
        %v8502 = vshrl.u32 %v8501, 7
        %v8503 = vsub.s32 7, %v8502
        %v8504 = vrot.slane %v7767, %v8503
        %v8505 = vlaneseq
        %v8506 = vshrl.u32 %v8505, 7
        %v8507 = vsub.s32 0, %v8506
        %v8508 = vrot.slane %v7770, %v8507
        %v8509 = vlaneseq
        %v8510 = vshrl.u32 %v8509, 7
        %v8511 = vsub.s32 1, %v8510
        %v8512 = vrot.slane %v7770, %v8511
        %v8513 = vlaneseq
        %v8514 = vshrl.u32 %v8513, 7
        %v8515 = vsub.s32 2, %v8514
        %v8516 = vrot.slane %v7770, %v8515
        %v8517 = vlaneseq
        %v8518 = vshrl.u32 %v8517, 7
        %v8519 = vsub.s32 3, %v8518
        %v8520 = vrot.slane %v7770, %v8519
        %v8521 = vlaneseq
        %v8522 = vshrl.u32 %v8521, 7
        %v8523 = vsub.s32 4, %v8522
        %v8524 = vrot.slane %v7770, %v8523
        %v8525 = vlaneseq
        %v8526 = vshrl.u32 %v8525, 7
        %v8527 = vsub.s32 5, %v8526
        %v8528 = vrot.slane %v7770, %v8527
        %v8529 = vlaneseq
        %v8530 = vshrl.u32 %v8529, 7
        %v8531 = vsub.s32 6, %v8530
        %v8532 = vrot.slane %v7770, %v8531
        %v8533 = vlaneseq
        %v8534 = vshrl.u32 %v8533, 7
        %v8535 = vsub.s32 7, %v8534
        %v8536 = vrot.slane %v7770, %v8535
        %v8537 = vlaneseq
        %v8538 = vshrl.u32 %v8537, 7
        %v8539 = vsub.s32 0, %v8538
        %v8540 = vrot.slane %v7773, %v8539
        %v8541 = vlaneseq
        %v8542 = vshrl.u32 %v8541, 7
        %v8543 = vsub.s32 1, %v8542
        %v8544 = vrot.slane %v7773, %v8543
        %v8545 = vlaneseq
        %v8546 = vshrl.u32 %v8545, 7
        %v8547 = vsub.s32 2, %v8546
        %v8548 = vrot.slane %v7773, %v8547
        %v8549 = vlaneseq
        %v8550 = vshrl.u32 %v8549, 7
        %v8551 = vsub.s32 3, %v8550
        %v8552 = vrot.slane %v7773, %v8551
        %v8553 = vlaneseq
        %v8554 = vshrl.u32 %v8553, 7
        %v8555 = vsub.s32 4, %v8554
        %v8556 = vrot.slane %v7773, %v8555
        %v8557 = vlaneseq
        %v8558 = vshrl.u32 %v8557, 7
        %v8559 = vsub.s32 5, %v8558
        %v8560 = vrot.slane %v7773, %v8559
        %v8561 = vlaneseq
        %v8562 = vshrl.u32 %v8561, 7
        %v8563 = vsub.s32 6, %v8562
        %v8564 = vrot.slane %v7773, %v8563
        %v8565 = vlaneseq
        %v8566 = vshrl.u32 %v8565, 7
        %v8567 = vsub.s32 7, %v8566
        %v8568 = vrot.slane %v7773, %v8567
        %v8569 = vlaneseq
        %v8570 = vshrl.u32 %v8569, 7
        %v8571 = vsub.s32 0, %v8570
        %v8572 = vrot.slane %v7776, %v8571
        %v8573 = vlaneseq
        %v8574 = vshrl.u32 %v8573, 7
        %v8575 = vsub.s32 1, %v8574
        %v8576 = vrot.slane %v7776, %v8575
        %v8577 = vlaneseq
        %v8578 = vshrl.u32 %v8577, 7
        %v8579 = vsub.s32 2, %v8578
        %v8580 = vrot.slane %v7776, %v8579
        %v8581 = vlaneseq
        %v8582 = vshrl.u32 %v8581, 7
        %v8583 = vsub.s32 3, %v8582
        %v8584 = vrot.slane %v7776, %v8583
        %v8585 = vlaneseq
        %v8586 = vshrl.u32 %v8585, 7
        %v8587 = vsub.s32 4, %v8586
        %v8588 = vrot.slane %v7776, %v8587
        %v8589 = vlaneseq
        %v8590 = vshrl.u32 %v8589, 7
        %v8591 = vsub.s32 5, %v8590
        %v8592 = vrot.slane %v7776, %v8591
        %v8593 = vlaneseq
        %v8594 = vshrl.u32 %v8593, 7
        %v8595 = vsub.s32 6, %v8594
        %v8596 = vrot.slane %v7776, %v8595
        %v8597 = vlaneseq
        %v8598 = vshrl.u32 %v8597, 7
        %v8599 = vsub.s32 7, %v8598
        %v8600 = vrot.slane %v7776, %v8599
        %v8601 = vlaneseq
        %v8602 = vshrl.u32 %v8601, 7
        %v8603 = vsub.s32 0, %v8602
        %v8604 = vrot.slane %v7779, %v8603
        %v8605 = vlaneseq
        %v8606 = vshrl.u32 %v8605, 7
        %v8607 = vsub.s32 1, %v8606
        %v8608 = vrot.slane %v7779, %v8607
        %v8609 = vlaneseq
        %v8610 = vshrl.u32 %v8609, 7
        %v8611 = vsub.s32 2, %v8610
        %v8612 = vrot.slane %v7779, %v8611
        %v8613 = vlaneseq
        %v8614 = vshrl.u32 %v8613, 7
        %v8615 = vsub.s32 3, %v8614
        %v8616 = vrot.slane %v7779, %v8615
        %v8617 = vlaneseq
        %v8618 = vshrl.u32 %v8617, 7
        %v8619 = vsub.s32 4, %v8618
        %v8620 = vrot.slane %v7779, %v8619
        %v8621 = vlaneseq
        %v8622 = vshrl.u32 %v8621, 7
        %v8623 = vsub.s32 5, %v8622
        %v8624 = vrot.slane %v7779, %v8623
        %v8625 = vlaneseq
        %v8626 = vshrl.u32 %v8625, 7
        %v8627 = vsub.s32 6, %v8626
        %v8628 = vrot.slane %v7779, %v8627
        %v8629 = vlaneseq
        %v8630 = vshrl.u32 %v8629, 7
        %v8631 = vsub.s32 7, %v8630
        %v8632 = vrot.slane %v7779, %v8631
        %v8633 = vlaneseq
        %v8634 = vshrl.u32 %v8633, 7
        %v8635 = vsub.s32 0, %v8634
        %v8636 = vrot.slane %v7782, %v8635
        %v8637 = vlaneseq
        %v8638 = vshrl.u32 %v8637, 7
        %v8639 = vsub.s32 1, %v8638
        %v8640 = vrot.slane %v7782, %v8639
        %v8641 = vlaneseq
        %v8642 = vshrl.u32 %v8641, 7
        %v8643 = vsub.s32 2, %v8642
        %v8644 = vrot.slane %v7782, %v8643
        %v8645 = vlaneseq
        %v8646 = vshrl.u32 %v8645, 7
        %v8647 = vsub.s32 3, %v8646
        %v8648 = vrot.slane %v7782, %v8647
        %v8649 = vlaneseq
        %v8650 = vshrl.u32 %v8649, 7
        %v8651 = vsub.s32 4, %v8650
        %v8652 = vrot.slane %v7782, %v8651
        %v8653 = vlaneseq
        %v8654 = vshrl.u32 %v8653, 7
        %v8655 = vsub.s32 5, %v8654
        %v8656 = vrot.slane %v7782, %v8655
        %v8657 = vlaneseq
        %v8658 = vshrl.u32 %v8657, 7
        %v8659 = vsub.s32 6, %v8658
        %v8660 = vrot.slane %v7782, %v8659
        %v8661 = vlaneseq
        %v8662 = vshrl.u32 %v8661, 7
        %v8663 = vsub.s32 7, %v8662
        %v8664 = vrot.slane %v7782, %v8663
        %v8665 = vlaneseq
        %v8666 = vshrl.u32 %v8665, 7
        %v8667 = vsub.s32 0, %v8666
        %v8668 = vrot.slane %v7785, %v8667
        %v8669 = vlaneseq
        %v8670 = vshrl.u32 %v8669, 7
        %v8671 = vsub.s32 1, %v8670
        %v8672 = vrot.slane %v7785, %v8671
        %v8673 = vlaneseq
        %v8674 = vshrl.u32 %v8673, 7
        %v8675 = vsub.s32 2, %v8674
        %v8676 = vrot.slane %v7785, %v8675
        %v8677 = vlaneseq
        %v8678 = vshrl.u32 %v8677, 7
        %v8679 = vsub.s32 3, %v8678
        %v8680 = vrot.slane %v7785, %v8679
        %v8681 = vlaneseq
        %v8682 = vshrl.u32 %v8681, 7
        %v8683 = vsub.s32 4, %v8682
        %v8684 = vrot.slane %v7785, %v8683
        %v8685 = vlaneseq
        %v8686 = vshrl.u32 %v8685, 7
        %v8687 = vsub.s32 5, %v8686
        %v8688 = vrot.slane %v7785, %v8687
        %v8689 = vlaneseq
        %v8690 = vshrl.u32 %v8689, 7
        %v8691 = vsub.s32 6, %v8690
        %v8692 = vrot.slane %v7785, %v8691
        %v8693 = vlaneseq
        %v8694 = vshrl.u32 %v8693, 7
        %v8695 = vsub.s32 7, %v8694
        %v8696 = vrot.slane %v7785, %v8695
        %v8697 = vlaneseq
        %v8698 = vshrl.u32 %v8697, 7
        %v8699 = vsub.s32 0, %v8698
        %v8700 = vrot.slane %v7788, %v8699
        %v8701 = vlaneseq
        %v8702 = vshrl.u32 %v8701, 7
        %v8703 = vsub.s32 1, %v8702
        %v8704 = vrot.slane %v7788, %v8703
        %v8705 = vlaneseq
        %v8706 = vshrl.u32 %v8705, 7
        %v8707 = vsub.s32 2, %v8706
        %v8708 = vrot.slane %v7788, %v8707
        %v8709 = vlaneseq
        %v8710 = vshrl.u32 %v8709, 7
        %v8711 = vsub.s32 3, %v8710
        %v8712 = vrot.slane %v7788, %v8711
        %v8713 = vlaneseq
        %v8714 = vshrl.u32 %v8713, 7
        %v8715 = vsub.s32 4, %v8714
        %v8716 = vrot.slane %v7788, %v8715
        %v8717 = vlaneseq
        %v8718 = vshrl.u32 %v8717, 7
        %v8719 = vsub.s32 5, %v8718
        %v8720 = vrot.slane %v7788, %v8719
        %v8721 = vlaneseq
        %v8722 = vshrl.u32 %v8721, 7
        %v8723 = vsub.s32 6, %v8722
        %v8724 = vrot.slane %v7788, %v8723
        %v8725 = vlaneseq
        %v8726 = vshrl.u32 %v8725, 7
        %v8727 = vsub.s32 7, %v8726
        %v8728 = vrot.slane %v7788, %v8727
        %v8729 = vlaneseq
        %v8730 = vshrl.u32 %v8729, 7
        %v8731 = vsub.s32 0, %v8730
        %v8732 = vrot.slane %v7791, %v8731
        %v8733 = vlaneseq
        %v8734 = vshrl.u32 %v8733, 7
        %v8735 = vsub.s32 1, %v8734
        %v8736 = vrot.slane %v7791, %v8735
        %v8737 = vlaneseq
        %v8738 = vshrl.u32 %v8737, 7
        %v8739 = vsub.s32 2, %v8738
        %v8740 = vrot.slane %v7791, %v8739
        %v8741 = vlaneseq
        %v8742 = vshrl.u32 %v8741, 7
        %v8743 = vsub.s32 3, %v8742
        %v8744 = vrot.slane %v7791, %v8743
        %v8745 = vlaneseq
        %v8746 = vshrl.u32 %v8745, 7
        %v8747 = vsub.s32 4, %v8746
        %v8748 = vrot.slane %v7791, %v8747
        %v8749 = vlaneseq
        %v8750 = vshrl.u32 %v8749, 7
        %v8751 = vsub.s32 5, %v8750
        %v8752 = vrot.slane %v7791, %v8751
        %v8753 = vlaneseq
        %v8754 = vshrl.u32 %v8753, 7
        %v8755 = vsub.s32 6, %v8754
        %v8756 = vrot.slane %v7791, %v8755
        %v8757 = vlaneseq
        %v8758 = vshrl.u32 %v8757, 7
        %v8759 = vsub.s32 7, %v8758
        %v8760 = vrot.slane %v7791, %v8759
        %v8761 = vlaneseq
        %v8762 = vshrl.u32 %v8761, 7
        %v8763 = vsub.s32 0, %v8762
        %v8764 = vrot.slane %v7794, %v8763
        %v8765 = vlaneseq
        %v8766 = vshrl.u32 %v8765, 7
        %v8767 = vsub.s32 1, %v8766
        %v8768 = vrot.slane %v7794, %v8767
        %v8769 = vlaneseq
        %v8770 = vshrl.u32 %v8769, 7
        %v8771 = vsub.s32 2, %v8770
        %v8772 = vrot.slane %v7794, %v8771
        %v8773 = vlaneseq
        %v8774 = vshrl.u32 %v8773, 7
        %v8775 = vsub.s32 3, %v8774
        %v8776 = vrot.slane %v7794, %v8775
        %v8777 = vlaneseq
        %v8778 = vshrl.u32 %v8777, 7
        %v8779 = vsub.s32 4, %v8778
        %v8780 = vrot.slane %v7794, %v8779
        %v8781 = vlaneseq
        %v8782 = vshrl.u32 %v8781, 7
        %v8783 = vsub.s32 5, %v8782
        %v8784 = vrot.slane %v7794, %v8783
        %v8785 = vlaneseq
        %v8786 = vshrl.u32 %v8785, 7
        %v8787 = vsub.s32 6, %v8786
        %v8788 = vrot.slane %v7794, %v8787
        %v8789 = vlaneseq
        %v8790 = vshrl.u32 %v8789, 7
        %v8791 = vsub.s32 7, %v8790
        %v8792 = vrot.slane %v7794, %v8791
        %v8793 = vlaneseq
        %v8794 = vshrl.u32 %v8793, 7
        %v8795 = vsub.s32 0, %v8794
        %v8796 = vrot.slane %v7797, %v8795
        %v8797 = vlaneseq
        %v8798 = vshrl.u32 %v8797, 7
        %v8799 = vsub.s32 1, %v8798
        %v8800 = vrot.slane %v7797, %v8799
        %v8801 = vlaneseq
        %v8802 = vshrl.u32 %v8801, 7
        %v8803 = vsub.s32 2, %v8802
        %v8804 = vrot.slane %v7797, %v8803
        %v8805 = vlaneseq
        %v8806 = vshrl.u32 %v8805, 7
        %v8807 = vsub.s32 3, %v8806
        %v8808 = vrot.slane %v7797, %v8807
        %v8809 = vlaneseq
        %v8810 = vshrl.u32 %v8809, 7
        %v8811 = vsub.s32 4, %v8810
        %v8812 = vrot.slane %v7797, %v8811
        %v8813 = vlaneseq
        %v8814 = vshrl.u32 %v8813, 7
        %v8815 = vsub.s32 5, %v8814
        %v8816 = vrot.slane %v7797, %v8815
        %v8817 = vlaneseq
        %v8818 = vshrl.u32 %v8817, 7
        %v8819 = vsub.s32 6, %v8818
        %v8820 = vrot.slane %v7797, %v8819
        %v8821 = vlaneseq
        %v8822 = vshrl.u32 %v8821, 7
        %v8823 = vsub.s32 7, %v8822
        %v8824 = vrot.slane %v7797, %v8823
        %v8825 = vlaneseq
        %v8826 = vshrl.u32 %v8825, 7
        %v8827 = vsub.s32 0, %v8826
        %v8828 = vrot.slane %v7800, %v8827
        %v8829 = vlaneseq
        %v8830 = vshrl.u32 %v8829, 7
        %v8831 = vsub.s32 1, %v8830
        %v8832 = vrot.slane %v7800, %v8831
        %v8833 = vlaneseq
        %v8834 = vshrl.u32 %v8833, 7
        %v8835 = vsub.s32 2, %v8834
        %v8836 = vrot.slane %v7800, %v8835
        %v8837 = vlaneseq
        %v8838 = vshrl.u32 %v8837, 7
        %v8839 = vsub.s32 3, %v8838
        %v8840 = vrot.slane %v7800, %v8839
        %v8841 = vlaneseq
        %v8842 = vshrl.u32 %v8841, 7
        %v8843 = vsub.s32 4, %v8842
        %v8844 = vrot.slane %v7800, %v8843
        %v8845 = vlaneseq
        %v8846 = vshrl.u32 %v8845, 7
        %v8847 = vsub.s32 5, %v8846
        %v8848 = vrot.slane %v7800, %v8847
        %v8849 = vlaneseq
        %v8850 = vshrl.u32 %v8849, 7
        %v8851 = vsub.s32 6, %v8850
        %v8852 = vrot.slane %v7800, %v8851
        %v8853 = vlaneseq
        %v8854 = vshrl.u32 %v8853, 7
        %v8855 = vsub.s32 7, %v8854
        %v8856 = vrot.slane %v7800, %v8855
        %v8857 = vcombine.low %v7836, %v7840
        %v8858 = vcombine.low %v7844, %v7848
        %v8859 = vcombine.low %v7852, %v7856
        %v8860 = vcombine.low %v7860, %v7864
        %v8862 = vunpack.c.l.s4 1966171168
        %v8863 = vunpack.c.0.s8 %v8862
        %v8864 = vlaneseq
        %v8865 = vshrl.u32 %v8864, 7
        %v8866 = vsub.s32 %v8863, %v8865
        %v8867 = vrot.slane %v8857, %v8866
        %v8869 = vunpack.c.l.s4 1966171168
        %v8870 = vunpack.c.0.s8 %v8869
        %v8871 = vlaneseq
        %v8872 = vshrl.u32 %v8871, 7
        %v8873 = vsub.s32 %v8870, %v8872
        %v8874 = vrot.slane %v8858, %v8873
        %v8876 = vunpack.c.l.s4 1966171168
        %v8877 = vunpack.c.0.s8 %v8876
        %v8878 = vlaneseq
        %v8879 = vshrl.u32 %v8878, 7
        %v8880 = vsub.s32 %v8877, %v8879
        %v8881 = vrot.slane %v8859, %v8880
        %v8883 = vunpack.c.l.s4 1966171168
        %v8884 = vunpack.c.0.s8 %v8883
        %v8885 = vlaneseq
        %v8886 = vshrl.u32 %v8885, 7
        %v8887 = vsub.s32 %v8884, %v8886
        %v8888 = vrot.slane %v8860, %v8887
        %v8889 = vcombine.low %v8867, %v8874
        %v8890 = vcombine.low %v8881, %v8888
        %v8892 = vunpack.c.l.s4 1966171168
        %v8893 = vunpack.c.0.s8 %v8892
        %v8894 = vlaneseq
        %v8895 = vshrl.u32 %v8894, 7
        %v8896 = vsub.s32 %v8893, %v8895
        %v8897 = vrot.slane %v8889, %v8896
        %v8899 = vunpack.c.l.s4 1966171168
        %v8900 = vunpack.c.0.s8 %v8899
        %v8901 = vlaneseq
        %v8902 = vshrl.u32 %v8901, 7
        %v8903 = vsub.s32 %v8900, %v8902
        %v8904 = vrot.slane %v8890, %v8903
        %v8905 = vcombine.low %v8897, %v8904
        %v8906 = vcombine.low %v7868, %v7872
        %v8907 = vcombine.low %v7876, %v7880
        %v8908 = vcombine.low %v7884, %v7888
        %v8909 = vcombine.low %v7892, %v7896
        %v8911 = vunpack.c.l.s4 1966171168
        %v8912 = vunpack.c.0.s8 %v8911
        %v8913 = vlaneseq
        %v8914 = vshrl.u32 %v8913, 7
        %v8915 = vsub.s32 %v8912, %v8914
        %v8916 = vrot.slane %v8906, %v8915
        %v8918 = vunpack.c.l.s4 1966171168
        %v8919 = vunpack.c.0.s8 %v8918
        %v8920 = vlaneseq
        %v8921 = vshrl.u32 %v8920, 7
        %v8922 = vsub.s32 %v8919, %v8921
        %v8923 = vrot.slane %v8907, %v8922
        %v8925 = vunpack.c.l.s4 1966171168
        %v8926 = vunpack.c.0.s8 %v8925
        %v8927 = vlaneseq
        %v8928 = vshrl.u32 %v8927, 7
        %v8929 = vsub.s32 %v8926, %v8928
        %v8930 = vrot.slane %v8908, %v8929
        %v8932 = vunpack.c.l.s4 1966171168
        %v8933 = vunpack.c.0.s8 %v8932
        %v8934 = vlaneseq
        %v8935 = vshrl.u32 %v8934, 7
        %v8936 = vsub.s32 %v8933, %v8935
        %v8937 = vrot.slane %v8909, %v8936
        %v8938 = vcombine.low %v8916, %v8923
        %v8939 = vcombine.low %v8930, %v8937
        %v8941 = vunpack.c.l.s4 1966171168
        %v8942 = vunpack.c.0.s8 %v8941
        %v8943 = vlaneseq
        %v8944 = vshrl.u32 %v8943, 7
        %v8945 = vsub.s32 %v8942, %v8944
        %v8946 = vrot.slane %v8938, %v8945
        %v8948 = vunpack.c.l.s4 1966171168
        %v8949 = vunpack.c.0.s8 %v8948
        %v8950 = vlaneseq
        %v8951 = vshrl.u32 %v8950, 7
        %v8952 = vsub.s32 %v8949, %v8951
        %v8953 = vrot.slane %v8939, %v8952
        %v8954 = vcombine.low %v8946, %v8953
        %v8955 = vcombine.low %v7900, %v7904
        %v8956 = vcombine.low %v7908, %v7912
        %v8957 = vcombine.low %v7916, %v7920
        %v8958 = vcombine.low %v7924, %v7928
        %v8960 = vunpack.c.l.s4 1966171168
        %v8961 = vunpack.c.0.s8 %v8960
        %v8962 = vlaneseq
        %v8963 = vshrl.u32 %v8962, 7
        %v8964 = vsub.s32 %v8961, %v8963
        %v8965 = vrot.slane %v8955, %v8964
        %v8967 = vunpack.c.l.s4 1966171168
        %v8968 = vunpack.c.0.s8 %v8967
        %v8969 = vlaneseq
        %v8970 = vshrl.u32 %v8969, 7
        %v8971 = vsub.s32 %v8968, %v8970
        %v8972 = vrot.slane %v8956, %v8971
        %v8974 = vunpack.c.l.s4 1966171168
        %v8975 = vunpack.c.0.s8 %v8974
        %v8976 = vlaneseq
        %v8977 = vshrl.u32 %v8976, 7
        %v8978 = vsub.s32 %v8975, %v8977
        %v8979 = vrot.slane %v8957, %v8978
        %v8981 = vunpack.c.l.s4 1966171168
        %v8982 = vunpack.c.0.s8 %v8981
        %v8983 = vlaneseq
        %v8984 = vshrl.u32 %v8983, 7
        %v8985 = vsub.s32 %v8982, %v8984
        %v8986 = vrot.slane %v8958, %v8985
        %v8987 = vcombine.low %v8965, %v8972
        %v8988 = vcombine.low %v8979, %v8986
        %v8990 = vunpack.c.l.s4 1966171168
        %v8991 = vunpack.c.0.s8 %v8990
        %v8992 = vlaneseq
        %v8993 = vshrl.u32 %v8992, 7
        %v8994 = vsub.s32 %v8991, %v8993
        %v8995 = vrot.slane %v8987, %v8994
        %v8997 = vunpack.c.l.s4 1966171168
        %v8998 = vunpack.c.0.s8 %v8997
        %v8999 = vlaneseq
        %v9000 = vshrl.u32 %v8999, 7
        %v9001 = vsub.s32 %v8998, %v9000
        %v9002 = vrot.slane %v8988, %v9001
        %v9003 = vcombine.low %v8995, %v9002
        %v9004 = vcombine.low %v7932, %v7936
        %v9005 = vcombine.low %v7940, %v7944
        %v9006 = vcombine.low %v7948, %v7952
        %v9007 = vcombine.low %v7956, %v7960
        %v9009 = vunpack.c.l.s4 1966171168
        %v9010 = vunpack.c.0.s8 %v9009
        %v9011 = vlaneseq
        %v9012 = vshrl.u32 %v9011, 7
        %v9013 = vsub.s32 %v9010, %v9012
        %v9014 = vrot.slane %v9004, %v9013
        %v9016 = vunpack.c.l.s4 1966171168
        %v9017 = vunpack.c.0.s8 %v9016
        %v9018 = vlaneseq
        %v9019 = vshrl.u32 %v9018, 7
        %v9020 = vsub.s32 %v9017, %v9019
        %v9021 = vrot.slane %v9005, %v9020
        %v9023 = vunpack.c.l.s4 1966171168
        %v9024 = vunpack.c.0.s8 %v9023
        %v9025 = vlaneseq
        %v9026 = vshrl.u32 %v9025, 7
        %v9027 = vsub.s32 %v9024, %v9026
        %v9028 = vrot.slane %v9006, %v9027
        %v9030 = vunpack.c.l.s4 1966171168
        %v9031 = vunpack.c.0.s8 %v9030
        %v9032 = vlaneseq
        %v9033 = vshrl.u32 %v9032, 7
        %v9034 = vsub.s32 %v9031, %v9033
        %v9035 = vrot.slane %v9007, %v9034
        %v9036 = vcombine.low %v9014, %v9021
        %v9037 = vcombine.low %v9028, %v9035
        %v9039 = vunpack.c.l.s4 1966171168
        %v9040 = vunpack.c.0.s8 %v9039
        %v9041 = vlaneseq
        %v9042 = vshrl.u32 %v9041, 7
        %v9043 = vsub.s32 %v9040, %v9042
        %v9044 = vrot.slane %v9036, %v9043
        %v9046 = vunpack.c.l.s4 1966171168
        %v9047 = vunpack.c.0.s8 %v9046
        %v9048 = vlaneseq
        %v9049 = vshrl.u32 %v9048, 7
        %v9050 = vsub.s32 %v9047, %v9049
        %v9051 = vrot.slane %v9037, %v9050
        %v9052 = vcombine.low %v9044, %v9051
        %v9053 = vcombine.low %v7964, %v7968
        %v9054 = vcombine.low %v7972, %v7976
        %v9055 = vcombine.low %v7980, %v7984
        %v9056 = vcombine.low %v7988, %v7992
        %v9058 = vunpack.c.l.s4 1966171168
        %v9059 = vunpack.c.0.s8 %v9058
        %v9060 = vlaneseq
        %v9061 = vshrl.u32 %v9060, 7
        %v9062 = vsub.s32 %v9059, %v9061
        %v9063 = vrot.slane %v9053, %v9062
        %v9065 = vunpack.c.l.s4 1966171168
        %v9066 = vunpack.c.0.s8 %v9065
        %v9067 = vlaneseq
        %v9068 = vshrl.u32 %v9067, 7
        %v9069 = vsub.s32 %v9066, %v9068
        %v9070 = vrot.slane %v9054, %v9069
        %v9072 = vunpack.c.l.s4 1966171168
        %v9073 = vunpack.c.0.s8 %v9072
        %v9074 = vlaneseq
        %v9075 = vshrl.u32 %v9074, 7
        %v9076 = vsub.s32 %v9073, %v9075
        %v9077 = vrot.slane %v9055, %v9076
        %v9079 = vunpack.c.l.s4 1966171168
        %v9080 = vunpack.c.0.s8 %v9079
        %v9081 = vlaneseq
        %v9082 = vshrl.u32 %v9081, 7
        %v9083 = vsub.s32 %v9080, %v9082
        %v9084 = vrot.slane %v9056, %v9083
        %v9085 = vcombine.low %v9063, %v9070
        %v9086 = vcombine.low %v9077, %v9084
        %v9088 = vunpack.c.l.s4 1966171168
        %v9089 = vunpack.c.0.s8 %v9088
        %v9090 = vlaneseq
        %v9091 = vshrl.u32 %v9090, 7
        %v9092 = vsub.s32 %v9089, %v9091
        %v9093 = vrot.slane %v9085, %v9092
        %v9095 = vunpack.c.l.s4 1966171168
        %v9096 = vunpack.c.0.s8 %v9095
        %v9097 = vlaneseq
        %v9098 = vshrl.u32 %v9097, 7
        %v9099 = vsub.s32 %v9096, %v9098
        %v9100 = vrot.slane %v9086, %v9099
        %v9101 = vcombine.low %v9093, %v9100
        %v9102 = vcombine.low %v7996, %v8000
        %v9103 = vcombine.low %v8004, %v8008
        %v9104 = vcombine.low %v8012, %v8016
        %v9105 = vcombine.low %v8020, %v8024
        %v9107 = vunpack.c.l.s4 1966171168
        %v9108 = vunpack.c.0.s8 %v9107
        %v9109 = vlaneseq
        %v9110 = vshrl.u32 %v9109, 7
        %v9111 = vsub.s32 %v9108, %v9110
        %v9112 = vrot.slane %v9102, %v9111
        %v9114 = vunpack.c.l.s4 1966171168
        %v9115 = vunpack.c.0.s8 %v9114
        %v9116 = vlaneseq
        %v9117 = vshrl.u32 %v9116, 7
        %v9118 = vsub.s32 %v9115, %v9117
        %v9119 = vrot.slane %v9103, %v9118
        %v9121 = vunpack.c.l.s4 1966171168
        %v9122 = vunpack.c.0.s8 %v9121
        %v9123 = vlaneseq
        %v9124 = vshrl.u32 %v9123, 7
        %v9125 = vsub.s32 %v9122, %v9124
        %v9126 = vrot.slane %v9104, %v9125
        %v9128 = vunpack.c.l.s4 1966171168
        %v9129 = vunpack.c.0.s8 %v9128
        %v9130 = vlaneseq
        %v9131 = vshrl.u32 %v9130, 7
        %v9132 = vsub.s32 %v9129, %v9131
        %v9133 = vrot.slane %v9105, %v9132
        %v9134 = vcombine.low %v9112, %v9119
        %v9135 = vcombine.low %v9126, %v9133
        %v9137 = vunpack.c.l.s4 1966171168
        %v9138 = vunpack.c.0.s8 %v9137
        %v9139 = vlaneseq
        %v9140 = vshrl.u32 %v9139, 7
        %v9141 = vsub.s32 %v9138, %v9140
        %v9142 = vrot.slane %v9134, %v9141
        %v9144 = vunpack.c.l.s4 1966171168
        %v9145 = vunpack.c.0.s8 %v9144
        %v9146 = vlaneseq
        %v9147 = vshrl.u32 %v9146, 7
        %v9148 = vsub.s32 %v9145, %v9147
        %v9149 = vrot.slane %v9135, %v9148
        %v9150 = vcombine.low %v9142, %v9149
        %v9151 = vcombine.low %v8028, %v8032
        %v9152 = vcombine.low %v8036, %v8040
        %v9153 = vcombine.low %v8044, %v8048
        %v9154 = vcombine.low %v8052, %v8056
        %v9156 = vunpack.c.l.s4 1966171168
        %v9157 = vunpack.c.0.s8 %v9156
        %v9158 = vlaneseq
        %v9159 = vshrl.u32 %v9158, 7
        %v9160 = vsub.s32 %v9157, %v9159
        %v9161 = vrot.slane %v9151, %v9160
        %v9163 = vunpack.c.l.s4 1966171168
        %v9164 = vunpack.c.0.s8 %v9163
        %v9165 = vlaneseq
        %v9166 = vshrl.u32 %v9165, 7
        %v9167 = vsub.s32 %v9164, %v9166
        %v9168 = vrot.slane %v9152, %v9167
        %v9170 = vunpack.c.l.s4 1966171168
        %v9171 = vunpack.c.0.s8 %v9170
        %v9172 = vlaneseq
        %v9173 = vshrl.u32 %v9172, 7
        %v9174 = vsub.s32 %v9171, %v9173
        %v9175 = vrot.slane %v9153, %v9174
        %v9177 = vunpack.c.l.s4 1966171168
        %v9178 = vunpack.c.0.s8 %v9177
        %v9179 = vlaneseq
        %v9180 = vshrl.u32 %v9179, 7
        %v9181 = vsub.s32 %v9178, %v9180
        %v9182 = vrot.slane %v9154, %v9181
        %v9183 = vcombine.low %v9161, %v9168
        %v9184 = vcombine.low %v9175, %v9182
        %v9186 = vunpack.c.l.s4 1966171168
        %v9187 = vunpack.c.0.s8 %v9186
        %v9188 = vlaneseq
        %v9189 = vshrl.u32 %v9188, 7
        %v9190 = vsub.s32 %v9187, %v9189
        %v9191 = vrot.slane %v9183, %v9190
        %v9193 = vunpack.c.l.s4 1966171168
        %v9194 = vunpack.c.0.s8 %v9193
        %v9195 = vlaneseq
        %v9196 = vshrl.u32 %v9195, 7
        %v9197 = vsub.s32 %v9194, %v9196
        %v9198 = vrot.slane %v9184, %v9197
        %v9199 = vcombine.low %v9191, %v9198
        %v9200 = vcombine.low %v8060, %v8064
        %v9201 = vcombine.low %v8068, %v8072
        %v9202 = vcombine.low %v8076, %v8080
        %v9203 = vcombine.low %v8084, %v8088
        %v9205 = vunpack.c.l.s4 1966171168
        %v9206 = vunpack.c.0.s8 %v9205
        %v9207 = vlaneseq
        %v9208 = vshrl.u32 %v9207, 7
        %v9209 = vsub.s32 %v9206, %v9208
        %v9210 = vrot.slane %v9200, %v9209
        %v9212 = vunpack.c.l.s4 1966171168
        %v9213 = vunpack.c.0.s8 %v9212
        %v9214 = vlaneseq
        %v9215 = vshrl.u32 %v9214, 7
        %v9216 = vsub.s32 %v9213, %v9215
        %v9217 = vrot.slane %v9201, %v9216
        %v9219 = vunpack.c.l.s4 1966171168
        %v9220 = vunpack.c.0.s8 %v9219
        %v9221 = vlaneseq
        %v9222 = vshrl.u32 %v9221, 7
        %v9223 = vsub.s32 %v9220, %v9222
        %v9224 = vrot.slane %v9202, %v9223
        %v9226 = vunpack.c.l.s4 1966171168
        %v9227 = vunpack.c.0.s8 %v9226
        %v9228 = vlaneseq
        %v9229 = vshrl.u32 %v9228, 7
        %v9230 = vsub.s32 %v9227, %v9229
        %v9231 = vrot.slane %v9203, %v9230
        %v9232 = vcombine.low %v9210, %v9217
        %v9233 = vcombine.low %v9224, %v9231
        %v9235 = vunpack.c.l.s4 1966171168
        %v9236 = vunpack.c.0.s8 %v9235
        %v9237 = vlaneseq
        %v9238 = vshrl.u32 %v9237, 7
        %v9239 = vsub.s32 %v9236, %v9238
        %v9240 = vrot.slane %v9232, %v9239
        %v9242 = vunpack.c.l.s4 1966171168
        %v9243 = vunpack.c.0.s8 %v9242
        %v9244 = vlaneseq
        %v9245 = vshrl.u32 %v9244, 7
        %v9246 = vsub.s32 %v9243, %v9245
        %v9247 = vrot.slane %v9233, %v9246
        %v9248 = vcombine.low %v9240, %v9247
        %v9249 = vcombine.low %v8092, %v8096
        %v9250 = vcombine.low %v8100, %v8104
        %v9251 = vcombine.low %v8108, %v8112
        %v9252 = vcombine.low %v8116, %v8120
        %v9254 = vunpack.c.l.s4 1966171168
        %v9255 = vunpack.c.0.s8 %v9254
        %v9256 = vlaneseq
        %v9257 = vshrl.u32 %v9256, 7
        %v9258 = vsub.s32 %v9255, %v9257
        %v9259 = vrot.slane %v9249, %v9258
        %v9261 = vunpack.c.l.s4 1966171168
        %v9262 = vunpack.c.0.s8 %v9261
        %v9263 = vlaneseq
        %v9264 = vshrl.u32 %v9263, 7
        %v9265 = vsub.s32 %v9262, %v9264
        %v9266 = vrot.slane %v9250, %v9265
        %v9268 = vunpack.c.l.s4 1966171168
        %v9269 = vunpack.c.0.s8 %v9268
        %v9270 = vlaneseq
        %v9271 = vshrl.u32 %v9270, 7
        %v9272 = vsub.s32 %v9269, %v9271
        %v9273 = vrot.slane %v9251, %v9272
        %v9275 = vunpack.c.l.s4 1966171168
        %v9276 = vunpack.c.0.s8 %v9275
        %v9277 = vlaneseq
        %v9278 = vshrl.u32 %v9277, 7
        %v9279 = vsub.s32 %v9276, %v9278
        %v9280 = vrot.slane %v9252, %v9279
        %v9281 = vcombine.low %v9259, %v9266
        %v9282 = vcombine.low %v9273, %v9280
        %v9284 = vunpack.c.l.s4 1966171168
        %v9285 = vunpack.c.0.s8 %v9284
        %v9286 = vlaneseq
        %v9287 = vshrl.u32 %v9286, 7
        %v9288 = vsub.s32 %v9285, %v9287
        %v9289 = vrot.slane %v9281, %v9288
        %v9291 = vunpack.c.l.s4 1966171168
        %v9292 = vunpack.c.0.s8 %v9291
        %v9293 = vlaneseq
        %v9294 = vshrl.u32 %v9293, 7
        %v9295 = vsub.s32 %v9292, %v9294
        %v9296 = vrot.slane %v9282, %v9295
        %v9297 = vcombine.low %v9289, %v9296
        %v9298 = vcombine.low %v8124, %v8128
        %v9299 = vcombine.low %v8132, %v8136
        %v9300 = vcombine.low %v8140, %v8144
        %v9301 = vcombine.low %v8148, %v8152
        %v9303 = vunpack.c.l.s4 1966171168
        %v9304 = vunpack.c.0.s8 %v9303
        %v9305 = vlaneseq
        %v9306 = vshrl.u32 %v9305, 7
        %v9307 = vsub.s32 %v9304, %v9306
        %v9308 = vrot.slane %v9298, %v9307
        %v9310 = vunpack.c.l.s4 1966171168
        %v9311 = vunpack.c.0.s8 %v9310
        %v9312 = vlaneseq
        %v9313 = vshrl.u32 %v9312, 7
        %v9314 = vsub.s32 %v9311, %v9313
        %v9315 = vrot.slane %v9299, %v9314
        %v9317 = vunpack.c.l.s4 1966171168
        %v9318 = vunpack.c.0.s8 %v9317
        %v9319 = vlaneseq
        %v9320 = vshrl.u32 %v9319, 7
        %v9321 = vsub.s32 %v9318, %v9320
        %v9322 = vrot.slane %v9300, %v9321
        %v9324 = vunpack.c.l.s4 1966171168
        %v9325 = vunpack.c.0.s8 %v9324
        %v9326 = vlaneseq
        %v9327 = vshrl.u32 %v9326, 7
        %v9328 = vsub.s32 %v9325, %v9327
        %v9329 = vrot.slane %v9301, %v9328
        %v9330 = vcombine.low %v9308, %v9315
        %v9331 = vcombine.low %v9322, %v9329
        %v9333 = vunpack.c.l.s4 1966171168
        %v9334 = vunpack.c.0.s8 %v9333
        %v9335 = vlaneseq
        %v9336 = vshrl.u32 %v9335, 7
        %v9337 = vsub.s32 %v9334, %v9336
        %v9338 = vrot.slane %v9330, %v9337
        %v9340 = vunpack.c.l.s4 1966171168
        %v9341 = vunpack.c.0.s8 %v9340
        %v9342 = vlaneseq
        %v9343 = vshrl.u32 %v9342, 7
        %v9344 = vsub.s32 %v9341, %v9343
        %v9345 = vrot.slane %v9331, %v9344
        %v9346 = vcombine.low %v9338, %v9345
        %v9347 = vcombine.low %v8156, %v8160
        %v9348 = vcombine.low %v8164, %v8168
        %v9349 = vcombine.low %v8172, %v8176
        %v9350 = vcombine.low %v8180, %v8184
        %v9352 = vunpack.c.l.s4 1966171168
        %v9353 = vunpack.c.0.s8 %v9352
        %v9354 = vlaneseq
        %v9355 = vshrl.u32 %v9354, 7
        %v9356 = vsub.s32 %v9353, %v9355
        %v9357 = vrot.slane %v9347, %v9356
        %v9359 = vunpack.c.l.s4 1966171168
        %v9360 = vunpack.c.0.s8 %v9359
        %v9361 = vlaneseq
        %v9362 = vshrl.u32 %v9361, 7
        %v9363 = vsub.s32 %v9360, %v9362
        %v9364 = vrot.slane %v9348, %v9363
        %v9366 = vunpack.c.l.s4 1966171168
        %v9367 = vunpack.c.0.s8 %v9366
        %v9368 = vlaneseq
        %v9369 = vshrl.u32 %v9368, 7
        %v9370 = vsub.s32 %v9367, %v9369
        %v9371 = vrot.slane %v9349, %v9370
        %v9373 = vunpack.c.l.s4 1966171168
        %v9374 = vunpack.c.0.s8 %v9373
        %v9375 = vlaneseq
        %v9376 = vshrl.u32 %v9375, 7
        %v9377 = vsub.s32 %v9374, %v9376
        %v9378 = vrot.slane %v9350, %v9377
        %v9379 = vcombine.low %v9357, %v9364
        %v9380 = vcombine.low %v9371, %v9378
        %v9382 = vunpack.c.l.s4 1966171168
        %v9383 = vunpack.c.0.s8 %v9382
        %v9384 = vlaneseq
        %v9385 = vshrl.u32 %v9384, 7
        %v9386 = vsub.s32 %v9383, %v9385
        %v9387 = vrot.slane %v9379, %v9386
        %v9389 = vunpack.c.l.s4 1966171168
        %v9390 = vunpack.c.0.s8 %v9389
        %v9391 = vlaneseq
        %v9392 = vshrl.u32 %v9391, 7
        %v9393 = vsub.s32 %v9390, %v9392
        %v9394 = vrot.slane %v9380, %v9393
        %v9395 = vcombine.low %v9387, %v9394
        %v9396 = vcombine.low %v8188, %v8192
        %v9397 = vcombine.low %v8196, %v8200
        %v9398 = vcombine.low %v8204, %v8208
        %v9399 = vcombine.low %v8212, %v8216
        %v9401 = vunpack.c.l.s4 1966171168
        %v9402 = vunpack.c.0.s8 %v9401
        %v9403 = vlaneseq
        %v9404 = vshrl.u32 %v9403, 7
        %v9405 = vsub.s32 %v9402, %v9404
        %v9406 = vrot.slane %v9396, %v9405
        %v9408 = vunpack.c.l.s4 1966171168
        %v9409 = vunpack.c.0.s8 %v9408
        %v9410 = vlaneseq
        %v9411 = vshrl.u32 %v9410, 7
        %v9412 = vsub.s32 %v9409, %v9411
        %v9413 = vrot.slane %v9397, %v9412
        %v9415 = vunpack.c.l.s4 1966171168
        %v9416 = vunpack.c.0.s8 %v9415
        %v9417 = vlaneseq
        %v9418 = vshrl.u32 %v9417, 7
        %v9419 = vsub.s32 %v9416, %v9418
        %v9420 = vrot.slane %v9398, %v9419
        %v9422 = vunpack.c.l.s4 1966171168
        %v9423 = vunpack.c.0.s8 %v9422
        %v9424 = vlaneseq
        %v9425 = vshrl.u32 %v9424, 7
        %v9426 = vsub.s32 %v9423, %v9425
        %v9427 = vrot.slane %v9399, %v9426
        %v9428 = vcombine.low %v9406, %v9413
        %v9429 = vcombine.low %v9420, %v9427
        %v9431 = vunpack.c.l.s4 1966171168
        %v9432 = vunpack.c.0.s8 %v9431
        %v9433 = vlaneseq
        %v9434 = vshrl.u32 %v9433, 7
        %v9435 = vsub.s32 %v9432, %v9434
        %v9436 = vrot.slane %v9428, %v9435
        %v9438 = vunpack.c.l.s4 1966171168
        %v9439 = vunpack.c.0.s8 %v9438
        %v9440 = vlaneseq
        %v9441 = vshrl.u32 %v9440, 7
        %v9442 = vsub.s32 %v9439, %v9441
        %v9443 = vrot.slane %v9429, %v9442
        %v9444 = vcombine.low %v9436, %v9443
        %v9445 = vcombine.low %v8220, %v8224
        %v9446 = vcombine.low %v8228, %v8232
        %v9447 = vcombine.low %v8236, %v8240
        %v9448 = vcombine.low %v8244, %v8248
        %v9450 = vunpack.c.l.s4 1966171168
        %v9451 = vunpack.c.0.s8 %v9450
        %v9452 = vlaneseq
        %v9453 = vshrl.u32 %v9452, 7
        %v9454 = vsub.s32 %v9451, %v9453
        %v9455 = vrot.slane %v9445, %v9454
        %v9457 = vunpack.c.l.s4 1966171168
        %v9458 = vunpack.c.0.s8 %v9457
        %v9459 = vlaneseq
        %v9460 = vshrl.u32 %v9459, 7
        %v9461 = vsub.s32 %v9458, %v9460
        %v9462 = vrot.slane %v9446, %v9461
        %v9464 = vunpack.c.l.s4 1966171168
        %v9465 = vunpack.c.0.s8 %v9464
        %v9466 = vlaneseq
        %v9467 = vshrl.u32 %v9466, 7
        %v9468 = vsub.s32 %v9465, %v9467
        %v9469 = vrot.slane %v9447, %v9468
        %v9471 = vunpack.c.l.s4 1966171168
        %v9472 = vunpack.c.0.s8 %v9471
        %v9473 = vlaneseq
        %v9474 = vshrl.u32 %v9473, 7
        %v9475 = vsub.s32 %v9472, %v9474
        %v9476 = vrot.slane %v9448, %v9475
        %v9477 = vcombine.low %v9455, %v9462
        %v9478 = vcombine.low %v9469, %v9476
        %v9480 = vunpack.c.l.s4 1966171168
        %v9481 = vunpack.c.0.s8 %v9480
        %v9482 = vlaneseq
        %v9483 = vshrl.u32 %v9482, 7
        %v9484 = vsub.s32 %v9481, %v9483
        %v9485 = vrot.slane %v9477, %v9484
        %v9487 = vunpack.c.l.s4 1966171168
        %v9488 = vunpack.c.0.s8 %v9487
        %v9489 = vlaneseq
        %v9490 = vshrl.u32 %v9489, 7
        %v9491 = vsub.s32 %v9488, %v9490
        %v9492 = vrot.slane %v9478, %v9491
        %v9493 = vcombine.low %v9485, %v9492
        %v9494 = vcombine.low %v8252, %v8256
        %v9495 = vcombine.low %v8260, %v8264
        %v9496 = vcombine.low %v8268, %v8272
        %v9497 = vcombine.low %v8276, %v8280
        %v9499 = vunpack.c.l.s4 1966171168
        %v9500 = vunpack.c.0.s8 %v9499
        %v9501 = vlaneseq
        %v9502 = vshrl.u32 %v9501, 7
        %v9503 = vsub.s32 %v9500, %v9502
        %v9504 = vrot.slane %v9494, %v9503
        %v9506 = vunpack.c.l.s4 1966171168
        %v9507 = vunpack.c.0.s8 %v9506
        %v9508 = vlaneseq
        %v9509 = vshrl.u32 %v9508, 7
        %v9510 = vsub.s32 %v9507, %v9509
        %v9511 = vrot.slane %v9495, %v9510
        %v9513 = vunpack.c.l.s4 1966171168
        %v9514 = vunpack.c.0.s8 %v9513
        %v9515 = vlaneseq
        %v9516 = vshrl.u32 %v9515, 7
        %v9517 = vsub.s32 %v9514, %v9516
        %v9518 = vrot.slane %v9496, %v9517
        %v9520 = vunpack.c.l.s4 1966171168
        %v9521 = vunpack.c.0.s8 %v9520
        %v9522 = vlaneseq
        %v9523 = vshrl.u32 %v9522, 7
        %v9524 = vsub.s32 %v9521, %v9523
        %v9525 = vrot.slane %v9497, %v9524
        %v9526 = vcombine.low %v9504, %v9511
        %v9527 = vcombine.low %v9518, %v9525
        %v9529 = vunpack.c.l.s4 1966171168
        %v9530 = vunpack.c.0.s8 %v9529
        %v9531 = vlaneseq
        %v9532 = vshrl.u32 %v9531, 7
        %v9533 = vsub.s32 %v9530, %v9532
        %v9534 = vrot.slane %v9526, %v9533
        %v9536 = vunpack.c.l.s4 1966171168
        %v9537 = vunpack.c.0.s8 %v9536
        %v9538 = vlaneseq
        %v9539 = vshrl.u32 %v9538, 7
        %v9540 = vsub.s32 %v9537, %v9539
        %v9541 = vrot.slane %v9527, %v9540
        %v9542 = vcombine.low %v9534, %v9541
        %v9543 = vcombine.low %v8284, %v8288
        %v9544 = vcombine.low %v8292, %v8296
        %v9545 = vcombine.low %v8300, %v8304
        %v9546 = vcombine.low %v8308, %v8312
        %v9548 = vunpack.c.l.s4 1966171168
        %v9549 = vunpack.c.0.s8 %v9548
        %v9550 = vlaneseq
        %v9551 = vshrl.u32 %v9550, 7
        %v9552 = vsub.s32 %v9549, %v9551
        %v9553 = vrot.slane %v9543, %v9552
        %v9555 = vunpack.c.l.s4 1966171168
        %v9556 = vunpack.c.0.s8 %v9555
        %v9557 = vlaneseq
        %v9558 = vshrl.u32 %v9557, 7
        %v9559 = vsub.s32 %v9556, %v9558
        %v9560 = vrot.slane %v9544, %v9559
        %v9562 = vunpack.c.l.s4 1966171168
        %v9563 = vunpack.c.0.s8 %v9562
        %v9564 = vlaneseq
        %v9565 = vshrl.u32 %v9564, 7
        %v9566 = vsub.s32 %v9563, %v9565
        %v9567 = vrot.slane %v9545, %v9566
        %v9569 = vunpack.c.l.s4 1966171168
        %v9570 = vunpack.c.0.s8 %v9569
        %v9571 = vlaneseq
        %v9572 = vshrl.u32 %v9571, 7
        %v9573 = vsub.s32 %v9570, %v9572
        %v9574 = vrot.slane %v9546, %v9573
        %v9575 = vcombine.low %v9553, %v9560
        %v9576 = vcombine.low %v9567, %v9574
        %v9578 = vunpack.c.l.s4 1966171168
        %v9579 = vunpack.c.0.s8 %v9578
        %v9580 = vlaneseq
        %v9581 = vshrl.u32 %v9580, 7
        %v9582 = vsub.s32 %v9579, %v9581
        %v9583 = vrot.slane %v9575, %v9582
        %v9585 = vunpack.c.l.s4 1966171168
        %v9586 = vunpack.c.0.s8 %v9585
        %v9587 = vlaneseq
        %v9588 = vshrl.u32 %v9587, 7
        %v9589 = vsub.s32 %v9586, %v9588
        %v9590 = vrot.slane %v9576, %v9589
        %v9591 = vcombine.low %v9583, %v9590
        %v9592 = vcombine.low %v8316, %v8320
        %v9593 = vcombine.low %v8324, %v8328
        %v9594 = vcombine.low %v8332, %v8336
        %v9595 = vcombine.low %v8340, %v8344
        %v9597 = vunpack.c.l.s4 1966171168
        %v9598 = vunpack.c.0.s8 %v9597
        %v9599 = vlaneseq
        %v9600 = vshrl.u32 %v9599, 7
        %v9601 = vsub.s32 %v9598, %v9600
        %v9602 = vrot.slane %v9592, %v9601
        %v9604 = vunpack.c.l.s4 1966171168
        %v9605 = vunpack.c.0.s8 %v9604
        %v9606 = vlaneseq
        %v9607 = vshrl.u32 %v9606, 7
        %v9608 = vsub.s32 %v9605, %v9607
        %v9609 = vrot.slane %v9593, %v9608
        %v9611 = vunpack.c.l.s4 1966171168
        %v9612 = vunpack.c.0.s8 %v9611
        %v9613 = vlaneseq
        %v9614 = vshrl.u32 %v9613, 7
        %v9615 = vsub.s32 %v9612, %v9614
        %v9616 = vrot.slane %v9594, %v9615
        %v9618 = vunpack.c.l.s4 1966171168
        %v9619 = vunpack.c.0.s8 %v9618
        %v9620 = vlaneseq
        %v9621 = vshrl.u32 %v9620, 7
        %v9622 = vsub.s32 %v9619, %v9621
        %v9623 = vrot.slane %v9595, %v9622
        %v9624 = vcombine.low %v9602, %v9609
        %v9625 = vcombine.low %v9616, %v9623
        %v9627 = vunpack.c.l.s4 1966171168
        %v9628 = vunpack.c.0.s8 %v9627
        %v9629 = vlaneseq
        %v9630 = vshrl.u32 %v9629, 7
        %v9631 = vsub.s32 %v9628, %v9630
        %v9632 = vrot.slane %v9624, %v9631
        %v9634 = vunpack.c.l.s4 1966171168
        %v9635 = vunpack.c.0.s8 %v9634
        %v9636 = vlaneseq
        %v9637 = vshrl.u32 %v9636, 7
        %v9638 = vsub.s32 %v9635, %v9637
        %v9639 = vrot.slane %v9625, %v9638
        %v9640 = vcombine.low %v9632, %v9639
        %v9641 = vcombine.low %v8348, %v8352
        %v9642 = vcombine.low %v8356, %v8360
        %v9643 = vcombine.low %v8364, %v8368
        %v9644 = vcombine.low %v8372, %v8376
        %v9646 = vunpack.c.l.s4 1966171168
        %v9647 = vunpack.c.0.s8 %v9646
        %v9648 = vlaneseq
        %v9649 = vshrl.u32 %v9648, 7
        %v9650 = vsub.s32 %v9647, %v9649
        %v9651 = vrot.slane %v9641, %v9650
        %v9653 = vunpack.c.l.s4 1966171168
        %v9654 = vunpack.c.0.s8 %v9653
        %v9655 = vlaneseq
        %v9656 = vshrl.u32 %v9655, 7
        %v9657 = vsub.s32 %v9654, %v9656
        %v9658 = vrot.slane %v9642, %v9657
        %v9660 = vunpack.c.l.s4 1966171168
        %v9661 = vunpack.c.0.s8 %v9660
        %v9662 = vlaneseq
        %v9663 = vshrl.u32 %v9662, 7
        %v9664 = vsub.s32 %v9661, %v9663
        %v9665 = vrot.slane %v9643, %v9664
        %v9667 = vunpack.c.l.s4 1966171168
        %v9668 = vunpack.c.0.s8 %v9667
        %v9669 = vlaneseq
        %v9670 = vshrl.u32 %v9669, 7
        %v9671 = vsub.s32 %v9668, %v9670
        %v9672 = vrot.slane %v9644, %v9671
        %v9673 = vcombine.low %v9651, %v9658
        %v9674 = vcombine.low %v9665, %v9672
        %v9676 = vunpack.c.l.s4 1966171168
        %v9677 = vunpack.c.0.s8 %v9676
        %v9678 = vlaneseq
        %v9679 = vshrl.u32 %v9678, 7
        %v9680 = vsub.s32 %v9677, %v9679
        %v9681 = vrot.slane %v9673, %v9680
        %v9683 = vunpack.c.l.s4 1966171168
        %v9684 = vunpack.c.0.s8 %v9683
        %v9685 = vlaneseq
        %v9686 = vshrl.u32 %v9685, 7
        %v9687 = vsub.s32 %v9684, %v9686
        %v9688 = vrot.slane %v9674, %v9687
        %v9689 = vcombine.low %v9681, %v9688
        %v9690 = vcombine.low %v8380, %v8384
        %v9691 = vcombine.low %v8388, %v8392
        %v9692 = vcombine.low %v8396, %v8400
        %v9693 = vcombine.low %v8404, %v8408
        %v9695 = vunpack.c.l.s4 1966171168
        %v9696 = vunpack.c.0.s8 %v9695
        %v9697 = vlaneseq
        %v9698 = vshrl.u32 %v9697, 7
        %v9699 = vsub.s32 %v9696, %v9698
        %v9700 = vrot.slane %v9690, %v9699
        %v9702 = vunpack.c.l.s4 1966171168
        %v9703 = vunpack.c.0.s8 %v9702
        %v9704 = vlaneseq
        %v9705 = vshrl.u32 %v9704, 7
        %v9706 = vsub.s32 %v9703, %v9705
        %v9707 = vrot.slane %v9691, %v9706
        %v9709 = vunpack.c.l.s4 1966171168
        %v9710 = vunpack.c.0.s8 %v9709
        %v9711 = vlaneseq
        %v9712 = vshrl.u32 %v9711, 7
        %v9713 = vsub.s32 %v9710, %v9712
        %v9714 = vrot.slane %v9692, %v9713
        %v9716 = vunpack.c.l.s4 1966171168
        %v9717 = vunpack.c.0.s8 %v9716
        %v9718 = vlaneseq
        %v9719 = vshrl.u32 %v9718, 7
        %v9720 = vsub.s32 %v9717, %v9719
        %v9721 = vrot.slane %v9693, %v9720
        %v9722 = vcombine.low %v9700, %v9707
        %v9723 = vcombine.low %v9714, %v9721
        %v9725 = vunpack.c.l.s4 1966171168
        %v9726 = vunpack.c.0.s8 %v9725
        %v9727 = vlaneseq
        %v9728 = vshrl.u32 %v9727, 7
        %v9729 = vsub.s32 %v9726, %v9728
        %v9730 = vrot.slane %v9722, %v9729
        %v9732 = vunpack.c.l.s4 1966171168
        %v9733 = vunpack.c.0.s8 %v9732
        %v9734 = vlaneseq
        %v9735 = vshrl.u32 %v9734, 7
        %v9736 = vsub.s32 %v9733, %v9735
        %v9737 = vrot.slane %v9723, %v9736
        %v9738 = vcombine.low %v9730, %v9737
        %v9739 = vcombine.low %v8412, %v8416
        %v9740 = vcombine.low %v8420, %v8424
        %v9741 = vcombine.low %v8428, %v8432
        %v9742 = vcombine.low %v8436, %v8440
        %v9744 = vunpack.c.l.s4 1966171168
        %v9745 = vunpack.c.0.s8 %v9744
        %v9746 = vlaneseq
        %v9747 = vshrl.u32 %v9746, 7
        %v9748 = vsub.s32 %v9745, %v9747
        %v9749 = vrot.slane %v9739, %v9748
        %v9751 = vunpack.c.l.s4 1966171168
        %v9752 = vunpack.c.0.s8 %v9751
        %v9753 = vlaneseq
        %v9754 = vshrl.u32 %v9753, 7
        %v9755 = vsub.s32 %v9752, %v9754
        %v9756 = vrot.slane %v9740, %v9755
        %v9758 = vunpack.c.l.s4 1966171168
        %v9759 = vunpack.c.0.s8 %v9758
        %v9760 = vlaneseq
        %v9761 = vshrl.u32 %v9760, 7
        %v9762 = vsub.s32 %v9759, %v9761
        %v9763 = vrot.slane %v9741, %v9762
        %v9765 = vunpack.c.l.s4 1966171168
        %v9766 = vunpack.c.0.s8 %v9765
        %v9767 = vlaneseq
        %v9768 = vshrl.u32 %v9767, 7
        %v9769 = vsub.s32 %v9766, %v9768
        %v9770 = vrot.slane %v9742, %v9769
        %v9771 = vcombine.low %v9749, %v9756
        %v9772 = vcombine.low %v9763, %v9770
        %v9774 = vunpack.c.l.s4 1966171168
        %v9775 = vunpack.c.0.s8 %v9774
        %v9776 = vlaneseq
        %v9777 = vshrl.u32 %v9776, 7
        %v9778 = vsub.s32 %v9775, %v9777
        %v9779 = vrot.slane %v9771, %v9778
        %v9781 = vunpack.c.l.s4 1966171168
        %v9782 = vunpack.c.0.s8 %v9781
        %v9783 = vlaneseq
        %v9784 = vshrl.u32 %v9783, 7
        %v9785 = vsub.s32 %v9782, %v9784
        %v9786 = vrot.slane %v9772, %v9785
        %v9787 = vcombine.low %v9779, %v9786
        %v9788 = vcombine.low %v8444, %v8448
        %v9789 = vcombine.low %v8452, %v8456
        %v9790 = vcombine.low %v8460, %v8464
        %v9791 = vcombine.low %v8468, %v8472
        %v9793 = vunpack.c.l.s4 1966171168
        %v9794 = vunpack.c.0.s8 %v9793
        %v9795 = vlaneseq
        %v9796 = vshrl.u32 %v9795, 7
        %v9797 = vsub.s32 %v9794, %v9796
        %v9798 = vrot.slane %v9788, %v9797
        %v9800 = vunpack.c.l.s4 1966171168
        %v9801 = vunpack.c.0.s8 %v9800
        %v9802 = vlaneseq
        %v9803 = vshrl.u32 %v9802, 7
        %v9804 = vsub.s32 %v9801, %v9803
        %v9805 = vrot.slane %v9789, %v9804
        %v9807 = vunpack.c.l.s4 1966171168
        %v9808 = vunpack.c.0.s8 %v9807
        %v9809 = vlaneseq
        %v9810 = vshrl.u32 %v9809, 7
        %v9811 = vsub.s32 %v9808, %v9810
        %v9812 = vrot.slane %v9790, %v9811
        %v9814 = vunpack.c.l.s4 1966171168
        %v9815 = vunpack.c.0.s8 %v9814
        %v9816 = vlaneseq
        %v9817 = vshrl.u32 %v9816, 7
        %v9818 = vsub.s32 %v9815, %v9817
        %v9819 = vrot.slane %v9791, %v9818
        %v9820 = vcombine.low %v9798, %v9805
        %v9821 = vcombine.low %v9812, %v9819
        %v9823 = vunpack.c.l.s4 1966171168
        %v9824 = vunpack.c.0.s8 %v9823
        %v9825 = vlaneseq
        %v9826 = vshrl.u32 %v9825, 7
        %v9827 = vsub.s32 %v9824, %v9826
        %v9828 = vrot.slane %v9820, %v9827
        %v9830 = vunpack.c.l.s4 1966171168
        %v9831 = vunpack.c.0.s8 %v9830
        %v9832 = vlaneseq
        %v9833 = vshrl.u32 %v9832, 7
        %v9834 = vsub.s32 %v9831, %v9833
        %v9835 = vrot.slane %v9821, %v9834
        %v9836 = vcombine.low %v9828, %v9835
        %v9837 = vcombine.low %v8476, %v8480
        %v9838 = vcombine.low %v8484, %v8488
        %v9839 = vcombine.low %v8492, %v8496
        %v9840 = vcombine.low %v8500, %v8504
        %v9842 = vunpack.c.l.s4 1966171168
        %v9843 = vunpack.c.0.s8 %v9842
        %v9844 = vlaneseq
        %v9845 = vshrl.u32 %v9844, 7
        %v9846 = vsub.s32 %v9843, %v9845
        %v9847 = vrot.slane %v9837, %v9846
        %v9849 = vunpack.c.l.s4 1966171168
        %v9850 = vunpack.c.0.s8 %v9849
        %v9851 = vlaneseq
        %v9852 = vshrl.u32 %v9851, 7
        %v9853 = vsub.s32 %v9850, %v9852
        %v9854 = vrot.slane %v9838, %v9853
        %v9856 = vunpack.c.l.s4 1966171168
        %v9857 = vunpack.c.0.s8 %v9856
        %v9858 = vlaneseq
        %v9859 = vshrl.u32 %v9858, 7
        %v9860 = vsub.s32 %v9857, %v9859
        %v9861 = vrot.slane %v9839, %v9860
        %v9863 = vunpack.c.l.s4 1966171168
        %v9864 = vunpack.c.0.s8 %v9863
        %v9865 = vlaneseq
        %v9866 = vshrl.u32 %v9865, 7
        %v9867 = vsub.s32 %v9864, %v9866
        %v9868 = vrot.slane %v9840, %v9867
        %v9869 = vcombine.low %v9847, %v9854
        %v9870 = vcombine.low %v9861, %v9868
        %v9872 = vunpack.c.l.s4 1966171168
        %v9873 = vunpack.c.0.s8 %v9872
        %v9874 = vlaneseq
        %v9875 = vshrl.u32 %v9874, 7
        %v9876 = vsub.s32 %v9873, %v9875
        %v9877 = vrot.slane %v9869, %v9876
        %v9879 = vunpack.c.l.s4 1966171168
        %v9880 = vunpack.c.0.s8 %v9879
        %v9881 = vlaneseq
        %v9882 = vshrl.u32 %v9881, 7
        %v9883 = vsub.s32 %v9880, %v9882
        %v9884 = vrot.slane %v9870, %v9883
        %v9885 = vcombine.low %v9877, %v9884
        %v9886 = vcombine.low %v8508, %v8512
        %v9887 = vcombine.low %v8516, %v8520
        %v9888 = vcombine.low %v8524, %v8528
        %v9889 = vcombine.low %v8532, %v8536
        %v9891 = vunpack.c.l.s4 1966171168
        %v9892 = vunpack.c.0.s8 %v9891
        %v9893 = vlaneseq
        %v9894 = vshrl.u32 %v9893, 7
        %v9895 = vsub.s32 %v9892, %v9894
        %v9896 = vrot.slane %v9886, %v9895
        %v9898 = vunpack.c.l.s4 1966171168
        %v9899 = vunpack.c.0.s8 %v9898
        %v9900 = vlaneseq
        %v9901 = vshrl.u32 %v9900, 7
        %v9902 = vsub.s32 %v9899, %v9901
        %v9903 = vrot.slane %v9887, %v9902
        %v9905 = vunpack.c.l.s4 1966171168
        %v9906 = vunpack.c.0.s8 %v9905
        %v9907 = vlaneseq
        %v9908 = vshrl.u32 %v9907, 7
        %v9909 = vsub.s32 %v9906, %v9908
        %v9910 = vrot.slane %v9888, %v9909
        %v9912 = vunpack.c.l.s4 1966171168
        %v9913 = vunpack.c.0.s8 %v9912
        %v9914 = vlaneseq
        %v9915 = vshrl.u32 %v9914, 7
        %v9916 = vsub.s32 %v9913, %v9915
        %v9917 = vrot.slane %v9889, %v9916
        %v9918 = vcombine.low %v9896, %v9903
        %v9919 = vcombine.low %v9910, %v9917
        %v9921 = vunpack.c.l.s4 1966171168
        %v9922 = vunpack.c.0.s8 %v9921
        %v9923 = vlaneseq
        %v9924 = vshrl.u32 %v9923, 7
        %v9925 = vsub.s32 %v9922, %v9924
        %v9926 = vrot.slane %v9918, %v9925
        %v9928 = vunpack.c.l.s4 1966171168
        %v9929 = vunpack.c.0.s8 %v9928
        %v9930 = vlaneseq
        %v9931 = vshrl.u32 %v9930, 7
        %v9932 = vsub.s32 %v9929, %v9931
        %v9933 = vrot.slane %v9919, %v9932
        %v9934 = vcombine.low %v9926, %v9933
        %v9935 = vcombine.low %v8540, %v8544
        %v9936 = vcombine.low %v8548, %v8552
        %v9937 = vcombine.low %v8556, %v8560
        %v9938 = vcombine.low %v8564, %v8568
        %v9940 = vunpack.c.l.s4 1966171168
        %v9941 = vunpack.c.0.s8 %v9940
        %v9942 = vlaneseq
        %v9943 = vshrl.u32 %v9942, 7
        %v9944 = vsub.s32 %v9941, %v9943
        %v9945 = vrot.slane %v9935, %v9944
        %v9947 = vunpack.c.l.s4 1966171168
        %v9948 = vunpack.c.0.s8 %v9947
        %v9949 = vlaneseq
        %v9950 = vshrl.u32 %v9949, 7
        %v9951 = vsub.s32 %v9948, %v9950
        %v9952 = vrot.slane %v9936, %v9951
        %v9954 = vunpack.c.l.s4 1966171168
        %v9955 = vunpack.c.0.s8 %v9954
        %v9956 = vlaneseq
        %v9957 = vshrl.u32 %v9956, 7
        %v9958 = vsub.s32 %v9955, %v9957
        %v9959 = vrot.slane %v9937, %v9958
        %v9961 = vunpack.c.l.s4 1966171168
        %v9962 = vunpack.c.0.s8 %v9961
        %v9963 = vlaneseq
        %v9964 = vshrl.u32 %v9963, 7
        %v9965 = vsub.s32 %v9962, %v9964
        %v9966 = vrot.slane %v9938, %v9965
        %v9967 = vcombine.low %v9945, %v9952
        %v9968 = vcombine.low %v9959, %v9966
        %v9970 = vunpack.c.l.s4 1966171168
        %v9971 = vunpack.c.0.s8 %v9970
        %v9972 = vlaneseq
        %v9973 = vshrl.u32 %v9972, 7
        %v9974 = vsub.s32 %v9971, %v9973
        %v9975 = vrot.slane %v9967, %v9974
        %v9977 = vunpack.c.l.s4 1966171168
        %v9978 = vunpack.c.0.s8 %v9977
        %v9979 = vlaneseq
        %v9980 = vshrl.u32 %v9979, 7
        %v9981 = vsub.s32 %v9978, %v9980
        %v9982 = vrot.slane %v9968, %v9981
        %v9983 = vcombine.low %v9975, %v9982
        %v9984 = vcombine.low %v8572, %v8576
        %v9985 = vcombine.low %v8580, %v8584
        %v9986 = vcombine.low %v8588, %v8592
        %v9987 = vcombine.low %v8596, %v8600
        %v9989 = vunpack.c.l.s4 1966171168
        %v9990 = vunpack.c.0.s8 %v9989
        %v9991 = vlaneseq
        %v9992 = vshrl.u32 %v9991, 7
        %v9993 = vsub.s32 %v9990, %v9992
        %v9994 = vrot.slane %v9984, %v9993
        %v9996 = vunpack.c.l.s4 1966171168
        %v9997 = vunpack.c.0.s8 %v9996
        %v9998 = vlaneseq
        %v9999 = vshrl.u32 %v9998, 7
        %v10000 = vsub.s32 %v9997, %v9999
        %v10001 = vrot.slane %v9985, %v10000
        %v10003 = vunpack.c.l.s4 1966171168
        %v10004 = vunpack.c.0.s8 %v10003
        %v10005 = vlaneseq
        %v10006 = vshrl.u32 %v10005, 7
        %v10007 = vsub.s32 %v10004, %v10006
        %v10008 = vrot.slane %v9986, %v10007
        %v10010 = vunpack.c.l.s4 1966171168
        %v10011 = vunpack.c.0.s8 %v10010
        %v10012 = vlaneseq
        %v10013 = vshrl.u32 %v10012, 7
        %v10014 = vsub.s32 %v10011, %v10013
        %v10015 = vrot.slane %v9987, %v10014
        %v10016 = vcombine.low %v9994, %v10001
        %v10017 = vcombine.low %v10008, %v10015
        %v10019 = vunpack.c.l.s4 1966171168
        %v10020 = vunpack.c.0.s8 %v10019
        %v10021 = vlaneseq
        %v10022 = vshrl.u32 %v10021, 7
        %v10023 = vsub.s32 %v10020, %v10022
        %v10024 = vrot.slane %v10016, %v10023
        %v10026 = vunpack.c.l.s4 1966171168
        %v10027 = vunpack.c.0.s8 %v10026
        %v10028 = vlaneseq
        %v10029 = vshrl.u32 %v10028, 7
        %v10030 = vsub.s32 %v10027, %v10029
        %v10031 = vrot.slane %v10017, %v10030
        %v10032 = vcombine.low %v10024, %v10031
        %v10033 = vcombine.low %v8604, %v8608
        %v10034 = vcombine.low %v8612, %v8616
        %v10035 = vcombine.low %v8620, %v8624
        %v10036 = vcombine.low %v8628, %v8632
        %v10038 = vunpack.c.l.s4 1966171168
        %v10039 = vunpack.c.0.s8 %v10038
        %v10040 = vlaneseq
        %v10041 = vshrl.u32 %v10040, 7
        %v10042 = vsub.s32 %v10039, %v10041
        %v10043 = vrot.slane %v10033, %v10042
        %v10045 = vunpack.c.l.s4 1966171168
        %v10046 = vunpack.c.0.s8 %v10045
        %v10047 = vlaneseq
        %v10048 = vshrl.u32 %v10047, 7
        %v10049 = vsub.s32 %v10046, %v10048
        %v10050 = vrot.slane %v10034, %v10049
        %v10052 = vunpack.c.l.s4 1966171168
        %v10053 = vunpack.c.0.s8 %v10052
        %v10054 = vlaneseq
        %v10055 = vshrl.u32 %v10054, 7
        %v10056 = vsub.s32 %v10053, %v10055
        %v10057 = vrot.slane %v10035, %v10056
        %v10059 = vunpack.c.l.s4 1966171168
        %v10060 = vunpack.c.0.s8 %v10059
        %v10061 = vlaneseq
        %v10062 = vshrl.u32 %v10061, 7
        %v10063 = vsub.s32 %v10060, %v10062
        %v10064 = vrot.slane %v10036, %v10063
        %v10065 = vcombine.low %v10043, %v10050
        %v10066 = vcombine.low %v10057, %v10064
        %v10068 = vunpack.c.l.s4 1966171168
        %v10069 = vunpack.c.0.s8 %v10068
        %v10070 = vlaneseq
        %v10071 = vshrl.u32 %v10070, 7
        %v10072 = vsub.s32 %v10069, %v10071
        %v10073 = vrot.slane %v10065, %v10072
        %v10075 = vunpack.c.l.s4 1966171168
        %v10076 = vunpack.c.0.s8 %v10075
        %v10077 = vlaneseq
        %v10078 = vshrl.u32 %v10077, 7
        %v10079 = vsub.s32 %v10076, %v10078
        %v10080 = vrot.slane %v10066, %v10079
        %v10081 = vcombine.low %v10073, %v10080
        %v10082 = vcombine.low %v8636, %v8640
        %v10083 = vcombine.low %v8644, %v8648
        %v10084 = vcombine.low %v8652, %v8656
        %v10085 = vcombine.low %v8660, %v8664
        %v10087 = vunpack.c.l.s4 1966171168
        %v10088 = vunpack.c.0.s8 %v10087
        %v10089 = vlaneseq
        %v10090 = vshrl.u32 %v10089, 7
        %v10091 = vsub.s32 %v10088, %v10090
        %v10092 = vrot.slane %v10082, %v10091
        %v10094 = vunpack.c.l.s4 1966171168
        %v10095 = vunpack.c.0.s8 %v10094
        %v10096 = vlaneseq
        %v10097 = vshrl.u32 %v10096, 7
        %v10098 = vsub.s32 %v10095, %v10097
        %v10099 = vrot.slane %v10083, %v10098
        %v10101 = vunpack.c.l.s4 1966171168
        %v10102 = vunpack.c.0.s8 %v10101
        %v10103 = vlaneseq
        %v10104 = vshrl.u32 %v10103, 7
        %v10105 = vsub.s32 %v10102, %v10104
        %v10106 = vrot.slane %v10084, %v10105
        %v10108 = vunpack.c.l.s4 1966171168
        %v10109 = vunpack.c.0.s8 %v10108
        %v10110 = vlaneseq
        %v10111 = vshrl.u32 %v10110, 7
        %v10112 = vsub.s32 %v10109, %v10111
        %v10113 = vrot.slane %v10085, %v10112
        %v10114 = vcombine.low %v10092, %v10099
        %v10115 = vcombine.low %v10106, %v10113
        %v10117 = vunpack.c.l.s4 1966171168
        %v10118 = vunpack.c.0.s8 %v10117
        %v10119 = vlaneseq
        %v10120 = vshrl.u32 %v10119, 7
        %v10121 = vsub.s32 %v10118, %v10120
        %v10122 = vrot.slane %v10114, %v10121
        %v10124 = vunpack.c.l.s4 1966171168
        %v10125 = vunpack.c.0.s8 %v10124
        %v10126 = vlaneseq
        %v10127 = vshrl.u32 %v10126, 7
        %v10128 = vsub.s32 %v10125, %v10127
        %v10129 = vrot.slane %v10115, %v10128
        %v10130 = vcombine.low %v10122, %v10129
        %v10131 = vcombine.low %v8668, %v8672
        %v10132 = vcombine.low %v8676, %v8680
        %v10133 = vcombine.low %v8684, %v8688
        %v10134 = vcombine.low %v8692, %v8696
        %v10136 = vunpack.c.l.s4 1966171168
        %v10137 = vunpack.c.0.s8 %v10136
        %v10138 = vlaneseq
        %v10139 = vshrl.u32 %v10138, 7
        %v10140 = vsub.s32 %v10137, %v10139
        %v10141 = vrot.slane %v10131, %v10140
        %v10143 = vunpack.c.l.s4 1966171168
        %v10144 = vunpack.c.0.s8 %v10143
        %v10145 = vlaneseq
        %v10146 = vshrl.u32 %v10145, 7
        %v10147 = vsub.s32 %v10144, %v10146
        %v10148 = vrot.slane %v10132, %v10147
        %v10150 = vunpack.c.l.s4 1966171168
        %v10151 = vunpack.c.0.s8 %v10150
        %v10152 = vlaneseq
        %v10153 = vshrl.u32 %v10152, 7
        %v10154 = vsub.s32 %v10151, %v10153
        %v10155 = vrot.slane %v10133, %v10154
        %v10157 = vunpack.c.l.s4 1966171168
        %v10158 = vunpack.c.0.s8 %v10157
        %v10159 = vlaneseq
        %v10160 = vshrl.u32 %v10159, 7
        %v10161 = vsub.s32 %v10158, %v10160
        %v10162 = vrot.slane %v10134, %v10161
        %v10163 = vcombine.low %v10141, %v10148
        %v10164 = vcombine.low %v10155, %v10162
        %v10166 = vunpack.c.l.s4 1966171168
        %v10167 = vunpack.c.0.s8 %v10166
        %v10168 = vlaneseq
        %v10169 = vshrl.u32 %v10168, 7
        %v10170 = vsub.s32 %v10167, %v10169
        %v10171 = vrot.slane %v10163, %v10170
        %v10173 = vunpack.c.l.s4 1966171168
        %v10174 = vunpack.c.0.s8 %v10173
        %v10175 = vlaneseq
        %v10176 = vshrl.u32 %v10175, 7
        %v10177 = vsub.s32 %v10174, %v10176
        %v10178 = vrot.slane %v10164, %v10177
        %v10179 = vcombine.low %v10171, %v10178
        %v10180 = vcombine.low %v8700, %v8704
        %v10181 = vcombine.low %v8708, %v8712
        %v10182 = vcombine.low %v8716, %v8720
        %v10183 = vcombine.low %v8724, %v8728
        %v10185 = vunpack.c.l.s4 1966171168
        %v10186 = vunpack.c.0.s8 %v10185
        %v10187 = vlaneseq
        %v10188 = vshrl.u32 %v10187, 7
        %v10189 = vsub.s32 %v10186, %v10188
        %v10190 = vrot.slane %v10180, %v10189
        %v10192 = vunpack.c.l.s4 1966171168
        %v10193 = vunpack.c.0.s8 %v10192
        %v10194 = vlaneseq
        %v10195 = vshrl.u32 %v10194, 7
        %v10196 = vsub.s32 %v10193, %v10195
        %v10197 = vrot.slane %v10181, %v10196
        %v10199 = vunpack.c.l.s4 1966171168
        %v10200 = vunpack.c.0.s8 %v10199
        %v10201 = vlaneseq
        %v10202 = vshrl.u32 %v10201, 7
        %v10203 = vsub.s32 %v10200, %v10202
        %v10204 = vrot.slane %v10182, %v10203
        %v10206 = vunpack.c.l.s4 1966171168
        %v10207 = vunpack.c.0.s8 %v10206
        %v10208 = vlaneseq
        %v10209 = vshrl.u32 %v10208, 7
        %v10210 = vsub.s32 %v10207, %v10209
        %v10211 = vrot.slane %v10183, %v10210
        %v10212 = vcombine.low %v10190, %v10197
        %v10213 = vcombine.low %v10204, %v10211
        %v10215 = vunpack.c.l.s4 1966171168
        %v10216 = vunpack.c.0.s8 %v10215
        %v10217 = vlaneseq
        %v10218 = vshrl.u32 %v10217, 7
        %v10219 = vsub.s32 %v10216, %v10218
        %v10220 = vrot.slane %v10212, %v10219
        %v10222 = vunpack.c.l.s4 1966171168
        %v10223 = vunpack.c.0.s8 %v10222
        %v10224 = vlaneseq
        %v10225 = vshrl.u32 %v10224, 7
        %v10226 = vsub.s32 %v10223, %v10225
        %v10227 = vrot.slane %v10213, %v10226
        %v10228 = vcombine.low %v10220, %v10227
        %v10229 = vcombine.low %v8732, %v8736
        %v10230 = vcombine.low %v8740, %v8744
        %v10231 = vcombine.low %v8748, %v8752
        %v10232 = vcombine.low %v8756, %v8760
        %v10234 = vunpack.c.l.s4 1966171168
        %v10235 = vunpack.c.0.s8 %v10234
        %v10236 = vlaneseq
        %v10237 = vshrl.u32 %v10236, 7
        %v10238 = vsub.s32 %v10235, %v10237
        %v10239 = vrot.slane %v10229, %v10238
        %v10241 = vunpack.c.l.s4 1966171168
        %v10242 = vunpack.c.0.s8 %v10241
        %v10243 = vlaneseq
        %v10244 = vshrl.u32 %v10243, 7
        %v10245 = vsub.s32 %v10242, %v10244
        %v10246 = vrot.slane %v10230, %v10245
        %v10248 = vunpack.c.l.s4 1966171168
        %v10249 = vunpack.c.0.s8 %v10248
        %v10250 = vlaneseq
        %v10251 = vshrl.u32 %v10250, 7
        %v10252 = vsub.s32 %v10249, %v10251
        %v10253 = vrot.slane %v10231, %v10252
        %v10255 = vunpack.c.l.s4 1966171168
        %v10256 = vunpack.c.0.s8 %v10255
        %v10257 = vlaneseq
        %v10258 = vshrl.u32 %v10257, 7
        %v10259 = vsub.s32 %v10256, %v10258
        %v10260 = vrot.slane %v10232, %v10259
        %v10261 = vcombine.low %v10239, %v10246
        %v10262 = vcombine.low %v10253, %v10260
        %v10264 = vunpack.c.l.s4 1966171168
        %v10265 = vunpack.c.0.s8 %v10264
        %v10266 = vlaneseq
        %v10267 = vshrl.u32 %v10266, 7
        %v10268 = vsub.s32 %v10265, %v10267
        %v10269 = vrot.slane %v10261, %v10268
        %v10271 = vunpack.c.l.s4 1966171168
        %v10272 = vunpack.c.0.s8 %v10271
        %v10273 = vlaneseq
        %v10274 = vshrl.u32 %v10273, 7
        %v10275 = vsub.s32 %v10272, %v10274
        %v10276 = vrot.slane %v10262, %v10275
        %v10277 = vcombine.low %v10269, %v10276
        %v10278 = vcombine.low %v8764, %v8768
        %v10279 = vcombine.low %v8772, %v8776
        %v10280 = vcombine.low %v8780, %v8784
        %v10281 = vcombine.low %v8788, %v8792
        %v10283 = vunpack.c.l.s4 1966171168
        %v10284 = vunpack.c.0.s8 %v10283
        %v10285 = vlaneseq
        %v10286 = vshrl.u32 %v10285, 7
        %v10287 = vsub.s32 %v10284, %v10286
        %v10288 = vrot.slane %v10278, %v10287
        %v10290 = vunpack.c.l.s4 1966171168
        %v10291 = vunpack.c.0.s8 %v10290
        %v10292 = vlaneseq
        %v10293 = vshrl.u32 %v10292, 7
        %v10294 = vsub.s32 %v10291, %v10293
        %v10295 = vrot.slane %v10279, %v10294
        %v10297 = vunpack.c.l.s4 1966171168
        %v10298 = vunpack.c.0.s8 %v10297
        %v10299 = vlaneseq
        %v10300 = vshrl.u32 %v10299, 7
        %v10301 = vsub.s32 %v10298, %v10300
        %v10302 = vrot.slane %v10280, %v10301
        %v10304 = vunpack.c.l.s4 1966171168
        %v10305 = vunpack.c.0.s8 %v10304
        %v10306 = vlaneseq
        %v10307 = vshrl.u32 %v10306, 7
        %v10308 = vsub.s32 %v10305, %v10307
        %v10309 = vrot.slane %v10281, %v10308
        %v10310 = vcombine.low %v10288, %v10295
        %v10311 = vcombine.low %v10302, %v10309
        %v10313 = vunpack.c.l.s4 1966171168
        %v10314 = vunpack.c.0.s8 %v10313
        %v10315 = vlaneseq
        %v10316 = vshrl.u32 %v10315, 7
        %v10317 = vsub.s32 %v10314, %v10316
        %v10318 = vrot.slane %v10310, %v10317
        %v10320 = vunpack.c.l.s4 1966171168
        %v10321 = vunpack.c.0.s8 %v10320
        %v10322 = vlaneseq
        %v10323 = vshrl.u32 %v10322, 7
        %v10324 = vsub.s32 %v10321, %v10323
        %v10325 = vrot.slane %v10311, %v10324
        %v10326 = vcombine.low %v10318, %v10325
        %v10327 = vcombine.low %v8796, %v8800
        %v10328 = vcombine.low %v8804, %v8808
        %v10329 = vcombine.low %v8812, %v8816
        %v10330 = vcombine.low %v8820, %v8824
        %v10332 = vunpack.c.l.s4 1966171168
        %v10333 = vunpack.c.0.s8 %v10332
        %v10334 = vlaneseq
        %v10335 = vshrl.u32 %v10334, 7
        %v10336 = vsub.s32 %v10333, %v10335
        %v10337 = vrot.slane %v10327, %v10336
        %v10339 = vunpack.c.l.s4 1966171168
        %v10340 = vunpack.c.0.s8 %v10339
        %v10341 = vlaneseq
        %v10342 = vshrl.u32 %v10341, 7
        %v10343 = vsub.s32 %v10340, %v10342
        %v10344 = vrot.slane %v10328, %v10343
        %v10346 = vunpack.c.l.s4 1966171168
        %v10347 = vunpack.c.0.s8 %v10346
        %v10348 = vlaneseq
        %v10349 = vshrl.u32 %v10348, 7
        %v10350 = vsub.s32 %v10347, %v10349
        %v10351 = vrot.slane %v10329, %v10350
        %v10353 = vunpack.c.l.s4 1966171168
        %v10354 = vunpack.c.0.s8 %v10353
        %v10355 = vlaneseq
        %v10356 = vshrl.u32 %v10355, 7
        %v10357 = vsub.s32 %v10354, %v10356
        %v10358 = vrot.slane %v10330, %v10357
        %v10359 = vcombine.low %v10337, %v10344
        %v10360 = vcombine.low %v10351, %v10358
        %v10362 = vunpack.c.l.s4 1966171168
        %v10363 = vunpack.c.0.s8 %v10362
        %v10364 = vlaneseq
        %v10365 = vshrl.u32 %v10364, 7
        %v10366 = vsub.s32 %v10363, %v10365
        %v10367 = vrot.slane %v10359, %v10366
        %v10369 = vunpack.c.l.s4 1966171168
        %v10370 = vunpack.c.0.s8 %v10369
        %v10371 = vlaneseq
        %v10372 = vshrl.u32 %v10371, 7
        %v10373 = vsub.s32 %v10370, %v10372
        %v10374 = vrot.slane %v10360, %v10373
        %v10375 = vcombine.low %v10367, %v10374
        %v10376 = vcombine.low %v8828, %v8832
        %v10377 = vcombine.low %v8836, %v8840
        %v10378 = vcombine.low %v8844, %v8848
        %v10379 = vcombine.low %v8852, %v8856
        %v10381 = vunpack.c.l.s4 1966171168
        %v10382 = vunpack.c.0.s8 %v10381
        %v10383 = vlaneseq
        %v10384 = vshrl.u32 %v10383, 7
        %v10385 = vsub.s32 %v10382, %v10384
        %v10386 = vrot.slane %v10376, %v10385
        %v10388 = vunpack.c.l.s4 1966171168
        %v10389 = vunpack.c.0.s8 %v10388
        %v10390 = vlaneseq
        %v10391 = vshrl.u32 %v10390, 7
        %v10392 = vsub.s32 %v10389, %v10391
        %v10393 = vrot.slane %v10377, %v10392
        %v10395 = vunpack.c.l.s4 1966171168
        %v10396 = vunpack.c.0.s8 %v10395
        %v10397 = vlaneseq
        %v10398 = vshrl.u32 %v10397, 7
        %v10399 = vsub.s32 %v10396, %v10398
        %v10400 = vrot.slane %v10378, %v10399
        %v10402 = vunpack.c.l.s4 1966171168
        %v10403 = vunpack.c.0.s8 %v10402
        %v10404 = vlaneseq
        %v10405 = vshrl.u32 %v10404, 7
        %v10406 = vsub.s32 %v10403, %v10405
        %v10407 = vrot.slane %v10379, %v10406
        %v10408 = vcombine.low %v10386, %v10393
        %v10409 = vcombine.low %v10400, %v10407
        %v10411 = vunpack.c.l.s4 1966171168
        %v10412 = vunpack.c.0.s8 %v10411
        %v10413 = vlaneseq
        %v10414 = vshrl.u32 %v10413, 7
        %v10415 = vsub.s32 %v10412, %v10414
        %v10416 = vrot.slane %v10408, %v10415
        %v10418 = vunpack.c.l.s4 1966171168
        %v10419 = vunpack.c.0.s8 %v10418
        %v10420 = vlaneseq
        %v10421 = vshrl.u32 %v10420, 7
        %v10422 = vsub.s32 %v10419, %v10421
        %v10423 = vrot.slane %v10409, %v10422
        %v10424 = vcombine.low %v10416, %v10423
        %10425 = vset.pattern.permute.xlu0 0
        %10426 = vperm.xlu0 %10425, %v8905
        %v10427 = vpop.permute.xlu0 %10426
        %10428 = vset.pattern.permute.xlu0 0
        %10429 = vperm.xlu0 %10428, %v8954
        %v10430 = vpop.permute.xlu0 %10429
        %10431 = vset.pattern.permute.xlu0 0
        %10432 = vperm.xlu0 %10431, %v9003
        %v10433 = vpop.permute.xlu0 %10432
        %10434 = vset.pattern.permute.xlu0 0
        %10435 = vperm.xlu0 %10434, %v9052
        %v10436 = vpop.permute.xlu0 %10435
        %10437 = vset.pattern.permute.xlu0 0
        %10438 = vperm.xlu0 %10437, %v9101
        %v10439 = vpop.permute.xlu0 %10438
        %10440 = vset.pattern.permute.xlu0 0
        %10441 = vperm.xlu0 %10440, %v9150
        %v10442 = vpop.permute.xlu0 %10441
        %10443 = vset.pattern.permute.xlu0 0
        %10444 = vperm.xlu0 %10443, %v9199
        %v10445 = vpop.permute.xlu0 %10444
        %10446 = vset.pattern.permute.xlu0 0
        %10447 = vperm.xlu0 %10446, %v9248
        %v10448 = vpop.permute.xlu0 %10447
        %10449 = vset.pattern.permute.xlu0 0
        %10450 = vperm.xlu0 %10449, %v9297
        %v10451 = vpop.permute.xlu0 %10450
        %10452 = vset.pattern.permute.xlu0 0
        %10453 = vperm.xlu0 %10452, %v9346
        %v10454 = vpop.permute.xlu0 %10453
        %10455 = vset.pattern.permute.xlu0 0
        %10456 = vperm.xlu0 %10455, %v9395
        %v10457 = vpop.permute.xlu0 %10456
        %10458 = vset.pattern.permute.xlu0 0
        %10459 = vperm.xlu0 %10458, %v9444
        %v10460 = vpop.permute.xlu0 %10459
        %10461 = vset.pattern.permute.xlu0 0
        %10462 = vperm.xlu0 %10461, %v9493
        %v10463 = vpop.permute.xlu0 %10462
        %10464 = vset.pattern.permute.xlu0 0
        %10465 = vperm.xlu0 %10464, %v9542
        %v10466 = vpop.permute.xlu0 %10465
        %10467 = vset.pattern.permute.xlu0 0
        %10468 = vperm.xlu0 %10467, %v9591
        %v10469 = vpop.permute.xlu0 %10468
        %10470 = vset.pattern.permute.xlu0 0
        %10471 = vperm.xlu0 %10470, %v9640
        %v10472 = vpop.permute.xlu0 %10471
        %10473 = vset.pattern.permute.xlu0 0
        %10474 = vperm.xlu0 %10473, %v9689
        %v10475 = vpop.permute.xlu0 %10474
        %10476 = vset.pattern.permute.xlu0 0
        %10477 = vperm.xlu0 %10476, %v9738
        %v10478 = vpop.permute.xlu0 %10477
        %10479 = vset.pattern.permute.xlu0 0
        %10480 = vperm.xlu0 %10479, %v9787
        %v10481 = vpop.permute.xlu0 %10480
        %10482 = vset.pattern.permute.xlu0 0
        %10483 = vperm.xlu0 %10482, %v9836
        %v10484 = vpop.permute.xlu0 %10483
        %10485 = vset.pattern.permute.xlu0 0
        %10486 = vperm.xlu0 %10485, %v9885
        %v10487 = vpop.permute.xlu0 %10486
        %10488 = vset.pattern.permute.xlu0 0
        %10489 = vperm.xlu0 %10488, %v9934
        %v10490 = vpop.permute.xlu0 %10489
        %10491 = vset.pattern.permute.xlu0 0
        %10492 = vperm.xlu0 %10491, %v9983
        %v10493 = vpop.permute.xlu0 %10492
        %10494 = vset.pattern.permute.xlu0 0
        %10495 = vperm.xlu0 %10494, %v10032
        %v10496 = vpop.permute.xlu0 %10495
        %10497 = vset.pattern.permute.xlu0 0
        %10498 = vperm.xlu0 %10497, %v10081
        %v10499 = vpop.permute.xlu0 %10498
        %10500 = vset.pattern.permute.xlu0 0
        %10501 = vperm.xlu0 %10500, %v10130
        %v10502 = vpop.permute.xlu0 %10501
        %10503 = vset.pattern.permute.xlu0 0
        %10504 = vperm.xlu0 %10503, %v10179
        %v10505 = vpop.permute.xlu0 %10504
        %10506 = vset.pattern.permute.xlu0 0
        %10507 = vperm.xlu0 %10506, %v10228
        %v10508 = vpop.permute.xlu0 %10507
        %10509 = vset.pattern.permute.xlu0 0
        %10510 = vperm.xlu0 %10509, %v10277
        %v10511 = vpop.permute.xlu0 %10510
        %10512 = vset.pattern.permute.xlu0 0
        %10513 = vperm.xlu0 %10512, %v10326
        %v10514 = vpop.permute.xlu0 %10513
        %10515 = vset.pattern.permute.xlu0 0
        %10516 = vperm.xlu0 %10515, %v10375
        %v10517 = vpop.permute.xlu0 %10516
        %10518 = vset.pattern.permute.xlu0 0
        %10519 = vperm.xlu0 %10518, %v10424
        %v10520 = vpop.permute.xlu0 %10519
        %v10521 = vlaneseq
        %v10522 = vand.u32 %v10521, 127
        %v10523 = vlaneseq
        %v10524 = vshrl.u32 %v10523, 7
        %v10525 = vsub.s32 %v10522, %v10524
        %v10526 = vrot.slane %v10427, %v10525
        %v10527 = vadd.s32 %v10522, 4294967288
        %v10528 = vlaneseq
        %v10529 = vshrl.u32 %v10528, 7
        %v10530 = vsub.s32 %v10527, %v10529
        %v10531 = vrot.slane %v10430, %v10530
        %vm10532 = vcmask 130112
        %v10533 = vsel %vm10532, %v10531, %v10526
        %v10534 = vadd.s32 %v10522, 4294967280
        %v10535 = vlaneseq
        %v10536 = vshrl.u32 %v10535, 7
        %v10537 = vsub.s32 %v10534, %v10536
        %v10538 = vrot.slane %v10433, %v10537
        %vm10539 = vcmask 195712
        %v10540 = vsel %vm10539, %v10538, %v10533
        %v10541 = vadd.s32 %v10522, 4294967272
        %v10542 = vlaneseq
        %v10543 = vshrl.u32 %v10542, 7
        %v10544 = vsub.s32 %v10541, %v10543
        %v10545 = vrot.slane %v10436, %v10544
        %vm10546 = vcmask 261312
        %v10547 = vsel %vm10546, %v10545, %v10540
        %v10548 = vadd.s32 %v10522, 4294967264
        %v10549 = vlaneseq
        %v10550 = vshrl.u32 %v10549, 7
        %v10551 = vsub.s32 %v10548, %v10550
        %v10552 = vrot.slane %v10439, %v10551
        %vm10553 = vcmask 326912
        %v10554 = vsel %vm10553, %v10552, %v10547
        %v10555 = vadd.s32 %v10522, 4294967256
        %v10556 = vlaneseq
        %v10557 = vshrl.u32 %v10556, 7
        %v10558 = vsub.s32 %v10555, %v10557
        %v10559 = vrot.slane %v10442, %v10558
        %vm10560 = vcmask 392512
        %v10561 = vsel %vm10560, %v10559, %v10554
        %v10562 = vadd.s32 %v10522, 4294967248
        %v10563 = vlaneseq
        %v10564 = vshrl.u32 %v10563, 7
        %v10565 = vsub.s32 %v10562, %v10564
        %v10566 = vrot.slane %v10445, %v10565
        %vm10567 = vcmask 458112
        %v10568 = vsel %vm10567, %v10566, %v10561
        %v10569 = vadd.s32 %v10522, 4294967240
        %v10570 = vlaneseq
        %v10571 = vshrl.u32 %v10570, 7
        %v10572 = vsub.s32 %v10569, %v10571
        %v10573 = vrot.slane %v10448, %v10572
        %vm10574 = vcmask 523712
        %v10575 = vsel %vm10574, %v10573, %v10568
        %v10576 = vadd.s32 %v10522, 4294967232
        %v10577 = vlaneseq
        %v10578 = vshrl.u32 %v10577, 7
        %v10579 = vsub.s32 %v10576, %v10578
        %v10580 = vrot.slane %v10451, %v10579
        %vm10581 = vcmask 589312
        %v10582 = vsel %vm10581, %v10580, %v10575
        %v10583 = vadd.s32 %v10522, 4294967224
        %v10584 = vlaneseq
        %v10585 = vshrl.u32 %v10584, 7
        %v10586 = vsub.s32 %v10583, %v10585
        %v10587 = vrot.slane %v10454, %v10586
        %vm10588 = vcmask 654912
        %v10589 = vsel %vm10588, %v10587, %v10582
        %v10590 = vadd.s32 %v10522, 4294967216
        %v10591 = vlaneseq
        %v10592 = vshrl.u32 %v10591, 7
        %v10593 = vsub.s32 %v10590, %v10592
        %v10594 = vrot.slane %v10457, %v10593
        %vm10595 = vcmask 720512
        %v10596 = vsel %vm10595, %v10594, %v10589
        %v10597 = vadd.s32 %v10522, 4294967208
        %v10598 = vlaneseq
        %v10599 = vshrl.u32 %v10598, 7
        %v10600 = vsub.s32 %v10597, %v10599
        %v10601 = vrot.slane %v10460, %v10600
        %vm10602 = vcmask 786112
        %v10603 = vsel %vm10602, %v10601, %v10596
        %v10604 = vadd.s32 %v10522, 4294967200
        %v10605 = vlaneseq
        %v10606 = vshrl.u32 %v10605, 7
        %v10607 = vsub.s32 %v10604, %v10606
        %v10608 = vrot.slane %v10463, %v10607
        %vm10609 = vcmask 851712
        %v10610 = vsel %vm10609, %v10608, %v10603
        %v10611 = vadd.s32 %v10522, 4294967192
        %v10612 = vlaneseq
        %v10613 = vshrl.u32 %v10612, 7
        %v10614 = vsub.s32 %v10611, %v10613
        %v10615 = vrot.slane %v10466, %v10614
        %vm10616 = vcmask 917312
        %v10617 = vsel %vm10616, %v10615, %v10610
        %v10618 = vadd.s32 %v10522, 4294967184
        %v10619 = vlaneseq
        %v10620 = vshrl.u32 %v10619, 7
        %v10621 = vsub.s32 %v10618, %v10620
        %v10622 = vrot.slane %v10469, %v10621
        %vm10623 = vcmask 982912
        %v10624 = vsel %vm10623, %v10622, %v10617
        %v10625 = vadd.s32 %v10522, 4294967176
        %v10626 = vlaneseq
        %v10627 = vshrl.u32 %v10626, 7
        %v10628 = vsub.s32 %v10625, %v10627
        %v10629 = vrot.slane %v10472, %v10628
        %vm10630 = vcmask 1048512
        %v10631 = vsel %vm10630, %v10629, %v10624
        %v10632 = vlaneseq
        %v10633 = vshrl.u32 %v10632, 7
        %v10634 = vsub.s32 %v10522, %v10633
        %v10635 = vrot.slane %v10475, %v10634
        %v10636 = vlaneseq
        %v10637 = vshrl.u32 %v10636, 7
        %v10638 = vsub.s32 %v10527, %v10637
        %v10639 = vrot.slane %v10478, %v10638
        %v10640 = vsel %vm10532, %v10639, %v10635
        %v10641 = vlaneseq
        %v10642 = vshrl.u32 %v10641, 7
        %v10643 = vsub.s32 %v10534, %v10642
        %v10644 = vrot.slane %v10481, %v10643
        %v10645 = vsel %vm10539, %v10644, %v10640
        %v10646 = vlaneseq
        %v10647 = vshrl.u32 %v10646, 7
        %v10648 = vsub.s32 %v10541, %v10647
        %v10649 = vrot.slane %v10484, %v10648
        %v10650 = vsel %vm10546, %v10649, %v10645
        %v10651 = vlaneseq
        %v10652 = vshrl.u32 %v10651, 7
        %v10653 = vsub.s32 %v10548, %v10652
        %v10654 = vrot.slane %v10487, %v10653
        %v10655 = vsel %vm10553, %v10654, %v10650
        %v10656 = vlaneseq
        %v10657 = vshrl.u32 %v10656, 7
        %v10658 = vsub.s32 %v10555, %v10657
        %v10659 = vrot.slane %v10490, %v10658
        %v10660 = vsel %vm10560, %v10659, %v10655
        %v10661 = vlaneseq
        %v10662 = vshrl.u32 %v10661, 7
        %v10663 = vsub.s32 %v10562, %v10662
        %v10664 = vrot.slane %v10493, %v10663
        %v10665 = vsel %vm10567, %v10664, %v10660
        %v10666 = vlaneseq
        %v10667 = vshrl.u32 %v10666, 7
        %v10668 = vsub.s32 %v10569, %v10667
        %v10669 = vrot.slane %v10496, %v10668
        %v10670 = vsel %vm10574, %v10669, %v10665
        %v10671 = vlaneseq
        %v10672 = vshrl.u32 %v10671, 7
        %v10673 = vsub.s32 %v10576, %v10672
        %v10674 = vrot.slane %v10499, %v10673
        %v10675 = vsel %vm10581, %v10674, %v10670
        %v10676 = vlaneseq
        %v10677 = vshrl.u32 %v10676, 7
        %v10678 = vsub.s32 %v10583, %v10677
        %v10679 = vrot.slane %v10502, %v10678
        %v10680 = vsel %vm10588, %v10679, %v10675
        %v10681 = vlaneseq
        %v10682 = vshrl.u32 %v10681, 7
        %v10683 = vsub.s32 %v10590, %v10682
        %v10684 = vrot.slane %v10505, %v10683
        %v10685 = vsel %vm10595, %v10684, %v10680
        %v10686 = vlaneseq
        %v10687 = vshrl.u32 %v10686, 7
        %v10688 = vsub.s32 %v10597, %v10687
        %v10689 = vrot.slane %v10508, %v10688
        %v10690 = vsel %vm10602, %v10689, %v10685
        %v10691 = vlaneseq
        %v10692 = vshrl.u32 %v10691, 7
        %v10693 = vsub.s32 %v10604, %v10692
        %v10694 = vrot.slane %v10511, %v10693
        %v10695 = vsel %vm10609, %v10694, %v10690
        %v10696 = vlaneseq
        %v10697 = vshrl.u32 %v10696, 7
        %v10698 = vsub.s32 %v10611, %v10697
        %v10699 = vrot.slane %v10514, %v10698
        %v10700 = vsel %vm10616, %v10699, %v10695
        %v10701 = vlaneseq
        %v10702 = vshrl.u32 %v10701, 7
        %v10703 = vsub.s32 %v10618, %v10702
        %v10704 = vrot.slane %v10517, %v10703
        %v10705 = vsel %vm10623, %v10704, %v10700
        %v10706 = vlaneseq
        %v10707 = vshrl.u32 %v10706, 7
        %v10708 = vsub.s32 %v10625, %v10707
        %v10709 = vrot.slane %v10520, %v10708
        %v10710 = vsel %vm10630, %v10709, %v10705
        %v10711 = vcombine.low %v10631, %v10710
        %v10713 = vunpack.c.l.s4 1966171168
        %v10714 = vunpack.c.0.s8 %v10713
        %v10715 = vlaneseq
        %v10716 = vshrl.u32 %v10715, 7
        %v10717 = vsub.s32 %v10714, %v10716
        %v10718 = vrot.slane %v10711, %v10717
        %v10720 = vunpack.c.l.s4 1966171168
        %v10721 = vunpack.c.0.s8 %v10720
        %v10722 = vlaneseq
        %v10723 = vshrl.u32 %v10722, 7
        %v10724 = vsub.s32 %v10721, %v10723
        %v10725 = vrot.slane %v10718, %v10724
        %v10727 = vlaneseq
        %vm10728 = vcmp.ge.s32.totalorder %v10727, 0
        %vm10729 = vcmp.lt.s32.totalorder %v10727, 256
        %vm10730 = vmand %vm10728, %vm10729
        %10731 = vst.msk [vmem:[%s394] sm:$0x3] %vm10730, %v10725
        %v10732 = vadd.f32 %v7577, %v7579
        %v10733 = vadd.f32 %v10732, %v7581
        %v10734 = vadd.f32 %v10733, %v7583
        %v10735 = vadd.f32 %v10734, %v7585
        %v10736 = vadd.f32 %v10735, %v7587
        %v10737 = vadd.f32 %v10736, %v7589
        %v10738 = vadd.f32 %v10737, %v7591
        %v10739 = vadd.f32 %v10738, %v7593
        %v10740 = vadd.f32 %v10739, %v7595
        %v10741 = vadd.f32 %v10740, %v7597
        %v10742 = vadd.f32 %v10741, %v7599
        %v10743 = vadd.f32 %v10742, %v7601
        %v10744 = vadd.f32 %v10743, %v7603
        %v10745 = vadd.f32 %v10744, %v7605
        %v10746 = vadd.f32 %v10745, %v7607
        %v10747 = vadd.f32 %v10746, %v7609
        %v10748 = vadd.f32 %v10747, %v7611
        %v10749 = vadd.f32 %v10748, %v7613
        %v10750 = vadd.f32 %v10749, %v7615
        %v10751 = vadd.f32 %v10750, %v7617
        %v10752 = vadd.f32 %v10751, %v7619
        %v10753 = vadd.f32 %v10752, %v7621
        %v10754 = vadd.f32 %v10753, %v7623
        %v10755 = vadd.f32 %v10754, %v7625
        %v10756 = vadd.f32 %v10755, %v7627
        %v10757 = vadd.f32 %v10756, %v7629
        %v10758 = vadd.f32 %v10757, %v7631
        %v10759 = vadd.f32 %v10758, %v7633
        %v10760 = vadd.f32 %v10759, %v7635
        %v10761 = vadd.f32 %v10760, %v7637
        %v10762 = vadd.f32 %v10761, %v7639
        %v10763 = vrot.slane %v10762, 4
        %v10764 = vadd.f32 %v10762, %v10763
        %v10765 = vrot.slane %v10764, 2
        %v10766 = vadd.f32 %v10764, %v10765
        %v10767 = vrot.slane %v10766, 1
        %v10768 = vadd.f32 %v10766, %v10767
        %v10769 = vadd.f32 %v7578, %v7580
        %v10770 = vadd.f32 %v10769, %v7582
        %v10771 = vadd.f32 %v10770, %v7584
        %v10772 = vadd.f32 %v10771, %v7586
        %v10773 = vadd.f32 %v10772, %v7588
        %v10774 = vadd.f32 %v10773, %v7590
        %v10775 = vadd.f32 %v10774, %v7592
        %v10776 = vadd.f32 %v10775, %v7594
        %v10777 = vadd.f32 %v10776, %v7596
        %v10778 = vadd.f32 %v10777, %v7598
        %v10779 = vadd.f32 %v10778, %v7600
        %v10780 = vadd.f32 %v10779, %v7602
        %v10781 = vadd.f32 %v10780, %v7604
        %v10782 = vadd.f32 %v10781, %v7606
        %v10783 = vadd.f32 %v10782, %v7608
        %v10784 = vadd.f32 %v10783, %v7610
        %v10785 = vadd.f32 %v10784, %v7612
        %v10786 = vadd.f32 %v10785, %v7614
        %v10787 = vadd.f32 %v10786, %v7616
        %v10788 = vadd.f32 %v10787, %v7618
        %v10789 = vadd.f32 %v10788, %v7620
        %v10790 = vadd.f32 %v10789, %v7622
        %v10791 = vadd.f32 %v10790, %v7624
        %v10792 = vadd.f32 %v10791, %v7626
        %v10793 = vadd.f32 %v10792, %v7628
        %v10794 = vadd.f32 %v10793, %v7630
        %v10795 = vadd.f32 %v10794, %v7632
        %v10796 = vadd.f32 %v10795, %v7634
        %v10797 = vadd.f32 %v10796, %v7636
        %v10798 = vadd.f32 %v10797, %v7638
        %v10799 = vadd.f32 %v10798, %v7640
        %v10800 = vrot.slane %v10799, 4
        %v10801 = vadd.f32 %v10799, %v10800
        %v10802 = vrot.slane %v10801, 2
        %v10803 = vadd.f32 %v10801, %v10802
        %v10804 = vrot.slane %v10803, 1
        %v10805 = vadd.f32 %v10803, %v10804
        %v10808 = vcombine.low %v10768, %v10805
        %v10810 = vunpack.c.l.s4 1966171168
        %v10811 = vunpack.c.0.s8 %v10810
        %v10812 = vlaneseq
        %v10813 = vshrl.u32 %v10812, 7
        %v10814 = vsub.s32 %v10811, %v10813
        %v10815 = vrot.slane %v10808, %v10814
        %v10817 = vunpack.c.l.s4 1966171168
        %v10818 = vunpack.c.0.s8 %v10817
        %v10819 = vlaneseq
        %v10820 = vshrl.u32 %v10819, 7
        %v10821 = vsub.s32 %v10818, %v10820
        %v10822 = vrot.slane %v10815, %v10821
        %10824 = vst.msk [vmem:[%s398] sm:$0x3] %vm10730, %v10822
        %s10825 = sand.u32 %s211, 1
        %s10826 = scalar_lea.sflag [#allocation3], %s10825
        %s10827 = sand.u32 %s211, 1
        %s10828 = smul.addr %s10827, 512
        %s10829 = scalar_lea.vmem [#allocation2], %s10828
        %p10830 = scmp.lt.s32.totalorder %s25, 1
        %s10831 = scalar_select %p10830, %s25, 1
        %s10832 = smul.addr %s10831, 2
        %s10833 = scalar_lea.vmem %s9, %s10832
        %p10834 = scmp.lt.s32.totalorder %s25, 1
        %s10835 = scalar_select %p10834, %s25, 1
        %s10836 = smul.addr %s10835, 2
        %s10837 = scalar_lea.vmem %s10, %s10836
        // Predicated region
        $region53: #{_phase_corr_jit.1} parent=51 // pred_check
          %p10838 = pneg %p221
        $region54: #{_phase_corr_jit.1} parent=51 // pred_check_branch
          %10840 = sbr.rel (%p10838) target = $region56
        $region55: #{_phase_corr_jit.1} parent=51 // pred_region
          %s10842 = ssub.s32 8192, 8192
          %10843 = vsyncadd %s10826, %s10842
          %s10844 = smul.addr %s25, 64
          %s10845 = smul.addr %s10844, 128
          %s10846 = scalar_lea.hbm %s8, %s10845
          %s10847 = sshll.u32 %s10829, 4
          %s10848 = int_to_ptr.vmem [resolvable:$true] %s10847
          %10853 = dma.vmem_to_hbm [thread:$0]  %s10848, 8192, %s10846, %s10826, 256, 256, 16
        $region56: #{_phase_corr_jit.1} parent=51 // pred_fallthru
          _
        // Predicated region
        $region57: #{_phase_corr_jit.1} parent=51 // pred_check
          %p10854 = pneg %p247
        $region58: #{_phase_corr_jit.1} parent=51 // pred_check_branch
          %10856 = sbr.rel (%p10854) target = $region60
        $region59: #{_phase_corr_jit.1} parent=51 // pred_region
          _
        $region60: #{_phase_corr_jit.1} parent=51 // pred_fallthru
          _
        // Predicated region
        $region61: #{_phase_corr_jit.1} parent=51 // pred_check
          %p10857 = pneg %p273
        $region62: #{_phase_corr_jit.1} parent=51 // pred_check_branch
          %10859 = sbr.rel (%p10857) target = $region64
        $region63: #{_phase_corr_jit.1} parent=51 // pred_region
          _
        $region64: #{_phase_corr_jit.1} parent=51 // pred_fallthru
          _
      $region52: #{_phase_corr_jit.1} parent=5 // pred_fallthru
        _
      %p10860 = scmp.le.s32.totalorder 2, %s20
      // Predicated region
      $region65: #{_phase_corr_jit.1} parent=5 // pred_check
        %p10861 = pneg %p10860
      $region66: #{_phase_corr_jit.1} parent=5 // pred_check_branch
        %10863 = sbr.rel (%p10861) target = $region68
      $region67: #{_phase_corr_jit.1} parent=5 // pred_region
        %s10864 = ssub.s32 %s20, 2
        // Predicated region
        $region69: #{_phase_corr_jit.1} parent=67 // pred_check
          %p10865 = pneg %p227
        $region70: #{_phase_corr_jit.1} parent=67 // pred_check_branch
          %10867 = sbr.rel (%p10865) target = $region72
        $region71: #{_phase_corr_jit.1} parent=67 // pred_region
          %s10868 = sand.u32 %s212, 1
          %s10869 = scalar_lea.sflag [#allocation3], %s10868
          %s10870 = sand.u32 %s212, 1
          %s10871 = smul.addr %s10870, 512
          %s10872 = scalar_lea.vmem [#allocation2], %s10871
          %10873 = dma.done %s10869, 8192
        $region72: #{_phase_corr_jit.1} parent=67 // pred_fallthru
          _
        // Predicated region
        $region73: #{_phase_corr_jit.1} parent=67 // pred_check
          %p10874 = pneg %p253
        $region74: #{_phase_corr_jit.1} parent=67 // pred_check_branch
          %10876 = sbr.rel (%p10874) target = $region76
        $region75: #{_phase_corr_jit.1} parent=67 // pred_region
          %p10877 = scmp.lt.s32.totalorder %s26, 1
          %s10878 = scalar_select %p10877, %s26, 1
          %s10879 = smul.addr %s10878, 2
          %s10880 = scalar_lea.vmem %s9, %s10879
        $region76: #{_phase_corr_jit.1} parent=67 // pred_fallthru
          _
        // Predicated region
        $region77: #{_phase_corr_jit.1} parent=67 // pred_check
          %p10881 = pneg %p279
        $region78: #{_phase_corr_jit.1} parent=67 // pred_check_branch
          %10883 = sbr.rel (%p10881) target = $region80
        $region79: #{_phase_corr_jit.1} parent=67 // pred_region
          %p10884 = scmp.lt.s32.totalorder %s26, 1
          %s10885 = scalar_select %p10884, %s26, 1
          %s10886 = smul.addr %s10885, 2
          %s10887 = scalar_lea.vmem %s10, %s10886
        $region80: #{_phase_corr_jit.1} parent=67 // pred_fallthru
          _
      $region68: #{_phase_corr_jit.1} parent=5 // pred_fallthru
        _
    $region6: #{_phase_corr_jit.1} parent=1 // loop_footer
      %s24 = sadd.s32 1, %s20
    $region7: #{_phase_corr_jit.1} parent=1 // loop_footer_branch
      %19 = sbr.rel target = $region3
    $region8: #{_phase_corr_jit.1} parent=1 // loop_exit
      _
    %10888 = vsyncpa [#allocation3], 1
    %s10889 = scalar_lea.sflag [#allocation3], 1
    %10890 = vsyncpa %s10889, 1

</llo_original>
